<compile_context>
chip_gen: v7x
topology: tpu7x:2x2x1
jax: 0.10.0
libtpu: 0.0.40
codegen_flags: <defaults>
</compile_context>

<pallas_src>
import functools

import numpy as np
import jax
import jax.numpy as jnp
from jax import lax
from jax.experimental import pallas as pl
from jax.experimental.pallas import tpu as pltpu

KSIZE = 5
PAD = KSIZE // 2        # 'same' padding of the 5x5 depthwise convs
HALO = PAD              # half-resolution halo rows/cols kept in the shared scratch


def _fused_wtconv_kernel(xs_c_ref, xs_t_ref, xs_b_ref, ww_ref, bw_ref, bb_ref,
                         out_ref, pad_ref, *, w_left):
    """One (channel-group, batch, row-tile) tile of the fused WTConv2d forward.

    xs_c_ref : (1,1,4,th,Wh,cg)    centre rows, phase blk=2p+q holds x[2u+p,2v+q]
    xs_t_ref : (1,1,4,HALO,Wh,cg)  rows just above the tile (garbage at image top)
    xs_b_ref : (1,1,4,HALO,Wh,cg)  rows just below the tile (garbage at image bottom)
    ww_ref   : (1,5,5,4,cg)        wavelet depthwise weights * wavelet_scale * 0.25
    bw_ref   : (1,5,5,cg)          base depthwise weights * base_scale
    bb_ref   : (1,1,cg)            base bias * base_scale (float32)
    out_ref  : (1,1,4,th,Wh,cg)    fused output, same phase layout as xs
    pad_ref  : (4, th+2*HALO, w_left+Wh+HALO, cg) shared zero-padded scratch
    """
    cdt = pad_ref.dtype
    odt = out_ref.dtype
    _, _, _, th, Wh, cg = xs_c_ref.shape
    n_rows = th + 2 * HALO

    r = pl.program_id(2)
    nr = pl.num_programs(2)

    # ---- zero only the column-halo strips that are actually read ----------------
    zcol = jnp.zeros((4, n_rows, HALO, cg), cdt)
    pad_ref[:, :, w_left - HALO:w_left, :] = zcol
    pad_ref[:, :, w_left + Wh:w_left + Wh + HALO, :] = zcol

    # ---- halo rows: real neighbour data, zero-masked at the image boundary ------
    top_keep = jnp.where(r > 0, 1.0, 0.0).astype(cdt)
    bot_keep = jnp.where(r < nr - 1, 1.0, 0.0).astype(cdt)
    xt = xs_t_ref[0, 0] * top_keep                       # (4, HALO, Wh, cg)
    xb = xs_b_ref[0, 0] * bot_keep                       # (4, HALO, Wh, cg)

    # ============================= wavelet branch =================================
    # Haar analysis (0.5 folded into ww): write un-normalised subbands (a±b±c±d)
    # for the halo rows and the interior rows into the shared scratch.
    def store_subbands(ph, r0, n):
        a, b, c, d = ph[0], ph[1], ph[2], ph[3]
        s0 = a + b; s1 = c + d; e0 = a - b; e1 = c - d
        pad_ref[0, r0:r0 + n, w_left:w_left + Wh, :] = s0 + s1
        pad_ref[1, r0:r0 + n, w_left:w_left + Wh, :] = s0 - s1
        pad_ref[2, r0:r0 + n, w_left:w_left + Wh, :] = e0 + e1
        pad_ref[3, r0:r0 + n, w_left:w_left + Wh, :] = e0 - e1

    store_subbands(xt, 0, HALO)
    store_subbands(xs_c_ref[0, 0], HALO, th)
    store_subbands(xb, HALO + th, HALO)

    # depthwise 5x5 'same' conv on the 4 subbands with folded weights (f32 acc)
    wwv = ww_ref[0]                                                  # (5,5,4,cg)
    ww_taps = [[wwv[i, j][:, None, None, :] for j in range(KSIZE)]
               for i in range(KSIZE)]
    wacc = jnp.zeros((4, th, Wh, cg), jnp.float32)
    for i in range(KSIZE):
        for j in range(KSIZE):
            win = pad_ref[:, i:i + th,
                          w_left - PAD + j:w_left - PAD + j + Wh, :]
            wacc = wacc + win * ww_taps[i][j]

    # Haar synthesis (0.5 folded into ww): stage y_tag directly in the output block
    s0 = wacc[0] + wacc[1]; s1 = wacc[2] + wacc[3]
    e0 = wacc[0] - wacc[1]; e1 = wacc[2] - wacc[3]
    out_ref[0, 0, 0] = (s0 + s1).astype(odt)
    out_ref[0, 0, 1] = (s0 - s1).astype(odt)
    out_ref[0, 0, 2] = (e0 + e1).astype(odt)
    out_ref[0, 0, 3] = (e0 - e1).astype(odt)

    # =============================== base branch ==================================
    # overwrite the scratch interior + halo rows with the raw phases
    pad_ref[:, 0:HALO, w_left:w_left + Wh, :] = xt
    pad_ref[:, HALO:HALO + th, w_left:w_left + Wh, :] = xs_c_ref[0, 0]
    pad_ref[:, HALO + th:HALO + th + HALO, w_left:w_left + Wh, :] = xb

    bwv = bw_ref[0]                                                  # (5,5,cg)
    bw_taps = [[bwv[i, j] for j in range(KSIZE)] for i in range(KSIZE)]
    bb = bb_ref[0]                                                   # (1,cg) f32

    # deduplicated polyphase loop: each distinct (phase, di, dj) window is loaded
    # exactly once and accumulated into every output phase that uses it.
    acc = [jnp.zeros((th, Wh, cg), jnp.float32) for _ in range(4)]
    for ii in range(-PAD, PAD + 2):              # full-res row offset -2..3
        ri, di = ii % 2, ii // 2
        for jj in range(-PAD, PAD + 2):          # full-res col offset -2..3
            rj, dj = jj % 2, jj // 2
            win = pad_ref[2 * ri + rj,
                          HALO + di:HALO + di + th,
                          w_left + dj:w_left + dj + Wh, :]
            for p in range(2):
                i = ii - p + PAD
                if i < 0 or i >= KSIZE:
                    continue
                for q in range(2):
                    j = jj - q + PAD
                    if j < 0 or j >= KSIZE:
                        continue
                    blk = 2 * p + q
                    acc[blk] = acc[blk] + win * bw_taps[i][j]

    # fused output: y = base_scale*(conv(x)+bias) + wavelet branch (already staged)
    # TODO(synk): TDTB undefined in the reference source -> identity.
    for blk in range(4):
        out_ref[0, 0, blk] = (out_ref[0, 0, blk].astype(jnp.float32)
                              + acc[blk] + bb[None, :, :]).astype(odt)


def _default_compute_dtype():
    """bf16 tap math on chips with a bf16 VPU (v6e/v7x); f32 on v5e and older."""
    try:
        kind = jax.devices()[0].device_kind.lower()
    except Exception:
        return jnp.float32
    if "v6" in kind or "v7" in kind:
        return jnp.bfloat16
    return jnp.float32


def _vmem_capacity_bytes():
    try:
        return int(pltpu.get_tpu_info().vmem_capacity_bytes)
    except Exception:
        return 64 << 20         # conservative: v7x per-TensorCore VMEM


def _estimate_vmem_bytes(th, Wh, cg, w_left, csize):
    blk_c = 4 * th * Wh * cg * csize              # activation block (compute dtype)
    blk_f = 4 * th * Wh * cg * 4                  # activation block (f32)
    halo_c = 4 * HALO * Wh * cg * csize
    wts = KSIZE * KSIZE * 5 * cg * csize + 2 * cg * 4
    scratch = 4 * (th + 2 * HALO) * (w_left + Wh + HALO) * cg * csize
    # double-buffered pipeline blocks + scratch + live temporaries
    # (one f32 accumulator set + ~2 compute-dtype window/phase blocks)
    return 2 * (blk_c + 2 * halo_c + wts) + 2 * blk_f + scratch + blk_f + 2 * blk_c


def _pick_row_tile(Hh, Wh, cg, w_left, csize, budget):
    cands = [t for t in range(Hh, 1, -1) if Hh % t == 0 and t % 2 == 0]
    if not cands:
        cands = [Hh]
    for t in cands:
        if _estimate_vmem_bytes(t, Wh, cg, w_left, csize) <= budget:
            return t
    return cands[-1]


def wtconv2d_forward(x_nchw, params, *, lane_tile=128, row_tile=None,
                     compute_dtype=None):
    """WTConv2d forward (kernel_size=5, stride=1, wt_levels=1, wt_type='db1').

    Input/output are NCHW float32 (PyTorch layout).  One fused Pallas kernel per
    (channel-group, batch, row-tile) computes both branches.  Channels are zero-padded
    up to a multiple of `lane_tile` (default 128) for lane-dense vregs; `compute_dtype`
    defaults to bf16 on v6e/v7x (f32 accumulators kept) and f32 on v5e.
    """
    B, C, H, W = x_nchw.shape
    assert H % 2 == 0 and W % 2 == 0, "odd-size pad/crop path not exercised here"
    Hh, Wh = H // 2, W // 2
    assert Hh % 2 == 0, "row-halo tiling needs an even half-resolution height"

    if compute_dtype is None:
        compute_dtype = _default_compute_dtype()
    csize = np.dtype(compute_dtype).itemsize
    w_left = max((8 * 4) // csize, HALO)        # sublane-aligned left pad (8 f32 / 16 bf16)

    # lane-dense channel grouping: zero-pad C up to a multiple of lane_tile
    cg = int(lane_tile)
    Cp = ((C + cg - 1) // cg) * cg
    G = Cp // cg

    cap = _vmem_capacity_bytes()
    budget = cap - (8 << 20)
    th = row_tile if row_tile is not None else _pick_row_tile(Hh, Wh, cg, w_left,
                                                              csize, budget)
    assert Hh % th == 0 and th % 2 == 0
    R = Hh // th

    need = _estimate_vmem_bytes(th, Wh, cg, w_left, csize)
    floor_ = min(32 << 20, cap - (4 << 20))
    vmem_limit = int(max(min(int(1.3 * need) + (1 << 20), cap - (4 << 20)), floor_))

    f32 = jnp.float32
    x = x_nchw.astype(f32)
    if Cp != C:
        x = jnp.pad(x, ((0, 0), (0, Cp - C), (0, 0), (0, 0)))
    # one-shot layout glue (compute-dtype cast fuses into this transpose):
    # NCHW -> (B, G, phase, Hh, Wh, cg), phase blk = 2*p + q
    xs = x.astype(compute_dtype).reshape(B, G, cg, Hh, 2, Wh, 2)
    xs = jnp.transpose(xs, (0, 1, 4, 6, 3, 5, 2)).reshape(B, G, 4, Hh, Wh, cg)

    def pad_c(a, axis):
        if Cp == C:
            return a
        widths = [(0, 0)] * a.ndim
        widths[axis] = (0, Cp - C)
        return jnp.pad(a, widths)

    # fold constant scales into the (tiny) weights at repack time:
    #   ww_eff = wconv_w * wavelet_scale * 0.25   (0.25 = analysis 0.5 * synthesis 0.5)
    #   bw_eff = bconv_w * base_scale,  bb_eff = bias * base_scale
    ww = params["wconv_w"].astype(f32).reshape(KSIZE, KSIZE, 4, C)
    ws = params["wscale"].astype(f32).reshape(4, C)
    ww = pad_c(ww * ws[None, None] * 0.25, 3).reshape(KSIZE, KSIZE, 4, G, cg)
    ww = jnp.transpose(ww, (3, 0, 1, 2, 4)).astype(compute_dtype)     # (G,5,5,4,cg)

    bs = params["bscale"].astype(f32).reshape(C)
    bw = pad_c(params["bconv_w"].astype(f32) * bs[None, None, :], 2)
    bw = jnp.transpose(bw.reshape(KSIZE, KSIZE, G, cg),
                       (2, 0, 1, 3)).astype(compute_dtype)            # (G,5,5,cg)
    bb = pad_c(params["bbias"].astype(f32).reshape(C) * bs, 0).reshape(G, 1, cg)

    khalf = th // HALO
    kernel = functools.partial(_fused_wtconv_kernel, w_left=w_left)

    out = pl.pallas_call(
        kernel,
        out_shape=jax.ShapeDtypeStruct((B, G, 4, Hh, Wh, cg), f32),
        grid=(G, B, R),
        in_specs=[
            pl.BlockSpec((1, 1, 4, th, Wh, cg), lambda g, b, r: (b, g, 0, r, 0, 0)),
            pl.BlockSpec((1, 1, 4, HALO, Wh, cg),
                         lambda g, b, r: (b, g, 0,
                                          jnp.maximum(r * khalf - 1, 0), 0, 0)),
            pl.BlockSpec((1, 1, 4, HALO, Wh, cg),
                         lambda g, b, r: (b, g, 0,
                                          jnp.minimum((r + 1) * khalf,
                                                      Hh // HALO - 1), 0, 0)),
            pl.BlockSpec((1, KSIZE, KSIZE, 4, cg), lambda g, b, r: (g, 0, 0, 0, 0)),
            pl.BlockSpec((1, KSIZE, KSIZE, cg), lambda g, b, r: (g, 0, 0, 0)),
            pl.BlockSpec((1, 1, cg), lambda g, b, r: (g, 0, 0)),
        ],
        out_specs=pl.BlockSpec((1, 1, 4, th, Wh, cg), lambda g, b, r: (b, g, 0, r, 0, 0)),
        scratch_shapes=[
            pltpu.VMEM((4, th + 2 * HALO, w_left + Wh + HALO, cg), compute_dtype)
        ],
        compiler_params=pltpu.CompilerParams(
            dimension_semantics=("parallel", "parallel", "parallel"),
            vmem_limit_bytes=vmem_limit,
        ),
    )(xs, xs, xs, ww, bw, bb)

    # layout glue back: (B, G, phase, Hh, Wh, cg) -> NCHW; drop channel padding
    y = out.reshape(B, G, 2, 2, Hh, Wh, cg)
    y = jnp.transpose(y, (0, 1, 6, 4, 2, 5, 3)).reshape(B, Cp, H, W)
    return y[:, :C]


def reference_nchw(x, p):
    """Plain-JAX reference mirroring the PyTorch code (NCHW, lax convs)."""
    B, C, H, W = x.shape
    s2 = np.float32(1.0 / np.sqrt(2.0))
    dec_lo = jnp.array([s2, s2], jnp.float32)       # pywt db1 dec_lo reversed
    dec_hi = jnp.array([s2, -s2], jnp.float32)      # pywt db1 dec_hi reversed
    rec_lo = jnp.array([s2, s2], jnp.float32)
    rec_hi = jnp.array([s2, -s2], jnp.float32)
    dec = jnp.stack([dec_lo[None, :] * dec_lo[:, None], dec_lo[None, :] * dec_hi[:, None],
                     dec_hi[None, :] * dec_lo[:, None], dec_hi[None, :] * dec_hi[:, None]], 0)
    rec = jnp.stack([rec_lo[None, :] * rec_lo[:, None], rec_lo[None, :] * rec_hi[:, None],
                     rec_hi[None, :] * rec_lo[:, None], rec_hi[None, :] * rec_hi[:, None]], 0)
    dn = ('NCHW', 'OIHW', 'NCHW')
    prec = lax.Precision.HIGHEST

    # wavelet_transform: grouped stride-2 conv, torch channel order o = 4*ch + k
    wt_filt = jnp.tile(dec[:, None], (C, 1, 1, 1))                       # (4C,1,2,2)
    xw = lax.conv_general_dilated(x, wt_filt, (2, 2), [(0, 0), (0, 0)],
                                  feature_group_count=C, dimension_numbers=dn,
                                  precision=prec)

    # depthwise 5x5 'same' conv + scale (permute subband-major params to torch order)
    idx = np.array([(t % 4) * C + t // 4 for t in range(4 * C)])
    w_t = jnp.transpose(p["wconv_w"], (2, 0, 1))[idx][:, None]           # (4C,1,5,5)
    s_t = p["wscale"][0][idx]
    xw = lax.conv_general_dilated(xw, w_t, (1, 1), [(2, 2), (2, 2)],
                                  feature_group_count=4 * C, dimension_numbers=dn,
                                  precision=prec)
    xw = xw * s_t[None, :, None, None]

    # inverse_wavelet_transform: grouped conv_transpose2d(stride=2) == lhs-dilated conv
    rec_fwd = jnp.tile(jnp.flip(rec, axis=(1, 2))[None], (C, 1, 1, 1))   # (C,4,2,2)
    x_tag = lax.conv_general_dilated(xw, rec_fwd, (1, 1), [(1, 1), (1, 1)],
                                     lhs_dilation=(2, 2),
                                     feature_group_count=C, dimension_numbers=dn,
                                     precision=prec)

    # base branch: depthwise conv + bias, then base_scale
    wb = jnp.transpose(p["bconv_w"], (2, 0, 1))[:, None]                 # (C,1,5,5)
    xb = lax.conv_general_dilated(x, wb, (1, 1), [(2, 2), (2, 2)],
                                  feature_group_count=C, dimension_numbers=dn,
                                  precision=prec)
    xb = (xb + p["bbias"][0][None, :, None, None]) * p["bscale"][0][None, :, None, None]

    # TDTB treated as identity, then x + x_tag
    return xb + x_tag


def _make_params(key, C):
    k1, k2, k3 = jax.random.split(key, 3)
    return {
        # base_conv: depthwise Conv2d(C, C, 5, groups=C, bias=True)
        "bconv_w": 0.1 * jax.random.normal(k1, (KSIZE, KSIZE, C), jnp.float32),
        "bbias":   0.1 * jax.random.normal(k2, (1, C), jnp.float32),
        # base_scale: _ScaleModule([1,C,1,1], init_scale=1.0)
        "bscale":  jnp.ones((1, C), jnp.float32),
        # wavelet_convs[0]: depthwise Conv2d(4C, 4C, 5, groups=4C, bias=False)
        "wconv_w": 0.1 * jax.random.normal(k3, (KSIZE, KSIZE, 4 * C), jnp.float32),
        # wavelet_scale[0]: _ScaleModule([1,4C,1,1], init_scale=0.1)
        "wscale":  0.1 * jnp.ones((1, 4 * C), jnp.float32),
    }


if __name__ == "__main__":
    key = jax.random.PRNGKey(0)
    kp1, kx1, kp2, kx2, kp3, kx3 = jax.random.split(key, 6)

    auto_dt = _default_compute_dtype()

    def check(out, ref, dtype):
        tol = 1e-4 if dtype == jnp.float32 else 6e-2    # bf16 tap math needs loose tol
        np.testing.assert_allclose(np.asarray(out), np.asarray(ref), rtol=tol, atol=tol)

    # config 1: module-default small shape, forced f32 tap math (exact check);
    # exercises lane padding (C=4 -> cg=128) with a single row tile.
    B, C, H, W = 2, 4, 16, 16
    params1 = _make_params(kp1, C)
    x1 = jax.random.normal(kx1, (B, C, H, W), jnp.float32)
    out1 = jax.block_until_ready(
        wtconv2d_forward(x1, params1, compute_dtype=jnp.float32))
    ref1 = reference_nchw(x1, params1)
    assert out1.shape == (B, C, H, W)
    check(out1, ref1, jnp.float32)

    # config 2: exercises G=2 channel groups and R=2 row tiles (real halo exchange
    # between row tiles) with the device-default compute dtype (bf16 on v6e/v7x).
    B2, C2 = 2, 8
    params2 = _make_params(kp2, C2)
    x2 = jax.random.normal(kx2, (B2, C2, H, W), jnp.float32)
    out2 = jax.block_until_ready(
        wtconv2d_forward(x2, params2, lane_tile=4, row_tile=4))
    ref2 = reference_nchw(x2, params2)
    check(out2, ref2, auto_dt)

    # config 3: all defaults (lane-dense cg=128, auto row tile, auto compute dtype).
    params3 = _make_params(kp3, 8)
    x3 = jax.random.normal(kx3, (2, 8, H, W), jnp.float32)
    out3 = jax.block_until_ready(wtconv2d_forward(x3, params3))
    ref3 = reference_nchw(x3, params3)
    check(out3, ref3, auto_dt)

    print("KERNEL_OK")
</pallas_src>

<mosaic_0001>
module attributes {stable_mosaic.version = 11 : i64} {
  func.func @_fused_wtconv_kernel(%arg0: i32, %arg1: i32, %arg2: i32, %arg3: memref<1x1x4x8x8x128xf32, #tpu.memory_space<vmem>>, %arg4: memref<1x1x4x2x8x128xf32, #tpu.memory_space<vmem>>, %arg5: memref<1x1x4x2x8x128xf32, #tpu.memory_space<vmem>>, %arg6: memref<1x5x5x4x128xf32, #tpu.memory_space<vmem>>, %arg7: memref<1x5x5x128xf32, #tpu.memory_space<vmem>>, %arg8: memref<1x1x128xf32, #tpu.memory_space<vmem>>, %arg9: memref<1x1x4x8x8x128xf32, #tpu.memory_space<vmem>>, %arg10: memref<4x12x18x128xf32, #tpu.memory_space<vmem>>) attributes {dimension_semantics = [#tpu.dimension_semantics<parallel>, #tpu.dimension_semantics<parallel>, #tpu.dimension_semantics<parallel>], iteration_bounds = array<i64: 1, 2, 1>, scalar_prefetch = 0 : i64, scratch_operands = 1 : i64, tpu.core_type = #tpu.core_type<tc>, window_params = [{transform_indices = @transform_0, window_bounds = array<i64: 1, 1, 4, 8, 8, 128>}, {transform_indices = @transform_1, window_bounds = array<i64: 1, 1, 4, 2, 8, 128>}, {transform_indices = @transform_2, window_bounds = array<i64: 1, 1, 4, 2, 8, 128>}, {transform_indices = @transform_3, window_bounds = array<i64: 1, 5, 5, 4, 128>}, {transform_indices = @transform_4, window_bounds = array<i64: 1, 5, 5, 128>}, {transform_indices = @transform_5, window_bounds = array<i64: 1, 1, 128>}, {transform_indices = @transform_6, window_bounds = array<i64: 1, 1, 4, 8, 8, 128>}]} {
    %cst = arith.constant 0.000000e+00 : f32
    %0 = vector.broadcast %cst : f32 to vector<4x12x2x128xf32>
    %c0 = arith.constant 0 : index
    %c0_0 = arith.constant 0 : index
    %c6 = arith.constant 6 : index
    %c0_1 = arith.constant 0 : index
    %1 = vector.load %arg10[%c0, %c0_0, %c6, %c0_1] : memref<4x12x18x128xf32, #tpu.memory_space<vmem>>, vector<4x12x2x128xf32>
    tpu.vector_store %arg10[%c0, %c0_0, %c6, %c0_1], %0 {strides = array<i32>} : memref<4x12x18x128xf32, #tpu.memory_space<vmem>>, vector<4x12x2x128xf32>,
    %c0_2 = arith.constant 0 : index
    %c0_3 = arith.constant 0 : index
    %c16 = arith.constant 16 : index
    %c0_4 = arith.constant 0 : index
    %2 = vector.load %arg10[%c0_2, %c0_3, %c16, %c0_4] : memref<4x12x18x128xf32, #tpu.memory_space<vmem>>, vector<4x12x2x128xf32>
    tpu.vector_store %arg10[%c0_2, %c0_3, %c16, %c0_4], %0 {strides = array<i32>} : memref<4x12x18x128xf32, #tpu.memory_space<vmem>>, vector<4x12x2x128xf32>,
    %c0_i32 = arith.constant 0 : i32
    %3 = arith.cmpi sgt, %arg2, %c0_i32 : i32
    %cst_5 = arith.constant 1.000000e+00 : f32
    %cst_6 = arith.constant 0.000000e+00 : f32
    %4 = arith.select %3, %cst_5, %cst_6 : f32
    %c0_i32_7 = arith.constant 0 : i32
    %5 = arith.cmpi slt, %arg2, %c0_i32_7 : i32
    %cst_8 = arith.constant 1.000000e+00 : f32
    %cst_9 = arith.constant 0.000000e+00 : f32
    %6 = arith.select %5, %cst_8, %cst_9 : f32
    %c0_10 = arith.constant 0 : index
    %c0_11 = arith.constant 0 : index
    %c0_12 = arith.constant 0 : index
    %c0_13 = arith.constant 0 : index
    %c0_14 = arith.constant 0 : index
    %c0_15 = arith.constant 0 : index
    %7 = vector.load %arg4[%c0_10, %c0_11, %c0_12, %c0_13, %c0_14, %c0_15] : memref<1x1x4x2x8x128xf32, #tpu.memory_space<vmem>>, vector<1x1x4x2x8x128xf32>
    %8 = vector.shape_cast %7 : vector<1x1x4x2x8x128xf32> to vector<4x2x8x128xf32>
    %9 = vector.broadcast %4 : f32 to vector<4x2x8x128xf32>
    %10 = arith.mulf %8, %9 : vector<4x2x8x128xf32>
    %c0_16 = arith.constant 0 : index
    %c0_17 = arith.constant 0 : index
    %c0_18 = arith.constant 0 : index
    %c0_19 = arith.constant 0 : index
    %c0_20 = arith.constant 0 : index
    %c0_21 = arith.constant 0 : index
    %11 = vector.load %arg5[%c0_16, %c0_17, %c0_18, %c0_19, %c0_20, %c0_21] : memref<1x1x4x2x8x128xf32, #tpu.memory_space<vmem>>, vector<1x1x4x2x8x128xf32>
    %12 = vector.shape_cast %11 : vector<1x1x4x2x8x128xf32> to vector<4x2x8x128xf32>
    %13 = vector.broadcast %6 : f32 to vector<4x2x8x128xf32>
    %14 = arith.mulf %12, %13 : vector<4x2x8x128xf32>
    %15 = vector.extract_strided_slice %10 {offsets = [0, 0, 0, 0], sizes = [1, 2, 8, 128], strides = [1, 1, 1, 1]} : vector<4x2x8x128xf32> to vector<1x2x8x128xf32>
    %16 = vector.shape_cast %15 : vector<1x2x8x128xf32> to vector<2x8x128xf32>
    %17 = vector.extract_strided_slice %10 {offsets = [1, 0, 0, 0], sizes = [1, 2, 8, 128], strides = [1, 1, 1, 1]} : vector<4x2x8x128xf32> to vector<1x2x8x128xf32>
    %18 = vector.shape_cast %17 : vector<1x2x8x128xf32> to vector<2x8x128xf32>
    %19 = vector.extract_strided_slice %10 {offsets = [2, 0, 0, 0], sizes = [1, 2, 8, 128], strides = [1, 1, 1, 1]} : vector<4x2x8x128xf32> to vector<1x2x8x128xf32>
    %20 = vector.shape_cast %19 : vector<1x2x8x128xf32> to vector<2x8x128xf32>
    %21 = vector.extract_strided_slice %10 {offsets = [3, 0, 0, 0], sizes = [1, 2, 8, 128], strides = [1, 1, 1, 1]} : vector<4x2x8x128xf32> to vector<1x2x8x128xf32>
    %22 = vector.shape_cast %21 : vector<1x2x8x128xf32> to vector<2x8x128xf32>
    %23 = arith.addf %16, %18 : vector<2x8x128xf32>
    %24 = arith.addf %20, %22 : vector<2x8x128xf32>
    %25 = arith.subf %16, %18 : vector<2x8x128xf32>
    %26 = arith.subf %20, %22 : vector<2x8x128xf32>
    %27 = arith.addf %23, %24 : vector<2x8x128xf32>
    %c0_22 = arith.constant 0 : index
    %c0_23 = arith.constant 0 : index
    %c8 = arith.constant 8 : index
    %c0_24 = arith.constant 0 : index
    %28 = vector.load %arg10[%c0_22, %c0_23, %c8, %c0_24] : memref<4x12x18x128xf32, #tpu.memory_space<vmem>>, vector<1x2x8x128xf32>
    %29 = vector.shape_cast %28 : vector<1x2x8x128xf32> to vector<2x8x128xf32>
    %30 = vector.shape_cast %27 : vector<2x8x128xf32> to vector<1x2x8x128xf32>
    tpu.vector_store %arg10[%c0_22, %c0_23, %c8, %c0_24], %30 {strides = array<i32>} : memref<4x12x18x128xf32, #tpu.memory_space<vmem>>, vector<1x2x8x128xf32>,
    %31 = arith.subf %23, %24 : vector<2x8x128xf32>
    %c1 = arith.constant 1 : index
    %c0_25 = arith.constant 0 : index
    %c8_26 = arith.constant 8 : index
    %c0_27 = arith.constant 0 : index
    %32 = vector.load %arg10[%c1, %c0_25, %c8_26, %c0_27] : memref<4x12x18x128xf32, #tpu.memory_space<vmem>>, vector<1x2x8x128xf32>
    %33 = vector.shape_cast %32 : vector<1x2x8x128xf32> to vector<2x8x128xf32>
    %34 = vector.shape_cast %31 : vector<2x8x128xf32> to vector<1x2x8x128xf32>
    tpu.vector_store %arg10[%c1, %c0_25, %c8_26, %c0_27], %34 {strides = array<i32>} : memref<4x12x18x128xf32, #tpu.memory_space<vmem>>, vector<1x2x8x128xf32>,
    %35 = arith.addf %25, %26 : vector<2x8x128xf32>
    %c2 = arith.constant 2 : index
    %c0_28 = arith.constant 0 : index
    %c8_29 = arith.constant 8 : index
    %c0_30 = arith.constant 0 : index
    %36 = vector.load %arg10[%c2, %c0_28, %c8_29, %c0_30] : memref<4x12x18x128xf32, #tpu.memory_space<vmem>>, vector<1x2x8x128xf32>
    %37 = vector.shape_cast %36 : vector<1x2x8x128xf32> to vector<2x8x128xf32>
    %38 = vector.shape_cast %35 : vector<2x8x128xf32> to vector<1x2x8x128xf32>
    tpu.vector_store %arg10[%c2, %c0_28, %c8_29, %c0_30], %38 {strides = array<i32>} : memref<4x12x18x128xf32, #tpu.memory_space<vmem>>, vector<1x2x8x128xf32>,
    %39 = arith.subf %25, %26 : vector<2x8x128xf32>
    %c3 = arith.constant 3 : index
    %c0_31 = arith.constant 0 : index
    %c8_32 = arith.constant 8 : index
    %c0_33 = arith.constant 0 : index
    %40 = vector.load %arg10[%c3, %c0_31, %c8_32, %c0_33] : memref<4x12x18x128xf32, #tpu.memory_space<vmem>>, vector<1x2x8x128xf32>
    %41 = vector.shape_cast %40 : vector<1x2x8x128xf32> to vector<2x8x128xf32>
    %42 = vector.shape_cast %39 : vector<2x8x128xf32> to vector<1x2x8x128xf32>
    tpu.vector_store %arg10[%c3, %c0_31, %c8_32, %c0_33], %42 {strides = array<i32>} : memref<4x12x18x128xf32, #tpu.memory_space<vmem>>, vector<1x2x8x128xf32>,
    %c0_34 = arith.constant 0 : index
    %c0_35 = arith.constant 0 : index
    %c0_36 = arith.constant 0 : index
    %c0_37 = arith.constant 0 : index
    %c0_38 = arith.constant 0 : index
    %c0_39 = arith.constant 0 : index
    %43 = vector.load %arg3[%c0_34, %c0_35, %c0_36, %c0_37, %c0_38, %c0_39] : memref<1x1x4x8x8x128xf32, #tpu.memory_space<vmem>>, vector<1x1x4x8x8x128xf32>
    %44 = vector.shape_cast %43 : vector<1x1x4x8x8x128xf32> to vector<4x8x8x128xf32>
    %45 = vector.extract_strided_slice %44 {offsets = [0, 0, 0, 0], sizes = [1, 8, 8, 128], strides = [1, 1, 1, 1]} : vector<4x8x8x128xf32> to vector<1x8x8x128xf32>
    %46 = vector.shape_cast %45 : vector<1x8x8x128xf32> to vector<8x8x128xf32>
    %47 = vector.extract_strided_slice %44 {offsets = [1, 0, 0, 0], sizes = [1, 8, 8, 128], strides = [1, 1, 1, 1]} : vector<4x8x8x128xf32> to vector<1x8x8x128xf32>
    %48 = vector.shape_cast %47 : vector<1x8x8x128xf32> to vector<8x8x128xf32>
    %49 = vector.extract_strided_slice %44 {offsets = [2, 0, 0, 0], sizes = [1, 8, 8, 128], strides = [1, 1, 1, 1]} : vector<4x8x8x128xf32> to vector<1x8x8x128xf32>
    %50 = vector.shape_cast %49 : vector<1x8x8x128xf32> to vector<8x8x128xf32>
    %51 = vector.extract_strided_slice %44 {offsets = [3, 0, 0, 0], sizes = [1, 8, 8, 128], strides = [1, 1, 1, 1]} : vector<4x8x8x128xf32> to vector<1x8x8x128xf32>
    %52 = vector.shape_cast %51 : vector<1x8x8x128xf32> to vector<8x8x128xf32>
    %53 = arith.addf %46, %48 : vector<8x8x128xf32>
    %54 = arith.addf %50, %52 : vector<8x8x128xf32>
    %55 = arith.subf %46, %48 : vector<8x8x128xf32>
    %56 = arith.subf %50, %52 : vector<8x8x128xf32>
    %57 = arith.addf %53, %54 : vector<8x8x128xf32>
    %c0_40 = arith.constant 0 : index
    %c2_41 = arith.constant 2 : index
    %c8_42 = arith.constant 8 : index
    %c0_43 = arith.constant 0 : index
    %58 = vector.load %arg10[%c0_40, %c2_41, %c8_42, %c0_43] : memref<4x12x18x128xf32, #tpu.memory_space<vmem>>, vector<1x8x8x128xf32>
    %59 = vector.shape_cast %58 : vector<1x8x8x128xf32> to vector<8x8x128xf32>
    %60 = vector.shape_cast %57 : vector<8x8x128xf32> to vector<1x8x8x128xf32>
    tpu.vector_store %arg10[%c0_40, %c2_41, %c8_42, %c0_43], %60 {strides = array<i32>} : memref<4x12x18x128xf32, #tpu.memory_space<vmem>>, vector<1x8x8x128xf32>,
    %61 = arith.subf %53, %54 : vector<8x8x128xf32>
    %c1_44 = arith.constant 1 : index
    %c2_45 = arith.constant 2 : index
    %c8_46 = arith.constant 8 : index
    %c0_47 = arith.constant 0 : index
    %62 = vector.load %arg10[%c1_44, %c2_45, %c8_46, %c0_47] : memref<4x12x18x128xf32, #tpu.memory_space<vmem>>, vector<1x8x8x128xf32>
    %63 = vector.shape_cast %62 : vector<1x8x8x128xf32> to vector<8x8x128xf32>
    %64 = vector.shape_cast %61 : vector<8x8x128xf32> to vector<1x8x8x128xf32>
    tpu.vector_store %arg10[%c1_44, %c2_45, %c8_46, %c0_47], %64 {strides = array<i32>} : memref<4x12x18x128xf32, #tpu.memory_space<vmem>>, vector<1x8x8x128xf32>,
    %65 = arith.addf %55, %56 : vector<8x8x128xf32>
    %c2_48 = arith.constant 2 : index
    %c2_49 = arith.constant 2 : index
    %c8_50 = arith.constant 8 : index
    %c0_51 = arith.constant 0 : index
    %66 = vector.load %arg10[%c2_48, %c2_49, %c8_50, %c0_51] : memref<4x12x18x128xf32, #tpu.memory_space<vmem>>, vector<1x8x8x128xf32>
    %67 = vector.shape_cast %66 : vector<1x8x8x128xf32> to vector<8x8x128xf32>
    %68 = vector.shape_cast %65 : vector<8x8x128xf32> to vector<1x8x8x128xf32>
    tpu.vector_store %arg10[%c2_48, %c2_49, %c8_50, %c0_51], %68 {strides = array<i32>} : memref<4x12x18x128xf32, #tpu.memory_space<vmem>>, vector<1x8x8x128xf32>,
    %69 = arith.subf %55, %56 : vector<8x8x128xf32>
    %c3_52 = arith.constant 3 : index
    %c2_53 = arith.constant 2 : index
    %c8_54 = arith.constant 8 : index
    %c0_55 = arith.constant 0 : index
    %70 = vector.load %arg10[%c3_52, %c2_53, %c8_54, %c0_55] : memref<4x12x18x128xf32, #tpu.memory_space<vmem>>, vector<1x8x8x128xf32>
    %71 = vector.shape_cast %70 : vector<1x8x8x128xf32> to vector<8x8x128xf32>
    %72 = vector.shape_cast %69 : vector<8x8x128xf32> to vector<1x8x8x128xf32>
    tpu.vector_store %arg10[%c3_52, %c2_53, %c8_54, %c0_55], %72 {strides = array<i32>} : memref<4x12x18x128xf32, #tpu.memory_space<vmem>>, vector<1x8x8x128xf32>,
    %73 = vector.extract_strided_slice %14 {offsets = [0, 0, 0, 0], sizes = [1, 2, 8, 128], strides = [1, 1, 1, 1]} : vector<4x2x8x128xf32> to vector<1x2x8x128xf32>
    %74 = vector.shape_cast %73 : vector<1x2x8x128xf32> to vector<2x8x128xf32>
    %75 = vector.extract_strided_slice %14 {offsets = [1, 0, 0, 0], sizes = [1, 2, 8, 128], strides = [1, 1, 1, 1]} : vector<4x2x8x128xf32> to vector<1x2x8x128xf32>
    %76 = vector.shape_cast %75 : vector<1x2x8x128xf32> to vector<2x8x128xf32>
    %77 = vector.extract_strided_slice %14 {offsets = [2, 0, 0, 0], sizes = [1, 2, 8, 128], strides = [1, 1, 1, 1]} : vector<4x2x8x128xf32> to vector<1x2x8x128xf32>
    %78 = vector.shape_cast %77 : vector<1x2x8x128xf32> to vector<2x8x128xf32>
    %79 = vector.extract_strided_slice %14 {offsets = [3, 0, 0, 0], sizes = [1, 2, 8, 128], strides = [1, 1, 1, 1]} : vector<4x2x8x128xf32> to vector<1x2x8x128xf32>
    %80 = vector.shape_cast %79 : vector<1x2x8x128xf32> to vector<2x8x128xf32>
    %81 = arith.addf %74, %76 : vector<2x8x128xf32>
    %82 = arith.addf %78, %80 : vector<2x8x128xf32>
    %83 = arith.subf %74, %76 : vector<2x8x128xf32>
    %84 = arith.subf %78, %80 : vector<2x8x128xf32>
    %85 = arith.addf %81, %82 : vector<2x8x128xf32>
    %c0_56 = arith.constant 0 : index
    %c10 = arith.constant 10 : index
    %c8_57 = arith.constant 8 : index
    %c0_58 = arith.constant 0 : index
    %86 = vector.load %arg10[%c0_56, %c10, %c8_57, %c0_58] : memref<4x12x18x128xf32, #tpu.memory_space<vmem>>, vector<1x2x8x128xf32>
    %87 = vector.shape_cast %86 : vector<1x2x8x128xf32> to vector<2x8x128xf32>
    %88 = vector.shape_cast %85 : vector<2x8x128xf32> to vector<1x2x8x128xf32>
    tpu.vector_store %arg10[%c0_56, %c10, %c8_57, %c0_58], %88 {strides = array<i32>} : memref<4x12x18x128xf32, #tpu.memory_space<vmem>>, vector<1x2x8x128xf32>,
    %89 = arith.subf %81, %82 : vector<2x8x128xf32>
    %c1_59 = arith.constant 1 : index
    %c10_60 = arith.constant 10 : index
    %c8_61 = arith.constant 8 : index
    %c0_62 = arith.constant 0 : index
    %90 = vector.load %arg10[%c1_59, %c10_60, %c8_61, %c0_62] : memref<4x12x18x128xf32, #tpu.memory_space<vmem>>, vector<1x2x8x128xf32>
    %91 = vector.shape_cast %90 : vector<1x2x8x128xf32> to vector<2x8x128xf32>
    %92 = vector.shape_cast %89 : vector<2x8x128xf32> to vector<1x2x8x128xf32>
    tpu.vector_store %arg10[%c1_59, %c10_60, %c8_61, %c0_62], %92 {strides = array<i32>} : memref<4x12x18x128xf32, #tpu.memory_space<vmem>>, vector<1x2x8x128xf32>,
    %93 = arith.addf %83, %84 : vector<2x8x128xf32>
    %c2_63 = arith.constant 2 : index
    %c10_64 = arith.constant 10 : index
    %c8_65 = arith.constant 8 : index
    %c0_66 = arith.constant 0 : index
    %94 = vector.load %arg10[%c2_63, %c10_64, %c8_65, %c0_66] : memref<4x12x18x128xf32, #tpu.memory_space<vmem>>, vector<1x2x8x128xf32>
    %95 = vector.shape_cast %94 : vector<1x2x8x128xf32> to vector<2x8x128xf32>
    %96 = vector.shape_cast %93 : vector<2x8x128xf32> to vector<1x2x8x128xf32>
    tpu.vector_store %arg10[%c2_63, %c10_64, %c8_65, %c0_66], %96 {strides = array<i32>} : memref<4x12x18x128xf32, #tpu.memory_space<vmem>>, vector<1x2x8x128xf32>,
    %97 = arith.subf %83, %84 : vector<2x8x128xf32>
    %c3_67 = arith.constant 3 : index
    %c10_68 = arith.constant 10 : index
    %c8_69 = arith.constant 8 : index
    %c0_70 = arith.constant 0 : index
    %98 = vector.load %arg10[%c3_67, %c10_68, %c8_69, %c0_70] : memref<4x12x18x128xf32, #tpu.memory_space<vmem>>, vector<1x2x8x128xf32>
    %99 = vector.shape_cast %98 : vector<1x2x8x128xf32> to vector<2x8x128xf32>
    %100 = vector.shape_cast %97 : vector<2x8x128xf32> to vector<1x2x8x128xf32>
    tpu.vector_store %arg10[%c3_67, %c10_68, %c8_69, %c0_70], %100 {strides = array<i32>} : memref<4x12x18x128xf32, #tpu.memory_space<vmem>>, vector<1x2x8x128xf32>,
    %c0_71 = arith.constant 0 : index
    %c0_72 = arith.constant 0 : index
    %c0_73 = arith.constant 0 : index
    %c0_74 = arith.constant 0 : index
    %c0_75 = arith.constant 0 : index
    %101 = vector.load %arg6[%c0_71, %c0_72, %c0_73, %c0_74, %c0_75] : memref<1x5x5x4x128xf32, #tpu.memory_space<vmem>>, vector<1x5x5x4x128xf32>
    %102 = vector.shape_cast %101 : vector<1x5x5x4x128xf32> to vector<5x5x4x128xf32>
    %103 = vector.extract_strided_slice %102 {offsets = [0, 0, 0, 0], sizes = [1, 1, 4, 128], strides = [1, 1, 1, 1]} : vector<5x5x4x128xf32> to vector<1x1x4x128xf32>
    %104 = vector.shape_cast %103 : vector<1x1x4x128xf32> to vector<4x128xf32>
    %105 = vector.shape_cast %104 : vector<4x128xf32> to vector<4x1x1x128xf32>
    %106 = vector.extract_strided_slice %102 {offsets = [0, 1, 0, 0], sizes = [1, 1, 4, 128], strides = [1, 1, 1, 1]} : vector<5x5x4x128xf32> to vector<1x1x4x128xf32>
    %107 = vector.shape_cast %106 : vector<1x1x4x128xf32> to vector<4x128xf32>
    %108 = vector.shape_cast %107 : vector<4x128xf32> to vector<4x1x1x128xf32>
    %109 = vector.extract_strided_slice %102 {offsets = [0, 2, 0, 0], sizes = [1, 1, 4, 128], strides = [1, 1, 1, 1]} : vector<5x5x4x128xf32> to vector<1x1x4x128xf32>
    %110 = vector.shape_cast %109 : vector<1x1x4x128xf32> to vector<4x128xf32>
    %111 = vector.shape_cast %110 : vector<4x128xf32> to vector<4x1x1x128xf32>
    %112 = vector.extract_strided_slice %102 {offsets = [0, 3, 0, 0], sizes = [1, 1, 4, 128], strides = [1, 1, 1, 1]} : vector<5x5x4x128xf32> to vector<1x1x4x128xf32>
    %113 = vector.shape_cast %112 : vector<1x1x4x128xf32> to vector<4x128xf32>
    %114 = vector.shape_cast %113 : vector<4x128xf32> to vector<4x1x1x128xf32>
    %115 = vector.extract_strided_slice %102 {offsets = [0, 4, 0, 0], sizes = [1, 1, 4, 128], strides = [1, 1, 1, 1]} : vector<5x5x4x128xf32> to vector<1x1x4x128xf32>
    %116 = vector.shape_cast %115 : vector<1x1x4x128xf32> to vector<4x128xf32>
    %117 = vector.shape_cast %116 : vector<4x128xf32> to vector<4x1x1x128xf32>
    %118 = vector.extract_strided_slice %102 {offsets = [1, 0, 0, 0], sizes = [1, 1, 4, 128], strides = [1, 1, 1, 1]} : vector<5x5x4x128xf32> to vector<1x1x4x128xf32>
    %119 = vector.shape_cast %118 : vector<1x1x4x128xf32> to vector<4x128xf32>
    %120 = vector.shape_cast %119 : vector<4x128xf32> to vector<4x1x1x128xf32>
    %121 = vector.extract_strided_slice %102 {offsets = [1, 1, 0, 0], sizes = [1, 1, 4, 128], strides = [1, 1, 1, 1]} : vector<5x5x4x128xf32> to vector<1x1x4x128xf32>
    %122 = vector.shape_cast %121 : vector<1x1x4x128xf32> to vector<4x128xf32>
    %123 = vector.shape_cast %122 : vector<4x128xf32> to vector<4x1x1x128xf32>
    %124 = vector.extract_strided_slice %102 {offsets = [1, 2, 0, 0], sizes = [1, 1, 4, 128], strides = [1, 1, 1, 1]} : vector<5x5x4x128xf32> to vector<1x1x4x128xf32>
    %125 = vector.shape_cast %124 : vector<1x1x4x128xf32> to vector<4x128xf32>
    %126 = vector.shape_cast %125 : vector<4x128xf32> to vector<4x1x1x128xf32>
    %127 = vector.extract_strided_slice %102 {offsets = [1, 3, 0, 0], sizes = [1, 1, 4, 128], strides = [1, 1, 1, 1]} : vector<5x5x4x128xf32> to vector<1x1x4x128xf32>
    %128 = vector.shape_cast %127 : vector<1x1x4x128xf32> to vector<4x128xf32>
    %129 = vector.shape_cast %128 : vector<4x128xf32> to vector<4x1x1x128xf32>
    %130 = vector.extract_strided_slice %102 {offsets = [1, 4, 0, 0], sizes = [1, 1, 4, 128], strides = [1, 1, 1, 1]} : vector<5x5x4x128xf32> to vector<1x1x4x128xf32>
    %131 = vector.shape_cast %130 : vector<1x1x4x128xf32> to vector<4x128xf32>
    %132 = vector.shape_cast %131 : vector<4x128xf32> to vector<4x1x1x128xf32>
    %133 = vector.extract_strided_slice %102 {offsets = [2, 0, 0, 0], sizes = [1, 1, 4, 128], strides = [1, 1, 1, 1]} : vector<5x5x4x128xf32> to vector<1x1x4x128xf32>
    %134 = vector.shape_cast %133 : vector<1x1x4x128xf32> to vector<4x128xf32>
    %135 = vector.shape_cast %134 : vector<4x128xf32> to vector<4x1x1x128xf32>
    %136 = vector.extract_strided_slice %102 {offsets = [2, 1, 0, 0], sizes = [1, 1, 4, 128], strides = [1, 1, 1, 1]} : vector<5x5x4x128xf32> to vector<1x1x4x128xf32>
    %137 = vector.shape_cast %136 : vector<1x1x4x128xf32> to vector<4x128xf32>
    %138 = vector.shape_cast %137 : vector<4x128xf32> to vector<4x1x1x128xf32>
    %139 = vector.extract_strided_slice %102 {offsets = [2, 2, 0, 0], sizes = [1, 1, 4, 128], strides = [1, 1, 1, 1]} : vector<5x5x4x128xf32> to vector<1x1x4x128xf32>
    %140 = vector.shape_cast %139 : vector<1x1x4x128xf32> to vector<4x128xf32>
    %141 = vector.shape_cast %140 : vector<4x128xf32> to vector<4x1x1x128xf32>
    %142 = vector.extract_strided_slice %102 {offsets = [2, 3, 0, 0], sizes = [1, 1, 4, 128], strides = [1, 1, 1, 1]} : vector<5x5x4x128xf32> to vector<1x1x4x128xf32>
    %143 = vector.shape_cast %142 : vector<1x1x4x128xf32> to vector<4x128xf32>
    %144 = vector.shape_cast %143 : vector<4x128xf32> to vector<4x1x1x128xf32>
    %145 = vector.extract_strided_slice %102 {offsets = [2, 4, 0, 0], sizes = [1, 1, 4, 128], strides = [1, 1, 1, 1]} : vector<5x5x4x128xf32> to vector<1x1x4x128xf32>
    %146 = vector.shape_cast %145 : vector<1x1x4x128xf32> to vector<4x128xf32>
    %147 = vector.shape_cast %146 : vector<4x128xf32> to vector<4x1x1x128xf32>
    %148 = vector.extract_strided_slice %102 {offsets = [3, 0, 0, 0], sizes = [1, 1, 4, 128], strides = [1, 1, 1, 1]} : vector<5x5x4x128xf32> to vector<1x1x4x128xf32>
    %149 = vector.shape_cast %148 : vector<1x1x4x128xf32> to vector<4x128xf32>
    %150 = vector.shape_cast %149 : vector<4x128xf32> to vector<4x1x1x128xf32>
    %151 = vector.extract_strided_slice %102 {offsets = [3, 1, 0, 0], sizes = [1, 1, 4, 128], strides = [1, 1, 1, 1]} : vector<5x5x4x128xf32> to vector<1x1x4x128xf32>
    %152 = vector.shape_cast %151 : vector<1x1x4x128xf32> to vector<4x128xf32>
    %153 = vector.shape_cast %152 : vector<4x128xf32> to vector<4x1x1x128xf32>
    %154 = vector.extract_strided_slice %102 {offsets = [3, 2, 0, 0], sizes = [1, 1, 4, 128], strides = [1, 1, 1, 1]} : vector<5x5x4x128xf32> to vector<1x1x4x128xf32>
    %155 = vector.shape_cast %154 : vector<1x1x4x128xf32> to vector<4x128xf32>
    %156 = vector.shape_cast %155 : vector<4x128xf32> to vector<4x1x1x128xf32>
    %157 = vector.extract_strided_slice %102 {offsets = [3, 3, 0, 0], sizes = [1, 1, 4, 128], strides = [1, 1, 1, 1]} : vector<5x5x4x128xf32> to vector<1x1x4x128xf32>
    %158 = vector.shape_cast %157 : vector<1x1x4x128xf32> to vector<4x128xf32>
    %159 = vector.shape_cast %158 : vector<4x128xf32> to vector<4x1x1x128xf32>
    %160 = vector.extract_strided_slice %102 {offsets = [3, 4, 0, 0], sizes = [1, 1, 4, 128], strides = [1, 1, 1, 1]} : vector<5x5x4x128xf32> to vector<1x1x4x128xf32>
    %161 = vector.shape_cast %160 : vector<1x1x4x128xf32> to vector<4x128xf32>
    %162 = vector.shape_cast %161 : vector<4x128xf32> to vector<4x1x1x128xf32>
    %163 = vector.extract_strided_slice %102 {offsets = [4, 0, 0, 0], sizes = [1, 1, 4, 128], strides = [1, 1, 1, 1]} : vector<5x5x4x128xf32> to vector<1x1x4x128xf32>
    %164 = vector.shape_cast %163 : vector<1x1x4x128xf32> to vector<4x128xf32>
    %165 = vector.shape_cast %164 : vector<4x128xf32> to vector<4x1x1x128xf32>
    %166 = vector.extract_strided_slice %102 {offsets = [4, 1, 0, 0], sizes = [1, 1, 4, 128], strides = [1, 1, 1, 1]} : vector<5x5x4x128xf32> to vector<1x1x4x128xf32>
    %167 = vector.shape_cast %166 : vector<1x1x4x128xf32> to vector<4x128xf32>
    %168 = vector.shape_cast %167 : vector<4x128xf32> to vector<4x1x1x128xf32>
    %169 = vector.extract_strided_slice %102 {offsets = [4, 2, 0, 0], sizes = [1, 1, 4, 128], strides = [1, 1, 1, 1]} : vector<5x5x4x128xf32> to vector<1x1x4x128xf32>
    %170 = vector.shape_cast %169 : vector<1x1x4x128xf32> to vector<4x128xf32>
    %171 = vector.shape_cast %170 : vector<4x128xf32> to vector<4x1x1x128xf32>
    %172 = vector.extract_strided_slice %102 {offsets = [4, 3, 0, 0], sizes = [1, 1, 4, 128], strides = [1, 1, 1, 1]} : vector<5x5x4x128xf32> to vector<1x1x4x128xf32>
    %173 = vector.shape_cast %172 : vector<1x1x4x128xf32> to vector<4x128xf32>
    %174 = vector.shape_cast %173 : vector<4x128xf32> to vector<4x1x1x128xf32>
    %175 = vector.extract_strided_slice %102 {offsets = [4, 4, 0, 0], sizes = [1, 1, 4, 128], strides = [1, 1, 1, 1]} : vector<5x5x4x128xf32> to vector<1x1x4x128xf32>
    %176 = vector.shape_cast %175 : vector<1x1x4x128xf32> to vector<4x128xf32>
    %177 = vector.shape_cast %176 : vector<4x128xf32> to vector<4x1x1x128xf32>
    %cst_76 = arith.constant 0.000000e+00 : f32
    %178 = vector.broadcast %cst_76 : f32 to vector<4x8x8x128xf32>
    %c0_77 = arith.constant 0 : index
    %c0_78 = arith.constant 0 : index
    %c6_79 = arith.constant 6 : index
    %c0_80 = arith.constant 0 : index
    %179 = vector.load %arg10[%c0_77, %c0_78, %c6_79, %c0_80] : memref<4x12x18x128xf32, #tpu.memory_space<vmem>>, vector<4x8x8x128xf32>
    %180 = vector.broadcast %105 : vector<4x1x1x128xf32> to vector<4x8x8x128xf32>
    %181 = arith.mulf %179, %180 : vector<4x8x8x128xf32>
    %182 = arith.addf %178, %181 : vector<4x8x8x128xf32>
    %c0_81 = arith.constant 0 : index
    %c0_82 = arith.constant 0 : index
    %c7 = arith.constant 7 : index
    %c0_83 = arith.constant 0 : index
    %183 = vector.load %arg10[%c0_81, %c0_82, %c7, %c0_83] : memref<4x12x18x128xf32, #tpu.memory_space<vmem>>, vector<4x8x8x128xf32>
    %184 = vector.broadcast %108 : vector<4x1x1x128xf32> to vector<4x8x8x128xf32>
    %185 = arith.mulf %183, %184 : vector<4x8x8x128xf32>
    %186 = arith.addf %182, %185 : vector<4x8x8x128xf32>
    %c0_84 = arith.constant 0 : index
    %c0_85 = arith.constant 0 : index
    %c8_86 = arith.constant 8 : index
    %c0_87 = arith.constant 0 : index
    %187 = vector.load %arg10[%c0_84, %c0_85, %c8_86, %c0_87] : memref<4x12x18x128xf32, #tpu.memory_space<vmem>>, vector<4x8x8x128xf32>
    %188 = vector.broadcast %111 : vector<4x1x1x128xf32> to vector<4x8x8x128xf32>
    %189 = arith.mulf %187, %188 : vector<4x8x8x128xf32>
    %190 = arith.addf %186, %189 : vector<4x8x8x128xf32>
    %c0_88 = arith.constant 0 : index
    %c0_89 = arith.constant 0 : index
    %c9 = arith.constant 9 : index
    %c0_90 = arith.constant 0 : index
    %191 = vector.load %arg10[%c0_88, %c0_89, %c9, %c0_90] : memref<4x12x18x128xf32, #tpu.memory_space<vmem>>, vector<4x8x8x128xf32>
    %192 = vector.broadcast %114 : vector<4x1x1x128xf32> to vector<4x8x8x128xf32>
    %193 = arith.mulf %191, %192 : vector<4x8x8x128xf32>
    %194 = arith.addf %190, %193 : vector<4x8x8x128xf32>
    %c0_91 = arith.constant 0 : index
    %c0_92 = arith.constant 0 : index
    %c10_93 = arith.constant 10 : index
    %c0_94 = arith.constant 0 : index
    %195 = vector.load %arg10[%c0_91, %c0_92, %c10_93, %c0_94] : memref<4x12x18x128xf32, #tpu.memory_space<vmem>>, vector<4x8x8x128xf32>
    %196 = vector.broadcast %117 : vector<4x1x1x128xf32> to vector<4x8x8x128xf32>
    %197 = arith.mulf %195, %196 : vector<4x8x8x128xf32>
    %198 = arith.addf %194, %197 : vector<4x8x8x128xf32>
    %c0_95 = arith.constant 0 : index
    %c1_96 = arith.constant 1 : index
    %c6_97 = arith.constant 6 : index
    %c0_98 = arith.constant 0 : index
    %199 = vector.load %arg10[%c0_95, %c1_96, %c6_97, %c0_98] : memref<4x12x18x128xf32, #tpu.memory_space<vmem>>, vector<4x8x8x128xf32>
    %200 = vector.broadcast %120 : vector<4x1x1x128xf32> to vector<4x8x8x128xf32>
    %201 = arith.mulf %199, %200 : vector<4x8x8x128xf32>
    %202 = arith.addf %198, %201 : vector<4x8x8x128xf32>
    %c0_99 = arith.constant 0 : index
    %c1_100 = arith.constant 1 : index
    %c7_101 = arith.constant 7 : index
    %c0_102 = arith.constant 0 : index
    %203 = vector.load %arg10[%c0_99, %c1_100, %c7_101, %c0_102] : memref<4x12x18x128xf32, #tpu.memory_space<vmem>>, vector<4x8x8x128xf32>
    %204 = vector.broadcast %123 : vector<4x1x1x128xf32> to vector<4x8x8x128xf32>
    %205 = arith.mulf %203, %204 : vector<4x8x8x128xf32>
    %206 = arith.addf %202, %205 : vector<4x8x8x128xf32>
    %c0_103 = arith.constant 0 : index
    %c1_104 = arith.constant 1 : index
    %c8_105 = arith.constant 8 : index
    %c0_106 = arith.constant 0 : index
    %207 = vector.load %arg10[%c0_103, %c1_104, %c8_105, %c0_106] : memref<4x12x18x128xf32, #tpu.memory_space<vmem>>, vector<4x8x8x128xf32>
    %208 = vector.broadcast %126 : vector<4x1x1x128xf32> to vector<4x8x8x128xf32>
    %209 = arith.mulf %207, %208 : vector<4x8x8x128xf32>
    %210 = arith.addf %206, %209 : vector<4x8x8x128xf32>
    %c0_107 = arith.constant 0 : index
    %c1_108 = arith.constant 1 : index
    %c9_109 = arith.constant 9 : index
    %c0_110 = arith.constant 0 : index
    %211 = vector.load %arg10[%c0_107, %c1_108, %c9_109, %c0_110] : memref<4x12x18x128xf32, #tpu.memory_space<vmem>>, vector<4x8x8x128xf32>
    %212 = vector.broadcast %129 : vector<4x1x1x128xf32> to vector<4x8x8x128xf32>
    %213 = arith.mulf %211, %212 : vector<4x8x8x128xf32>
    %214 = arith.addf %210, %213 : vector<4x8x8x128xf32>
    %c0_111 = arith.constant 0 : index
    %c1_112 = arith.constant 1 : index
    %c10_113 = arith.constant 10 : index
    %c0_114 = arith.constant 0 : index
    %215 = vector.load %arg10[%c0_111, %c1_112, %c10_113, %c0_114] : memref<4x12x18x128xf32, #tpu.memory_space<vmem>>, vector<4x8x8x128xf32>
    %216 = vector.broadcast %132 : vector<4x1x1x128xf32> to vector<4x8x8x128xf32>
    %217 = arith.mulf %215, %216 : vector<4x8x8x128xf32>
    %218 = arith.addf %214, %217 : vector<4x8x8x128xf32>
    %c0_115 = arith.constant 0 : index
    %c2_116 = arith.constant 2 : index
    %c6_117 = arith.constant 6 : index
    %c0_118 = arith.constant 0 : index
    %219 = vector.load %arg10[%c0_115, %c2_116, %c6_117, %c0_118] : memref<4x12x18x128xf32, #tpu.memory_space<vmem>>, vector<4x8x8x128xf32>
    %220 = vector.broadcast %135 : vector<4x1x1x128xf32> to vector<4x8x8x128xf32>
    %221 = arith.mulf %219, %220 : vector<4x8x8x128xf32>
    %222 = arith.addf %218, %221 : vector<4x8x8x128xf32>
    %c0_119 = arith.constant 0 : index
    %c2_120 = arith.constant 2 : index
    %c7_121 = arith.constant 7 : index
    %c0_122 = arith.constant 0 : index
    %223 = vector.load %arg10[%c0_119, %c2_120, %c7_121, %c0_122] : memref<4x12x18x128xf32, #tpu.memory_space<vmem>>, vector<4x8x8x128xf32>
    %224 = vector.broadcast %138 : vector<4x1x1x128xf32> to vector<4x8x8x128xf32>
    %225 = arith.mulf %223, %224 : vector<4x8x8x128xf32>
    %226 = arith.addf %222, %225 : vector<4x8x8x128xf32>
    %c0_123 = arith.constant 0 : index
    %c2_124 = arith.constant 2 : index
    %c8_125 = arith.constant 8 : index
    %c0_126 = arith.constant 0 : index
    %227 = vector.load %arg10[%c0_123, %c2_124, %c8_125, %c0_126] : memref<4x12x18x128xf32, #tpu.memory_space<vmem>>, vector<4x8x8x128xf32>
    %228 = vector.broadcast %141 : vector<4x1x1x128xf32> to vector<4x8x8x128xf32>
    %229 = arith.mulf %227, %228 : vector<4x8x8x128xf32>
    %230 = arith.addf %226, %229 : vector<4x8x8x128xf32>
    %c0_127 = arith.constant 0 : index
    %c2_128 = arith.constant 2 : index
    %c9_129 = arith.constant 9 : index
    %c0_130 = arith.constant 0 : index
    %231 = vector.load %arg10[%c0_127, %c2_128, %c9_129, %c0_130] : memref<4x12x18x128xf32, #tpu.memory_space<vmem>>, vector<4x8x8x128xf32>
    %232 = vector.broadcast %144 : vector<4x1x1x128xf32> to vector<4x8x8x128xf32>
    %233 = arith.mulf %231, %232 : vector<4x8x8x128xf32>
    %234 = arith.addf %230, %233 : vector<4x8x8x128xf32>
    %c0_131 = arith.constant 0 : index
    %c2_132 = arith.constant 2 : index
    %c10_133 = arith.constant 10 : index
    %c0_134 = arith.constant 0 : index
    %235 = vector.load %arg10[%c0_131, %c2_132, %c10_133, %c0_134] : memref<4x12x18x128xf32, #tpu.memory_space<vmem>>, vector<4x8x8x128xf32>
    %236 = vector.broadcast %147 : vector<4x1x1x128xf32> to vector<4x8x8x128xf32>
    %237 = arith.mulf %235, %236 : vector<4x8x8x128xf32>
    %238 = arith.addf %234, %237 : vector<4x8x8x128xf32>
    %c0_135 = arith.constant 0 : index
    %c3_136 = arith.constant 3 : index
    %c6_137 = arith.constant 6 : index
    %c0_138 = arith.constant 0 : index
    %239 = vector.load %arg10[%c0_135, %c3_136, %c6_137, %c0_138] : memref<4x12x18x128xf32, #tpu.memory_space<vmem>>, vector<4x8x8x128xf32>
    %240 = vector.broadcast %150 : vector<4x1x1x128xf32> to vector<4x8x8x128xf32>
    %241 = arith.mulf %239, %240 : vector<4x8x8x128xf32>
    %242 = arith.addf %238, %241 : vector<4x8x8x128xf32>
    %c0_139 = arith.constant 0 : index
    %c3_140 = arith.constant 3 : index
    %c7_141 = arith.constant 7 : index
    %c0_142 = arith.constant 0 : index
    %243 = vector.load %arg10[%c0_139, %c3_140, %c7_141, %c0_142] : memref<4x12x18x128xf32, #tpu.memory_space<vmem>>, vector<4x8x8x128xf32>
    %244 = vector.broadcast %153 : vector<4x1x1x128xf32> to vector<4x8x8x128xf32>
    %245 = arith.mulf %243, %244 : vector<4x8x8x128xf32>
    %246 = arith.addf %242, %245 : vector<4x8x8x128xf32>
    %c0_143 = arith.constant 0 : index
    %c3_144 = arith.constant 3 : index
    %c8_145 = arith.constant 8 : index
    %c0_146 = arith.constant 0 : index
    %247 = vector.load %arg10[%c0_143, %c3_144, %c8_145, %c0_146] : memref<4x12x18x128xf32, #tpu.memory_space<vmem>>, vector<4x8x8x128xf32>
    %248 = vector.broadcast %156 : vector<4x1x1x128xf32> to vector<4x8x8x128xf32>
    %249 = arith.mulf %247, %248 : vector<4x8x8x128xf32>
    %250 = arith.addf %246, %249 : vector<4x8x8x128xf32>
    %c0_147 = arith.constant 0 : index
    %c3_148 = arith.constant 3 : index
    %c9_149 = arith.constant 9 : index
    %c0_150 = arith.constant 0 : index
    %251 = vector.load %arg10[%c0_147, %c3_148, %c9_149, %c0_150] : memref<4x12x18x128xf32, #tpu.memory_space<vmem>>, vector<4x8x8x128xf32>
    %252 = vector.broadcast %159 : vector<4x1x1x128xf32> to vector<4x8x8x128xf32>
    %253 = arith.mulf %251, %252 : vector<4x8x8x128xf32>
    %254 = arith.addf %250, %253 : vector<4x8x8x128xf32>
    %c0_151 = arith.constant 0 : index
    %c3_152 = arith.constant 3 : index
    %c10_153 = arith.constant 10 : index
    %c0_154 = arith.constant 0 : index
    %255 = vector.load %arg10[%c0_151, %c3_152, %c10_153, %c0_154] : memref<4x12x18x128xf32, #tpu.memory_space<vmem>>, vector<4x8x8x128xf32>
    %256 = vector.broadcast %162 : vector<4x1x1x128xf32> to vector<4x8x8x128xf32>
    %257 = arith.mulf %255, %256 : vector<4x8x8x128xf32>
    %258 = arith.addf %254, %257 : vector<4x8x8x128xf32>
    %c0_155 = arith.constant 0 : index
    %c4 = arith.constant 4 : index
    %c6_156 = arith.constant 6 : index
    %c0_157 = arith.constant 0 : index
    %259 = vector.load %arg10[%c0_155, %c4, %c6_156, %c0_157] : memref<4x12x18x128xf32, #tpu.memory_space<vmem>>, vector<4x8x8x128xf32>
    %260 = vector.broadcast %165 : vector<4x1x1x128xf32> to vector<4x8x8x128xf32>
    %261 = arith.mulf %259, %260 : vector<4x8x8x128xf32>
    %262 = arith.addf %258, %261 : vector<4x8x8x128xf32>
    %c0_158 = arith.constant 0 : index
    %c4_159 = arith.constant 4 : index
    %c7_160 = arith.constant 7 : index
    %c0_161 = arith.constant 0 : index
    %263 = vector.load %arg10[%c0_158, %c4_159, %c7_160, %c0_161] : memref<4x12x18x128xf32, #tpu.memory_space<vmem>>, vector<4x8x8x128xf32>
    %264 = vector.broadcast %168 : vector<4x1x1x128xf32> to vector<4x8x8x128xf32>
    %265 = arith.mulf %263, %264 : vector<4x8x8x128xf32>
    %266 = arith.addf %262, %265 : vector<4x8x8x128xf32>
    %c0_162 = arith.constant 0 : index
    %c4_163 = arith.constant 4 : index
    %c8_164 = arith.constant 8 : index
    %c0_165 = arith.constant 0 : index
    %267 = vector.load %arg10[%c0_162, %c4_163, %c8_164, %c0_165] : memref<4x12x18x128xf32, #tpu.memory_space<vmem>>, vector<4x8x8x128xf32>
    %268 = vector.broadcast %171 : vector<4x1x1x128xf32> to vector<4x8x8x128xf32>
    %269 = arith.mulf %267, %268 : vector<4x8x8x128xf32>
    %270 = arith.addf %266, %269 : vector<4x8x8x128xf32>
    %c0_166 = arith.constant 0 : index
    %c4_167 = arith.constant 4 : index
    %c9_168 = arith.constant 9 : index
    %c0_169 = arith.constant 0 : index
    %271 = vector.load %arg10[%c0_166, %c4_167, %c9_168, %c0_169] : memref<4x12x18x128xf32, #tpu.memory_space<vmem>>, vector<4x8x8x128xf32>
    %272 = vector.broadcast %174 : vector<4x1x1x128xf32> to vector<4x8x8x128xf32>
    %273 = arith.mulf %271, %272 : vector<4x8x8x128xf32>
    %274 = arith.addf %270, %273 : vector<4x8x8x128xf32>
    %c0_170 = arith.constant 0 : index
    %c4_171 = arith.constant 4 : index
    %c10_172 = arith.constant 10 : index
    %c0_173 = arith.constant 0 : index
    %275 = vector.load %arg10[%c0_170, %c4_171, %c10_172, %c0_173] : memref<4x12x18x128xf32, #tpu.memory_space<vmem>>, vector<4x8x8x128xf32>
    %276 = vector.broadcast %177 : vector<4x1x1x128xf32> to vector<4x8x8x128xf32>
    %277 = arith.mulf %275, %276 : vector<4x8x8x128xf32>
    %278 = arith.addf %274, %277 : vector<4x8x8x128xf32>
    %279 = vector.extract_strided_slice %278 {offsets = [0, 0, 0, 0], sizes = [1, 8, 8, 128], strides = [1, 1, 1, 1]} : vector<4x8x8x128xf32> to vector<1x8x8x128xf32>
    %280 = vector.shape_cast %279 : vector<1x8x8x128xf32> to vector<8x8x128xf32>
    %281 = vector.extract_strided_slice %278 {offsets = [1, 0, 0, 0], sizes = [1, 8, 8, 128], strides = [1, 1, 1, 1]} : vector<4x8x8x128xf32> to vector<1x8x8x128xf32>
    %282 = vector.shape_cast %281 : vector<1x8x8x128xf32> to vector<8x8x128xf32>
    %283 = arith.addf %280, %282 : vector<8x8x128xf32>
    %284 = vector.extract_strided_slice %278 {offsets = [2, 0, 0, 0], sizes = [1, 8, 8, 128], strides = [1, 1, 1, 1]} : vector<4x8x8x128xf32> to vector<1x8x8x128xf32>
    %285 = vector.shape_cast %284 : vector<1x8x8x128xf32> to vector<8x8x128xf32>
    %286 = vector.extract_strided_slice %278 {offsets = [3, 0, 0, 0], sizes = [1, 8, 8, 128], strides = [1, 1, 1, 1]} : vector<4x8x8x128xf32> to vector<1x8x8x128xf32>
    %287 = vector.shape_cast %286 : vector<1x8x8x128xf32> to vector<8x8x128xf32>
    %288 = arith.addf %285, %287 : vector<8x8x128xf32>
    %289 = vector.extract_strided_slice %278 {offsets = [0, 0, 0, 0], sizes = [1, 8, 8, 128], strides = [1, 1, 1, 1]} : vector<4x8x8x128xf32> to vector<1x8x8x128xf32>
    %290 = vector.shape_cast %289 : vector<1x8x8x128xf32> to vector<8x8x128xf32>
    %291 = vector.extract_strided_slice %278 {offsets = [1, 0, 0, 0], sizes = [1, 8, 8, 128], strides = [1, 1, 1, 1]} : vector<4x8x8x128xf32> to vector<1x8x8x128xf32>
    %292 = vector.shape_cast %291 : vector<1x8x8x128xf32> to vector<8x8x128xf32>
    %293 = arith.subf %290, %292 : vector<8x8x128xf32>
    %294 = vector.extract_strided_slice %278 {offsets = [2, 0, 0, 0], sizes = [1, 8, 8, 128], strides = [1, 1, 1, 1]} : vector<4x8x8x128xf32> to vector<1x8x8x128xf32>
    %295 = vector.shape_cast %294 : vector<1x8x8x128xf32> to vector<8x8x128xf32>
    %296 = vector.extract_strided_slice %278 {offsets = [3, 0, 0, 0], sizes = [1, 8, 8, 128], strides = [1, 1, 1, 1]} : vector<4x8x8x128xf32> to vector<1x8x8x128xf32>
    %297 = vector.shape_cast %296 : vector<1x8x8x128xf32> to vector<8x8x128xf32>
    %298 = arith.subf %295, %297 : vector<8x8x128xf32>
    %299 = arith.addf %283, %288 : vector<8x8x128xf32>
    %c0_174 = arith.constant 0 : index
    %c0_175 = arith.constant 0 : index
    %c0_176 = arith.constant 0 : index
    %c0_177 = arith.constant 0 : index
    %c0_178 = arith.constant 0 : index
    %c0_179 = arith.constant 0 : index
    %300 = vector.load %arg9[%c0_174, %c0_175, %c0_176, %c0_177, %c0_178, %c0_179] : memref<1x1x4x8x8x128xf32, #tpu.memory_space<vmem>>, vector<1x1x1x8x8x128xf32>
    %301 = vector.shape_cast %300 : vector<1x1x1x8x8x128xf32> to vector<8x8x128xf32>
    %302 = vector.shape_cast %299 : vector<8x8x128xf32> to vector<1x1x1x8x8x128xf32>
    tpu.vector_store %arg9[%c0_174, %c0_175, %c0_176, %c0_177, %c0_178, %c0_179], %302 {strides = array<i32>} : memref<1x1x4x8x8x128xf32, #tpu.memory_space<vmem>>, vector<1x1x1x8x8x128xf32>,
    %303 = arith.subf %283, %288 : vector<8x8x128xf32>
    %c0_180 = arith.constant 0 : index
    %c0_181 = arith.constant 0 : index
    %c1_182 = arith.constant 1 : index
    %c0_183 = arith.constant 0 : index
    %c0_184 = arith.constant 0 : index
    %c0_185 = arith.constant 0 : index
    %304 = vector.load %arg9[%c0_180, %c0_181, %c1_182, %c0_183, %c0_184, %c0_185] : memref<1x1x4x8x8x128xf32, #tpu.memory_space<vmem>>, vector<1x1x1x8x8x128xf32>
    %305 = vector.shape_cast %304 : vector<1x1x1x8x8x128xf32> to vector<8x8x128xf32>
    %306 = vector.shape_cast %303 : vector<8x8x128xf32> to vector<1x1x1x8x8x128xf32>
    tpu.vector_store %arg9[%c0_180, %c0_181, %c1_182, %c0_183, %c0_184, %c0_185], %306 {strides = array<i32>} : memref<1x1x4x8x8x128xf32, #tpu.memory_space<vmem>>, vector<1x1x1x8x8x128xf32>,
    %307 = arith.addf %293, %298 : vector<8x8x128xf32>
    %c0_186 = arith.constant 0 : index
    %c0_187 = arith.constant 0 : index
    %c2_188 = arith.constant 2 : index
    %c0_189 = arith.constant 0 : index
    %c0_190 = arith.constant 0 : index
    %c0_191 = arith.constant 0 : index
    %308 = vector.load %arg9[%c0_186, %c0_187, %c2_188, %c0_189, %c0_190, %c0_191] : memref<1x1x4x8x8x128xf32, #tpu.memory_space<vmem>>, vector<1x1x1x8x8x128xf32>
    %309 = vector.shape_cast %308 : vector<1x1x1x8x8x128xf32> to vector<8x8x128xf32>
    %310 = vector.shape_cast %307 : vector<8x8x128xf32> to vector<1x1x1x8x8x128xf32>
    tpu.vector_store %arg9[%c0_186, %c0_187, %c2_188, %c0_189, %c0_190, %c0_191], %310 {strides = array<i32>} : memref<1x1x4x8x8x128xf32, #tpu.memory_space<vmem>>, vector<1x1x1x8x8x128xf32>,
    %311 = arith.subf %293, %298 : vector<8x8x128xf32>
    %c0_192 = arith.constant 0 : index
    %c0_193 = arith.constant 0 : index
    %c3_194 = arith.constant 3 : index
    %c0_195 = arith.constant 0 : index
    %c0_196 = arith.constant 0 : index
    %c0_197 = arith.constant 0 : index
    %312 = vector.load %arg9[%c0_192, %c0_193, %c3_194, %c0_195, %c0_196, %c0_197] : memref<1x1x4x8x8x128xf32, #tpu.memory_space<vmem>>, vector<1x1x1x8x8x128xf32>
    %313 = vector.shape_cast %312 : vector<1x1x1x8x8x128xf32> to vector<8x8x128xf32>
    %314 = vector.shape_cast %311 : vector<8x8x128xf32> to vector<1x1x1x8x8x128xf32>
    tpu.vector_store %arg9[%c0_192, %c0_193, %c3_194, %c0_195, %c0_196, %c0_197], %314 {strides = array<i32>} : memref<1x1x4x8x8x128xf32, #tpu.memory_space<vmem>>, vector<1x1x1x8x8x128xf32>,
    %c0_198 = arith.constant 0 : index
    %c0_199 = arith.constant 0 : index
    %c8_200 = arith.constant 8 : index
    %c0_201 = arith.constant 0 : index
    %315 = vector.load %arg10[%c0_198, %c0_199, %c8_200, %c0_201] : memref<4x12x18x128xf32, #tpu.memory_space<vmem>>, vector<4x2x8x128xf32>
    tpu.vector_store %arg10[%c0_198, %c0_199, %c8_200, %c0_201], %10 {strides = array<i32>} : memref<4x12x18x128xf32, #tpu.memory_space<vmem>>, vector<4x2x8x128xf32>,
    %c0_202 = arith.constant 0 : index
    %c0_203 = arith.constant 0 : index
    %c0_204 = arith.constant 0 : index
    %c0_205 = arith.constant 0 : index
    %c0_206 = arith.constant 0 : index
    %c0_207 = arith.constant 0 : index
    %316 = vector.load %arg3[%c0_202, %c0_203, %c0_204, %c0_205, %c0_206, %c0_207] : memref<1x1x4x8x8x128xf32, #tpu.memory_space<vmem>>, vector<1x1x4x8x8x128xf32>
    %317 = vector.shape_cast %316 : vector<1x1x4x8x8x128xf32> to vector<4x8x8x128xf32>
    %c0_208 = arith.constant 0 : index
    %c2_209 = arith.constant 2 : index
    %c8_210 = arith.constant 8 : index
    %c0_211 = arith.constant 0 : index
    %318 = vector.load %arg10[%c0_208, %c2_209, %c8_210, %c0_211] : memref<4x12x18x128xf32, #tpu.memory_space<vmem>>, vector<4x8x8x128xf32>
    tpu.vector_store %arg10[%c0_208, %c2_209, %c8_210, %c0_211], %317 {strides = array<i32>} : memref<4x12x18x128xf32, #tpu.memory_space<vmem>>, vector<4x8x8x128xf32>,
    %c0_212 = arith.constant 0 : index
    %c10_213 = arith.constant 10 : index
    %c8_214 = arith.constant 8 : index
    %c0_215 = arith.constant 0 : index
    %319 = vector.load %arg10[%c0_212, %c10_213, %c8_214, %c0_215] : memref<4x12x18x128xf32, #tpu.memory_space<vmem>>, vector<4x2x8x128xf32>
    tpu.vector_store %arg10[%c0_212, %c10_213, %c8_214, %c0_215], %14 {strides = array<i32>} : memref<4x12x18x128xf32, #tpu.memory_space<vmem>>, vector<4x2x8x128xf32>,
    %c0_216 = arith.constant 0 : index
    %c0_217 = arith.constant 0 : index
    %c0_218 = arith.constant 0 : index
    %c0_219 = arith.constant 0 : index
    %320 = vector.load %arg7[%c0_216, %c0_217, %c0_218, %c0_219] : memref<1x5x5x128xf32, #tpu.memory_space<vmem>>, vector<1x5x5x128xf32>
    %321 = vector.shape_cast %320 : vector<1x5x5x128xf32> to vector<5x5x128xf32>
    %322 = vector.extract_strided_slice %321 {offsets = [0, 0, 0], sizes = [1, 1, 128], strides = [1, 1, 1]} : vector<5x5x128xf32> to vector<1x1x128xf32>
    %323 = vector.shape_cast %322 : vector<1x1x128xf32> to vector<128xf32>
    %324 = vector.extract_strided_slice %321 {offsets = [0, 1, 0], sizes = [1, 1, 128], strides = [1, 1, 1]} : vector<5x5x128xf32> to vector<1x1x128xf32>
    %325 = vector.shape_cast %324 : vector<1x1x128xf32> to vector<128xf32>
    %326 = vector.extract_strided_slice %321 {offsets = [0, 2, 0], sizes = [1, 1, 128], strides = [1, 1, 1]} : vector<5x5x128xf32> to vector<1x1x128xf32>
    %327 = vector.shape_cast %326 : vector<1x1x128xf32> to vector<128xf32>
    %328 = vector.extract_strided_slice %321 {offsets = [0, 3, 0], sizes = [1, 1, 128], strides = [1, 1, 1]} : vector<5x5x128xf32> to vector<1x1x128xf32>
    %329 = vector.shape_cast %328 : vector<1x1x128xf32> to vector<128xf32>
    %330 = vector.extract_strided_slice %321 {offsets = [0, 4, 0], sizes = [1, 1, 128], strides = [1, 1, 1]} : vector<5x5x128xf32> to vector<1x1x128xf32>
    %331 = vector.shape_cast %330 : vector<1x1x128xf32> to vector<128xf32>
    %332 = vector.extract_strided_slice %321 {offsets = [1, 0, 0], sizes = [1, 1, 128], strides = [1, 1, 1]} : vector<5x5x128xf32> to vector<1x1x128xf32>
    %333 = vector.shape_cast %332 : vector<1x1x128xf32> to vector<128xf32>
    %334 = vector.extract_strided_slice %321 {offsets = [1, 1, 0], sizes = [1, 1, 128], strides = [1, 1, 1]} : vector<5x5x128xf32> to vector<1x1x128xf32>
    %335 = vector.shape_cast %334 : vector<1x1x128xf32> to vector<128xf32>
    %336 = vector.extract_strided_slice %321 {offsets = [1, 2, 0], sizes = [1, 1, 128], strides = [1, 1, 1]} : vector<5x5x128xf32> to vector<1x1x128xf32>
    %337 = vector.shape_cast %336 : vector<1x1x128xf32> to vector<128xf32>
    %338 = vector.extract_strided_slice %321 {offsets = [1, 3, 0], sizes = [1, 1, 128], strides = [1, 1, 1]} : vector<5x5x128xf32> to vector<1x1x128xf32>
    %339 = vector.shape_cast %338 : vector<1x1x128xf32> to vector<128xf32>
    %340 = vector.extract_strided_slice %321 {offsets = [1, 4, 0], sizes = [1, 1, 128], strides = [1, 1, 1]} : vector<5x5x128xf32> to vector<1x1x128xf32>
    %341 = vector.shape_cast %340 : vector<1x1x128xf32> to vector<128xf32>
    %342 = vector.extract_strided_slice %321 {offsets = [2, 0, 0], sizes = [1, 1, 128], strides = [1, 1, 1]} : vector<5x5x128xf32> to vector<1x1x128xf32>
    %343 = vector.shape_cast %342 : vector<1x1x128xf32> to vector<128xf32>
    %344 = vector.extract_strided_slice %321 {offsets = [2, 1, 0], sizes = [1, 1, 128], strides = [1, 1, 1]} : vector<5x5x128xf32> to vector<1x1x128xf32>
    %345 = vector.shape_cast %344 : vector<1x1x128xf32> to vector<128xf32>
    %346 = vector.extract_strided_slice %321 {offsets = [2, 2, 0], sizes = [1, 1, 128], strides = [1, 1, 1]} : vector<5x5x128xf32> to vector<1x1x128xf32>
    %347 = vector.shape_cast %346 : vector<1x1x128xf32> to vector<128xf32>
    %348 = vector.extract_strided_slice %321 {offsets = [2, 3, 0], sizes = [1, 1, 128], strides = [1, 1, 1]} : vector<5x5x128xf32> to vector<1x1x128xf32>
    %349 = vector.shape_cast %348 : vector<1x1x128xf32> to vector<128xf32>
    %350 = vector.extract_strided_slice %321 {offsets = [2, 4, 0], sizes = [1, 1, 128], strides = [1, 1, 1]} : vector<5x5x128xf32> to vector<1x1x128xf32>
    %351 = vector.shape_cast %350 : vector<1x1x128xf32> to vector<128xf32>
    %352 = vector.extract_strided_slice %321 {offsets = [3, 0, 0], sizes = [1, 1, 128], strides = [1, 1, 1]} : vector<5x5x128xf32> to vector<1x1x128xf32>
    %353 = vector.shape_cast %352 : vector<1x1x128xf32> to vector<128xf32>
    %354 = vector.extract_strided_slice %321 {offsets = [3, 1, 0], sizes = [1, 1, 128], strides = [1, 1, 1]} : vector<5x5x128xf32> to vector<1x1x128xf32>
    %355 = vector.shape_cast %354 : vector<1x1x128xf32> to vector<128xf32>
    %356 = vector.extract_strided_slice %321 {offsets = [3, 2, 0], sizes = [1, 1, 128], strides = [1, 1, 1]} : vector<5x5x128xf32> to vector<1x1x128xf32>
    %357 = vector.shape_cast %356 : vector<1x1x128xf32> to vector<128xf32>
    %358 = vector.extract_strided_slice %321 {offsets = [3, 3, 0], sizes = [1, 1, 128], strides = [1, 1, 1]} : vector<5x5x128xf32> to vector<1x1x128xf32>
    %359 = vector.shape_cast %358 : vector<1x1x128xf32> to vector<128xf32>
    %360 = vector.extract_strided_slice %321 {offsets = [3, 4, 0], sizes = [1, 1, 128], strides = [1, 1, 1]} : vector<5x5x128xf32> to vector<1x1x128xf32>
    %361 = vector.shape_cast %360 : vector<1x1x128xf32> to vector<128xf32>
    %362 = vector.extract_strided_slice %321 {offsets = [4, 0, 0], sizes = [1, 1, 128], strides = [1, 1, 1]} : vector<5x5x128xf32> to vector<1x1x128xf32>
    %363 = vector.shape_cast %362 : vector<1x1x128xf32> to vector<128xf32>
    %364 = vector.extract_strided_slice %321 {offsets = [4, 1, 0], sizes = [1, 1, 128], strides = [1, 1, 1]} : vector<5x5x128xf32> to vector<1x1x128xf32>
    %365 = vector.shape_cast %364 : vector<1x1x128xf32> to vector<128xf32>
    %366 = vector.extract_strided_slice %321 {offsets = [4, 2, 0], sizes = [1, 1, 128], strides = [1, 1, 1]} : vector<5x5x128xf32> to vector<1x1x128xf32>
    %367 = vector.shape_cast %366 : vector<1x1x128xf32> to vector<128xf32>
    %368 = vector.extract_strided_slice %321 {offsets = [4, 3, 0], sizes = [1, 1, 128], strides = [1, 1, 1]} : vector<5x5x128xf32> to vector<1x1x128xf32>
    %369 = vector.shape_cast %368 : vector<1x1x128xf32> to vector<128xf32>
    %370 = vector.extract_strided_slice %321 {offsets = [4, 4, 0], sizes = [1, 1, 128], strides = [1, 1, 1]} : vector<5x5x128xf32> to vector<1x1x128xf32>
    %371 = vector.shape_cast %370 : vector<1x1x128xf32> to vector<128xf32>
    %c0_220 = arith.constant 0 : index
    %c0_221 = arith.constant 0 : index
    %c0_222 = arith.constant 0 : index
    %372 = vector.load %arg8[%c0_220, %c0_221, %c0_222] : memref<1x1x128xf32, #tpu.memory_space<vmem>>, vector<1x1x128xf32>
    %373 = vector.shape_cast %372 : vector<1x1x128xf32> to vector<1x128xf32>
    %cst_223 = arith.constant 0.000000e+00 : f32
    %374 = vector.broadcast %cst_223 : f32 to vector<8x8x128xf32>
    %cst_224 = arith.constant 0.000000e+00 : f32
    %375 = vector.broadcast %cst_224 : f32 to vector<8x8x128xf32>
    %cst_225 = arith.constant 0.000000e+00 : f32
    %376 = vector.broadcast %cst_225 : f32 to vector<8x8x128xf32>
    %cst_226 = arith.constant 0.000000e+00 : f32
    %377 = vector.broadcast %cst_226 : f32 to vector<8x8x128xf32>
    %c0_227 = arith.constant 0 : index
    %c1_228 = arith.constant 1 : index
    %c7_229 = arith.constant 7 : index
    %c0_230 = arith.constant 0 : index
    %378 = vector.load %arg10[%c0_227, %c1_228, %c7_229, %c0_230] : memref<4x12x18x128xf32, #tpu.memory_space<vmem>>, vector<1x8x8x128xf32>
    %379 = vector.shape_cast %378 : vector<1x8x8x128xf32> to vector<8x8x128xf32>
    %380 = vector.shape_cast %323 : vector<128xf32> to vector<1x1x128xf32>
    %381 = vector.broadcast %380 : vector<1x1x128xf32> to vector<8x8x128xf32>
    %382 = arith.mulf %379, %381 : vector<8x8x128xf32>
    %383 = arith.addf %374, %382 : vector<8x8x128xf32>
    %c1_231 = arith.constant 1 : index
    %c1_232 = arith.constant 1 : index
    %c7_233 = arith.constant 7 : index
    %c0_234 = arith.constant 0 : index
    %384 = vector.load %arg10[%c1_231, %c1_232, %c7_233, %c0_234] : memref<4x12x18x128xf32, #tpu.memory_space<vmem>>, vector<1x8x8x128xf32>
    %385 = vector.shape_cast %384 : vector<1x8x8x128xf32> to vector<8x8x128xf32>
    %386 = vector.shape_cast %325 : vector<128xf32> to vector<1x1x128xf32>
    %387 = vector.broadcast %386 : vector<1x1x128xf32> to vector<8x8x128xf32>
    %388 = arith.mulf %385, %387 : vector<8x8x128xf32>
    %389 = arith.addf %383, %388 : vector<8x8x128xf32>
    %390 = vector.shape_cast %323 : vector<128xf32> to vector<1x1x128xf32>
    %391 = vector.broadcast %390 : vector<1x1x128xf32> to vector<8x8x128xf32>
    %392 = arith.mulf %385, %391 : vector<8x8x128xf32>
    %393 = arith.addf %375, %392 : vector<8x8x128xf32>
    %c0_235 = arith.constant 0 : index
    %c1_236 = arith.constant 1 : index
    %c8_237 = arith.constant 8 : index
    %c0_238 = arith.constant 0 : index
    %394 = vector.load %arg10[%c0_235, %c1_236, %c8_237, %c0_238] : memref<4x12x18x128xf32, #tpu.memory_space<vmem>>, vector<1x8x8x128xf32>
    %395 = vector.shape_cast %394 : vector<1x8x8x128xf32> to vector<8x8x128xf32>
    %396 = vector.shape_cast %327 : vector<128xf32> to vector<1x1x128xf32>
    %397 = vector.broadcast %396 : vector<1x1x128xf32> to vector<8x8x128xf32>
    %398 = arith.mulf %395, %397 : vector<8x8x128xf32>
    %399 = arith.addf %389, %398 : vector<8x8x128xf32>
    %400 = vector.shape_cast %325 : vector<128xf32> to vector<1x1x128xf32>
    %401 = vector.broadcast %400 : vector<1x1x128xf32> to vector<8x8x128xf32>
    %402 = arith.mulf %395, %401 : vector<8x8x128xf32>
    %403 = arith.addf %393, %402 : vector<8x8x128xf32>
    %c1_239 = arith.constant 1 : index
    %c1_240 = arith.constant 1 : index
    %c8_241 = arith.constant 8 : index
    %c0_242 = arith.constant 0 : index
    %404 = vector.load %arg10[%c1_239, %c1_240, %c8_241, %c0_242] : memref<4x12x18x128xf32, #tpu.memory_space<vmem>>, vector<1x8x8x128xf32>
    %405 = vector.shape_cast %404 : vector<1x8x8x128xf32> to vector<8x8x128xf32>
    %406 = vector.shape_cast %329 : vector<128xf32> to vector<1x1x128xf32>
    %407 = vector.broadcast %406 : vector<1x1x128xf32> to vector<8x8x128xf32>
    %408 = arith.mulf %405, %407 : vector<8x8x128xf32>
    %409 = arith.addf %399, %408 : vector<8x8x128xf32>
    %410 = vector.shape_cast %327 : vector<128xf32> to vector<1x1x128xf32>
    %411 = vector.broadcast %410 : vector<1x1x128xf32> to vector<8x8x128xf32>
    %412 = arith.mulf %405, %411 : vector<8x8x128xf32>
    %413 = arith.addf %403, %412 : vector<8x8x128xf32>
    %c0_243 = arith.constant 0 : index
    %c1_244 = arith.constant 1 : index
    %c9_245 = arith.constant 9 : index
    %c0_246 = arith.constant 0 : index
    %414 = vector.load %arg10[%c0_243, %c1_244, %c9_245, %c0_246] : memref<4x12x18x128xf32, #tpu.memory_space<vmem>>, vector<1x8x8x128xf32>
    %415 = vector.shape_cast %414 : vector<1x8x8x128xf32> to vector<8x8x128xf32>
    %416 = vector.shape_cast %331 : vector<128xf32> to vector<1x1x128xf32>
    %417 = vector.broadcast %416 : vector<1x1x128xf32> to vector<8x8x128xf32>
    %418 = arith.mulf %415, %417 : vector<8x8x128xf32>
    %419 = arith.addf %409, %418 : vector<8x8x128xf32>
    %420 = vector.shape_cast %329 : vector<128xf32> to vector<1x1x128xf32>
    %421 = vector.broadcast %420 : vector<1x1x128xf32> to vector<8x8x128xf32>
    %422 = arith.mulf %415, %421 : vector<8x8x128xf32>
    %423 = arith.addf %413, %422 : vector<8x8x128xf32>
    %c1_247 = arith.constant 1 : index
    %c1_248 = arith.constant 1 : index
    %c9_249 = arith.constant 9 : index
    %c0_250 = arith.constant 0 : index
    %424 = vector.load %arg10[%c1_247, %c1_248, %c9_249, %c0_250] : memref<4x12x18x128xf32, #tpu.memory_space<vmem>>, vector<1x8x8x128xf32>
    %425 = vector.shape_cast %424 : vector<1x8x8x128xf32> to vector<8x8x128xf32>
    %426 = vector.shape_cast %331 : vector<128xf32> to vector<1x1x128xf32>
    %427 = vector.broadcast %426 : vector<1x1x128xf32> to vector<8x8x128xf32>
    %428 = arith.mulf %425, %427 : vector<8x8x128xf32>
    %429 = arith.addf %423, %428 : vector<8x8x128xf32>
    %c2_251 = arith.constant 2 : index
    %c1_252 = arith.constant 1 : index
    %c7_253 = arith.constant 7 : index
    %c0_254 = arith.constant 0 : index
    %430 = vector.load %arg10[%c2_251, %c1_252, %c7_253, %c0_254] : memref<4x12x18x128xf32, #tpu.memory_space<vmem>>, vector<1x8x8x128xf32>
    %431 = vector.shape_cast %430 : vector<1x8x8x128xf32> to vector<8x8x128xf32>
    %432 = vector.shape_cast %333 : vector<128xf32> to vector<1x1x128xf32>
    %433 = vector.broadcast %432 : vector<1x1x128xf32> to vector<8x8x128xf32>
    %434 = arith.mulf %431, %433 : vector<8x8x128xf32>
    %435 = arith.addf %419, %434 : vector<8x8x128xf32>
    %436 = vector.shape_cast %323 : vector<128xf32> to vector<1x1x128xf32>
    %437 = vector.broadcast %436 : vector<1x1x128xf32> to vector<8x8x128xf32>
    %438 = arith.mulf %431, %437 : vector<8x8x128xf32>
    %439 = arith.addf %376, %438 : vector<8x8x128xf32>
    %c3_255 = arith.constant 3 : index
    %c1_256 = arith.constant 1 : index
    %c7_257 = arith.constant 7 : index
    %c0_258 = arith.constant 0 : index
    %440 = vector.load %arg10[%c3_255, %c1_256, %c7_257, %c0_258] : memref<4x12x18x128xf32, #tpu.memory_space<vmem>>, vector<1x8x8x128xf32>
    %441 = vector.shape_cast %440 : vector<1x8x8x128xf32> to vector<8x8x128xf32>
    %442 = vector.shape_cast %335 : vector<128xf32> to vector<1x1x128xf32>
    %443 = vector.broadcast %442 : vector<1x1x128xf32> to vector<8x8x128xf32>
    %444 = arith.mulf %441, %443 : vector<8x8x128xf32>
    %445 = arith.addf %435, %444 : vector<8x8x128xf32>
    %446 = vector.shape_cast %333 : vector<128xf32> to vector<1x1x128xf32>
    %447 = vector.broadcast %446 : vector<1x1x128xf32> to vector<8x8x128xf32>
    %448 = arith.mulf %441, %447 : vector<8x8x128xf32>
    %449 = arith.addf %429, %448 : vector<8x8x128xf32>
    %450 = vector.shape_cast %325 : vector<128xf32> to vector<1x1x128xf32>
    %451 = vector.broadcast %450 : vector<1x1x128xf32> to vector<8x8x128xf32>
    %452 = arith.mulf %441, %451 : vector<8x8x128xf32>
    %453 = arith.addf %439, %452 : vector<8x8x128xf32>
    %454 = vector.shape_cast %323 : vector<128xf32> to vector<1x1x128xf32>
    %455 = vector.broadcast %454 : vector<1x1x128xf32> to vector<8x8x128xf32>
    %456 = arith.mulf %441, %455 : vector<8x8x128xf32>
    %457 = arith.addf %377, %456 : vector<8x8x128xf32>
    %c2_259 = arith.constant 2 : index
    %c1_260 = arith.constant 1 : index
    %c8_261 = arith.constant 8 : index
    %c0_262 = arith.constant 0 : index
    %458 = vector.load %arg10[%c2_259, %c1_260, %c8_261, %c0_262] : memref<4x12x18x128xf32, #tpu.memory_space<vmem>>, vector<1x8x8x128xf32>
    %459 = vector.shape_cast %458 : vector<1x8x8x128xf32> to vector<8x8x128xf32>
    %460 = vector.shape_cast %337 : vector<128xf32> to vector<1x1x128xf32>
    %461 = vector.broadcast %460 : vector<1x1x128xf32> to vector<8x8x128xf32>
    %462 = arith.mulf %459, %461 : vector<8x8x128xf32>
    %463 = arith.addf %445, %462 : vector<8x8x128xf32>
    %464 = vector.shape_cast %335 : vector<128xf32> to vector<1x1x128xf32>
    %465 = vector.broadcast %464 : vector<1x1x128xf32> to vector<8x8x128xf32>
    %466 = arith.mulf %459, %465 : vector<8x8x128xf32>
    %467 = arith.addf %449, %466 : vector<8x8x128xf32>
    %468 = vector.shape_cast %327 : vector<128xf32> to vector<1x1x128xf32>
    %469 = vector.broadcast %468 : vector<1x1x128xf32> to vector<8x8x128xf32>
    %470 = arith.mulf %459, %469 : vector<8x8x128xf32>
    %471 = arith.addf %453, %470 : vector<8x8x128xf32>
    %472 = vector.shape_cast %325 : vector<128xf32> to vector<1x1x128xf32>
    %473 = vector.broadcast %472 : vector<1x1x128xf32> to vector<8x8x128xf32>
    %474 = arith.mulf %459, %473 : vector<8x8x128xf32>
    %475 = arith.addf %457, %474 : vector<8x8x128xf32>
    %c3_263 = arith.constant 3 : index
    %c1_264 = arith.constant 1 : index
    %c8_265 = arith.constant 8 : index
    %c0_266 = arith.constant 0 : index
    %476 = vector.load %arg10[%c3_263, %c1_264, %c8_265, %c0_266] : memref<4x12x18x128xf32, #tpu.memory_space<vmem>>, vector<1x8x8x128xf32>
    %477 = vector.shape_cast %476 : vector<1x8x8x128xf32> to vector<8x8x128xf32>
    %478 = vector.shape_cast %339 : vector<128xf32> to vector<1x1x128xf32>
    %479 = vector.broadcast %478 : vector<1x1x128xf32> to vector<8x8x128xf32>
    %480 = arith.mulf %477, %479 : vector<8x8x128xf32>
    %481 = arith.addf %463, %480 : vector<8x8x128xf32>
    %482 = vector.shape_cast %337 : vector<128xf32> to vector<1x1x128xf32>
    %483 = vector.broadcast %482 : vector<1x1x128xf32> to vector<8x8x128xf32>
    %484 = arith.mulf %477, %483 : vector<8x8x128xf32>
    %485 = arith.addf %467, %484 : vector<8x8x128xf32>
    %486 = vector.shape_cast %329 : vector<128xf32> to vector<1x1x128xf32>
    %487 = vector.broadcast %486 : vector<1x1x128xf32> to vector<8x8x128xf32>
    %488 = arith.mulf %477, %487 : vector<8x8x128xf32>
    %489 = arith.addf %471, %488 : vector<8x8x128xf32>
    %490 = vector.shape_cast %327 : vector<128xf32> to vector<1x1x128xf32>
    %491 = vector.broadcast %490 : vector<1x1x128xf32> to vector<8x8x128xf32>
    %492 = arith.mulf %477, %491 : vector<8x8x128xf32>
    %493 = arith.addf %475, %492 : vector<8x8x128xf32>
    %c2_267 = arith.constant 2 : index
    %c1_268 = arith.constant 1 : index
    %c9_269 = arith.constant 9 : index
    %c0_270 = arith.constant 0 : index
    %494 = vector.load %arg10[%c2_267, %c1_268, %c9_269, %c0_270] : memref<4x12x18x128xf32, #tpu.memory_space<vmem>>, vector<1x8x8x128xf32>
    %495 = vector.shape_cast %494 : vector<1x8x8x128xf32> to vector<8x8x128xf32>
    %496 = vector.shape_cast %341 : vector<128xf32> to vector<1x1x128xf32>
    %497 = vector.broadcast %496 : vector<1x1x128xf32> to vector<8x8x128xf32>
    %498 = arith.mulf %495, %497 : vector<8x8x128xf32>
    %499 = arith.addf %481, %498 : vector<8x8x128xf32>
    %500 = vector.shape_cast %339 : vector<128xf32> to vector<1x1x128xf32>
    %501 = vector.broadcast %500 : vector<1x1x128xf32> to vector<8x8x128xf32>
    %502 = arith.mulf %495, %501 : vector<8x8x128xf32>
    %503 = arith.addf %485, %502 : vector<8x8x128xf32>
    %504 = vector.shape_cast %331 : vector<128xf32> to vector<1x1x128xf32>
    %505 = vector.broadcast %504 : vector<1x1x128xf32> to vector<8x8x128xf32>
    %506 = arith.mulf %495, %505 : vector<8x8x128xf32>
    %507 = arith.addf %489, %506 : vector<8x8x128xf32>
    %508 = vector.shape_cast %329 : vector<128xf32> to vector<1x1x128xf32>
    %509 = vector.broadcast %508 : vector<1x1x128xf32> to vector<8x8x128xf32>
    %510 = arith.mulf %495, %509 : vector<8x8x128xf32>
    %511 = arith.addf %493, %510 : vector<8x8x128xf32>
    %c3_271 = arith.constant 3 : index
    %c1_272 = arith.constant 1 : index
    %c9_273 = arith.constant 9 : index
    %c0_274 = arith.constant 0 : index
    %512 = vector.load %arg10[%c3_271, %c1_272, %c9_273, %c0_274] : memref<4x12x18x128xf32, #tpu.memory_space<vmem>>, vector<1x8x8x128xf32>
    %513 = vector.shape_cast %512 : vector<1x8x8x128xf32> to vector<8x8x128xf32>
    %514 = vector.shape_cast %341 : vector<128xf32> to vector<1x1x128xf32>
    %515 = vector.broadcast %514 : vector<1x1x128xf32> to vector<8x8x128xf32>
    %516 = arith.mulf %513, %515 : vector<8x8x128xf32>
    %517 = arith.addf %503, %516 : vector<8x8x128xf32>
    %518 = vector.shape_cast %331 : vector<128xf32> to vector<1x1x128xf32>
    %519 = vector.broadcast %518 : vector<1x1x128xf32> to vector<8x8x128xf32>
    %520 = arith.mulf %513, %519 : vector<8x8x128xf32>
    %521 = arith.addf %511, %520 : vector<8x8x128xf32>
    %c0_275 = arith.constant 0 : index
    %c2_276 = arith.constant 2 : index
    %c7_277 = arith.constant 7 : index
    %c0_278 = arith.constant 0 : index
    %522 = vector.load %arg10[%c0_275, %c2_276, %c7_277, %c0_278] : memref<4x12x18x128xf32, #tpu.memory_space<vmem>>, vector<1x8x8x128xf32>
    %523 = vector.shape_cast %522 : vector<1x8x8x128xf32> to vector<8x8x128xf32>
    %524 = vector.shape_cast %343 : vector<128xf32> to vector<1x1x128xf32>
    %525 = vector.broadcast %524 : vector<1x1x128xf32> to vector<8x8x128xf32>
    %526 = arith.mulf %523, %525 : vector<8x8x128xf32>
    %527 = arith.addf %499, %526 : vector<8x8x128xf32>
    %528 = vector.shape_cast %333 : vector<128xf32> to vector<1x1x128xf32>
    %529 = vector.broadcast %528 : vector<1x1x128xf32> to vector<8x8x128xf32>
    %530 = arith.mulf %523, %529 : vector<8x8x128xf32>
    %531 = arith.addf %507, %530 : vector<8x8x128xf32>
    %c1_279 = arith.constant 1 : index
    %c2_280 = arith.constant 2 : index
    %c7_281 = arith.constant 7 : index
    %c0_282 = arith.constant 0 : index
    %532 = vector.load %arg10[%c1_279, %c2_280, %c7_281, %c0_282] : memref<4x12x18x128xf32, #tpu.memory_space<vmem>>, vector<1x8x8x128xf32>
    %533 = vector.shape_cast %532 : vector<1x8x8x128xf32> to vector<8x8x128xf32>
    %534 = vector.shape_cast %345 : vector<128xf32> to vector<1x1x128xf32>
    %535 = vector.broadcast %534 : vector<1x1x128xf32> to vector<8x8x128xf32>
    %536 = arith.mulf %533, %535 : vector<8x8x128xf32>
    %537 = arith.addf %527, %536 : vector<8x8x128xf32>
    %538 = vector.shape_cast %343 : vector<128xf32> to vector<1x1x128xf32>
    %539 = vector.broadcast %538 : vector<1x1x128xf32> to vector<8x8x128xf32>
    %540 = arith.mulf %533, %539 : vector<8x8x128xf32>
    %541 = arith.addf %517, %540 : vector<8x8x128xf32>
    %542 = vector.shape_cast %335 : vector<128xf32> to vector<1x1x128xf32>
    %543 = vector.broadcast %542 : vector<1x1x128xf32> to vector<8x8x128xf32>
    %544 = arith.mulf %533, %543 : vector<8x8x128xf32>
    %545 = arith.addf %531, %544 : vector<8x8x128xf32>
    %546 = vector.shape_cast %333 : vector<128xf32> to vector<1x1x128xf32>
    %547 = vector.broadcast %546 : vector<1x1x128xf32> to vector<8x8x128xf32>
    %548 = arith.mulf %533, %547 : vector<8x8x128xf32>
    %549 = arith.addf %521, %548 : vector<8x8x128xf32>
    %c0_283 = arith.constant 0 : index
    %c2_284 = arith.constant 2 : index
    %c8_285 = arith.constant 8 : index
    %c0_286 = arith.constant 0 : index
    %550 = vector.load %arg10[%c0_283, %c2_284, %c8_285, %c0_286] : memref<4x12x18x128xf32, #tpu.memory_space<vmem>>, vector<1x8x8x128xf32>
    %551 = vector.shape_cast %550 : vector<1x8x8x128xf32> to vector<8x8x128xf32>
    %552 = vector.shape_cast %347 : vector<128xf32> to vector<1x1x128xf32>
    %553 = vector.broadcast %552 : vector<1x1x128xf32> to vector<8x8x128xf32>
    %554 = arith.mulf %551, %553 : vector<8x8x128xf32>
    %555 = arith.addf %537, %554 : vector<8x8x128xf32>
    %556 = vector.shape_cast %345 : vector<128xf32> to vector<1x1x128xf32>
    %557 = vector.broadcast %556 : vector<1x1x128xf32> to vector<8x8x128xf32>
    %558 = arith.mulf %551, %557 : vector<8x8x128xf32>
    %559 = arith.addf %541, %558 : vector<8x8x128xf32>
    %560 = vector.shape_cast %337 : vector<128xf32> to vector<1x1x128xf32>
    %561 = vector.broadcast %560 : vector<1x1x128xf32> to vector<8x8x128xf32>
    %562 = arith.mulf %551, %561 : vector<8x8x128xf32>
    %563 = arith.addf %545, %562 : vector<8x8x128xf32>
    %564 = vector.shape_cast %335 : vector<128xf32> to vector<1x1x128xf32>
    %565 = vector.broadcast %564 : vector<1x1x128xf32> to vector<8x8x128xf32>
    %566 = arith.mulf %551, %565 : vector<8x8x128xf32>
    %567 = arith.addf %549, %566 : vector<8x8x128xf32>
    %c1_287 = arith.constant 1 : index
    %c2_288 = arith.constant 2 : index
    %c8_289 = arith.constant 8 : index
    %c0_290 = arith.constant 0 : index
    %568 = vector.load %arg10[%c1_287, %c2_288, %c8_289, %c0_290] : memref<4x12x18x128xf32, #tpu.memory_space<vmem>>, vector<1x8x8x128xf32>
    %569 = vector.shape_cast %568 : vector<1x8x8x128xf32> to vector<8x8x128xf32>
    %570 = vector.shape_cast %349 : vector<128xf32> to vector<1x1x128xf32>
    %571 = vector.broadcast %570 : vector<1x1x128xf32> to vector<8x8x128xf32>
    %572 = arith.mulf %569, %571 : vector<8x8x128xf32>
    %573 = arith.addf %555, %572 : vector<8x8x128xf32>
    %574 = vector.shape_cast %347 : vector<128xf32> to vector<1x1x128xf32>
    %575 = vector.broadcast %574 : vector<1x1x128xf32> to vector<8x8x128xf32>
    %576 = arith.mulf %569, %575 : vector<8x8x128xf32>
    %577 = arith.addf %559, %576 : vector<8x8x128xf32>
    %578 = vector.shape_cast %339 : vector<128xf32> to vector<1x1x128xf32>
    %579 = vector.broadcast %578 : vector<1x1x128xf32> to vector<8x8x128xf32>
    %580 = arith.mulf %569, %579 : vector<8x8x128xf32>
    %581 = arith.addf %563, %580 : vector<8x8x128xf32>
    %582 = vector.shape_cast %337 : vector<128xf32> to vector<1x1x128xf32>
    %583 = vector.broadcast %582 : vector<1x1x128xf32> to vector<8x8x128xf32>
    %584 = arith.mulf %569, %583 : vector<8x8x128xf32>
    %585 = arith.addf %567, %584 : vector<8x8x128xf32>
    %c0_291 = arith.constant 0 : index
    %c2_292 = arith.constant 2 : index
    %c9_293 = arith.constant 9 : index
    %c0_294 = arith.constant 0 : index
    %586 = vector.load %arg10[%c0_291, %c2_292, %c9_293, %c0_294] : memref<4x12x18x128xf32, #tpu.memory_space<vmem>>, vector<1x8x8x128xf32>
    %587 = vector.shape_cast %586 : vector<1x8x8x128xf32> to vector<8x8x128xf32>
    %588 = vector.shape_cast %351 : vector<128xf32> to vector<1x1x128xf32>
    %589 = vector.broadcast %588 : vector<1x1x128xf32> to vector<8x8x128xf32>
    %590 = arith.mulf %587, %589 : vector<8x8x128xf32>
    %591 = arith.addf %573, %590 : vector<8x8x128xf32>
    %592 = vector.shape_cast %349 : vector<128xf32> to vector<1x1x128xf32>
    %593 = vector.broadcast %592 : vector<1x1x128xf32> to vector<8x8x128xf32>
    %594 = arith.mulf %587, %593 : vector<8x8x128xf32>
    %595 = arith.addf %577, %594 : vector<8x8x128xf32>
    %596 = vector.shape_cast %341 : vector<128xf32> to vector<1x1x128xf32>
    %597 = vector.broadcast %596 : vector<1x1x128xf32> to vector<8x8x128xf32>
    %598 = arith.mulf %587, %597 : vector<8x8x128xf32>
    %599 = arith.addf %581, %598 : vector<8x8x128xf32>
    %600 = vector.shape_cast %339 : vector<128xf32> to vector<1x1x128xf32>
    %601 = vector.broadcast %600 : vector<1x1x128xf32> to vector<8x8x128xf32>
    %602 = arith.mulf %587, %601 : vector<8x8x128xf32>
    %603 = arith.addf %585, %602 : vector<8x8x128xf32>
    %c1_295 = arith.constant 1 : index
    %c2_296 = arith.constant 2 : index
    %c9_297 = arith.constant 9 : index
    %c0_298 = arith.constant 0 : index
    %604 = vector.load %arg10[%c1_295, %c2_296, %c9_297, %c0_298] : memref<4x12x18x128xf32, #tpu.memory_space<vmem>>, vector<1x8x8x128xf32>
    %605 = vector.shape_cast %604 : vector<1x8x8x128xf32> to vector<8x8x128xf32>
    %606 = vector.shape_cast %351 : vector<128xf32> to vector<1x1x128xf32>
    %607 = vector.broadcast %606 : vector<1x1x128xf32> to vector<8x8x128xf32>
    %608 = arith.mulf %605, %607 : vector<8x8x128xf32>
    %609 = arith.addf %595, %608 : vector<8x8x128xf32>
    %610 = vector.shape_cast %341 : vector<128xf32> to vector<1x1x128xf32>
    %611 = vector.broadcast %610 : vector<1x1x128xf32> to vector<8x8x128xf32>
    %612 = arith.mulf %605, %611 : vector<8x8x128xf32>
    %613 = arith.addf %603, %612 : vector<8x8x128xf32>
    %c2_299 = arith.constant 2 : index
    %c2_300 = arith.constant 2 : index
    %c7_301 = arith.constant 7 : index
    %c0_302 = arith.constant 0 : index
    %614 = vector.load %arg10[%c2_299, %c2_300, %c7_301, %c0_302] : memref<4x12x18x128xf32, #tpu.memory_space<vmem>>, vector<1x8x8x128xf32>
    %615 = vector.shape_cast %614 : vector<1x8x8x128xf32> to vector<8x8x128xf32>
    %616 = vector.shape_cast %353 : vector<128xf32> to vector<1x1x128xf32>
    %617 = vector.broadcast %616 : vector<1x1x128xf32> to vector<8x8x128xf32>
    %618 = arith.mulf %615, %617 : vector<8x8x128xf32>
    %619 = arith.addf %591, %618 : vector<8x8x128xf32>
    %620 = vector.shape_cast %343 : vector<128xf32> to vector<1x1x128xf32>
    %621 = vector.broadcast %620 : vector<1x1x128xf32> to vector<8x8x128xf32>
    %622 = arith.mulf %615, %621 : vector<8x8x128xf32>
    %623 = arith.addf %599, %622 : vector<8x8x128xf32>
    %c3_303 = arith.constant 3 : index
    %c2_304 = arith.constant 2 : index
    %c7_305 = arith.constant 7 : index
    %c0_306 = arith.constant 0 : index
    %624 = vector.load %arg10[%c3_303, %c2_304, %c7_305, %c0_306] : memref<4x12x18x128xf32, #tpu.memory_space<vmem>>, vector<1x8x8x128xf32>
    %625 = vector.shape_cast %624 : vector<1x8x8x128xf32> to vector<8x8x128xf32>
    %626 = vector.shape_cast %355 : vector<128xf32> to vector<1x1x128xf32>
    %627 = vector.broadcast %626 : vector<1x1x128xf32> to vector<8x8x128xf32>
    %628 = arith.mulf %625, %627 : vector<8x8x128xf32>
    %629 = arith.addf %619, %628 : vector<8x8x128xf32>
    %630 = vector.shape_cast %353 : vector<128xf32> to vector<1x1x128xf32>
    %631 = vector.broadcast %630 : vector<1x1x128xf32> to vector<8x8x128xf32>
    %632 = arith.mulf %625, %631 : vector<8x8x128xf32>
    %633 = arith.addf %609, %632 : vector<8x8x128xf32>
    %634 = vector.shape_cast %345 : vector<128xf32> to vector<1x1x128xf32>
    %635 = vector.broadcast %634 : vector<1x1x128xf32> to vector<8x8x128xf32>
    %636 = arith.mulf %625, %635 : vector<8x8x128xf32>
    %637 = arith.addf %623, %636 : vector<8x8x128xf32>
    %638 = vector.shape_cast %343 : vector<128xf32> to vector<1x1x128xf32>
    %639 = vector.broadcast %638 : vector<1x1x128xf32> to vector<8x8x128xf32>
    %640 = arith.mulf %625, %639 : vector<8x8x128xf32>
    %641 = arith.addf %613, %640 : vector<8x8x128xf32>
    %c2_307 = arith.constant 2 : index
    %c2_308 = arith.constant 2 : index
    %c8_309 = arith.constant 8 : index
    %c0_310 = arith.constant 0 : index
    %642 = vector.load %arg10[%c2_307, %c2_308, %c8_309, %c0_310] : memref<4x12x18x128xf32, #tpu.memory_space<vmem>>, vector<1x8x8x128xf32>
    %643 = vector.shape_cast %642 : vector<1x8x8x128xf32> to vector<8x8x128xf32>
    %644 = vector.shape_cast %357 : vector<128xf32> to vector<1x1x128xf32>
    %645 = vector.broadcast %644 : vector<1x1x128xf32> to vector<8x8x128xf32>
    %646 = arith.mulf %643, %645 : vector<8x8x128xf32>
    %647 = arith.addf %629, %646 : vector<8x8x128xf32>
    %648 = vector.shape_cast %355 : vector<128xf32> to vector<1x1x128xf32>
    %649 = vector.broadcast %648 : vector<1x1x128xf32> to vector<8x8x128xf32>
    %650 = arith.mulf %643, %649 : vector<8x8x128xf32>
    %651 = arith.addf %633, %650 : vector<8x8x128xf32>
    %652 = vector.shape_cast %347 : vector<128xf32> to vector<1x1x128xf32>
    %653 = vector.broadcast %652 : vector<1x1x128xf32> to vector<8x8x128xf32>
    %654 = arith.mulf %643, %653 : vector<8x8x128xf32>
    %655 = arith.addf %637, %654 : vector<8x8x128xf32>
    %656 = vector.shape_cast %345 : vector<128xf32> to vector<1x1x128xf32>
    %657 = vector.broadcast %656 : vector<1x1x128xf32> to vector<8x8x128xf32>
    %658 = arith.mulf %643, %657 : vector<8x8x128xf32>
    %659 = arith.addf %641, %658 : vector<8x8x128xf32>
    %c3_311 = arith.constant 3 : index
    %c2_312 = arith.constant 2 : index
    %c8_313 = arith.constant 8 : index
    %c0_314 = arith.constant 0 : index
    %660 = vector.load %arg10[%c3_311, %c2_312, %c8_313, %c0_314] : memref<4x12x18x128xf32, #tpu.memory_space<vmem>>, vector<1x8x8x128xf32>
    %661 = vector.shape_cast %660 : vector<1x8x8x128xf32> to vector<8x8x128xf32>
    %662 = vector.shape_cast %359 : vector<128xf32> to vector<1x1x128xf32>
    %663 = vector.broadcast %662 : vector<1x1x128xf32> to vector<8x8x128xf32>
    %664 = arith.mulf %661, %663 : vector<8x8x128xf32>
    %665 = arith.addf %647, %664 : vector<8x8x128xf32>
    %666 = vector.shape_cast %357 : vector<128xf32> to vector<1x1x128xf32>
    %667 = vector.broadcast %666 : vector<1x1x128xf32> to vector<8x8x128xf32>
    %668 = arith.mulf %661, %667 : vector<8x8x128xf32>
    %669 = arith.addf %651, %668 : vector<8x8x128xf32>
    %670 = vector.shape_cast %349 : vector<128xf32> to vector<1x1x128xf32>
    %671 = vector.broadcast %670 : vector<1x1x128xf32> to vector<8x8x128xf32>
    %672 = arith.mulf %661, %671 : vector<8x8x128xf32>
    %673 = arith.addf %655, %672 : vector<8x8x128xf32>
    %674 = vector.shape_cast %347 : vector<128xf32> to vector<1x1x128xf32>
    %675 = vector.broadcast %674 : vector<1x1x128xf32> to vector<8x8x128xf32>
    %676 = arith.mulf %661, %675 : vector<8x8x128xf32>
    %677 = arith.addf %659, %676 : vector<8x8x128xf32>
    %c2_315 = arith.constant 2 : index
    %c2_316 = arith.constant 2 : index
    %c9_317 = arith.constant 9 : index
    %c0_318 = arith.constant 0 : index
    %678 = vector.load %arg10[%c2_315, %c2_316, %c9_317, %c0_318] : memref<4x12x18x128xf32, #tpu.memory_space<vmem>>, vector<1x8x8x128xf32>
    %679 = vector.shape_cast %678 : vector<1x8x8x128xf32> to vector<8x8x128xf32>
    %680 = vector.shape_cast %361 : vector<128xf32> to vector<1x1x128xf32>
    %681 = vector.broadcast %680 : vector<1x1x128xf32> to vector<8x8x128xf32>
    %682 = arith.mulf %679, %681 : vector<8x8x128xf32>
    %683 = arith.addf %665, %682 : vector<8x8x128xf32>
    %684 = vector.shape_cast %359 : vector<128xf32> to vector<1x1x128xf32>
    %685 = vector.broadcast %684 : vector<1x1x128xf32> to vector<8x8x128xf32>
    %686 = arith.mulf %679, %685 : vector<8x8x128xf32>
    %687 = arith.addf %669, %686 : vector<8x8x128xf32>
    %688 = vector.shape_cast %351 : vector<128xf32> to vector<1x1x128xf32>
    %689 = vector.broadcast %688 : vector<1x1x128xf32> to vector<8x8x128xf32>
    %690 = arith.mulf %679, %689 : vector<8x8x128xf32>
    %691 = arith.addf %673, %690 : vector<8x8x128xf32>
    %692 = vector.shape_cast %349 : vector<128xf32> to vector<1x1x128xf32>
    %693 = vector.broadcast %692 : vector<1x1x128xf32> to vector<8x8x128xf32>
    %694 = arith.mulf %679, %693 : vector<8x8x128xf32>
    %695 = arith.addf %677, %694 : vector<8x8x128xf32>
    %c3_319 = arith.constant 3 : index
    %c2_320 = arith.constant 2 : index
    %c9_321 = arith.constant 9 : index
    %c0_322 = arith.constant 0 : index
    %696 = vector.load %arg10[%c3_319, %c2_320, %c9_321, %c0_322] : memref<4x12x18x128xf32, #tpu.memory_space<vmem>>, vector<1x8x8x128xf32>
    %697 = vector.shape_cast %696 : vector<1x8x8x128xf32> to vector<8x8x128xf32>
    %698 = vector.shape_cast %361 : vector<128xf32> to vector<1x1x128xf32>
    %699 = vector.broadcast %698 : vector<1x1x128xf32> to vector<8x8x128xf32>
    %700 = arith.mulf %697, %699 : vector<8x8x128xf32>
    %701 = arith.addf %687, %700 : vector<8x8x128xf32>
    %702 = vector.shape_cast %351 : vector<128xf32> to vector<1x1x128xf32>
    %703 = vector.broadcast %702 : vector<1x1x128xf32> to vector<8x8x128xf32>
    %704 = arith.mulf %697, %703 : vector<8x8x128xf32>
    %705 = arith.addf %695, %704 : vector<8x8x128xf32>
    %c0_323 = arith.constant 0 : index
    %c3_324 = arith.constant 3 : index
    %c7_325 = arith.constant 7 : index
    %c0_326 = arith.constant 0 : index
    %706 = vector.load %arg10[%c0_323, %c3_324, %c7_325, %c0_326] : memref<4x12x18x128xf32, #tpu.memory_space<vmem>>, vector<1x8x8x128xf32>
    %707 = vector.shape_cast %706 : vector<1x8x8x128xf32> to vector<8x8x128xf32>
    %708 = vector.shape_cast %363 : vector<128xf32> to vector<1x1x128xf32>
    %709 = vector.broadcast %708 : vector<1x1x128xf32> to vector<8x8x128xf32>
    %710 = arith.mulf %707, %709 : vector<8x8x128xf32>
    %711 = arith.addf %683, %710 : vector<8x8x128xf32>
    %712 = vector.shape_cast %353 : vector<128xf32> to vector<1x1x128xf32>
    %713 = vector.broadcast %712 : vector<1x1x128xf32> to vector<8x8x128xf32>
    %714 = arith.mulf %707, %713 : vector<8x8x128xf32>
    %715 = arith.addf %691, %714 : vector<8x8x128xf32>
    %c1_327 = arith.constant 1 : index
    %c3_328 = arith.constant 3 : index
    %c7_329 = arith.constant 7 : index
    %c0_330 = arith.constant 0 : index
    %716 = vector.load %arg10[%c1_327, %c3_328, %c7_329, %c0_330] : memref<4x12x18x128xf32, #tpu.memory_space<vmem>>, vector<1x8x8x128xf32>
    %717 = vector.shape_cast %716 : vector<1x8x8x128xf32> to vector<8x8x128xf32>
    %718 = vector.shape_cast %365 : vector<128xf32> to vector<1x1x128xf32>
    %719 = vector.broadcast %718 : vector<1x1x128xf32> to vector<8x8x128xf32>
    %720 = arith.mulf %717, %719 : vector<8x8x128xf32>
    %721 = arith.addf %711, %720 : vector<8x8x128xf32>
    %722 = vector.shape_cast %363 : vector<128xf32> to vector<1x1x128xf32>
    %723 = vector.broadcast %722 : vector<1x1x128xf32> to vector<8x8x128xf32>
    %724 = arith.mulf %717, %723 : vector<8x8x128xf32>
    %725 = arith.addf %701, %724 : vector<8x8x128xf32>
    %726 = vector.shape_cast %355 : vector<128xf32> to vector<1x1x128xf32>
    %727 = vector.broadcast %726 : vector<1x1x128xf32> to vector<8x8x128xf32>
    %728 = arith.mulf %717, %727 : vector<8x8x128xf32>
    %729 = arith.addf %715, %728 : vector<8x8x128xf32>
    %730 = vector.shape_cast %353 : vector<128xf32> to vector<1x1x128xf32>
    %731 = vector.broadcast %730 : vector<1x1x128xf32> to vector<8x8x128xf32>
    %732 = arith.mulf %717, %731 : vector<8x8x128xf32>
    %733 = arith.addf %705, %732 : vector<8x8x128xf32>
    %c0_331 = arith.constant 0 : index
    %c3_332 = arith.constant 3 : index
    %c8_333 = arith.constant 8 : index
    %c0_334 = arith.constant 0 : index
    %734 = vector.load %arg10[%c0_331, %c3_332, %c8_333, %c0_334] : memref<4x12x18x128xf32, #tpu.memory_space<vmem>>, vector<1x8x8x128xf32>
    %735 = vector.shape_cast %734 : vector<1x8x8x128xf32> to vector<8x8x128xf32>
    %736 = vector.shape_cast %367 : vector<128xf32> to vector<1x1x128xf32>
    %737 = vector.broadcast %736 : vector<1x1x128xf32> to vector<8x8x128xf32>
    %738 = arith.mulf %735, %737 : vector<8x8x128xf32>
    %739 = arith.addf %721, %738 : vector<8x8x128xf32>
    %740 = vector.shape_cast %365 : vector<128xf32> to vector<1x1x128xf32>
    %741 = vector.broadcast %740 : vector<1x1x128xf32> to vector<8x8x128xf32>
    %742 = arith.mulf %735, %741 : vector<8x8x128xf32>
    %743 = arith.addf %725, %742 : vector<8x8x128xf32>
    %744 = vector.shape_cast %357 : vector<128xf32> to vector<1x1x128xf32>
    %745 = vector.broadcast %744 : vector<1x1x128xf32> to vector<8x8x128xf32>
    %746 = arith.mulf %735, %745 : vector<8x8x128xf32>
    %747 = arith.addf %729, %746 : vector<8x8x128xf32>
    %748 = vector.shape_cast %355 : vector<128xf32> to vector<1x1x128xf32>
    %749 = vector.broadcast %748 : vector<1x1x128xf32> to vector<8x8x128xf32>
    %750 = arith.mulf %735, %749 : vector<8x8x128xf32>
    %751 = arith.addf %733, %750 : vector<8x8x128xf32>
    %c1_335 = arith.constant 1 : index
    %c3_336 = arith.constant 3 : index
    %c8_337 = arith.constant 8 : index
    %c0_338 = arith.constant 0 : index
    %752 = vector.load %arg10[%c1_335, %c3_336, %c8_337, %c0_338] : memref<4x12x18x128xf32, #tpu.memory_space<vmem>>, vector<1x8x8x128xf32>
    %753 = vector.shape_cast %752 : vector<1x8x8x128xf32> to vector<8x8x128xf32>
    %754 = vector.shape_cast %369 : vector<128xf32> to vector<1x1x128xf32>
    %755 = vector.broadcast %754 : vector<1x1x128xf32> to vector<8x8x128xf32>
    %756 = arith.mulf %753, %755 : vector<8x8x128xf32>
    %757 = arith.addf %739, %756 : vector<8x8x128xf32>
    %758 = vector.shape_cast %367 : vector<128xf32> to vector<1x1x128xf32>
    %759 = vector.broadcast %758 : vector<1x1x128xf32> to vector<8x8x128xf32>
    %760 = arith.mulf %753, %759 : vector<8x8x128xf32>
    %761 = arith.addf %743, %760 : vector<8x8x128xf32>
    %762 = vector.shape_cast %359 : vector<128xf32> to vector<1x1x128xf32>
    %763 = vector.broadcast %762 : vector<1x1x128xf32> to vector<8x8x128xf32>
    %764 = arith.mulf %753, %763 : vector<8x8x128xf32>
    %765 = arith.addf %747, %764 : vector<8x8x128xf32>
    %766 = vector.shape_cast %357 : vector<128xf32> to vector<1x1x128xf32>
    %767 = vector.broadcast %766 : vector<1x1x128xf32> to vector<8x8x128xf32>
    %768 = arith.mulf %753, %767 : vector<8x8x128xf32>
    %769 = arith.addf %751, %768 : vector<8x8x128xf32>
    %c0_339 = arith.constant 0 : index
    %c3_340 = arith.constant 3 : index
    %c9_341 = arith.constant 9 : index
    %c0_342 = arith.constant 0 : index
    %770 = vector.load %arg10[%c0_339, %c3_340, %c9_341, %c0_342] : memref<4x12x18x128xf32, #tpu.memory_space<vmem>>, vector<1x8x8x128xf32>
    %771 = vector.shape_cast %770 : vector<1x8x8x128xf32> to vector<8x8x128xf32>
    %772 = vector.shape_cast %371 : vector<128xf32> to vector<1x1x128xf32>
    %773 = vector.broadcast %772 : vector<1x1x128xf32> to vector<8x8x128xf32>
    %774 = arith.mulf %771, %773 : vector<8x8x128xf32>
    %775 = arith.addf %757, %774 : vector<8x8x128xf32>
    %776 = vector.shape_cast %369 : vector<128xf32> to vector<1x1x128xf32>
    %777 = vector.broadcast %776 : vector<1x1x128xf32> to vector<8x8x128xf32>
    %778 = arith.mulf %771, %777 : vector<8x8x128xf32>
    %779 = arith.addf %761, %778 : vector<8x8x128xf32>
    %780 = vector.shape_cast %361 : vector<128xf32> to vector<1x1x128xf32>
    %781 = vector.broadcast %780 : vector<1x1x128xf32> to vector<8x8x128xf32>
    %782 = arith.mulf %771, %781 : vector<8x8x128xf32>
    %783 = arith.addf %765, %782 : vector<8x8x128xf32>
    %784 = vector.shape_cast %359 : vector<128xf32> to vector<1x1x128xf32>
    %785 = vector.broadcast %784 : vector<1x1x128xf32> to vector<8x8x128xf32>
    %786 = arith.mulf %771, %785 : vector<8x8x128xf32>
    %787 = arith.addf %769, %786 : vector<8x8x128xf32>
    %c1_343 = arith.constant 1 : index
    %c3_344 = arith.constant 3 : index
    %c9_345 = arith.constant 9 : index
    %c0_346 = arith.constant 0 : index
    %788 = vector.load %arg10[%c1_343, %c3_344, %c9_345, %c0_346] : memref<4x12x18x128xf32, #tpu.memory_space<vmem>>, vector<1x8x8x128xf32>
    %789 = vector.shape_cast %788 : vector<1x8x8x128xf32> to vector<8x8x128xf32>
    %790 = vector.shape_cast %371 : vector<128xf32> to vector<1x1x128xf32>
    %791 = vector.broadcast %790 : vector<1x1x128xf32> to vector<8x8x128xf32>
    %792 = arith.mulf %789, %791 : vector<8x8x128xf32>
    %793 = arith.addf %779, %792 : vector<8x8x128xf32>
    %794 = vector.shape_cast %361 : vector<128xf32> to vector<1x1x128xf32>
    %795 = vector.broadcast %794 : vector<1x1x128xf32> to vector<8x8x128xf32>
    %796 = arith.mulf %789, %795 : vector<8x8x128xf32>
    %797 = arith.addf %787, %796 : vector<8x8x128xf32>
    %c2_347 = arith.constant 2 : index
    %c3_348 = arith.constant 3 : index
    %c7_349 = arith.constant 7 : index
    %c0_350 = arith.constant 0 : index
    %798 = vector.load %arg10[%c2_347, %c3_348, %c7_349, %c0_350] : memref<4x12x18x128xf32, #tpu.memory_space<vmem>>, vector<1x8x8x128xf32>
    %799 = vector.shape_cast %798 : vector<1x8x8x128xf32> to vector<8x8x128xf32>
    %800 = vector.shape_cast %363 : vector<128xf32> to vector<1x1x128xf32>
    %801 = vector.broadcast %800 : vector<1x1x128xf32> to vector<8x8x128xf32>
    %802 = arith.mulf %799, %801 : vector<8x8x128xf32>
    %803 = arith.addf %783, %802 : vector<8x8x128xf32>
    %c3_351 = arith.constant 3 : index
    %c3_352 = arith.constant 3 : index
    %c7_353 = arith.constant 7 : index
    %c0_354 = arith.constant 0 : index
    %804 = vector.load %arg10[%c3_351, %c3_352, %c7_353, %c0_354] : memref<4x12x18x128xf32, #tpu.memory_space<vmem>>, vector<1x8x8x128xf32>
    %805 = vector.shape_cast %804 : vector<1x8x8x128xf32> to vector<8x8x128xf32>
    %806 = vector.shape_cast %365 : vector<128xf32> to vector<1x1x128xf32>
    %807 = vector.broadcast %806 : vector<1x1x128xf32> to vector<8x8x128xf32>
    %808 = arith.mulf %805, %807 : vector<8x8x128xf32>
    %809 = arith.addf %803, %808 : vector<8x8x128xf32>
    %810 = vector.shape_cast %363 : vector<128xf32> to vector<1x1x128xf32>
    %811 = vector.broadcast %810 : vector<1x1x128xf32> to vector<8x8x128xf32>
    %812 = arith.mulf %805, %811 : vector<8x8x128xf32>
    %813 = arith.addf %797, %812 : vector<8x8x128xf32>
    %c2_355 = arith.constant 2 : index
    %c3_356 = arith.constant 3 : index
    %c8_357 = arith.constant 8 : index
    %c0_358 = arith.constant 0 : index
    %814 = vector.load %arg10[%c2_355, %c3_356, %c8_357, %c0_358] : memref<4x12x18x128xf32, #tpu.memory_space<vmem>>, vector<1x8x8x128xf32>
    %815 = vector.shape_cast %814 : vector<1x8x8x128xf32> to vector<8x8x128xf32>
    %816 = vector.shape_cast %367 : vector<128xf32> to vector<1x1x128xf32>
    %817 = vector.broadcast %816 : vector<1x1x128xf32> to vector<8x8x128xf32>
    %818 = arith.mulf %815, %817 : vector<8x8x128xf32>
    %819 = arith.addf %809, %818 : vector<8x8x128xf32>
    %820 = vector.shape_cast %365 : vector<128xf32> to vector<1x1x128xf32>
    %821 = vector.broadcast %820 : vector<1x1x128xf32> to vector<8x8x128xf32>
    %822 = arith.mulf %815, %821 : vector<8x8x128xf32>
    %823 = arith.addf %813, %822 : vector<8x8x128xf32>
    %c3_359 = arith.constant 3 : index
    %c3_360 = arith.constant 3 : index
    %c8_361 = arith.constant 8 : index
    %c0_362 = arith.constant 0 : index
    %824 = vector.load %arg10[%c3_359, %c3_360, %c8_361, %c0_362] : memref<4x12x18x128xf32, #tpu.memory_space<vmem>>, vector<1x8x8x128xf32>
    %825 = vector.shape_cast %824 : vector<1x8x8x128xf32> to vector<8x8x128xf32>
    %826 = vector.shape_cast %369 : vector<128xf32> to vector<1x1x128xf32>
    %827 = vector.broadcast %826 : vector<1x1x128xf32> to vector<8x8x128xf32>
    %828 = arith.mulf %825, %827 : vector<8x8x128xf32>
    %829 = arith.addf %819, %828 : vector<8x8x128xf32>
    %830 = vector.shape_cast %367 : vector<128xf32> to vector<1x1x128xf32>
    %831 = vector.broadcast %830 : vector<1x1x128xf32> to vector<8x8x128xf32>
    %832 = arith.mulf %825, %831 : vector<8x8x128xf32>
    %833 = arith.addf %823, %832 : vector<8x8x128xf32>
    %c2_363 = arith.constant 2 : index
    %c3_364 = arith.constant 3 : index
    %c9_365 = arith.constant 9 : index
    %c0_366 = arith.constant 0 : index
    %834 = vector.load %arg10[%c2_363, %c3_364, %c9_365, %c0_366] : memref<4x12x18x128xf32, #tpu.memory_space<vmem>>, vector<1x8x8x128xf32>
    %835 = vector.shape_cast %834 : vector<1x8x8x128xf32> to vector<8x8x128xf32>
    %836 = vector.shape_cast %371 : vector<128xf32> to vector<1x1x128xf32>
    %837 = vector.broadcast %836 : vector<1x1x128xf32> to vector<8x8x128xf32>
    %838 = arith.mulf %835, %837 : vector<8x8x128xf32>
    %839 = arith.addf %829, %838 : vector<8x8x128xf32>
    %840 = vector.shape_cast %369 : vector<128xf32> to vector<1x1x128xf32>
    %841 = vector.broadcast %840 : vector<1x1x128xf32> to vector<8x8x128xf32>
    %842 = arith.mulf %835, %841 : vector<8x8x128xf32>
    %843 = arith.addf %833, %842 : vector<8x8x128xf32>
    %c3_367 = arith.constant 3 : index
    %c3_368 = arith.constant 3 : index
    %c9_369 = arith.constant 9 : index
    %c0_370 = arith.constant 0 : index
    %844 = vector.load %arg10[%c3_367, %c3_368, %c9_369, %c0_370] : memref<4x12x18x128xf32, #tpu.memory_space<vmem>>, vector<1x8x8x128xf32>
    %845 = vector.shape_cast %844 : vector<1x8x8x128xf32> to vector<8x8x128xf32>
    %846 = vector.shape_cast %371 : vector<128xf32> to vector<1x1x128xf32>
    %847 = vector.broadcast %846 : vector<1x1x128xf32> to vector<8x8x128xf32>
    %848 = arith.mulf %845, %847 : vector<8x8x128xf32>
    %849 = arith.addf %843, %848 : vector<8x8x128xf32>
    %c0_371 = arith.constant 0 : index
    %c0_372 = arith.constant 0 : index
    %c0_373 = arith.constant 0 : index
    %c0_374 = arith.constant 0 : index
    %c0_375 = arith.constant 0 : index
    %c0_376 = arith.constant 0 : index
    %850 = vector.load %arg9[%c0_371, %c0_372, %c0_373, %c0_374, %c0_375, %c0_376] : memref<1x1x4x8x8x128xf32, #tpu.memory_space<vmem>>, vector<1x1x1x8x8x128xf32>
    %851 = vector.shape_cast %850 : vector<1x1x1x8x8x128xf32> to vector<8x8x128xf32>
    %852 = arith.addf %851, %775 : vector<8x8x128xf32>
    %853 = vector.shape_cast %373 : vector<1x128xf32> to vector<1x1x128xf32>
    %854 = vector.broadcast %853 : vector<1x1x128xf32> to vector<8x8x128xf32>
    %855 = arith.addf %852, %854 : vector<8x8x128xf32>
    %c0_377 = arith.constant 0 : index
    %c0_378 = arith.constant 0 : index
    %c0_379 = arith.constant 0 : index
    %c0_380 = arith.constant 0 : index
    %c0_381 = arith.constant 0 : index
    %c0_382 = arith.constant 0 : index
    %856 = vector.load %arg9[%c0_377, %c0_378, %c0_379, %c0_380, %c0_381, %c0_382] : memref<1x1x4x8x8x128xf32, #tpu.memory_space<vmem>>, vector<1x1x1x8x8x128xf32>
    %857 = vector.shape_cast %856 : vector<1x1x1x8x8x128xf32> to vector<8x8x128xf32>
    %858 = vector.shape_cast %855 : vector<8x8x128xf32> to vector<1x1x1x8x8x128xf32>
    tpu.vector_store %arg9[%c0_377, %c0_378, %c0_379, %c0_380, %c0_381, %c0_382], %858 {strides = array<i32>} : memref<1x1x4x8x8x128xf32, #tpu.memory_space<vmem>>, vector<1x1x1x8x8x128xf32>,
    %c0_383 = arith.constant 0 : index
    %c0_384 = arith.constant 0 : index
    %c1_385 = arith.constant 1 : index
    %c0_386 = arith.constant 0 : index
    %c0_387 = arith.constant 0 : index
    %c0_388 = arith.constant 0 : index
    %859 = vector.load %arg9[%c0_383, %c0_384, %c1_385, %c0_386, %c0_387, %c0_388] : memref<1x1x4x8x8x128xf32, #tpu.memory_space<vmem>>, vector<1x1x1x8x8x128xf32>
    %860 = vector.shape_cast %859 : vector<1x1x1x8x8x128xf32> to vector<8x8x128xf32>
    %861 = arith.addf %860, %793 : vector<8x8x128xf32>
    %862 = vector.shape_cast %373 : vector<1x128xf32> to vector<1x1x128xf32>
    %863 = vector.broadcast %862 : vector<1x1x128xf32> to vector<8x8x128xf32>
    %864 = arith.addf %861, %863 : vector<8x8x128xf32>
    %c0_389 = arith.constant 0 : index
    %c0_390 = arith.constant 0 : index
    %c1_391 = arith.constant 1 : index
    %c0_392 = arith.constant 0 : index
    %c0_393 = arith.constant 0 : index
    %c0_394 = arith.constant 0 : index
    %865 = vector.load %arg9[%c0_389, %c0_390, %c1_391, %c0_392, %c0_393, %c0_394] : memref<1x1x4x8x8x128xf32, #tpu.memory_space<vmem>>, vector<1x1x1x8x8x128xf32>
    %866 = vector.shape_cast %865 : vector<1x1x1x8x8x128xf32> to vector<8x8x128xf32>
    %867 = vector.shape_cast %864 : vector<8x8x128xf32> to vector<1x1x1x8x8x128xf32>
    tpu.vector_store %arg9[%c0_389, %c0_390, %c1_391, %c0_392, %c0_393, %c0_394], %867 {strides = array<i32>} : memref<1x1x4x8x8x128xf32, #tpu.memory_space<vmem>>, vector<1x1x1x8x8x128xf32>,
    %c0_395 = arith.constant 0 : index
    %c0_396 = arith.constant 0 : index
    %c2_397 = arith.constant 2 : index
    %c0_398 = arith.constant 0 : index
    %c0_399 = arith.constant 0 : index
    %c0_400 = arith.constant 0 : index
    %868 = vector.load %arg9[%c0_395, %c0_396, %c2_397, %c0_398, %c0_399, %c0_400] : memref<1x1x4x8x8x128xf32, #tpu.memory_space<vmem>>, vector<1x1x1x8x8x128xf32>
    %869 = vector.shape_cast %868 : vector<1x1x1x8x8x128xf32> to vector<8x8x128xf32>
    %870 = arith.addf %869, %839 : vector<8x8x128xf32>
    %871 = vector.shape_cast %373 : vector<1x128xf32> to vector<1x1x128xf32>
    %872 = vector.broadcast %871 : vector<1x1x128xf32> to vector<8x8x128xf32>
    %873 = arith.addf %870, %872 : vector<8x8x128xf32>
    %c0_401 = arith.constant 0 : index
    %c0_402 = arith.constant 0 : index
    %c2_403 = arith.constant 2 : index
    %c0_404 = arith.constant 0 : index
    %c0_405 = arith.constant 0 : index
    %c0_406 = arith.constant 0 : index
    %874 = vector.load %arg9[%c0_401, %c0_402, %c2_403, %c0_404, %c0_405, %c0_406] : memref<1x1x4x8x8x128xf32, #tpu.memory_space<vmem>>, vector<1x1x1x8x8x128xf32>
    %875 = vector.shape_cast %874 : vector<1x1x1x8x8x128xf32> to vector<8x8x128xf32>
    %876 = vector.shape_cast %873 : vector<8x8x128xf32> to vector<1x1x1x8x8x128xf32>
    tpu.vector_store %arg9[%c0_401, %c0_402, %c2_403, %c0_404, %c0_405, %c0_406], %876 {strides = array<i32>} : memref<1x1x4x8x8x128xf32, #tpu.memory_space<vmem>>, vector<1x1x1x8x8x128xf32>,
    %c0_407 = arith.constant 0 : index
    %c0_408 = arith.constant 0 : index
    %c3_409 = arith.constant 3 : index
    %c0_410 = arith.constant 0 : index
    %c0_411 = arith.constant 0 : index
    %c0_412 = arith.constant 0 : index
    %877 = vector.load %arg9[%c0_407, %c0_408, %c3_409, %c0_410, %c0_411, %c0_412] : memref<1x1x4x8x8x128xf32, #tpu.memory_space<vmem>>, vector<1x1x1x8x8x128xf32>
    %878 = vector.shape_cast %877 : vector<1x1x1x8x8x128xf32> to vector<8x8x128xf32>
    %879 = arith.addf %878, %849 : vector<8x8x128xf32>
    %880 = vector.shape_cast %373 : vector<1x128xf32> to vector<1x1x128xf32>
    %881 = vector.broadcast %880 : vector<1x1x128xf32> to vector<8x8x128xf32>
    %882 = arith.addf %879, %881 : vector<8x8x128xf32>
    %c0_413 = arith.constant 0 : index
    %c0_414 = arith.constant 0 : index
    %c3_415 = arith.constant 3 : index
    %c0_416 = arith.constant 0 : index
    %c0_417 = arith.constant 0 : index
    %c0_418 = arith.constant 0 : index
    %883 = vector.load %arg9[%c0_413, %c0_414, %c3_415, %c0_416, %c0_417, %c0_418] : memref<1x1x4x8x8x128xf32, #tpu.memory_space<vmem>>, vector<1x1x1x8x8x128xf32>
    %884 = vector.shape_cast %883 : vector<1x1x1x8x8x128xf32> to vector<8x8x128xf32>
    %885 = vector.shape_cast %882 : vector<8x8x128xf32> to vector<1x1x1x8x8x128xf32>
    tpu.vector_store %arg9[%c0_413, %c0_414, %c3_415, %c0_416, %c0_417, %c0_418], %885 {strides = array<i32>} : memref<1x1x4x8x8x128xf32, #tpu.memory_space<vmem>>, vector<1x1x1x8x8x128xf32>,
    return
  }
  func.func @transform_0(%arg0: i32, %arg1: i32, %arg2: i32) -> (i32, i32, i32, i32, i32, i32) {
    %c0_i32 = arith.constant 0 : i32
    %c0_i32_0 = arith.constant 0 : i32
    %c0_i32_1 = arith.constant 0 : i32
    %c0_i32_2 = arith.constant 0 : i32
    return %arg1, %arg0, %c0_i32, %arg2, %c0_i32_0, %c0_i32_1 : i32, i32, i32, i32, i32, i32
  }
  func.func @transform_1(%arg0: i32, %arg1: i32, %arg2: i32) -> (i32, i32, i32, i32, i32, i32) {
    %c4_i32 = arith.constant 4 : i32
    %0 = arith.muli %arg2, %c4_i32 : i32
    %c1_i32 = arith.constant 1 : i32
    %1 = arith.subi %0, %c1_i32 : i32
    %c0_i32 = arith.constant 0 : i32
    %2 = arith.maxsi %1, %c0_i32 : i32
    %c0_i32_0 = arith.constant 0 : i32
    %c0_i32_1 = arith.constant 0 : i32
    %c0_i32_2 = arith.constant 0 : i32
    %c0_i32_3 = arith.constant 0 : i32
    return %arg1, %arg0, %c0_i32_0, %2, %c0_i32_1, %c0_i32_2 : i32, i32, i32, i32, i32, i32
  }
  func.func @transform_2(%arg0: i32, %arg1: i32, %arg2: i32) -> (i32, i32, i32, i32, i32, i32) {
    %c1_i32 = arith.constant 1 : i32
    %0 = arith.addi %arg2, %c1_i32 : i32
    %c4_i32 = arith.constant 4 : i32
    %1 = arith.muli %0, %c4_i32 : i32
    %c3_i32 = arith.constant 3 : i32
    %2 = arith.minsi %1, %c3_i32 : i32
    %c0_i32 = arith.constant 0 : i32
    %c0_i32_0 = arith.constant 0 : i32
    %c0_i32_1 = arith.constant 0 : i32
    %c0_i32_2 = arith.constant 0 : i32
    return %arg1, %arg0, %c0_i32, %2, %c0_i32_0, %c0_i32_1 : i32, i32, i32, i32, i32, i32
  }
  func.func @transform_3(%arg0: i32, %arg1: i32, %arg2: i32) -> (i32, i32, i32, i32, i32) {
    %c0_i32 = arith.constant 0 : i32
    %c0_i32_0 = arith.constant 0 : i32
    %c0_i32_1 = arith.constant 0 : i32
    %c0_i32_2 = arith.constant 0 : i32
    %c0_i32_3 = arith.constant 0 : i32
    return %arg0, %c0_i32, %c0_i32_0, %c0_i32_1, %c0_i32_2 : i32, i32, i32, i32, i32
  }
  func.func @transform_4(%arg0: i32, %arg1: i32, %arg2: i32) -> (i32, i32, i32, i32) {
    %c0_i32 = arith.constant 0 : i32
    %c0_i32_0 = arith.constant 0 : i32
    %c0_i32_1 = arith.constant 0 : i32
    %c0_i32_2 = arith.constant 0 : i32
    return %arg0, %c0_i32, %c0_i32_0, %c0_i32_1 : i32, i32, i32, i32
  }
  func.func @transform_5(%arg0: i32, %arg1: i32, %arg2: i32) -> (i32, i32, i32) {
    %c0_i32 = arith.constant 0 : i32
    %c0_i32_0 = arith.constant 0 : i32
    %c0_i32_1 = arith.constant 0 : i32
    return %arg0, %c0_i32, %c0_i32_0 : i32, i32, i32
  }
  func.func @transform_6(%arg0: i32, %arg1: i32, %arg2: i32) -> (i32, i32, i32, i32, i32, i32) {
    %c0_i32 = arith.constant 0 : i32
    %c0_i32_0 = arith.constant 0 : i32
    %c0_i32_1 = arith.constant 0 : i32
    %c0_i32_2 = arith.constant 0 : i32
    return %arg1, %arg0, %c0_i32, %arg2, %c0_i32_0, %c0_i32_1 : i32, i32, i32, i32, i32, i32
  }
}

</mosaic_0001>

<llo_original>
// kernel: tpu_custom_call.1
$region0: #{tpu_custom_call.1}
  #allocation0 [shape = 'u32[]', space=smem, size = 0x4, offset = 0x4, fixed_abs, tag = 'smem constant byte address 0x4 - core index']
  #allocation1 [shape = 'u32[144,128]{1,0:T(1,128)}', space=vmem, size = 0x12000, scoped, tag = 'internal scratch']
  #allocation2 [shape = 'f32[4,12,18,128]{3,2,1,0:T(8,128)}', space=vmem, size = 0x90000, scoped, tag = 'scratch operand']
  #allocation12 [shape = 's32[]', space=sflag, size = 0x4, offset = 0, fixed_abs, tag = 'sflag constant byte address 0x0 - dummy sync flag']
  #allocation14 [shape = 's32[]', space=sflag, size = 0x4, offset = 0, fixed_abs, tag = 'sflag constant byte address 0x0 - dummy sync flag']
  %s0 = inlined_call_operand.hbm [shape: f32[2,1,4,8,8,128], index: 0, kind: input, shape index: {}]
  %s1 = inlined_call_operand.hbm [shape: f32[2,1,4,8,8,128], index: 1, kind: input, shape index: {}]
  %s2 = inlined_call_operand.hbm [shape: f32[2,1,4,8,8,128], index: 2, kind: input, shape index: {}]
  %s3 = inlined_call_operand.hbm [shape: f32[1,5,5,4,128], index: 3, kind: input, shape index: {}]
  %s4 = inlined_call_operand.vmem [shape: f32[1,5,5,128], index: 4, kind: input, shape index: {}]
  %s5 = inlined_call_operand.vmem [shape: f32[1,1,128], index: 5, kind: input, shape index: {}]
  %s6 = inlined_call_operand.hbm [shape: f32[2,1,4,8,8,128], index: 6, kind: output, shape index: {}]
  %s7 = sld [smem:[#allocation0]]
  $region73: #{tpu_custom_call.1} parent=0
    _
  %s9 = ssub.s32 1, %s7
  %s10 = scalar_select 0, %s9, %s7
  $region1: #{tpu_custom_call.1} parent=0
    #allocation3 [shape = 'u8[262144]{0}', space=vmem, size = 0x40000, scoped, tag = 'input window, operand 0']
    #allocation4 [shape = 's32[2]{0}', space=sflag, size = 0x8, scoped, tag = 'scoped memory for tpu_custom_call.1']
    #allocation5 [shape = 's32[2]{0}', space=sflag, size = 0x8, scoped, tag = 'scoped memory for tpu_custom_call.1']
    #allocation6 [shape = 'u8[65536]{0}', space=vmem, size = 0x10000, scoped, tag = 'input window, operand 1']
    #allocation7 [shape = 's32[2]{0}', space=sflag, size = 0x8, scoped, tag = 'scoped memory for tpu_custom_call.1']
    #allocation8 [shape = 'u8[65536]{0}', space=vmem, size = 0x10000, scoped, tag = 'input window, operand 2']
    #allocation9 [shape = 'u8[51200]{0}', space=vmem, size = 0xc800, scoped, tag = 'input window, operand 3, single buffered']
    #allocation10 [shape = 's32[1]{0}', space=sflag, size = 0x4, scoped, tag = 'scoped memory for tpu_custom_call.1']
    #allocation11 [shape = 'u8[262144]{0}', space=vmem, size = 0x40000, scoped, tag = 'output window, operand 0']
    %11 = vsyncpa [#allocation4], 0
    %s12 = scalar_lea.sflag [#allocation4], 1
    %13 = vsyncpa %s12, 0
    %14 = vsyncpa [#allocation7], 0
    %s15 = scalar_lea.sflag [#allocation7], 1
    %16 = vsyncpa %s15, 0
    %17 = vsyncpa [#allocation10], 0
    %18 = vsyncpa [#allocation5], 0
    %s19 = scalar_lea.sflag [#allocation5], 1
    %20 = vsyncpa %s19, 0
    loop: start=0, step=1, limit=4
    $region2: #{tpu_custom_call.1} parent=1 // loop_pre_header
      _
    $region3: #{tpu_custom_call.1} parent=1 // loop_header
      %s22 = sphi 0, %s26
      %p23 = scmp.ge.s32.totalorder %s22, 4
      %s29 = sphi 0, %s48
      %s30 = sphi 0, %s44
      %s31 = sphi 0, %s40
      %s32 = sphi 0, %s29
      %s33 = sphi 0, %s30
      %s34 = sphi 0, %s31
      %s35 = sphi 0, %s32
      %s36 = sphi 0, %s33
      %s37 = sphi 0, %s34
      %s55 = sphi 0, %s57
      %s58 = sphi 0, %s55
      %s59 = sphi 0, %s58
      %s75 = sphi 0, %s59
      %s93 = sphi 0, %s95
      %s96 = sphi 0, %s93
      %s97 = sphi 0, %s96
      %s113 = sphi 0, %s97
      %s131 = sphi 0, %s133
      %s134 = sphi 0, %s131
      %s135 = sphi 0, %s134
      %s151 = sphi 0, %s135
      %s157 = sphi 0, %s159
      %s160 = sphi 0, %s157
      %s161 = sphi 0, %s160
      %s177 = sphi 0, %s161
      %s183 = sphi 0, %s185
      %s186 = sphi 0, %s183
      %s187 = sphi 0, %s186
      %s203 = sphi 0, %s187
      %s209 = sphi 0, %s211
      %s212 = sphi 0, %s209
      %s213 = sphi 0, %s212
      %s229 = sphi 0, %s213
      %s239 = sphi 0, %s241
      %s242 = sphi 0, %s239
      %s243 = sphi 0, %s242
      %s259 = sphi 0, %s243
    $region4: #{tpu_custom_call.1} parent=1 // loop_header_branch
      %25 = sbr.rel (%p23) target = $region8
    $region5: #{tpu_custom_call.1} parent=1 // loop_body
      %s27 = ssub.s32 %s22, 1
      %s28 = ssub.s32 %s22, 2
      %s38 = sadd.s32 1, %s31
      %p39 = scmp.ge.s32.totalorder %s38, 1
      %s40 = scalar_select %p39, 0, %s38
      %s41 = sadd.s32 1, %s30
      %s42 = scalar_select %p39, %s41, %s30
      %p43 = scmp.ge.s32.totalorder %s42, 2
      %s44 = scalar_select %p43, 0, %s42
      %s45 = sadd.s32 1, %s29
      %s46 = scalar_select %p43, %s45, %s29
      %p47 = scmp.ge.s32.totalorder %s46, 1
      %s48 = scalar_select %p47, 0, %s46
      %s49 = ssub.s32 %s30, %s44
      %s50 = ssub.s32 %s29, %s48
      %s51 = sor.u32 %s49, %s50
      %s52 = ssub.s32 %s31, %s40
      %s53 = sor.u32 %s51, %s52
      %p54 = scmp.eq.s32.totalorder %s53, 0
      %s56 = sadd.s32 %s55, 1
      %s57 = scalar_select %p54, %s55, %s56
      %p60 = pneg %p54
      %p61 = scmp.eq.s32.totalorder %s22, 1
      %p62 = por %p60, %p61
      %p63 = scmp.ne.s32.totalorder %s55, %s58
      %p64 = scmp.eq.s32.totalorder %s22, 0
      %p65 = por %p63, %p64
      %p66 = scmp.ne.s32.totalorder %s55, %s58
      %p67 = scmp.eq.s32.totalorder %s27, 1
      %p68 = por %p66, %p67
      %p69 = scmp.ne.s32.totalorder %s58, %s59
      %p70 = scmp.eq.s32.totalorder %s27, 0
      %p71 = por %p69, %p70
      %p72 = scmp.ne.s32.totalorder %s58, %s59
      %p73 = scmp.eq.s32.totalorder %s28, 1
      %p74 = por %p72, %p73
      %p76 = scmp.ne.s32.totalorder %s59, %s75
      %p77 = scmp.eq.s32.totalorder %s28, 0
      %p78 = por %p76, %p77
      %s79 = smul.u32 %s31, 4
      %s80 = ssub.s32 %s79, 1
      %p81 = scmp.gt.s32.totalorder %s80, 0
      %s82 = scalar_select %p81, %s80, 0
      %s83 = smul.u32 %s40, 4
      %s84 = ssub.s32 %s83, 1
      %p85 = scmp.gt.s32.totalorder %s84, 0
      %s86 = scalar_select %p85, %s84, 0
      %s87 = ssub.s32 %s30, %s44
      %s88 = ssub.s32 %s29, %s48
      %s89 = sor.u32 %s87, %s88
      %s90 = ssub.s32 %s82, %s86
      %s91 = sor.u32 %s89, %s90
      %p92 = scmp.eq.s32.totalorder %s91, 0
      %s94 = sadd.s32 %s93, 1
      %s95 = scalar_select %p92, %s93, %s94
      %p98 = pneg %p92
      %p99 = scmp.eq.s32.totalorder %s22, 1
      %p100 = por %p98, %p99
      %p101 = scmp.ne.s32.totalorder %s93, %s96
      %p102 = scmp.eq.s32.totalorder %s22, 0
      %p103 = por %p101, %p102
      %p104 = scmp.ne.s32.totalorder %s93, %s96
      %p105 = scmp.eq.s32.totalorder %s27, 1
      %p106 = por %p104, %p105
      %p107 = scmp.ne.s32.totalorder %s96, %s97
      %p108 = scmp.eq.s32.totalorder %s27, 0
      %p109 = por %p107, %p108
      %p110 = scmp.ne.s32.totalorder %s96, %s97
      %p111 = scmp.eq.s32.totalorder %s28, 1
      %p112 = por %p110, %p111
      %p114 = scmp.ne.s32.totalorder %s97, %s113
      %p115 = scmp.eq.s32.totalorder %s28, 0
      %p116 = por %p114, %p115
      %s117 = sadd.s32 %s31, 1
      %s118 = smul.u32 %s117, 4
      %p119 = scmp.lt.s32.totalorder %s118, 3
      %s120 = scalar_select %p119, %s118, 3
      %s121 = sadd.s32 %s40, 1
      %s122 = smul.u32 %s121, 4
      %p123 = scmp.lt.s32.totalorder %s122, 3
      %s124 = scalar_select %p123, %s122, 3
      %s125 = ssub.s32 %s30, %s44
      %s126 = ssub.s32 %s29, %s48
      %s127 = sor.u32 %s125, %s126
      %s128 = ssub.s32 %s120, %s124
      %s129 = sor.u32 %s127, %s128
      %p130 = scmp.eq.s32.totalorder %s129, 0
      %s132 = sadd.s32 %s131, 1
      %s133 = scalar_select %p130, %s131, %s132
      %p136 = pneg %p130
      %p137 = scmp.eq.s32.totalorder %s22, 1
      %p138 = por %p136, %p137
      %p139 = scmp.ne.s32.totalorder %s131, %s134
      %p140 = scmp.eq.s32.totalorder %s22, 0
      %p141 = por %p139, %p140
      %p142 = scmp.ne.s32.totalorder %s131, %s134
      %p143 = scmp.eq.s32.totalorder %s27, 1
      %p144 = por %p142, %p143
      %p145 = scmp.ne.s32.totalorder %s134, %s135
      %p146 = scmp.eq.s32.totalorder %s27, 0
      %p147 = por %p145, %p146
      %p148 = scmp.ne.s32.totalorder %s134, %s135
      %p149 = scmp.eq.s32.totalorder %s28, 1
      %p150 = por %p148, %p149
      %p152 = scmp.ne.s32.totalorder %s135, %s151
      %p153 = scmp.eq.s32.totalorder %s28, 0
      %p154 = por %p152, %p153
      %s155 = ssub.s32 %s29, %s48
      %p156 = scmp.eq.s32.totalorder %s155, 0
      %s158 = sadd.s32 %s157, 1
      %s159 = scalar_select %p156, %s157, %s158
      %p162 = pneg %p156
      %p163 = scmp.eq.s32.totalorder %s22, 1
      %p164 = por %p162, %p163
      %p165 = scmp.ne.s32.totalorder %s157, %s160
      %p166 = scmp.eq.s32.totalorder %s22, 0
      %p167 = por %p165, %p166
      %p168 = scmp.ne.s32.totalorder %s157, %s160
      %p169 = scmp.eq.s32.totalorder %s27, 1
      %p170 = por %p168, %p169
      %p171 = scmp.ne.s32.totalorder %s160, %s161
      %p172 = scmp.eq.s32.totalorder %s27, 0
      %p173 = por %p171, %p172
      %p174 = scmp.ne.s32.totalorder %s160, %s161
      %p175 = scmp.eq.s32.totalorder %s28, 1
      %p176 = por %p174, %p175
      %p178 = scmp.ne.s32.totalorder %s161, %s177
      %p179 = scmp.eq.s32.totalorder %s28, 0
      %p180 = por %p178, %p179
      %s181 = ssub.s32 %s29, %s48
      %p182 = scmp.eq.s32.totalorder %s181, 0
      %s184 = sadd.s32 %s183, 1
      %s185 = scalar_select %p182, %s183, %s184
      %p188 = pneg %p182
      %p189 = scmp.eq.s32.totalorder %s22, 1
      %p190 = por %p188, %p189
      %p191 = scmp.ne.s32.totalorder %s183, %s186
      %p192 = scmp.eq.s32.totalorder %s22, 0
      %p193 = por %p191, %p192
      %p194 = scmp.ne.s32.totalorder %s183, %s186
      %p195 = scmp.eq.s32.totalorder %s27, 1
      %p196 = por %p194, %p195
      %p197 = scmp.ne.s32.totalorder %s186, %s187
      %p198 = scmp.eq.s32.totalorder %s27, 0
      %p199 = por %p197, %p198
      %p200 = scmp.ne.s32.totalorder %s186, %s187
      %p201 = scmp.eq.s32.totalorder %s28, 1
      %p202 = por %p200, %p201
      %p204 = scmp.ne.s32.totalorder %s187, %s203
      %p205 = scmp.eq.s32.totalorder %s28, 0
      %p206 = por %p204, %p205
      %s207 = ssub.s32 %s29, %s48
      %p208 = scmp.eq.s32.totalorder %s207, 0
      %s210 = sadd.s32 %s209, 1
      %s211 = scalar_select %p208, %s209, %s210
      %p214 = pneg %p208
      %p215 = scmp.eq.s32.totalorder %s22, 1
      %p216 = por %p214, %p215
      %p217 = scmp.ne.s32.totalorder %s209, %s212
      %p218 = scmp.eq.s32.totalorder %s22, 0
      %p219 = por %p217, %p218
      %p220 = scmp.ne.s32.totalorder %s209, %s212
      %p221 = scmp.eq.s32.totalorder %s27, 1
      %p222 = por %p220, %p221
      %p223 = scmp.ne.s32.totalorder %s212, %s213
      %p224 = scmp.eq.s32.totalorder %s27, 0
      %p225 = por %p223, %p224
      %p226 = scmp.ne.s32.totalorder %s212, %s213
      %p227 = scmp.eq.s32.totalorder %s28, 1
      %p228 = por %p226, %p227
      %p230 = scmp.ne.s32.totalorder %s213, %s229
      %p231 = scmp.eq.s32.totalorder %s28, 0
      %p232 = por %p230, %p231
      %s233 = ssub.s32 %s30, %s44
      %s234 = ssub.s32 %s29, %s48
      %s235 = sor.u32 %s233, %s234
      %s236 = ssub.s32 %s31, %s40
      %s237 = sor.u32 %s235, %s236
      %p238 = scmp.eq.s32.totalorder %s237, 0
      %s240 = sadd.s32 %s239, 1
      %s241 = scalar_select %p238, %s239, %s240
      %p244 = pneg %p238
      %p245 = scmp.eq.s32.totalorder %s22, 1
      %p246 = por %p244, %p245
      %p247 = scmp.ne.s32.totalorder %s239, %s242
      %p248 = scmp.eq.s32.totalorder %s22, 0
      %p249 = por %p247, %p248
      %p250 = scmp.ne.s32.totalorder %s239, %s242
      %p251 = scmp.eq.s32.totalorder %s27, 1
      %p252 = por %p250, %p251
      %p253 = scmp.ne.s32.totalorder %s242, %s243
      %p254 = scmp.eq.s32.totalorder %s27, 0
      %p255 = por %p253, %p254
      %p256 = scmp.ne.s32.totalorder %s242, %s243
      %p257 = scmp.eq.s32.totalorder %s28, 1
      %p258 = por %p256, %p257
      %p260 = scmp.ne.s32.totalorder %s243, %s259
      %p261 = scmp.eq.s32.totalorder %s28, 0
      %p262 = por %p260, %p261
      %p263 = scmp.le.s32.totalorder 1, %s22
      %p264 = scmp.lt.s32.totalorder %s22, 3
      %p265 = pnand %p263, %p264
      %p266 = pneg %p265
      // Predicated region
      $region9: #{tpu_custom_call.1} parent=5 // pred_check
        _
      $region10: #{tpu_custom_call.1} parent=5 // pred_check_branch
        %268 = sbr.rel (%p265) target = $region12
      $region11: #{tpu_custom_call.1} parent=5 // pred_region
        %s269 = ssub.s32 %s22, 1
        // Predicated region
        $region13: #{tpu_custom_call.1} parent=11 // pred_check
          %p270 = pneg %p173
        $region14: #{tpu_custom_call.1} parent=11 // pred_check_branch
          %272 = sbr.rel (%p270) target = $region16
        $region15: #{tpu_custom_call.1} parent=11 // pred_region
          %s274 = ssub.s32 1600, 1600
          %275 = vsyncadd [#allocation10], %s274
          %s276 = smul.addr %s32, 25
          %s277 = smul.addr %s276, 64
          %s278 = scalar_lea.hbm %s3, %s277
          %s279 = sshll.u32 [#allocation9], 4
          %s280 = int_to_ptr.vmem [resolvable:$true] %s279
          %285 = dma.hbm_to_vmem [thread:$0]  %s278, 1600, %s280, [#allocation10], 64, 64, 4
        $region16: #{tpu_custom_call.1} parent=11 // pred_fallthru
          _
        // Predicated region
        $region17: #{tpu_custom_call.1} parent=11 // pred_check
          %p286 = pneg %p199
        $region18: #{tpu_custom_call.1} parent=11 // pred_check_branch
          %288 = sbr.rel (%p286) target = $region20
        $region19: #{tpu_custom_call.1} parent=11 // pred_region
          %p289 = scmp.lt.s32.totalorder %s32, 0
          %s290 = scalar_select %p289, %s32, 0
          %s291 = smul.addr %s290, 5
          %s292 = smul.addr %s291, 8
          %s293 = scalar_lea.vmem %s4, %s292
        $region20: #{tpu_custom_call.1} parent=11 // pred_fallthru
          _
        // Predicated region
        $region21: #{tpu_custom_call.1} parent=11 // pred_check
          %p294 = pneg %p225
        $region22: #{tpu_custom_call.1} parent=11 // pred_check_branch
          %296 = sbr.rel (%p294) target = $region24
        $region23: #{tpu_custom_call.1} parent=11 // pred_region
          %p297 = scmp.lt.s32.totalorder %s32, 0
          %s298 = scalar_select %p297, %s32, 0
          %s299 = scalar_lea.vmem %s5, %s298
        $region24: #{tpu_custom_call.1} parent=11 // pred_fallthru
          _
      $region12: #{tpu_custom_call.1} parent=5 // pred_fallthru
        _
      %p300 = scmp.lt.s32.totalorder %s22, 2
      // Predicated region
      $region25: #{tpu_custom_call.1} parent=5 // pred_check
        %p301 = pneg %p300
      $region26: #{tpu_custom_call.1} parent=5 // pred_check_branch
        %303 = sbr.rel (%p301) target = $region28
      $region27: #{tpu_custom_call.1} parent=5 // pred_region
        // Predicated region
        $region29: #{tpu_custom_call.1} parent=27 // pred_check
          %p304 = pneg %p65
        $region30: #{tpu_custom_call.1} parent=27 // pred_check_branch
          %306 = sbr.rel (%p304) target = $region32
        $region31: #{tpu_custom_call.1} parent=27 // pred_region
          %s307 = sand.u32 %s55, 1
          %s308 = scalar_lea.sflag [#allocation4], %s307
          %s309 = sand.u32 %s55, 1
          %s310 = smul.addr %s309, 256
          %s311 = scalar_lea.vmem [#allocation3], %s310
          %s312 = smul.u32 8, %s31
          %s314 = ssub.s32 4096, 4096
          %315 = vsyncadd %s308, %s314
          %s316 = smul.addr %s29, 32
          %s317 = sadd.s32 %s312, %s316
          %s318 = smul.addr %s30, 32
          %s319 = sadd.s32 %s317, %s318
          %s320 = smul.addr %s319, 128
          %s321 = scalar_lea.hbm %s0, %s320
          %s322 = sshll.u32 %s311, 4
          %s323 = int_to_ptr.vmem [resolvable:$true] %s322
          %328 = dma.hbm_to_vmem [thread:$0]  %s321, 4096, %s323, %s308, 128, 128, 8
        $region32: #{tpu_custom_call.1} parent=27 // pred_fallthru
          _
        // Predicated region
        $region33: #{tpu_custom_call.1} parent=27 // pred_check
          %p329 = pneg %p103
        $region34: #{tpu_custom_call.1} parent=27 // pred_check_branch
          %331 = sbr.rel (%p329) target = $region36
        $region35: #{tpu_custom_call.1} parent=27 // pred_region
          #allocation13 [shape = 'u32[6]{0}', space=smem, size = 0x18, scoped, tag = 'DMA stride descriptor']
          %s332 = sand.u32 %s22, 1
          %s333 = scalar_lea.sflag [#allocation7], %s332
          %s334 = sand.u32 %s93, 1
          %s335 = smul.addr %s334, 64
          %s336 = scalar_lea.vmem [#allocation6], %s335
          %s337 = smul.u32 %s31, 4
          %s338 = ssub.s32 %s337, 1
          %p339 = scmp.gt.s32.totalorder %s338, 0
          %s340 = scalar_select %p339, %s338, 0
          %s341 = smul.u32 2, %s340
          %s343 = ssub.s32 1024, 1024
          %344 = vsyncadd %s333, %s343
          %s345 = smul.addr %s29, 32
          %s346 = sadd.s32 %s341, %s345
          %s347 = smul.addr %s30, 32
          %s348 = sadd.s32 %s346, %s347
          %s349 = smul.addr %s348, 128
          %s350 = scalar_lea.hbm %s1, %s349
          %s352 = sshll.u32 1, 14
          %s353 = sxor.u32 4294967295, %s352
          %s355 = sld [smem:[#allocation0]]
          %s356 = sadd.s32 2, %s355
          %s358 = sshll.u32 7, 26
          %s359 = sxor.u32 4294967295, %s358
          %s360 = sand.u32 0, %s359
          %s361 = sshll.u32 %s356, 26
          %s362 = sor.u32 %s360, %s361
          %s363 = sshll.u32 %s336, 4
          %s364 = int_to_ptr.vmem [resolvable:$true] %s363
          %370 = sst [smem:[#allocation13]] 1024
          %s371 = scalar_lea.smem [#allocation13], 1
          %372 = sst [smem:[%s371]] 256
          %s373 = scalar_lea.smem [#allocation13], 2
          %374 = sst [smem:[%s373]] 2
          %s375 = scalar_lea.smem [#allocation13], 3
          %376 = sst [smem:[%s375]] 128
          %s377 = scalar_lea.smem [#allocation13], 4
          %378 = sst [smem:[%s377]] 128
          %s379 = scalar_lea.smem [#allocation13], 5
          %380 = sst [smem:[%s379]] 8
          %382 = dma.general %s350, 1024, %s364, %s333, [#allocation12], [#allocation13], %s362, 0
        $region36: #{tpu_custom_call.1} parent=27 // pred_fallthru
          _
        // Predicated region
        $region37: #{tpu_custom_call.1} parent=27 // pred_check
          %p383 = pneg %p141
        $region38: #{tpu_custom_call.1} parent=27 // pred_check_branch
          %385 = sbr.rel (%p383) target = $region40
        $region39: #{tpu_custom_call.1} parent=27 // pred_region
          #allocation15 [shape = 'u32[6]{0}', space=smem, size = 0x18, scoped, tag = 'DMA stride descriptor']
          %s386 = sand.u32 %s22, 1
          %s387 = scalar_lea.sflag [#allocation7], %s386
          %s388 = sand.u32 %s131, 1
          %s389 = smul.addr %s388, 64
          %s390 = scalar_lea.vmem [#allocation8], %s389
          %s391 = sadd.s32 %s31, 1
          %s392 = smul.u32 %s391, 4
          %p393 = scmp.lt.s32.totalorder %s392, 3
          %s394 = scalar_select %p393, %s392, 3
          %s395 = smul.u32 2, %s394
          %s397 = ssub.s32 1024, 1024
          %398 = vsyncadd %s387, %s397
          %s399 = smul.addr %s29, 32
          %s400 = sadd.s32 %s395, %s399
          %s401 = smul.addr %s30, 32
          %s402 = sadd.s32 %s400, %s401
          %s403 = smul.addr %s402, 128
          %s404 = scalar_lea.hbm %s2, %s403
          %s406 = sshll.u32 1, 14
          %s407 = sxor.u32 4294967295, %s406
          %s409 = sld [smem:[#allocation0]]
          %s410 = sadd.s32 2, %s409
          %s412 = sshll.u32 7, 26
          %s413 = sxor.u32 4294967295, %s412
          %s414 = sand.u32 0, %s413
          %s415 = sshll.u32 %s410, 26
          %s416 = sor.u32 %s414, %s415
          %s417 = sshll.u32 %s390, 4
          %s418 = int_to_ptr.vmem [resolvable:$true] %s417
          %424 = sst [smem:[#allocation15]] 1024
          %s425 = scalar_lea.smem [#allocation15], 1
          %426 = sst [smem:[%s425]] 256
          %s427 = scalar_lea.smem [#allocation15], 2
          %428 = sst [smem:[%s427]] 2
          %s429 = scalar_lea.smem [#allocation15], 3
          %430 = sst [smem:[%s429]] 128
          %s431 = scalar_lea.smem [#allocation15], 4
          %432 = sst [smem:[%s431]] 128
          %s433 = scalar_lea.smem [#allocation15], 5
          %434 = sst [smem:[%s433]] 8
          %436 = dma.general %s404, 1024, %s418, %s387, [#allocation14], [#allocation15], %s416, 0
        $region40: #{tpu_custom_call.1} parent=27 // pred_fallthru
          _
      $region28: #{tpu_custom_call.1} parent=5 // pred_fallthru
        _
      %p437 = scmp.le.s32.totalorder 1, %s22
      %p438 = scmp.lt.s32.totalorder %s22, 3
      %p439 = pnand %p437, %p438
      %p440 = pneg %p439
      // Predicated region
      $region41: #{tpu_custom_call.1} parent=5 // pred_check
        _
      $region42: #{tpu_custom_call.1} parent=5 // pred_check_branch
        %442 = sbr.rel (%p439) target = $region44
      $region43: #{tpu_custom_call.1} parent=5 // pred_region
        %s443 = ssub.s32 %s22, 1
        %s444 = sand.u32 %s58, 1
        %s445 = scalar_lea.sflag [#allocation4], %s444
        %s446 = sand.u32 %s58, 1
        %s447 = smul.addr %s446, 256
        %s448 = scalar_lea.vmem [#allocation3], %s447
        // Predicated region
        $region45: #{tpu_custom_call.1} parent=43 // pred_check
          %p449 = pneg %p71
        $region46: #{tpu_custom_call.1} parent=43 // pred_check_branch
          %451 = sbr.rel (%p449) target = $region48
        $region47: #{tpu_custom_call.1} parent=43 // pred_region
          %452 = dma.done %s445, 4096
        $region48: #{tpu_custom_call.1} parent=43 // pred_fallthru
          _
        %s453 = sand.u32 %s27, 1
        %s454 = scalar_lea.sflag [#allocation7], %s453
        %s455 = sand.u32 %s96, 1
        %s456 = smul.addr %s455, 64
        %s457 = scalar_lea.vmem [#allocation6], %s456
        // Predicated region
        $region49: #{tpu_custom_call.1} parent=43 // pred_check
          %p458 = pneg %p109
        $region50: #{tpu_custom_call.1} parent=43 // pred_check_branch
          %460 = sbr.rel (%p458) target = $region52
        $region51: #{tpu_custom_call.1} parent=43 // pred_region
          %461 = dma.done %s454, 1024
        $region52: #{tpu_custom_call.1} parent=43 // pred_fallthru
          _
        %s462 = sand.u32 %s27, 1
        %s463 = scalar_lea.sflag [#allocation7], %s462
        %s464 = sand.u32 %s134, 1
        %s465 = smul.addr %s464, 64
        %s466 = scalar_lea.vmem [#allocation8], %s465
        // Predicated region
        $region53: #{tpu_custom_call.1} parent=43 // pred_check
          %p467 = pneg %p147
        $region54: #{tpu_custom_call.1} parent=43 // pred_check_branch
          %469 = sbr.rel (%p467) target = $region56
        $region55: #{tpu_custom_call.1} parent=43 // pred_region
          %470 = dma.done %s463, 1024
        $region56: #{tpu_custom_call.1} parent=43 // pred_fallthru
          _
        // Predicated region
        $region57: #{tpu_custom_call.1} parent=43 // pred_check
          %p471 = pneg %p173
        $region58: #{tpu_custom_call.1} parent=43 // pred_check_branch
          %473 = sbr.rel (%p471) target = $region60
        $region59: #{tpu_custom_call.1} parent=43 // pred_region
          %474 = dma.done [#allocation10], 1600
        $region60: #{tpu_custom_call.1} parent=43 // pred_fallthru
          _
        %s475 = sand.u32 %s58, 1
        %s476 = scalar_lea.sflag [#allocation4], %s475
        %s477 = sand.u32 %s58, 1
        %s478 = smul.addr %s477, 256
        %s479 = scalar_lea.vmem [#allocation3], %s478
        %p480 = pneg %p71
        %p481 = pneg %p68
        %s482 = sand.u32 %s27, 1
        %s483 = scalar_lea.sflag [#allocation7], %s482
        %s484 = sand.u32 %s96, 1
        %s485 = smul.addr %s484, 64
        %s486 = scalar_lea.vmem [#allocation6], %s485
        %p487 = pneg %p109
        %p488 = pneg %p106
        %s489 = sand.u32 %s27, 1
        %s490 = scalar_lea.sflag [#allocation7], %s489
        %s491 = sand.u32 %s134, 1
        %s492 = smul.addr %s491, 64
        %s493 = scalar_lea.vmem [#allocation8], %s492
        %p494 = pneg %p147
        %p495 = pneg %p144
        %p496 = pneg %p173
        %p497 = pneg %p170
        %p498 = scmp.lt.s32.totalorder %s32, 0
        %s499 = scalar_select %p498, %s32, 0
        %s500 = smul.addr %s499, 5
        %s501 = smul.addr %s500, 8
        %s502 = scalar_lea.vmem %s4, %s501
        %p503 = pneg %p199
        %p504 = pneg %p196
        %p505 = scmp.lt.s32.totalorder %s32, 0
        %s506 = scalar_select %p505, %s32, 0
        %s507 = scalar_lea.vmem %s5, %s506
        %p508 = pneg %p225
        %p509 = pneg %p222
        %p510 = pneg %p255
        %p511 = pneg %p252
        %s512 = sand.u32 %s242, 1
        %s513 = scalar_lea.sflag [#allocation5], %s512
        %s514 = sand.u32 %s242, 1
        %s515 = smul.addr %s514, 256
        %s516 = scalar_lea.vmem [#allocation11], %s515
        %s517 = smul.u32 8, %s34
        %s518 = smul.u32 %s34, 4
        %s519 = ssub.s32 %s518, 1
        %p520 = scmp.gt.s32.totalorder %s519, 0
        %s521 = scalar_select %p520, %s519, 0
        %s522 = smul.u32 2, %s521
        %s523 = sadd.s32 %s34, 1
        %s524 = smul.u32 %s523, 4
        %p525 = scmp.lt.s32.totalorder %s524, 3
        %s526 = scalar_select %p525, %s524, 3
        %s527 = smul.u32 2, %s526
        %p528 = scmp.lt.s32.totalorder %s32, 0
        %s529 = scalar_select %p528, %s32, 0
        %s530 = smul.addr %s529, 5
        %s531 = smul.addr %s530, 8
        %s532 = scalar_lea.vmem %s4, %s531
        %p533 = scmp.lt.s32.totalorder %s32, 0
        %s534 = scalar_select %p533, %s32, 0
        %s535 = scalar_lea.vmem %s5, %s534
        %s536 = smul.u32 8, %s34
        %537 = vst [vmem:[#allocation2 + $0x6] sm:$0x3] 0.0
        %538 = vst [vmem:[#allocation2 + $0x1e] sm:$0x3] 0.0
        %539 = vst [vmem:[#allocation2 + $0x36] sm:$0x3] 0.0
        %540 = vst [vmem:[#allocation2 + $0x4e] sm:$0x3] 0.0
        %541 = vst [vmem:[#allocation2 + $0x66] sm:$0x3] 0.0
        %542 = vst [vmem:[#allocation2 + $0x7e] sm:$0x3] 0.0
        %543 = vst [vmem:[#allocation2 + $0x96] sm:$0x3] 0.0
        %544 = vst [vmem:[#allocation2 + $0xae] sm:$0x3] 0.0
        %545 = vst [vmem:[#allocation2 + $0xc6] sm:$0x3] 0.0
        %546 = vst [vmem:[#allocation2 + $0xde] sm:$0x3] 0.0
        %547 = vst [vmem:[#allocation2 + $0xf6] sm:$0x3] 0.0
        %548 = vst [vmem:[#allocation2 + $0x10e] sm:$0x3] 0.0
        %549 = vst [vmem:[#allocation2 + $0x126] sm:$0x3] 0.0
        %550 = vst [vmem:[#allocation2 + $0x13e] sm:$0x3] 0.0
        %551 = vst [vmem:[#allocation2 + $0x156] sm:$0x3] 0.0
        %552 = vst [vmem:[#allocation2 + $0x16e] sm:$0x3] 0.0
        %553 = vst [vmem:[#allocation2 + $0x186] sm:$0x3] 0.0
        %554 = vst [vmem:[#allocation2 + $0x19e] sm:$0x3] 0.0
        %555 = vst [vmem:[#allocation2 + $0x1b6] sm:$0x3] 0.0
        %556 = vst [vmem:[#allocation2 + $0x1ce] sm:$0x3] 0.0
        %557 = vst [vmem:[#allocation2 + $0x1e6] sm:$0x3] 0.0
        %558 = vst [vmem:[#allocation2 + $0x1fe] sm:$0x3] 0.0
        %559 = vst [vmem:[#allocation2 + $0x216] sm:$0x3] 0.0
        %560 = vst [vmem:[#allocation2 + $0x22e] sm:$0x3] 0.0
        %561 = vst [vmem:[#allocation2 + $0x246] sm:$0x3] 0.0
        %562 = vst [vmem:[#allocation2 + $0x25e] sm:$0x3] 0.0
        %563 = vst [vmem:[#allocation2 + $0x276] sm:$0x3] 0.0
        %564 = vst [vmem:[#allocation2 + $0x28e] sm:$0x3] 0.0
        %565 = vst [vmem:[#allocation2 + $0x2a6] sm:$0x3] 0.0
        %566 = vst [vmem:[#allocation2 + $0x2be] sm:$0x3] 0.0
        %567 = vst [vmem:[#allocation2 + $0x2d6] sm:$0x3] 0.0
        %568 = vst [vmem:[#allocation2 + $0x2ee] sm:$0x3] 0.0
        %569 = vst [vmem:[#allocation2 + $0x306] sm:$0x3] 0.0
        %570 = vst [vmem:[#allocation2 + $0x31e] sm:$0x3] 0.0
        %571 = vst [vmem:[#allocation2 + $0x336] sm:$0x3] 0.0
        %572 = vst [vmem:[#allocation2 + $0x34e] sm:$0x3] 0.0
        %573 = vst [vmem:[#allocation2 + $0x366] sm:$0x3] 0.0
        %574 = vst [vmem:[#allocation2 + $0x37e] sm:$0x3] 0.0
        %575 = vst [vmem:[#allocation2 + $0x396] sm:$0x3] 0.0
        %576 = vst [vmem:[#allocation2 + $0x3ae] sm:$0x3] 0.0
        %577 = vst [vmem:[#allocation2 + $0x3c6] sm:$0x3] 0.0
        %578 = vst [vmem:[#allocation2 + $0x3de] sm:$0x3] 0.0
        %579 = vst [vmem:[#allocation2 + $0x3f6] sm:$0x3] 0.0
        %580 = vst [vmem:[#allocation2 + $0x40e] sm:$0x3] 0.0
        %581 = vst [vmem:[#allocation2 + $0x426] sm:$0x3] 0.0
        %582 = vst [vmem:[#allocation2 + $0x43e] sm:$0x3] 0.0
        %583 = vst [vmem:[#allocation2 + $0x456] sm:$0x3] 0.0
        %584 = vst [vmem:[#allocation2 + $0x46e] sm:$0x3] 0.0
        %585 = vst [vmem:[#allocation2 + $0x10] sm:$0x3] 0.0
        %586 = vst [vmem:[#allocation2 + $0x28] sm:$0x3] 0.0
        %587 = vst [vmem:[#allocation2 + $0x40] sm:$0x3] 0.0
        %588 = vst [vmem:[#allocation2 + $0x58] sm:$0x3] 0.0
        %589 = vst [vmem:[#allocation2 + $0x70] sm:$0x3] 0.0
        %590 = vst [vmem:[#allocation2 + $0x88] sm:$0x3] 0.0
        %591 = vst [vmem:[#allocation2 + $0xa0] sm:$0x3] 0.0
        %592 = vst [vmem:[#allocation2 + $0xb8] sm:$0x3] 0.0
        %593 = vst [vmem:[#allocation2 + $0xd0] sm:$0x3] 0.0
        %594 = vst [vmem:[#allocation2 + $0xe8] sm:$0x3] 0.0
        %595 = vst [vmem:[#allocation2 + $0x100] sm:$0x3] 0.0
        %596 = vst [vmem:[#allocation2 + $0x118] sm:$0x3] 0.0
        %597 = vst [vmem:[#allocation2 + $0x130] sm:$0x3] 0.0
        %598 = vst [vmem:[#allocation2 + $0x148] sm:$0x3] 0.0
        %599 = vst [vmem:[#allocation2 + $0x160] sm:$0x3] 0.0
        %600 = vst [vmem:[#allocation2 + $0x178] sm:$0x3] 0.0
        %601 = vst [vmem:[#allocation2 + $0x190] sm:$0x3] 0.0
        %602 = vst [vmem:[#allocation2 + $0x1a8] sm:$0x3] 0.0
        %603 = vst [vmem:[#allocation2 + $0x1c0] sm:$0x3] 0.0
        %604 = vst [vmem:[#allocation2 + $0x1d8] sm:$0x3] 0.0
        %605 = vst [vmem:[#allocation2 + $0x1f0] sm:$0x3] 0.0
        %606 = vst [vmem:[#allocation2 + $0x208] sm:$0x3] 0.0
        %607 = vst [vmem:[#allocation2 + $0x220] sm:$0x3] 0.0
        %608 = vst [vmem:[#allocation2 + $0x238] sm:$0x3] 0.0
        %609 = vst [vmem:[#allocation2 + $0x250] sm:$0x3] 0.0
        %610 = vst [vmem:[#allocation2 + $0x268] sm:$0x3] 0.0
        %611 = vst [vmem:[#allocation2 + $0x280] sm:$0x3] 0.0
        %612 = vst [vmem:[#allocation2 + $0x298] sm:$0x3] 0.0
        %613 = vst [vmem:[#allocation2 + $0x2b0] sm:$0x3] 0.0
        %614 = vst [vmem:[#allocation2 + $0x2c8] sm:$0x3] 0.0
        %615 = vst [vmem:[#allocation2 + $0x2e0] sm:$0x3] 0.0
        %616 = vst [vmem:[#allocation2 + $0x2f8] sm:$0x3] 0.0
        %617 = vst [vmem:[#allocation2 + $0x310] sm:$0x3] 0.0
        %618 = vst [vmem:[#allocation2 + $0x328] sm:$0x3] 0.0
        %619 = vst [vmem:[#allocation2 + $0x340] sm:$0x3] 0.0
        %620 = vst [vmem:[#allocation2 + $0x358] sm:$0x3] 0.0
        %621 = vst [vmem:[#allocation2 + $0x370] sm:$0x3] 0.0
        %622 = vst [vmem:[#allocation2 + $0x388] sm:$0x3] 0.0
        %623 = vst [vmem:[#allocation2 + $0x3a0] sm:$0x3] 0.0
        %624 = vst [vmem:[#allocation2 + $0x3b8] sm:$0x3] 0.0
        %625 = vst [vmem:[#allocation2 + $0x3d0] sm:$0x3] 0.0
        %626 = vst [vmem:[#allocation2 + $0x3e8] sm:$0x3] 0.0
        %627 = vst [vmem:[#allocation2 + $0x400] sm:$0x3] 0.0
        %628 = vst [vmem:[#allocation2 + $0x418] sm:$0x3] 0.0
        %629 = vst [vmem:[#allocation2 + $0x430] sm:$0x3] 0.0
        %630 = vst [vmem:[#allocation2 + $0x448] sm:$0x3] 0.0
        %631 = vst [vmem:[#allocation2 + $0x460] sm:$0x3] 0.0
        %632 = vst [vmem:[#allocation2 + $0x478] sm:$0x3] 0.0
        %p633 = scmp.gt.s32.totalorder %s34, 0
        %s634 = scalar_select %p633, 1.0, 0.0
        %p635 = scmp.lt.s32.totalorder %s34, 0
        %s636 = scalar_select %p635, 1.0, 0.0
        %v637 = vld [vmem:[%s457] sm:$0xff]
        %v638 = vld [vmem:[%s457 + $0x8] sm:$0xff]
        %v639 = vld [vmem:[%s457 + $0x10] sm:$0xff]
        %v640 = vld [vmem:[%s457 + $0x18] sm:$0xff]
        %v641 = vld [vmem:[%s457 + $0x20] sm:$0xff]
        %v642 = vld [vmem:[%s457 + $0x28] sm:$0xff]
        %v643 = vld [vmem:[%s457 + $0x30] sm:$0xff]
        %v644 = vld [vmem:[%s457 + $0x38] sm:$0xff]
        %v645 = vstv %s634
        %v646 = vmul.f32 %v637, %v645
        %v647 = vmul.f32 %v638, %v645
        %v648 = vmul.f32 %v639, %v645
        %v649 = vmul.f32 %v640, %v645
        %v650 = vmul.f32 %v641, %v645
        %v651 = vmul.f32 %v642, %v645
        %v652 = vmul.f32 %v643, %v645
        %v653 = vmul.f32 %v644, %v645
        %v654 = vld [vmem:[%s466] sm:$0xff]
        %v655 = vld [vmem:[%s466 + $0x8] sm:$0xff]
        %v656 = vld [vmem:[%s466 + $0x10] sm:$0xff]
        %v657 = vld [vmem:[%s466 + $0x18] sm:$0xff]
        %v658 = vld [vmem:[%s466 + $0x20] sm:$0xff]
        %v659 = vld [vmem:[%s466 + $0x28] sm:$0xff]
        %v660 = vld [vmem:[%s466 + $0x30] sm:$0xff]
        %v661 = vld [vmem:[%s466 + $0x38] sm:$0xff]
        %v662 = vstv %s636
        %v663 = vmul.f32 %v654, %v662
        %v664 = vmul.f32 %v655, %v662
        %v665 = vmul.f32 %v656, %v662
        %v666 = vmul.f32 %v657, %v662
        %v667 = vmul.f32 %v658, %v662
        %v668 = vmul.f32 %v659, %v662
        %v669 = vmul.f32 %v660, %v662
        %v670 = vmul.f32 %v661, %v662
        %v671 = vadd.f32 %v646, %v648
        %v672 = vadd.f32 %v647, %v649
        %v673 = vadd.f32 %v650, %v652
        %v674 = vadd.f32 %v651, %v653
        %v675 = vsub.f32 %v646, %v648
        %v676 = vsub.f32 %v647, %v649
        %v677 = vsub.f32 %v650, %v652
        %v678 = vsub.f32 %v651, %v653
        %v679 = vadd.f32 %v671, %v673
        %v680 = vadd.f32 %v672, %v674
        %681 = vst [vmem:[#allocation2 + $0x8] sm:$0xff] %v679
        %682 = vst [vmem:[#allocation2 + $0x20] sm:$0xff] %v680
        %v683 = vsub.f32 %v671, %v673
        %v684 = vsub.f32 %v672, %v674
        %s685 = scalar_lea.vmem [#allocation2], 288
        %686 = vst [vmem:[%s685 + $0x8] sm:$0xff] %v683
        %687 = vst [vmem:[%s685 + $0x20] sm:$0xff] %v684
        %v688 = vadd.f32 %v675, %v677
        %v689 = vadd.f32 %v676, %v678
        %s690 = scalar_lea.vmem [#allocation2], 576
        %691 = vst [vmem:[%s690 + $0x8] sm:$0xff] %v688
        %692 = vst [vmem:[%s690 + $0x20] sm:$0xff] %v689
        %v693 = vsub.f32 %v675, %v677
        %v694 = vsub.f32 %v676, %v678
        %s695 = scalar_lea.vmem [#allocation2], 864
        %696 = vst [vmem:[%s695 + $0x8] sm:$0xff] %v693
        %697 = vst [vmem:[%s695 + $0x20] sm:$0xff] %v694
        %v698 = vld [vmem:[%s448] sm:$0xff]
        %v699 = vld [vmem:[%s448 + $0x8] sm:$0xff]
        %v700 = vld [vmem:[%s448 + $0x10] sm:$0xff]
        %v701 = vld [vmem:[%s448 + $0x18] sm:$0xff]
        %v702 = vld [vmem:[%s448 + $0x20] sm:$0xff]
        %v703 = vld [vmem:[%s448 + $0x28] sm:$0xff]
        %v704 = vld [vmem:[%s448 + $0x30] sm:$0xff]
        %v705 = vld [vmem:[%s448 + $0x38] sm:$0xff]
        %v706 = vld [vmem:[%s448 + $0x40] sm:$0xff]
        %v707 = vld [vmem:[%s448 + $0x48] sm:$0xff]
        %v708 = vld [vmem:[%s448 + $0x50] sm:$0xff]
        %v709 = vld [vmem:[%s448 + $0x58] sm:$0xff]
        %v710 = vld [vmem:[%s448 + $0x60] sm:$0xff]
        %v711 = vld [vmem:[%s448 + $0x68] sm:$0xff]
        %v712 = vld [vmem:[%s448 + $0x70] sm:$0xff]
        %v713 = vld [vmem:[%s448 + $0x78] sm:$0xff]
        %v714 = vld [vmem:[%s448 + $0x80] sm:$0xff]
        %v715 = vld [vmem:[%s448 + $0x88] sm:$0xff]
        %v716 = vld [vmem:[%s448 + $0x90] sm:$0xff]
        %v717 = vld [vmem:[%s448 + $0x98] sm:$0xff]
        %v718 = vld [vmem:[%s448 + $0xa0] sm:$0xff]
        %v719 = vld [vmem:[%s448 + $0xa8] sm:$0xff]
        %v720 = vld [vmem:[%s448 + $0xb0] sm:$0xff]
        %v721 = vld [vmem:[%s448 + $0xb8] sm:$0xff]
        %v722 = vld [vmem:[%s448 + $0xc0] sm:$0xff]
        %v723 = vld [vmem:[%s448 + $0xc8] sm:$0xff]
        %v724 = vld [vmem:[%s448 + $0xd0] sm:$0xff]
        %v725 = vld [vmem:[%s448 + $0xd8] sm:$0xff]
        %v726 = vld [vmem:[%s448 + $0xe0] sm:$0xff]
        %v727 = vld [vmem:[%s448 + $0xe8] sm:$0xff]
        %v728 = vld [vmem:[%s448 + $0xf0] sm:$0xff]
        %v729 = vld [vmem:[%s448 + $0xf8] sm:$0xff]
        %v730 = vadd.f32 %v698, %v706
        %v731 = vadd.f32 %v699, %v707
        %v732 = vadd.f32 %v700, %v708
        %v733 = vadd.f32 %v701, %v709
        %v734 = vadd.f32 %v702, %v710
        %v735 = vadd.f32 %v703, %v711
        %v736 = vadd.f32 %v704, %v712
        %v737 = vadd.f32 %v705, %v713
        %v738 = vadd.f32 %v714, %v722
        %v739 = vadd.f32 %v715, %v723
        %v740 = vadd.f32 %v716, %v724
        %v741 = vadd.f32 %v717, %v725
        %v742 = vadd.f32 %v718, %v726
        %v743 = vadd.f32 %v719, %v727
        %v744 = vadd.f32 %v720, %v728
        %v745 = vadd.f32 %v721, %v729
        %v746 = vsub.f32 %v698, %v706
        %v747 = vsub.f32 %v699, %v707
        %v748 = vsub.f32 %v700, %v708
        %v749 = vsub.f32 %v701, %v709
        %v750 = vsub.f32 %v702, %v710
        %v751 = vsub.f32 %v703, %v711
        %v752 = vsub.f32 %v704, %v712
        %v753 = vsub.f32 %v705, %v713
        %v754 = vsub.f32 %v714, %v722
        %v755 = vsub.f32 %v715, %v723
        %v756 = vsub.f32 %v716, %v724
        %v757 = vsub.f32 %v717, %v725
        %v758 = vsub.f32 %v718, %v726
        %v759 = vsub.f32 %v719, %v727
        %v760 = vsub.f32 %v720, %v728
        %v761 = vsub.f32 %v721, %v729
        %v762 = vadd.f32 %v730, %v738
        %v763 = vadd.f32 %v731, %v739
        %v764 = vadd.f32 %v732, %v740
        %v765 = vadd.f32 %v733, %v741
        %v766 = vadd.f32 %v734, %v742
        %v767 = vadd.f32 %v735, %v743
        %v768 = vadd.f32 %v736, %v744
        %v769 = vadd.f32 %v737, %v745
        %s770 = scalar_lea.vmem [#allocation2], 48
        %771 = vst [vmem:[%s770 + $0x8] sm:$0xff] %v762
        %772 = vst [vmem:[%s770 + $0x20] sm:$0xff] %v763
        %773 = vst [vmem:[%s770 + $0x38] sm:$0xff] %v764
        %774 = vst [vmem:[%s770 + $0x50] sm:$0xff] %v765
        %775 = vst [vmem:[%s770 + $0x68] sm:$0xff] %v766
        %776 = vst [vmem:[%s770 + $0x80] sm:$0xff] %v767
        %777 = vst [vmem:[%s770 + $0x98] sm:$0xff] %v768
        %778 = vst [vmem:[%s770 + $0xb0] sm:$0xff] %v769
        %v779 = vsub.f32 %v730, %v738
        %v780 = vsub.f32 %v731, %v739
        %v781 = vsub.f32 %v732, %v740
        %v782 = vsub.f32 %v733, %v741
        %v783 = vsub.f32 %v734, %v742
        %v784 = vsub.f32 %v735, %v743
        %v785 = vsub.f32 %v736, %v744
        %v786 = vsub.f32 %v737, %v745
        %s787 = scalar_lea.vmem [#allocation2], 336
        %788 = vst [vmem:[%s787 + $0x8] sm:$0xff] %v779
        %789 = vst [vmem:[%s787 + $0x20] sm:$0xff] %v780
        %790 = vst [vmem:[%s787 + $0x38] sm:$0xff] %v781
        %791 = vst [vmem:[%s787 + $0x50] sm:$0xff] %v782
        %792 = vst [vmem:[%s787 + $0x68] sm:$0xff] %v783
        %793 = vst [vmem:[%s787 + $0x80] sm:$0xff] %v784
        %794 = vst [vmem:[%s787 + $0x98] sm:$0xff] %v785
        %795 = vst [vmem:[%s787 + $0xb0] sm:$0xff] %v786
        %v796 = vadd.f32 %v746, %v754
        %v797 = vadd.f32 %v747, %v755
        %v798 = vadd.f32 %v748, %v756
        %v799 = vadd.f32 %v749, %v757
        %v800 = vadd.f32 %v750, %v758
        %v801 = vadd.f32 %v751, %v759
        %v802 = vadd.f32 %v752, %v760
        %v803 = vadd.f32 %v753, %v761
        %s804 = scalar_lea.vmem [#allocation2], 624
        %805 = vst [vmem:[%s804 + $0x8] sm:$0xff] %v796
        %806 = vst [vmem:[%s804 + $0x20] sm:$0xff] %v797
        %807 = vst [vmem:[%s804 + $0x38] sm:$0xff] %v798
        %808 = vst [vmem:[%s804 + $0x50] sm:$0xff] %v799
        %809 = vst [vmem:[%s804 + $0x68] sm:$0xff] %v800
        %810 = vst [vmem:[%s804 + $0x80] sm:$0xff] %v801
        %811 = vst [vmem:[%s804 + $0x98] sm:$0xff] %v802
        %812 = vst [vmem:[%s804 + $0xb0] sm:$0xff] %v803
        %v813 = vsub.f32 %v746, %v754
        %v814 = vsub.f32 %v747, %v755
        %v815 = vsub.f32 %v748, %v756
        %v816 = vsub.f32 %v749, %v757
        %v817 = vsub.f32 %v750, %v758
        %v818 = vsub.f32 %v751, %v759
        %v819 = vsub.f32 %v752, %v760
        %v820 = vsub.f32 %v753, %v761
        %s821 = scalar_lea.vmem [#allocation2], 912
        %822 = vst [vmem:[%s821 + $0x8] sm:$0xff] %v813
        %823 = vst [vmem:[%s821 + $0x20] sm:$0xff] %v814
        %824 = vst [vmem:[%s821 + $0x38] sm:$0xff] %v815
        %825 = vst [vmem:[%s821 + $0x50] sm:$0xff] %v816
        %826 = vst [vmem:[%s821 + $0x68] sm:$0xff] %v817
        %827 = vst [vmem:[%s821 + $0x80] sm:$0xff] %v818
        %828 = vst [vmem:[%s821 + $0x98] sm:$0xff] %v819
        %829 = vst [vmem:[%s821 + $0xb0] sm:$0xff] %v820
        %v830 = vadd.f32 %v663, %v665
        %v831 = vadd.f32 %v664, %v666
        %v832 = vadd.f32 %v667, %v669
        %v833 = vadd.f32 %v668, %v670
        %v834 = vsub.f32 %v663, %v665
        %v835 = vsub.f32 %v664, %v666
        %v836 = vsub.f32 %v667, %v669
        %v837 = vsub.f32 %v668, %v670
        %v838 = vadd.f32 %v830, %v832
        %v839 = vadd.f32 %v831, %v833
        %s840 = scalar_lea.vmem [#allocation2], 240
        %841 = vst [vmem:[%s840 + $0x8] sm:$0xff] %v838
        %842 = vst [vmem:[%s840 + $0x20] sm:$0xff] %v839
        %v843 = vsub.f32 %v830, %v832
        %v844 = vsub.f32 %v831, %v833
        %s845 = scalar_lea.vmem [#allocation2], 528
        %846 = vst [vmem:[%s845 + $0x8] sm:$0xff] %v843
        %847 = vst [vmem:[%s845 + $0x20] sm:$0xff] %v844
        %v848 = vadd.f32 %v834, %v836
        %v849 = vadd.f32 %v835, %v837
        %s850 = scalar_lea.vmem [#allocation2], 816
        %851 = vst [vmem:[%s850 + $0x8] sm:$0xff] %v848
        %852 = vst [vmem:[%s850 + $0x20] sm:$0xff] %v849
        %v853 = vsub.f32 %v834, %v836
        %v854 = vsub.f32 %v835, %v837
        %s855 = scalar_lea.vmem [#allocation2], 1104
        %856 = vst [vmem:[%s855 + $0x8] sm:$0xff] %v853
        %857 = vst [vmem:[%s855 + $0x20] sm:$0xff] %v854
        %v858 = vld [vmem:[#allocation9] sm:$0xf]
        %v859 = vld [vmem:[#allocation9 + $0x4] sm:$0xf]
        %v860 = vld [vmem:[#allocation9 + $0x8] sm:$0xf]
        %v861 = vld [vmem:[#allocation9 + $0xc] sm:$0xf]
        %v862 = vld [vmem:[#allocation9 + $0x10] sm:$0xf]
        %v863 = vld [vmem:[#allocation9 + $0x14] sm:$0xf]
        %v864 = vld [vmem:[#allocation9 + $0x18] sm:$0xf]
        %v865 = vld [vmem:[#allocation9 + $0x1c] sm:$0xf]
        %v866 = vld [vmem:[#allocation9 + $0x20] sm:$0xf]
        %v867 = vld [vmem:[#allocation9 + $0x24] sm:$0xf]
        %v868 = vld [vmem:[#allocation9 + $0x28] sm:$0xf]
        %v869 = vld [vmem:[#allocation9 + $0x2c] sm:$0xf]
        %v870 = vld [vmem:[#allocation9 + $0x30] sm:$0xf]
        %v871 = vld [vmem:[#allocation9 + $0x34] sm:$0xf]
        %v872 = vld [vmem:[#allocation9 + $0x38] sm:$0xf]
        %v873 = vld [vmem:[#allocation9 + $0x3c] sm:$0xf]
        %v874 = vld [vmem:[#allocation9 + $0x40] sm:$0xf]
        %v875 = vld [vmem:[#allocation9 + $0x44] sm:$0xf]
        %v876 = vld [vmem:[#allocation9 + $0x48] sm:$0xf]
        %v877 = vld [vmem:[#allocation9 + $0x4c] sm:$0xf]
        %v878 = vld [vmem:[#allocation9 + $0x50] sm:$0xf]
        %v879 = vld [vmem:[#allocation9 + $0x54] sm:$0xf]
        %v880 = vld [vmem:[#allocation9 + $0x58] sm:$0xf]
        %v881 = vld [vmem:[#allocation9 + $0x5c] sm:$0xf]
        %v882 = vld [vmem:[#allocation9 + $0x60] sm:$0xf]
        %v885 = vunpack.c.l.s4 1966171168
        %v886 = vunpack.c.0.s8 %v885
        %v887 = vlaneseq
        %v888 = vshrl.u32 %v887, 7
        %v889 = vsub.s32 %v886, %v888
        %v890 = vrot.slane %v858, %v889
        %v891 = vcombine.high %v890, %v890
        %v893 = vunpack.c.l.s4 1966171168
        %v894 = vunpack.c.0.s8 %v893
        %v895 = vlaneseq
        %v896 = vshrl.u32 %v895, 7
        %v897 = vsub.s32 %v894, %v896
        %v898 = vrot.slane %v890, %v897
        %v900 = vunpack.c.l.s4 1966171168
        %v901 = vunpack.c.0.s8 %v900
        %v902 = vlaneseq
        %v903 = vshrl.u32 %v902, 7
        %v904 = vsub.s32 %v901, %v903
        %v905 = vrot.slane %v891, %v904
        %v906 = vcombine.high %v898, %v898
        %v907 = vcombine.high %v905, %v905
        %v910 = vunpack.c.l.s4 1966171168
        %v911 = vunpack.c.0.s8 %v910
        %v912 = vlaneseq
        %v913 = vshrl.u32 %v912, 7
        %v914 = vsub.s32 %v911, %v913
        %v915 = vrot.slane %v859, %v914
        %v916 = vcombine.high %v915, %v915
        %v918 = vunpack.c.l.s4 1966171168
        %v919 = vunpack.c.0.s8 %v918
        %v920 = vlaneseq
        %v921 = vshrl.u32 %v920, 7
        %v922 = vsub.s32 %v919, %v921
        %v923 = vrot.slane %v915, %v922
        %v925 = vunpack.c.l.s4 1966171168
        %v926 = vunpack.c.0.s8 %v925
        %v927 = vlaneseq
        %v928 = vshrl.u32 %v927, 7
        %v929 = vsub.s32 %v926, %v928
        %v930 = vrot.slane %v916, %v929
        %v931 = vcombine.high %v923, %v923
        %v932 = vcombine.high %v930, %v930
        %v935 = vunpack.c.l.s4 1966171168
        %v936 = vunpack.c.0.s8 %v935
        %v937 = vlaneseq
        %v938 = vshrl.u32 %v937, 7
        %v939 = vsub.s32 %v936, %v938
        %v940 = vrot.slane %v860, %v939
        %v941 = vcombine.high %v940, %v940
        %v943 = vunpack.c.l.s4 1966171168
        %v944 = vunpack.c.0.s8 %v943
        %v945 = vlaneseq
        %v946 = vshrl.u32 %v945, 7
        %v947 = vsub.s32 %v944, %v946
        %v948 = vrot.slane %v940, %v947
        %v950 = vunpack.c.l.s4 1966171168
        %v951 = vunpack.c.0.s8 %v950
        %v952 = vlaneseq
        %v953 = vshrl.u32 %v952, 7
        %v954 = vsub.s32 %v951, %v953
        %v955 = vrot.slane %v941, %v954
        %v956 = vcombine.high %v948, %v948
        %v957 = vcombine.high %v955, %v955
        %v960 = vunpack.c.l.s4 1966171168
        %v961 = vunpack.c.0.s8 %v960
        %v962 = vlaneseq
        %v963 = vshrl.u32 %v962, 7
        %v964 = vsub.s32 %v961, %v963
        %v965 = vrot.slane %v861, %v964
        %v966 = vcombine.high %v965, %v965
        %v968 = vunpack.c.l.s4 1966171168
        %v969 = vunpack.c.0.s8 %v968
        %v970 = vlaneseq
        %v971 = vshrl.u32 %v970, 7
        %v972 = vsub.s32 %v969, %v971
        %v973 = vrot.slane %v965, %v972
        %v975 = vunpack.c.l.s4 1966171168
        %v976 = vunpack.c.0.s8 %v975
        %v977 = vlaneseq
        %v978 = vshrl.u32 %v977, 7
        %v979 = vsub.s32 %v976, %v978
        %v980 = vrot.slane %v966, %v979
        %v981 = vcombine.high %v973, %v973
        %v982 = vcombine.high %v980, %v980
        %v985 = vunpack.c.l.s4 1966171168
        %v986 = vunpack.c.0.s8 %v985
        %v987 = vlaneseq
        %v988 = vshrl.u32 %v987, 7
        %v989 = vsub.s32 %v986, %v988
        %v990 = vrot.slane %v862, %v989
        %v991 = vcombine.high %v990, %v990
        %v993 = vunpack.c.l.s4 1966171168
        %v994 = vunpack.c.0.s8 %v993
        %v995 = vlaneseq
        %v996 = vshrl.u32 %v995, 7
        %v997 = vsub.s32 %v994, %v996
        %v998 = vrot.slane %v990, %v997
        %v1000 = vunpack.c.l.s4 1966171168
        %v1001 = vunpack.c.0.s8 %v1000
        %v1002 = vlaneseq
        %v1003 = vshrl.u32 %v1002, 7
        %v1004 = vsub.s32 %v1001, %v1003
        %v1005 = vrot.slane %v991, %v1004
        %v1006 = vcombine.high %v998, %v998
        %v1007 = vcombine.high %v1005, %v1005
        %v1010 = vunpack.c.l.s4 1966171168
        %v1011 = vunpack.c.0.s8 %v1010
        %v1012 = vlaneseq
        %v1013 = vshrl.u32 %v1012, 7
        %v1014 = vsub.s32 %v1011, %v1013
        %v1015 = vrot.slane %v863, %v1014
        %v1016 = vcombine.high %v1015, %v1015
        %v1018 = vunpack.c.l.s4 1966171168
        %v1019 = vunpack.c.0.s8 %v1018
        %v1020 = vlaneseq
        %v1021 = vshrl.u32 %v1020, 7
        %v1022 = vsub.s32 %v1019, %v1021
        %v1023 = vrot.slane %v1015, %v1022
        %v1025 = vunpack.c.l.s4 1966171168
        %v1026 = vunpack.c.0.s8 %v1025
        %v1027 = vlaneseq
        %v1028 = vshrl.u32 %v1027, 7
        %v1029 = vsub.s32 %v1026, %v1028
        %v1030 = vrot.slane %v1016, %v1029
        %v1031 = vcombine.high %v1023, %v1023
        %v1032 = vcombine.high %v1030, %v1030
        %v1035 = vunpack.c.l.s4 1966171168
        %v1036 = vunpack.c.0.s8 %v1035
        %v1037 = vlaneseq
        %v1038 = vshrl.u32 %v1037, 7
        %v1039 = vsub.s32 %v1036, %v1038
        %v1040 = vrot.slane %v864, %v1039
        %v1041 = vcombine.high %v1040, %v1040
        %v1043 = vunpack.c.l.s4 1966171168
        %v1044 = vunpack.c.0.s8 %v1043
        %v1045 = vlaneseq
        %v1046 = vshrl.u32 %v1045, 7
        %v1047 = vsub.s32 %v1044, %v1046
        %v1048 = vrot.slane %v1040, %v1047
        %v1050 = vunpack.c.l.s4 1966171168
        %v1051 = vunpack.c.0.s8 %v1050
        %v1052 = vlaneseq
        %v1053 = vshrl.u32 %v1052, 7
        %v1054 = vsub.s32 %v1051, %v1053
        %v1055 = vrot.slane %v1041, %v1054
        %v1056 = vcombine.high %v1048, %v1048
        %v1057 = vcombine.high %v1055, %v1055
        %v1060 = vunpack.c.l.s4 1966171168
        %v1061 = vunpack.c.0.s8 %v1060
        %v1062 = vlaneseq
        %v1063 = vshrl.u32 %v1062, 7
        %v1064 = vsub.s32 %v1061, %v1063
        %v1065 = vrot.slane %v865, %v1064
        %v1066 = vcombine.high %v1065, %v1065
        %v1068 = vunpack.c.l.s4 1966171168
        %v1069 = vunpack.c.0.s8 %v1068
        %v1070 = vlaneseq
        %v1071 = vshrl.u32 %v1070, 7
        %v1072 = vsub.s32 %v1069, %v1071
        %v1073 = vrot.slane %v1065, %v1072
        %v1075 = vunpack.c.l.s4 1966171168
        %v1076 = vunpack.c.0.s8 %v1075
        %v1077 = vlaneseq
        %v1078 = vshrl.u32 %v1077, 7
        %v1079 = vsub.s32 %v1076, %v1078
        %v1080 = vrot.slane %v1066, %v1079
        %v1081 = vcombine.high %v1073, %v1073
        %v1082 = vcombine.high %v1080, %v1080
        %v1085 = vunpack.c.l.s4 1966171168
        %v1086 = vunpack.c.0.s8 %v1085
        %v1087 = vlaneseq
        %v1088 = vshrl.u32 %v1087, 7
        %v1089 = vsub.s32 %v1086, %v1088
        %v1090 = vrot.slane %v866, %v1089
        %v1091 = vcombine.high %v1090, %v1090
        %v1093 = vunpack.c.l.s4 1966171168
        %v1094 = vunpack.c.0.s8 %v1093
        %v1095 = vlaneseq
        %v1096 = vshrl.u32 %v1095, 7
        %v1097 = vsub.s32 %v1094, %v1096
        %v1098 = vrot.slane %v1090, %v1097
        %v1100 = vunpack.c.l.s4 1966171168
        %v1101 = vunpack.c.0.s8 %v1100
        %v1102 = vlaneseq
        %v1103 = vshrl.u32 %v1102, 7
        %v1104 = vsub.s32 %v1101, %v1103
        %v1105 = vrot.slane %v1091, %v1104
        %v1106 = vcombine.high %v1098, %v1098
        %v1107 = vcombine.high %v1105, %v1105
        %v1110 = vunpack.c.l.s4 1966171168
        %v1111 = vunpack.c.0.s8 %v1110
        %v1112 = vlaneseq
        %v1113 = vshrl.u32 %v1112, 7
        %v1114 = vsub.s32 %v1111, %v1113
        %v1115 = vrot.slane %v867, %v1114
        %v1116 = vcombine.high %v1115, %v1115
        %v1118 = vunpack.c.l.s4 1966171168
        %v1119 = vunpack.c.0.s8 %v1118
        %v1120 = vlaneseq
        %v1121 = vshrl.u32 %v1120, 7
        %v1122 = vsub.s32 %v1119, %v1121
        %v1123 = vrot.slane %v1115, %v1122
        %v1125 = vunpack.c.l.s4 1966171168
        %v1126 = vunpack.c.0.s8 %v1125
        %v1127 = vlaneseq
        %v1128 = vshrl.u32 %v1127, 7
        %v1129 = vsub.s32 %v1126, %v1128
        %v1130 = vrot.slane %v1116, %v1129
        %v1131 = vcombine.high %v1123, %v1123
        %v1132 = vcombine.high %v1130, %v1130
        %v1135 = vunpack.c.l.s4 1966171168
        %v1136 = vunpack.c.0.s8 %v1135
        %v1137 = vlaneseq
        %v1138 = vshrl.u32 %v1137, 7
        %v1139 = vsub.s32 %v1136, %v1138
        %v1140 = vrot.slane %v868, %v1139
        %v1141 = vcombine.high %v1140, %v1140
        %v1143 = vunpack.c.l.s4 1966171168
        %v1144 = vunpack.c.0.s8 %v1143
        %v1145 = vlaneseq
        %v1146 = vshrl.u32 %v1145, 7
        %v1147 = vsub.s32 %v1144, %v1146
        %v1148 = vrot.slane %v1140, %v1147
        %v1150 = vunpack.c.l.s4 1966171168
        %v1151 = vunpack.c.0.s8 %v1150
        %v1152 = vlaneseq
        %v1153 = vshrl.u32 %v1152, 7
        %v1154 = vsub.s32 %v1151, %v1153
        %v1155 = vrot.slane %v1141, %v1154
        %v1156 = vcombine.high %v1148, %v1148
        %v1157 = vcombine.high %v1155, %v1155
        %v1160 = vunpack.c.l.s4 1966171168
        %v1161 = vunpack.c.0.s8 %v1160
        %v1162 = vlaneseq
        %v1163 = vshrl.u32 %v1162, 7
        %v1164 = vsub.s32 %v1161, %v1163
        %v1165 = vrot.slane %v869, %v1164
        %v1166 = vcombine.high %v1165, %v1165
        %v1168 = vunpack.c.l.s4 1966171168
        %v1169 = vunpack.c.0.s8 %v1168
        %v1170 = vlaneseq
        %v1171 = vshrl.u32 %v1170, 7
        %v1172 = vsub.s32 %v1169, %v1171
        %v1173 = vrot.slane %v1165, %v1172
        %v1175 = vunpack.c.l.s4 1966171168
        %v1176 = vunpack.c.0.s8 %v1175
        %v1177 = vlaneseq
        %v1178 = vshrl.u32 %v1177, 7
        %v1179 = vsub.s32 %v1176, %v1178
        %v1180 = vrot.slane %v1166, %v1179
        %v1181 = vcombine.high %v1173, %v1173
        %v1182 = vcombine.high %v1180, %v1180
        %v1185 = vunpack.c.l.s4 1966171168
        %v1186 = vunpack.c.0.s8 %v1185
        %v1187 = vlaneseq
        %v1188 = vshrl.u32 %v1187, 7
        %v1189 = vsub.s32 %v1186, %v1188
        %v1190 = vrot.slane %v870, %v1189
        %v1191 = vcombine.high %v1190, %v1190
        %v1193 = vunpack.c.l.s4 1966171168
        %v1194 = vunpack.c.0.s8 %v1193
        %v1195 = vlaneseq
        %v1196 = vshrl.u32 %v1195, 7
        %v1197 = vsub.s32 %v1194, %v1196
        %v1198 = vrot.slane %v1190, %v1197
        %v1200 = vunpack.c.l.s4 1966171168
        %v1201 = vunpack.c.0.s8 %v1200
        %v1202 = vlaneseq
        %v1203 = vshrl.u32 %v1202, 7
        %v1204 = vsub.s32 %v1201, %v1203
        %v1205 = vrot.slane %v1191, %v1204
        %v1206 = vcombine.high %v1198, %v1198
        %v1207 = vcombine.high %v1205, %v1205
        %v1210 = vunpack.c.l.s4 1966171168
        %v1211 = vunpack.c.0.s8 %v1210
        %v1212 = vlaneseq
        %v1213 = vshrl.u32 %v1212, 7
        %v1214 = vsub.s32 %v1211, %v1213
        %v1215 = vrot.slane %v871, %v1214
        %v1216 = vcombine.high %v1215, %v1215
        %v1218 = vunpack.c.l.s4 1966171168
        %v1219 = vunpack.c.0.s8 %v1218
        %v1220 = vlaneseq
        %v1221 = vshrl.u32 %v1220, 7
        %v1222 = vsub.s32 %v1219, %v1221
        %v1223 = vrot.slane %v1215, %v1222
        %v1225 = vunpack.c.l.s4 1966171168
        %v1226 = vunpack.c.0.s8 %v1225
        %v1227 = vlaneseq
        %v1228 = vshrl.u32 %v1227, 7
        %v1229 = vsub.s32 %v1226, %v1228
        %v1230 = vrot.slane %v1216, %v1229
        %v1231 = vcombine.high %v1223, %v1223
        %v1232 = vcombine.high %v1230, %v1230
        %v1235 = vunpack.c.l.s4 1966171168
        %v1236 = vunpack.c.0.s8 %v1235
        %v1237 = vlaneseq
        %v1238 = vshrl.u32 %v1237, 7
        %v1239 = vsub.s32 %v1236, %v1238
        %v1240 = vrot.slane %v872, %v1239
        %v1241 = vcombine.high %v1240, %v1240
        %v1243 = vunpack.c.l.s4 1966171168
        %v1244 = vunpack.c.0.s8 %v1243
        %v1245 = vlaneseq
        %v1246 = vshrl.u32 %v1245, 7
        %v1247 = vsub.s32 %v1244, %v1246
        %v1248 = vrot.slane %v1240, %v1247
        %v1250 = vunpack.c.l.s4 1966171168
        %v1251 = vunpack.c.0.s8 %v1250
        %v1252 = vlaneseq
        %v1253 = vshrl.u32 %v1252, 7
        %v1254 = vsub.s32 %v1251, %v1253
        %v1255 = vrot.slane %v1241, %v1254
        %v1256 = vcombine.high %v1248, %v1248
        %v1257 = vcombine.high %v1255, %v1255
        %v1260 = vunpack.c.l.s4 1966171168
        %v1261 = vunpack.c.0.s8 %v1260
        %v1262 = vlaneseq
        %v1263 = vshrl.u32 %v1262, 7
        %v1264 = vsub.s32 %v1261, %v1263
        %v1265 = vrot.slane %v873, %v1264
        %v1266 = vcombine.high %v1265, %v1265
        %v1268 = vunpack.c.l.s4 1966171168
        %v1269 = vunpack.c.0.s8 %v1268
        %v1270 = vlaneseq
        %v1271 = vshrl.u32 %v1270, 7
        %v1272 = vsub.s32 %v1269, %v1271
        %v1273 = vrot.slane %v1265, %v1272
        %v1275 = vunpack.c.l.s4 1966171168
        %v1276 = vunpack.c.0.s8 %v1275
        %v1277 = vlaneseq
        %v1278 = vshrl.u32 %v1277, 7
        %v1279 = vsub.s32 %v1276, %v1278
        %v1280 = vrot.slane %v1266, %v1279
        %v1281 = vcombine.high %v1273, %v1273
        %v1282 = vcombine.high %v1280, %v1280
        %v1285 = vunpack.c.l.s4 1966171168
        %v1286 = vunpack.c.0.s8 %v1285
        %v1287 = vlaneseq
        %v1288 = vshrl.u32 %v1287, 7
        %v1289 = vsub.s32 %v1286, %v1288
        %v1290 = vrot.slane %v874, %v1289
        %v1291 = vcombine.high %v1290, %v1290
        %v1293 = vunpack.c.l.s4 1966171168
        %v1294 = vunpack.c.0.s8 %v1293
        %v1295 = vlaneseq
        %v1296 = vshrl.u32 %v1295, 7
        %v1297 = vsub.s32 %v1294, %v1296
        %v1298 = vrot.slane %v1290, %v1297
        %v1300 = vunpack.c.l.s4 1966171168
        %v1301 = vunpack.c.0.s8 %v1300
        %v1302 = vlaneseq
        %v1303 = vshrl.u32 %v1302, 7
        %v1304 = vsub.s32 %v1301, %v1303
        %v1305 = vrot.slane %v1291, %v1304
        %v1306 = vcombine.high %v1298, %v1298
        %v1307 = vcombine.high %v1305, %v1305
        %v1310 = vunpack.c.l.s4 1966171168
        %v1311 = vunpack.c.0.s8 %v1310
        %v1312 = vlaneseq
        %v1313 = vshrl.u32 %v1312, 7
        %v1314 = vsub.s32 %v1311, %v1313
        %v1315 = vrot.slane %v875, %v1314
        %v1316 = vcombine.high %v1315, %v1315
        %v1318 = vunpack.c.l.s4 1966171168
        %v1319 = vunpack.c.0.s8 %v1318
        %v1320 = vlaneseq
        %v1321 = vshrl.u32 %v1320, 7
        %v1322 = vsub.s32 %v1319, %v1321
        %v1323 = vrot.slane %v1315, %v1322
        %v1325 = vunpack.c.l.s4 1966171168
        %v1326 = vunpack.c.0.s8 %v1325
        %v1327 = vlaneseq
        %v1328 = vshrl.u32 %v1327, 7
        %v1329 = vsub.s32 %v1326, %v1328
        %v1330 = vrot.slane %v1316, %v1329
        %v1331 = vcombine.high %v1323, %v1323
        %v1332 = vcombine.high %v1330, %v1330
        %v1335 = vunpack.c.l.s4 1966171168
        %v1336 = vunpack.c.0.s8 %v1335
        %v1337 = vlaneseq
        %v1338 = vshrl.u32 %v1337, 7
        %v1339 = vsub.s32 %v1336, %v1338
        %v1340 = vrot.slane %v876, %v1339
        %v1341 = vcombine.high %v1340, %v1340
        %v1343 = vunpack.c.l.s4 1966171168
        %v1344 = vunpack.c.0.s8 %v1343
        %v1345 = vlaneseq
        %v1346 = vshrl.u32 %v1345, 7
        %v1347 = vsub.s32 %v1344, %v1346
        %v1348 = vrot.slane %v1340, %v1347
        %v1350 = vunpack.c.l.s4 1966171168
        %v1351 = vunpack.c.0.s8 %v1350
        %v1352 = vlaneseq
        %v1353 = vshrl.u32 %v1352, 7
        %v1354 = vsub.s32 %v1351, %v1353
        %v1355 = vrot.slane %v1341, %v1354
        %v1356 = vcombine.high %v1348, %v1348
        %v1357 = vcombine.high %v1355, %v1355
        %v1360 = vunpack.c.l.s4 1966171168
        %v1361 = vunpack.c.0.s8 %v1360
        %v1362 = vlaneseq
        %v1363 = vshrl.u32 %v1362, 7
        %v1364 = vsub.s32 %v1361, %v1363
        %v1365 = vrot.slane %v877, %v1364
        %v1366 = vcombine.high %v1365, %v1365
        %v1368 = vunpack.c.l.s4 1966171168
        %v1369 = vunpack.c.0.s8 %v1368
        %v1370 = vlaneseq
        %v1371 = vshrl.u32 %v1370, 7
        %v1372 = vsub.s32 %v1369, %v1371
        %v1373 = vrot.slane %v1365, %v1372
        %v1375 = vunpack.c.l.s4 1966171168
        %v1376 = vunpack.c.0.s8 %v1375
        %v1377 = vlaneseq
        %v1378 = vshrl.u32 %v1377, 7
        %v1379 = vsub.s32 %v1376, %v1378
        %v1380 = vrot.slane %v1366, %v1379
        %v1381 = vcombine.high %v1373, %v1373
        %v1382 = vcombine.high %v1380, %v1380
        %v1385 = vunpack.c.l.s4 1966171168
        %v1386 = vunpack.c.0.s8 %v1385
        %v1387 = vlaneseq
        %v1388 = vshrl.u32 %v1387, 7
        %v1389 = vsub.s32 %v1386, %v1388
        %v1390 = vrot.slane %v878, %v1389
        %v1391 = vcombine.high %v1390, %v1390
        %v1393 = vunpack.c.l.s4 1966171168
        %v1394 = vunpack.c.0.s8 %v1393
        %v1395 = vlaneseq
        %v1396 = vshrl.u32 %v1395, 7
        %v1397 = vsub.s32 %v1394, %v1396
        %v1398 = vrot.slane %v1390, %v1397
        %v1400 = vunpack.c.l.s4 1966171168
        %v1401 = vunpack.c.0.s8 %v1400
        %v1402 = vlaneseq
        %v1403 = vshrl.u32 %v1402, 7
        %v1404 = vsub.s32 %v1401, %v1403
        %v1405 = vrot.slane %v1391, %v1404
        %v1406 = vcombine.high %v1398, %v1398
        %v1407 = vcombine.high %v1405, %v1405
        %v1410 = vunpack.c.l.s4 1966171168
        %v1411 = vunpack.c.0.s8 %v1410
        %v1412 = vlaneseq
        %v1413 = vshrl.u32 %v1412, 7
        %v1414 = vsub.s32 %v1411, %v1413
        %v1415 = vrot.slane %v879, %v1414
        %v1416 = vcombine.high %v1415, %v1415
        %v1418 = vunpack.c.l.s4 1966171168
        %v1419 = vunpack.c.0.s8 %v1418
        %v1420 = vlaneseq
        %v1421 = vshrl.u32 %v1420, 7
        %v1422 = vsub.s32 %v1419, %v1421
        %v1423 = vrot.slane %v1415, %v1422
        %v1425 = vunpack.c.l.s4 1966171168
        %v1426 = vunpack.c.0.s8 %v1425
        %v1427 = vlaneseq
        %v1428 = vshrl.u32 %v1427, 7
        %v1429 = vsub.s32 %v1426, %v1428
        %v1430 = vrot.slane %v1416, %v1429
        %v1431 = vcombine.high %v1423, %v1423
        %v1432 = vcombine.high %v1430, %v1430
        %v1435 = vunpack.c.l.s4 1966171168
        %v1436 = vunpack.c.0.s8 %v1435
        %v1437 = vlaneseq
        %v1438 = vshrl.u32 %v1437, 7
        %v1439 = vsub.s32 %v1436, %v1438
        %v1440 = vrot.slane %v880, %v1439
        %v1441 = vcombine.high %v1440, %v1440
        %v1443 = vunpack.c.l.s4 1966171168
        %v1444 = vunpack.c.0.s8 %v1443
        %v1445 = vlaneseq
        %v1446 = vshrl.u32 %v1445, 7
        %v1447 = vsub.s32 %v1444, %v1446
        %v1448 = vrot.slane %v1440, %v1447
        %v1450 = vunpack.c.l.s4 1966171168
        %v1451 = vunpack.c.0.s8 %v1450
        %v1452 = vlaneseq
        %v1453 = vshrl.u32 %v1452, 7
        %v1454 = vsub.s32 %v1451, %v1453
        %v1455 = vrot.slane %v1441, %v1454
        %v1456 = vcombine.high %v1448, %v1448
        %v1457 = vcombine.high %v1455, %v1455
        %v1460 = vunpack.c.l.s4 1966171168
        %v1461 = vunpack.c.0.s8 %v1460
        %v1462 = vlaneseq
        %v1463 = vshrl.u32 %v1462, 7
        %v1464 = vsub.s32 %v1461, %v1463
        %v1465 = vrot.slane %v881, %v1464
        %v1466 = vcombine.high %v1465, %v1465
        %v1468 = vunpack.c.l.s4 1966171168
        %v1469 = vunpack.c.0.s8 %v1468
        %v1470 = vlaneseq
        %v1471 = vshrl.u32 %v1470, 7
        %v1472 = vsub.s32 %v1469, %v1471
        %v1473 = vrot.slane %v1465, %v1472
        %v1475 = vunpack.c.l.s4 1966171168
        %v1476 = vunpack.c.0.s8 %v1475
        %v1477 = vlaneseq
        %v1478 = vshrl.u32 %v1477, 7
        %v1479 = vsub.s32 %v1476, %v1478
        %v1480 = vrot.slane %v1466, %v1479
        %v1481 = vcombine.high %v1473, %v1473
        %v1482 = vcombine.high %v1480, %v1480
        %v1485 = vunpack.c.l.s4 1966171168
        %v1486 = vunpack.c.0.s8 %v1485
        %v1487 = vlaneseq
        %v1488 = vshrl.u32 %v1487, 7
        %v1489 = vsub.s32 %v1486, %v1488
        %v1490 = vrot.slane %v882, %v1489
        %v1491 = vcombine.high %v1490, %v1490
        %v1493 = vunpack.c.l.s4 1966171168
        %v1494 = vunpack.c.0.s8 %v1493
        %v1495 = vlaneseq
        %v1496 = vshrl.u32 %v1495, 7
        %v1497 = vsub.s32 %v1494, %v1496
        %v1498 = vrot.slane %v1490, %v1497
        %v1500 = vunpack.c.l.s4 1966171168
        %v1501 = vunpack.c.0.s8 %v1500
        %v1502 = vlaneseq
        %v1503 = vshrl.u32 %v1502, 7
        %v1504 = vsub.s32 %v1501, %v1503
        %v1505 = vrot.slane %v1491, %v1504
        %v1506 = vcombine.high %v1498, %v1498
        %v1507 = vcombine.high %v1505, %v1505
        %v1508 = vld [vmem:[#allocation2 + $0x6] sm:$0xff]
        %v1509 = vld [vmem:[#allocation2 + $0x1e] sm:$0xff]
        %v1510 = vld [vmem:[#allocation2 + $0x36] sm:$0xff]
        %v1511 = vld [vmem:[#allocation2 + $0x4e] sm:$0xff]
        %v1512 = vld [vmem:[#allocation2 + $0x66] sm:$0xff]
        %v1513 = vld [vmem:[#allocation2 + $0x7e] sm:$0xff]
        %v1514 = vld [vmem:[#allocation2 + $0x96] sm:$0xff]
        %v1515 = vld [vmem:[#allocation2 + $0xae] sm:$0xff]
        %v1516 = vld [vmem:[#allocation2 + $0x126] sm:$0xff]
        %v1517 = vld [vmem:[#allocation2 + $0x13e] sm:$0xff]
        %v1518 = vld [vmem:[#allocation2 + $0x156] sm:$0xff]
        %v1519 = vld [vmem:[#allocation2 + $0x16e] sm:$0xff]
        %v1520 = vld [vmem:[#allocation2 + $0x186] sm:$0xff]
        %v1521 = vld [vmem:[#allocation2 + $0x19e] sm:$0xff]
        %v1522 = vld [vmem:[#allocation2 + $0x1b6] sm:$0xff]
        %v1523 = vld [vmem:[#allocation2 + $0x1ce] sm:$0xff]
        %v1524 = vld [vmem:[#allocation2 + $0x246] sm:$0xff]
        %v1525 = vld [vmem:[#allocation2 + $0x25e] sm:$0xff]
        %v1526 = vld [vmem:[#allocation2 + $0x276] sm:$0xff]
        %v1527 = vld [vmem:[#allocation2 + $0x28e] sm:$0xff]
        %v1528 = vld [vmem:[#allocation2 + $0x2a6] sm:$0xff]
        %v1529 = vld [vmem:[#allocation2 + $0x2be] sm:$0xff]
        %v1530 = vld [vmem:[#allocation2 + $0x2d6] sm:$0xff]
        %v1531 = vld [vmem:[#allocation2 + $0x2ee] sm:$0xff]
        %v1532 = vld [vmem:[#allocation2 + $0x366] sm:$0xff]
        %v1533 = vld [vmem:[#allocation2 + $0x37e] sm:$0xff]
        %v1534 = vld [vmem:[#allocation2 + $0x396] sm:$0xff]
        %v1535 = vld [vmem:[#allocation2 + $0x3ae] sm:$0xff]
        %v1536 = vld [vmem:[#allocation2 + $0x3c6] sm:$0xff]
        %v1537 = vld [vmem:[#allocation2 + $0x3de] sm:$0xff]
        %v1538 = vld [vmem:[#allocation2 + $0x3f6] sm:$0xff]
        %v1539 = vld [vmem:[#allocation2 + $0x40e] sm:$0xff]
        %v1540 = vlaneseq
        %v1541 = vshrl.u32 %v1540, 7
        %v1542 = vsub.s32 0, %v1541
        %v1543 = vrot.slane %v898, %v1542
        %v1544 = vlaneseq
        %v1545 = vshrl.u32 %v1544, 7
        %v1546 = vsub.s32 0, %v1545
        %v1547 = vrot.slane %v905, %v1546
        %v1548 = vlaneseq
        %v1549 = vshrl.u32 %v1548, 7
        %v1550 = vsub.s32 0, %v1549
        %v1551 = vrot.slane %v906, %v1550
        %v1552 = vlaneseq
        %v1553 = vshrl.u32 %v1552, 7
        %v1554 = vsub.s32 0, %v1553
        %v1555 = vrot.slane %v907, %v1554
        %v1560 = vmul.f32 %v1508, %v1543
        %v1561 = vmul.f32 %v1509, %v1543
        %v1562 = vmul.f32 %v1510, %v1543
        %v1563 = vmul.f32 %v1511, %v1543
        %v1564 = vmul.f32 %v1512, %v1543
        %v1565 = vmul.f32 %v1513, %v1543
        %v1566 = vmul.f32 %v1514, %v1543
        %v1567 = vmul.f32 %v1515, %v1543
        %v1568 = vmul.f32 %v1516, %v1547
        %v1569 = vmul.f32 %v1517, %v1547
        %v1570 = vmul.f32 %v1518, %v1547
        %v1571 = vmul.f32 %v1519, %v1547
        %v1572 = vmul.f32 %v1520, %v1547
        %v1573 = vmul.f32 %v1521, %v1547
        %v1574 = vmul.f32 %v1522, %v1547
        %v1575 = vmul.f32 %v1523, %v1547
        %v1576 = vmul.f32 %v1524, %v1551
        %v1577 = vmul.f32 %v1525, %v1551
        %v1578 = vmul.f32 %v1526, %v1551
        %v1579 = vmul.f32 %v1527, %v1551
        %v1580 = vmul.f32 %v1528, %v1551
        %v1581 = vmul.f32 %v1529, %v1551
        %v1582 = vmul.f32 %v1530, %v1551
        %v1583 = vmul.f32 %v1531, %v1551
        %v1584 = vmul.f32 %v1532, %v1555
        %v1585 = vmul.f32 %v1533, %v1555
        %v1586 = vmul.f32 %v1534, %v1555
        %v1587 = vmul.f32 %v1535, %v1555
        %v1588 = vmul.f32 %v1536, %v1555
        %v1589 = vmul.f32 %v1537, %v1555
        %v1590 = vmul.f32 %v1538, %v1555
        %v1591 = vmul.f32 %v1539, %v1555
        %v1592 = vadd.f32 %v1560, 0.0
        %v1593 = vadd.f32 %v1561, 0.0
        %v1594 = vadd.f32 %v1562, 0.0
        %v1595 = vadd.f32 %v1563, 0.0
        %v1596 = vadd.f32 %v1564, 0.0
        %v1597 = vadd.f32 %v1565, 0.0
        %v1598 = vadd.f32 %v1566, 0.0
        %v1599 = vadd.f32 %v1567, 0.0
        %v1600 = vadd.f32 %v1568, 0.0
        %v1601 = vadd.f32 %v1569, 0.0
        %v1602 = vadd.f32 %v1570, 0.0
        %v1603 = vadd.f32 %v1571, 0.0
        %v1604 = vadd.f32 %v1572, 0.0
        %v1605 = vadd.f32 %v1573, 0.0
        %v1606 = vadd.f32 %v1574, 0.0
        %v1607 = vadd.f32 %v1575, 0.0
        %v1608 = vadd.f32 %v1576, 0.0
        %v1609 = vadd.f32 %v1577, 0.0
        %v1610 = vadd.f32 %v1578, 0.0
        %v1611 = vadd.f32 %v1579, 0.0
        %v1612 = vadd.f32 %v1580, 0.0
        %v1613 = vadd.f32 %v1581, 0.0
        %v1614 = vadd.f32 %v1582, 0.0
        %v1615 = vadd.f32 %v1583, 0.0
        %v1616 = vadd.f32 %v1584, 0.0
        %v1617 = vadd.f32 %v1585, 0.0
        %v1618 = vadd.f32 %v1586, 0.0
        %v1619 = vadd.f32 %v1587, 0.0
        %v1620 = vadd.f32 %v1588, 0.0
        %v1621 = vadd.f32 %v1589, 0.0
        %v1622 = vadd.f32 %v1590, 0.0
        %v1623 = vadd.f32 %v1591, 0.0
        %v1624 = vld [vmem:[#allocation2 + $0x7] sm:$0xff]
        %v1625 = vld [vmem:[#allocation2 + $0x1f] sm:$0xff]
        %v1626 = vld [vmem:[#allocation2 + $0x37] sm:$0xff]
        %v1627 = vld [vmem:[#allocation2 + $0x4f] sm:$0xff]
        %v1628 = vld [vmem:[#allocation2 + $0x67] sm:$0xff]
        %v1629 = vld [vmem:[#allocation2 + $0x7f] sm:$0xff]
        %v1630 = vld [vmem:[#allocation2 + $0x97] sm:$0xff]
        %v1631 = vld [vmem:[#allocation2 + $0xaf] sm:$0xff]
        %v1632 = vld [vmem:[#allocation2 + $0x127] sm:$0xff]
        %v1633 = vld [vmem:[#allocation2 + $0x13f] sm:$0xff]
        %v1634 = vld [vmem:[#allocation2 + $0x157] sm:$0xff]
        %v1635 = vld [vmem:[#allocation2 + $0x16f] sm:$0xff]
        %v1636 = vld [vmem:[#allocation2 + $0x187] sm:$0xff]
        %v1637 = vld [vmem:[#allocation2 + $0x19f] sm:$0xff]
        %v1638 = vld [vmem:[#allocation2 + $0x1b7] sm:$0xff]
        %v1639 = vld [vmem:[#allocation2 + $0x1cf] sm:$0xff]
        %v1640 = vld [vmem:[#allocation2 + $0x247] sm:$0xff]
        %v1641 = vld [vmem:[#allocation2 + $0x25f] sm:$0xff]
        %v1642 = vld [vmem:[#allocation2 + $0x277] sm:$0xff]
        %v1643 = vld [vmem:[#allocation2 + $0x28f] sm:$0xff]
        %v1644 = vld [vmem:[#allocation2 + $0x2a7] sm:$0xff]
        %v1645 = vld [vmem:[#allocation2 + $0x2bf] sm:$0xff]
        %v1646 = vld [vmem:[#allocation2 + $0x2d7] sm:$0xff]
        %v1647 = vld [vmem:[#allocation2 + $0x2ef] sm:$0xff]
        %v1648 = vld [vmem:[#allocation2 + $0x367] sm:$0xff]
        %v1649 = vld [vmem:[#allocation2 + $0x37f] sm:$0xff]
        %v1650 = vld [vmem:[#allocation2 + $0x397] sm:$0xff]
        %v1651 = vld [vmem:[#allocation2 + $0x3af] sm:$0xff]
        %v1652 = vld [vmem:[#allocation2 + $0x3c7] sm:$0xff]
        %v1653 = vld [vmem:[#allocation2 + $0x3df] sm:$0xff]
        %v1654 = vld [vmem:[#allocation2 + $0x3f7] sm:$0xff]
        %v1655 = vld [vmem:[#allocation2 + $0x40f] sm:$0xff]
        %v1656 = vlaneseq
        %v1657 = vshrl.u32 %v1656, 7
        %v1658 = vsub.s32 0, %v1657
        %v1659 = vrot.slane %v923, %v1658
        %v1660 = vlaneseq
        %v1661 = vshrl.u32 %v1660, 7
        %v1662 = vsub.s32 0, %v1661
        %v1663 = vrot.slane %v930, %v1662
        %v1664 = vlaneseq
        %v1665 = vshrl.u32 %v1664, 7
        %v1666 = vsub.s32 0, %v1665
        %v1667 = vrot.slane %v931, %v1666
        %v1668 = vlaneseq
        %v1669 = vshrl.u32 %v1668, 7
        %v1670 = vsub.s32 0, %v1669
        %v1671 = vrot.slane %v932, %v1670
        %v1676 = vmul.f32 %v1624, %v1659
        %v1677 = vmul.f32 %v1625, %v1659
        %v1678 = vmul.f32 %v1626, %v1659
        %v1679 = vmul.f32 %v1627, %v1659
        %v1680 = vmul.f32 %v1628, %v1659
        %v1681 = vmul.f32 %v1629, %v1659
        %v1682 = vmul.f32 %v1630, %v1659
        %v1683 = vmul.f32 %v1631, %v1659
        %v1684 = vmul.f32 %v1632, %v1663
        %v1685 = vmul.f32 %v1633, %v1663
        %v1686 = vmul.f32 %v1634, %v1663
        %v1687 = vmul.f32 %v1635, %v1663
        %v1688 = vmul.f32 %v1636, %v1663
        %v1689 = vmul.f32 %v1637, %v1663
        %v1690 = vmul.f32 %v1638, %v1663
        %v1691 = vmul.f32 %v1639, %v1663
        %v1692 = vmul.f32 %v1640, %v1667
        %v1693 = vmul.f32 %v1641, %v1667
        %v1694 = vmul.f32 %v1642, %v1667
        %v1695 = vmul.f32 %v1643, %v1667
        %v1696 = vmul.f32 %v1644, %v1667
        %v1697 = vmul.f32 %v1645, %v1667
        %v1698 = vmul.f32 %v1646, %v1667
        %v1699 = vmul.f32 %v1647, %v1667
        %v1700 = vmul.f32 %v1648, %v1671
        %v1701 = vmul.f32 %v1649, %v1671
        %v1702 = vmul.f32 %v1650, %v1671
        %v1703 = vmul.f32 %v1651, %v1671
        %v1704 = vmul.f32 %v1652, %v1671
        %v1705 = vmul.f32 %v1653, %v1671
        %v1706 = vmul.f32 %v1654, %v1671
        %v1707 = vmul.f32 %v1655, %v1671
        %v1708 = vadd.f32 %v1592, %v1676
        %v1709 = vadd.f32 %v1593, %v1677
        %v1710 = vadd.f32 %v1594, %v1678
        %v1711 = vadd.f32 %v1595, %v1679
        %v1712 = vadd.f32 %v1596, %v1680
        %v1713 = vadd.f32 %v1597, %v1681
        %v1714 = vadd.f32 %v1598, %v1682
        %v1715 = vadd.f32 %v1599, %v1683
        %v1716 = vadd.f32 %v1600, %v1684
        %v1717 = vadd.f32 %v1601, %v1685
        %v1718 = vadd.f32 %v1602, %v1686
        %v1719 = vadd.f32 %v1603, %v1687
        %v1720 = vadd.f32 %v1604, %v1688
        %v1721 = vadd.f32 %v1605, %v1689
        %v1722 = vadd.f32 %v1606, %v1690
        %v1723 = vadd.f32 %v1607, %v1691
        %v1724 = vadd.f32 %v1608, %v1692
        %v1725 = vadd.f32 %v1609, %v1693
        %v1726 = vadd.f32 %v1610, %v1694
        %v1727 = vadd.f32 %v1611, %v1695
        %v1728 = vadd.f32 %v1612, %v1696
        %v1729 = vadd.f32 %v1613, %v1697
        %v1730 = vadd.f32 %v1614, %v1698
        %v1731 = vadd.f32 %v1615, %v1699
        %v1732 = vadd.f32 %v1616, %v1700
        %v1733 = vadd.f32 %v1617, %v1701
        %v1734 = vadd.f32 %v1618, %v1702
        %v1735 = vadd.f32 %v1619, %v1703
        %v1736 = vadd.f32 %v1620, %v1704
        %v1737 = vadd.f32 %v1621, %v1705
        %v1738 = vadd.f32 %v1622, %v1706
        %v1739 = vadd.f32 %v1623, %v1707
        %v1740 = vld [vmem:[#allocation2 + $0x8] sm:$0xff]
        %v1741 = vld [vmem:[#allocation2 + $0x20] sm:$0xff]
        %v1742 = vld [vmem:[#allocation2 + $0x38] sm:$0xff]
        %v1743 = vld [vmem:[#allocation2 + $0x50] sm:$0xff]
        %v1744 = vld [vmem:[#allocation2 + $0x68] sm:$0xff]
        %v1745 = vld [vmem:[#allocation2 + $0x80] sm:$0xff]
        %v1746 = vld [vmem:[#allocation2 + $0x98] sm:$0xff]
        %v1747 = vld [vmem:[#allocation2 + $0xb0] sm:$0xff]
        %v1748 = vld [vmem:[#allocation2 + $0x128] sm:$0xff]
        %v1749 = vld [vmem:[#allocation2 + $0x140] sm:$0xff]
        %v1750 = vld [vmem:[#allocation2 + $0x158] sm:$0xff]
        %v1751 = vld [vmem:[#allocation2 + $0x170] sm:$0xff]
        %v1752 = vld [vmem:[#allocation2 + $0x188] sm:$0xff]
        %v1753 = vld [vmem:[#allocation2 + $0x1a0] sm:$0xff]
        %v1754 = vld [vmem:[#allocation2 + $0x1b8] sm:$0xff]
        %v1755 = vld [vmem:[#allocation2 + $0x1d0] sm:$0xff]
        %v1756 = vld [vmem:[#allocation2 + $0x248] sm:$0xff]
        %v1757 = vld [vmem:[#allocation2 + $0x260] sm:$0xff]
        %v1758 = vld [vmem:[#allocation2 + $0x278] sm:$0xff]
        %v1759 = vld [vmem:[#allocation2 + $0x290] sm:$0xff]
        %v1760 = vld [vmem:[#allocation2 + $0x2a8] sm:$0xff]
        %v1761 = vld [vmem:[#allocation2 + $0x2c0] sm:$0xff]
        %v1762 = vld [vmem:[#allocation2 + $0x2d8] sm:$0xff]
        %v1763 = vld [vmem:[#allocation2 + $0x2f0] sm:$0xff]
        %v1764 = vld [vmem:[#allocation2 + $0x368] sm:$0xff]
        %v1765 = vld [vmem:[#allocation2 + $0x380] sm:$0xff]
        %v1766 = vld [vmem:[#allocation2 + $0x398] sm:$0xff]
        %v1767 = vld [vmem:[#allocation2 + $0x3b0] sm:$0xff]
        %v1768 = vld [vmem:[#allocation2 + $0x3c8] sm:$0xff]
        %v1769 = vld [vmem:[#allocation2 + $0x3e0] sm:$0xff]
        %v1770 = vld [vmem:[#allocation2 + $0x3f8] sm:$0xff]
        %v1771 = vld [vmem:[#allocation2 + $0x410] sm:$0xff]
        %v1772 = vlaneseq
        %v1773 = vshrl.u32 %v1772, 7
        %v1774 = vsub.s32 0, %v1773
        %v1775 = vrot.slane %v948, %v1774
        %v1776 = vlaneseq
        %v1777 = vshrl.u32 %v1776, 7
        %v1778 = vsub.s32 0, %v1777
        %v1779 = vrot.slane %v955, %v1778
        %v1780 = vlaneseq
        %v1781 = vshrl.u32 %v1780, 7
        %v1782 = vsub.s32 0, %v1781
        %v1783 = vrot.slane %v956, %v1782
        %v1784 = vlaneseq
        %v1785 = vshrl.u32 %v1784, 7
        %v1786 = vsub.s32 0, %v1785
        %v1787 = vrot.slane %v957, %v1786
        %v1792 = vmul.f32 %v1740, %v1775
        %v1793 = vmul.f32 %v1741, %v1775
        %v1794 = vmul.f32 %v1742, %v1775
        %v1795 = vmul.f32 %v1743, %v1775
        %v1796 = vmul.f32 %v1744, %v1775
        %v1797 = vmul.f32 %v1745, %v1775
        %v1798 = vmul.f32 %v1746, %v1775
        %v1799 = vmul.f32 %v1747, %v1775
        %v1800 = vmul.f32 %v1748, %v1779
        %v1801 = vmul.f32 %v1749, %v1779
        %v1802 = vmul.f32 %v1750, %v1779
        %v1803 = vmul.f32 %v1751, %v1779
        %v1804 = vmul.f32 %v1752, %v1779
        %v1805 = vmul.f32 %v1753, %v1779
        %v1806 = vmul.f32 %v1754, %v1779
        %v1807 = vmul.f32 %v1755, %v1779
        %v1808 = vmul.f32 %v1756, %v1783
        %v1809 = vmul.f32 %v1757, %v1783
        %v1810 = vmul.f32 %v1758, %v1783
        %v1811 = vmul.f32 %v1759, %v1783
        %v1812 = vmul.f32 %v1760, %v1783
        %v1813 = vmul.f32 %v1761, %v1783
        %v1814 = vmul.f32 %v1762, %v1783
        %v1815 = vmul.f32 %v1763, %v1783
        %v1816 = vmul.f32 %v1764, %v1787
        %v1817 = vmul.f32 %v1765, %v1787
        %v1818 = vmul.f32 %v1766, %v1787
        %v1819 = vmul.f32 %v1767, %v1787
        %v1820 = vmul.f32 %v1768, %v1787
        %v1821 = vmul.f32 %v1769, %v1787
        %v1822 = vmul.f32 %v1770, %v1787
        %v1823 = vmul.f32 %v1771, %v1787
        %v1824 = vadd.f32 %v1708, %v1792
        %v1825 = vadd.f32 %v1709, %v1793
        %v1826 = vadd.f32 %v1710, %v1794
        %v1827 = vadd.f32 %v1711, %v1795
        %v1828 = vadd.f32 %v1712, %v1796
        %v1829 = vadd.f32 %v1713, %v1797
        %v1830 = vadd.f32 %v1714, %v1798
        %v1831 = vadd.f32 %v1715, %v1799
        %v1832 = vadd.f32 %v1716, %v1800
        %v1833 = vadd.f32 %v1717, %v1801
        %v1834 = vadd.f32 %v1718, %v1802
        %v1835 = vadd.f32 %v1719, %v1803
        %v1836 = vadd.f32 %v1720, %v1804
        %v1837 = vadd.f32 %v1721, %v1805
        %v1838 = vadd.f32 %v1722, %v1806
        %v1839 = vadd.f32 %v1723, %v1807
        %v1840 = vadd.f32 %v1724, %v1808
        %v1841 = vadd.f32 %v1725, %v1809
        %v1842 = vadd.f32 %v1726, %v1810
        %v1843 = vadd.f32 %v1727, %v1811
        %v1844 = vadd.f32 %v1728, %v1812
        %v1845 = vadd.f32 %v1729, %v1813
        %v1846 = vadd.f32 %v1730, %v1814
        %v1847 = vadd.f32 %v1731, %v1815
        %v1848 = vadd.f32 %v1732, %v1816
        %v1849 = vadd.f32 %v1733, %v1817
        %v1850 = vadd.f32 %v1734, %v1818
        %v1851 = vadd.f32 %v1735, %v1819
        %v1852 = vadd.f32 %v1736, %v1820
        %v1853 = vadd.f32 %v1737, %v1821
        %v1854 = vadd.f32 %v1738, %v1822
        %v1855 = vadd.f32 %v1739, %v1823
        %v1856 = vld [vmem:[#allocation2 + $0x9] sm:$0xff]
        %v1857 = vld [vmem:[#allocation2 + $0x21] sm:$0xff]
        %v1858 = vld [vmem:[#allocation2 + $0x39] sm:$0xff]
        %v1859 = vld [vmem:[#allocation2 + $0x51] sm:$0xff]
        %v1860 = vld [vmem:[#allocation2 + $0x69] sm:$0xff]
        %v1861 = vld [vmem:[#allocation2 + $0x81] sm:$0xff]
        %v1862 = vld [vmem:[#allocation2 + $0x99] sm:$0xff]
        %v1863 = vld [vmem:[#allocation2 + $0xb1] sm:$0xff]
        %v1864 = vld [vmem:[#allocation2 + $0x129] sm:$0xff]
        %v1865 = vld [vmem:[#allocation2 + $0x141] sm:$0xff]
        %v1866 = vld [vmem:[#allocation2 + $0x159] sm:$0xff]
        %v1867 = vld [vmem:[#allocation2 + $0x171] sm:$0xff]
        %v1868 = vld [vmem:[#allocation2 + $0x189] sm:$0xff]
        %v1869 = vld [vmem:[#allocation2 + $0x1a1] sm:$0xff]
        %v1870 = vld [vmem:[#allocation2 + $0x1b9] sm:$0xff]
        %v1871 = vld [vmem:[#allocation2 + $0x1d1] sm:$0xff]
        %v1872 = vld [vmem:[#allocation2 + $0x249] sm:$0xff]
        %v1873 = vld [vmem:[#allocation2 + $0x261] sm:$0xff]
        %v1874 = vld [vmem:[#allocation2 + $0x279] sm:$0xff]
        %v1875 = vld [vmem:[#allocation2 + $0x291] sm:$0xff]
        %v1876 = vld [vmem:[#allocation2 + $0x2a9] sm:$0xff]
        %v1877 = vld [vmem:[#allocation2 + $0x2c1] sm:$0xff]
        %v1878 = vld [vmem:[#allocation2 + $0x2d9] sm:$0xff]
        %v1879 = vld [vmem:[#allocation2 + $0x2f1] sm:$0xff]
        %v1880 = vld [vmem:[#allocation2 + $0x369] sm:$0xff]
        %v1881 = vld [vmem:[#allocation2 + $0x381] sm:$0xff]
        %v1882 = vld [vmem:[#allocation2 + $0x399] sm:$0xff]
        %v1883 = vld [vmem:[#allocation2 + $0x3b1] sm:$0xff]
        %v1884 = vld [vmem:[#allocation2 + $0x3c9] sm:$0xff]
        %v1885 = vld [vmem:[#allocation2 + $0x3e1] sm:$0xff]
        %v1886 = vld [vmem:[#allocation2 + $0x3f9] sm:$0xff]
        %v1887 = vld [vmem:[#allocation2 + $0x411] sm:$0xff]
        %v1888 = vlaneseq
        %v1889 = vshrl.u32 %v1888, 7
        %v1890 = vsub.s32 0, %v1889
        %v1891 = vrot.slane %v973, %v1890
        %v1892 = vlaneseq
        %v1893 = vshrl.u32 %v1892, 7
        %v1894 = vsub.s32 0, %v1893
        %v1895 = vrot.slane %v980, %v1894
        %v1896 = vlaneseq
        %v1897 = vshrl.u32 %v1896, 7
        %v1898 = vsub.s32 0, %v1897
        %v1899 = vrot.slane %v981, %v1898
        %v1900 = vlaneseq
        %v1901 = vshrl.u32 %v1900, 7
        %v1902 = vsub.s32 0, %v1901
        %v1903 = vrot.slane %v982, %v1902
        %v1908 = vmul.f32 %v1856, %v1891
        %v1909 = vmul.f32 %v1857, %v1891
        %v1910 = vmul.f32 %v1858, %v1891
        %v1911 = vmul.f32 %v1859, %v1891
        %v1912 = vmul.f32 %v1860, %v1891
        %v1913 = vmul.f32 %v1861, %v1891
        %v1914 = vmul.f32 %v1862, %v1891
        %v1915 = vmul.f32 %v1863, %v1891
        %v1916 = vmul.f32 %v1864, %v1895
        %v1917 = vmul.f32 %v1865, %v1895
        %v1918 = vmul.f32 %v1866, %v1895
        %v1919 = vmul.f32 %v1867, %v1895
        %v1920 = vmul.f32 %v1868, %v1895
        %v1921 = vmul.f32 %v1869, %v1895
        %v1922 = vmul.f32 %v1870, %v1895
        %v1923 = vmul.f32 %v1871, %v1895
        %v1924 = vmul.f32 %v1872, %v1899
        %v1925 = vmul.f32 %v1873, %v1899
        %v1926 = vmul.f32 %v1874, %v1899
        %v1927 = vmul.f32 %v1875, %v1899
        %v1928 = vmul.f32 %v1876, %v1899
        %v1929 = vmul.f32 %v1877, %v1899
        %v1930 = vmul.f32 %v1878, %v1899
        %v1931 = vmul.f32 %v1879, %v1899
        %v1932 = vmul.f32 %v1880, %v1903
        %v1933 = vmul.f32 %v1881, %v1903
        %v1934 = vmul.f32 %v1882, %v1903
        %v1935 = vmul.f32 %v1883, %v1903
        %v1936 = vmul.f32 %v1884, %v1903
        %v1937 = vmul.f32 %v1885, %v1903
        %v1938 = vmul.f32 %v1886, %v1903
        %v1939 = vmul.f32 %v1887, %v1903
        %v1940 = vadd.f32 %v1824, %v1908
        %v1941 = vadd.f32 %v1825, %v1909
        %v1942 = vadd.f32 %v1826, %v1910
        %v1943 = vadd.f32 %v1827, %v1911
        %v1944 = vadd.f32 %v1828, %v1912
        %v1945 = vadd.f32 %v1829, %v1913
        %v1946 = vadd.f32 %v1830, %v1914
        %v1947 = vadd.f32 %v1831, %v1915
        %v1948 = vadd.f32 %v1832, %v1916
        %v1949 = vadd.f32 %v1833, %v1917
        %v1950 = vadd.f32 %v1834, %v1918
        %v1951 = vadd.f32 %v1835, %v1919
        %v1952 = vadd.f32 %v1836, %v1920
        %v1953 = vadd.f32 %v1837, %v1921
        %v1954 = vadd.f32 %v1838, %v1922
        %v1955 = vadd.f32 %v1839, %v1923
        %v1956 = vadd.f32 %v1840, %v1924
        %v1957 = vadd.f32 %v1841, %v1925
        %v1958 = vadd.f32 %v1842, %v1926
        %v1959 = vadd.f32 %v1843, %v1927
        %v1960 = vadd.f32 %v1844, %v1928
        %v1961 = vadd.f32 %v1845, %v1929
        %v1962 = vadd.f32 %v1846, %v1930
        %v1963 = vadd.f32 %v1847, %v1931
        %v1964 = vadd.f32 %v1848, %v1932
        %v1965 = vadd.f32 %v1849, %v1933
        %v1966 = vadd.f32 %v1850, %v1934
        %v1967 = vadd.f32 %v1851, %v1935
        %v1968 = vadd.f32 %v1852, %v1936
        %v1969 = vadd.f32 %v1853, %v1937
        %v1970 = vadd.f32 %v1854, %v1938
        %v1971 = vadd.f32 %v1855, %v1939
        %v1972 = vld [vmem:[#allocation2 + $0xa] sm:$0xff]
        %v1973 = vld [vmem:[#allocation2 + $0x22] sm:$0xff]
        %v1974 = vld [vmem:[#allocation2 + $0x3a] sm:$0xff]
        %v1975 = vld [vmem:[#allocation2 + $0x52] sm:$0xff]
        %v1976 = vld [vmem:[#allocation2 + $0x6a] sm:$0xff]
        %v1977 = vld [vmem:[#allocation2 + $0x82] sm:$0xff]
        %v1978 = vld [vmem:[#allocation2 + $0x9a] sm:$0xff]
        %v1979 = vld [vmem:[#allocation2 + $0xb2] sm:$0xff]
        %v1980 = vld [vmem:[#allocation2 + $0x12a] sm:$0xff]
        %v1981 = vld [vmem:[#allocation2 + $0x142] sm:$0xff]
        %v1982 = vld [vmem:[#allocation2 + $0x15a] sm:$0xff]
        %v1983 = vld [vmem:[#allocation2 + $0x172] sm:$0xff]
        %v1984 = vld [vmem:[#allocation2 + $0x18a] sm:$0xff]
        %v1985 = vld [vmem:[#allocation2 + $0x1a2] sm:$0xff]
        %v1986 = vld [vmem:[#allocation2 + $0x1ba] sm:$0xff]
        %v1987 = vld [vmem:[#allocation2 + $0x1d2] sm:$0xff]
        %v1988 = vld [vmem:[#allocation2 + $0x24a] sm:$0xff]
        %v1989 = vld [vmem:[#allocation2 + $0x262] sm:$0xff]
        %v1990 = vld [vmem:[#allocation2 + $0x27a] sm:$0xff]
        %v1991 = vld [vmem:[#allocation2 + $0x292] sm:$0xff]
        %v1992 = vld [vmem:[#allocation2 + $0x2aa] sm:$0xff]
        %v1993 = vld [vmem:[#allocation2 + $0x2c2] sm:$0xff]
        %v1994 = vld [vmem:[#allocation2 + $0x2da] sm:$0xff]
        %v1995 = vld [vmem:[#allocation2 + $0x2f2] sm:$0xff]
        %v1996 = vld [vmem:[#allocation2 + $0x36a] sm:$0xff]
        %v1997 = vld [vmem:[#allocation2 + $0x382] sm:$0xff]
        %v1998 = vld [vmem:[#allocation2 + $0x39a] sm:$0xff]
        %v1999 = vld [vmem:[#allocation2 + $0x3b2] sm:$0xff]
        %v2000 = vld [vmem:[#allocation2 + $0x3ca] sm:$0xff]
        %v2001 = vld [vmem:[#allocation2 + $0x3e2] sm:$0xff]
        %v2002 = vld [vmem:[#allocation2 + $0x3fa] sm:$0xff]
        %v2003 = vld [vmem:[#allocation2 + $0x412] sm:$0xff]
        %v2004 = vlaneseq
        %v2005 = vshrl.u32 %v2004, 7
        %v2006 = vsub.s32 0, %v2005
        %v2007 = vrot.slane %v998, %v2006
        %v2008 = vlaneseq
        %v2009 = vshrl.u32 %v2008, 7
        %v2010 = vsub.s32 0, %v2009
        %v2011 = vrot.slane %v1005, %v2010
        %v2012 = vlaneseq
        %v2013 = vshrl.u32 %v2012, 7
        %v2014 = vsub.s32 0, %v2013
        %v2015 = vrot.slane %v1006, %v2014
        %v2016 = vlaneseq
        %v2017 = vshrl.u32 %v2016, 7
        %v2018 = vsub.s32 0, %v2017
        %v2019 = vrot.slane %v1007, %v2018
        %v2024 = vmul.f32 %v1972, %v2007
        %v2025 = vmul.f32 %v1973, %v2007
        %v2026 = vmul.f32 %v1974, %v2007
        %v2027 = vmul.f32 %v1975, %v2007
        %v2028 = vmul.f32 %v1976, %v2007
        %v2029 = vmul.f32 %v1977, %v2007
        %v2030 = vmul.f32 %v1978, %v2007
        %v2031 = vmul.f32 %v1979, %v2007
        %v2032 = vmul.f32 %v1980, %v2011
        %v2033 = vmul.f32 %v1981, %v2011
        %v2034 = vmul.f32 %v1982, %v2011
        %v2035 = vmul.f32 %v1983, %v2011
        %v2036 = vmul.f32 %v1984, %v2011
        %v2037 = vmul.f32 %v1985, %v2011
        %v2038 = vmul.f32 %v1986, %v2011
        %v2039 = vmul.f32 %v1987, %v2011
        %v2040 = vmul.f32 %v1988, %v2015
        %v2041 = vmul.f32 %v1989, %v2015
        %v2042 = vmul.f32 %v1990, %v2015
        %v2043 = vmul.f32 %v1991, %v2015
        %v2044 = vmul.f32 %v1992, %v2015
        %v2045 = vmul.f32 %v1993, %v2015
        %v2046 = vmul.f32 %v1994, %v2015
        %v2047 = vmul.f32 %v1995, %v2015
        %v2048 = vmul.f32 %v1996, %v2019
        %v2049 = vmul.f32 %v1997, %v2019
        %v2050 = vmul.f32 %v1998, %v2019
        %v2051 = vmul.f32 %v1999, %v2019
        %v2052 = vmul.f32 %v2000, %v2019
        %v2053 = vmul.f32 %v2001, %v2019
        %v2054 = vmul.f32 %v2002, %v2019
        %v2055 = vmul.f32 %v2003, %v2019
        %v2056 = vadd.f32 %v1940, %v2024
        %v2057 = vadd.f32 %v1941, %v2025
        %v2058 = vadd.f32 %v1942, %v2026
        %v2059 = vadd.f32 %v1943, %v2027
        %v2060 = vadd.f32 %v1944, %v2028
        %v2061 = vadd.f32 %v1945, %v2029
        %v2062 = vadd.f32 %v1946, %v2030
        %v2063 = vadd.f32 %v1947, %v2031
        %v2064 = vadd.f32 %v1948, %v2032
        %v2065 = vadd.f32 %v1949, %v2033
        %v2066 = vadd.f32 %v1950, %v2034
        %v2067 = vadd.f32 %v1951, %v2035
        %v2068 = vadd.f32 %v1952, %v2036
        %v2069 = vadd.f32 %v1953, %v2037
        %v2070 = vadd.f32 %v1954, %v2038
        %v2071 = vadd.f32 %v1955, %v2039
        %v2072 = vadd.f32 %v1956, %v2040
        %v2073 = vadd.f32 %v1957, %v2041
        %v2074 = vadd.f32 %v1958, %v2042
        %v2075 = vadd.f32 %v1959, %v2043
        %v2076 = vadd.f32 %v1960, %v2044
        %v2077 = vadd.f32 %v1961, %v2045
        %v2078 = vadd.f32 %v1962, %v2046
        %v2079 = vadd.f32 %v1963, %v2047
        %v2080 = vadd.f32 %v1964, %v2048
        %v2081 = vadd.f32 %v1965, %v2049
        %v2082 = vadd.f32 %v1966, %v2050
        %v2083 = vadd.f32 %v1967, %v2051
        %v2084 = vadd.f32 %v1968, %v2052
        %v2085 = vadd.f32 %v1969, %v2053
        %v2086 = vadd.f32 %v1970, %v2054
        %v2087 = vadd.f32 %v1971, %v2055
        %s2088 = scalar_lea.vmem [#allocation2], 24
        %v2089 = vld [vmem:[%s2088 + $0x6] sm:$0xff]
        %v2090 = vld [vmem:[%s2088 + $0x1e] sm:$0xff]
        %v2091 = vld [vmem:[%s2088 + $0x36] sm:$0xff]
        %v2092 = vld [vmem:[%s2088 + $0x4e] sm:$0xff]
        %v2093 = vld [vmem:[%s2088 + $0x66] sm:$0xff]
        %v2094 = vld [vmem:[%s2088 + $0x7e] sm:$0xff]
        %v2095 = vld [vmem:[%s2088 + $0x96] sm:$0xff]
        %v2096 = vld [vmem:[%s2088 + $0xae] sm:$0xff]
        %v2097 = vld [vmem:[%s2088 + $0x126] sm:$0xff]
        %v2098 = vld [vmem:[%s2088 + $0x13e] sm:$0xff]
        %v2099 = vld [vmem:[%s2088 + $0x156] sm:$0xff]
        %v2100 = vld [vmem:[%s2088 + $0x16e] sm:$0xff]
        %v2101 = vld [vmem:[%s2088 + $0x186] sm:$0xff]
        %v2102 = vld [vmem:[%s2088 + $0x19e] sm:$0xff]
        %v2103 = vld [vmem:[%s2088 + $0x1b6] sm:$0xff]
        %v2104 = vld [vmem:[%s2088 + $0x1ce] sm:$0xff]
        %v2105 = vld [vmem:[%s2088 + $0x246] sm:$0xff]
        %v2106 = vld [vmem:[%s2088 + $0x25e] sm:$0xff]
        %v2107 = vld [vmem:[%s2088 + $0x276] sm:$0xff]
        %v2108 = vld [vmem:[%s2088 + $0x28e] sm:$0xff]
        %v2109 = vld [vmem:[%s2088 + $0x2a6] sm:$0xff]
        %v2110 = vld [vmem:[%s2088 + $0x2be] sm:$0xff]
        %v2111 = vld [vmem:[%s2088 + $0x2d6] sm:$0xff]
        %v2112 = vld [vmem:[%s2088 + $0x2ee] sm:$0xff]
        %v2113 = vld [vmem:[%s2088 + $0x366] sm:$0xff]
        %v2114 = vld [vmem:[%s2088 + $0x37e] sm:$0xff]
        %v2115 = vld [vmem:[%s2088 + $0x396] sm:$0xff]
        %v2116 = vld [vmem:[%s2088 + $0x3ae] sm:$0xff]
        %v2117 = vld [vmem:[%s2088 + $0x3c6] sm:$0xff]
        %v2118 = vld [vmem:[%s2088 + $0x3de] sm:$0xff]
        %v2119 = vld [vmem:[%s2088 + $0x3f6] sm:$0xff]
        %v2120 = vld [vmem:[%s2088 + $0x40e] sm:$0xff]
        %v2121 = vlaneseq
        %v2122 = vshrl.u32 %v2121, 7
        %v2123 = vsub.s32 0, %v2122
        %v2124 = vrot.slane %v1023, %v2123
        %v2125 = vlaneseq
        %v2126 = vshrl.u32 %v2125, 7
        %v2127 = vsub.s32 0, %v2126
        %v2128 = vrot.slane %v1030, %v2127
        %v2129 = vlaneseq
        %v2130 = vshrl.u32 %v2129, 7
        %v2131 = vsub.s32 0, %v2130
        %v2132 = vrot.slane %v1031, %v2131
        %v2133 = vlaneseq
        %v2134 = vshrl.u32 %v2133, 7
        %v2135 = vsub.s32 0, %v2134
        %v2136 = vrot.slane %v1032, %v2135
        %v2141 = vmul.f32 %v2089, %v2124
        %v2142 = vmul.f32 %v2090, %v2124
        %v2143 = vmul.f32 %v2091, %v2124
        %v2144 = vmul.f32 %v2092, %v2124
        %v2145 = vmul.f32 %v2093, %v2124
        %v2146 = vmul.f32 %v2094, %v2124
        %v2147 = vmul.f32 %v2095, %v2124
        %v2148 = vmul.f32 %v2096, %v2124
        %v2149 = vmul.f32 %v2097, %v2128
        %v2150 = vmul.f32 %v2098, %v2128
        %v2151 = vmul.f32 %v2099, %v2128
        %v2152 = vmul.f32 %v2100, %v2128
        %v2153 = vmul.f32 %v2101, %v2128
        %v2154 = vmul.f32 %v2102, %v2128
        %v2155 = vmul.f32 %v2103, %v2128
        %v2156 = vmul.f32 %v2104, %v2128
        %v2157 = vmul.f32 %v2105, %v2132
        %v2158 = vmul.f32 %v2106, %v2132
        %v2159 = vmul.f32 %v2107, %v2132
        %v2160 = vmul.f32 %v2108, %v2132
        %v2161 = vmul.f32 %v2109, %v2132
        %v2162 = vmul.f32 %v2110, %v2132
        %v2163 = vmul.f32 %v2111, %v2132
        %v2164 = vmul.f32 %v2112, %v2132
        %v2165 = vmul.f32 %v2113, %v2136
        %v2166 = vmul.f32 %v2114, %v2136
        %v2167 = vmul.f32 %v2115, %v2136
        %v2168 = vmul.f32 %v2116, %v2136
        %v2169 = vmul.f32 %v2117, %v2136
        %v2170 = vmul.f32 %v2118, %v2136
        %v2171 = vmul.f32 %v2119, %v2136
        %v2172 = vmul.f32 %v2120, %v2136
        %v2173 = vadd.f32 %v2056, %v2141
        %v2174 = vadd.f32 %v2057, %v2142
        %v2175 = vadd.f32 %v2058, %v2143
        %v2176 = vadd.f32 %v2059, %v2144
        %v2177 = vadd.f32 %v2060, %v2145
        %v2178 = vadd.f32 %v2061, %v2146
        %v2179 = vadd.f32 %v2062, %v2147
        %v2180 = vadd.f32 %v2063, %v2148
        %v2181 = vadd.f32 %v2064, %v2149
        %v2182 = vadd.f32 %v2065, %v2150
        %v2183 = vadd.f32 %v2066, %v2151
        %v2184 = vadd.f32 %v2067, %v2152
        %v2185 = vadd.f32 %v2068, %v2153
        %v2186 = vadd.f32 %v2069, %v2154
        %v2187 = vadd.f32 %v2070, %v2155
        %v2188 = vadd.f32 %v2071, %v2156
        %v2189 = vadd.f32 %v2072, %v2157
        %v2190 = vadd.f32 %v2073, %v2158
        %v2191 = vadd.f32 %v2074, %v2159
        %v2192 = vadd.f32 %v2075, %v2160
        %v2193 = vadd.f32 %v2076, %v2161
        %v2194 = vadd.f32 %v2077, %v2162
        %v2195 = vadd.f32 %v2078, %v2163
        %v2196 = vadd.f32 %v2079, %v2164
        %v2197 = vadd.f32 %v2080, %v2165
        %v2198 = vadd.f32 %v2081, %v2166
        %v2199 = vadd.f32 %v2082, %v2167
        %v2200 = vadd.f32 %v2083, %v2168
        %v2201 = vadd.f32 %v2084, %v2169
        %v2202 = vadd.f32 %v2085, %v2170
        %v2203 = vadd.f32 %v2086, %v2171
        %v2204 = vadd.f32 %v2087, %v2172
        %v2205 = vld [vmem:[%s2088 + $0x7] sm:$0xff]
        %v2206 = vld [vmem:[%s2088 + $0x1f] sm:$0xff]
        %v2207 = vld [vmem:[%s2088 + $0x37] sm:$0xff]
        %v2208 = vld [vmem:[%s2088 + $0x4f] sm:$0xff]
        %v2209 = vld [vmem:[%s2088 + $0x67] sm:$0xff]
        %v2210 = vld [vmem:[%s2088 + $0x7f] sm:$0xff]
        %v2211 = vld [vmem:[%s2088 + $0x97] sm:$0xff]
        %v2212 = vld [vmem:[%s2088 + $0xaf] sm:$0xff]
        %v2213 = vld [vmem:[%s2088 + $0x127] sm:$0xff]
        %v2214 = vld [vmem:[%s2088 + $0x13f] sm:$0xff]
        %v2215 = vld [vmem:[%s2088 + $0x157] sm:$0xff]
        %v2216 = vld [vmem:[%s2088 + $0x16f] sm:$0xff]
        %v2217 = vld [vmem:[%s2088 + $0x187] sm:$0xff]
        %v2218 = vld [vmem:[%s2088 + $0x19f] sm:$0xff]
        %v2219 = vld [vmem:[%s2088 + $0x1b7] sm:$0xff]
        %v2220 = vld [vmem:[%s2088 + $0x1cf] sm:$0xff]
        %v2221 = vld [vmem:[%s2088 + $0x247] sm:$0xff]
        %v2222 = vld [vmem:[%s2088 + $0x25f] sm:$0xff]
        %v2223 = vld [vmem:[%s2088 + $0x277] sm:$0xff]
        %v2224 = vld [vmem:[%s2088 + $0x28f] sm:$0xff]
        %v2225 = vld [vmem:[%s2088 + $0x2a7] sm:$0xff]
        %v2226 = vld [vmem:[%s2088 + $0x2bf] sm:$0xff]
        %v2227 = vld [vmem:[%s2088 + $0x2d7] sm:$0xff]
        %v2228 = vld [vmem:[%s2088 + $0x2ef] sm:$0xff]
        %v2229 = vld [vmem:[%s2088 + $0x367] sm:$0xff]
        %v2230 = vld [vmem:[%s2088 + $0x37f] sm:$0xff]
        %v2231 = vld [vmem:[%s2088 + $0x397] sm:$0xff]
        %v2232 = vld [vmem:[%s2088 + $0x3af] sm:$0xff]
        %v2233 = vld [vmem:[%s2088 + $0x3c7] sm:$0xff]
        %v2234 = vld [vmem:[%s2088 + $0x3df] sm:$0xff]
        %v2235 = vld [vmem:[%s2088 + $0x3f7] sm:$0xff]
        %v2236 = vld [vmem:[%s2088 + $0x40f] sm:$0xff]
        %v2237 = vlaneseq
        %v2238 = vshrl.u32 %v2237, 7
        %v2239 = vsub.s32 0, %v2238
        %v2240 = vrot.slane %v1048, %v2239
        %v2241 = vlaneseq
        %v2242 = vshrl.u32 %v2241, 7
        %v2243 = vsub.s32 0, %v2242
        %v2244 = vrot.slane %v1055, %v2243
        %v2245 = vlaneseq
        %v2246 = vshrl.u32 %v2245, 7
        %v2247 = vsub.s32 0, %v2246
        %v2248 = vrot.slane %v1056, %v2247
        %v2249 = vlaneseq
        %v2250 = vshrl.u32 %v2249, 7
        %v2251 = vsub.s32 0, %v2250
        %v2252 = vrot.slane %v1057, %v2251
        %v2257 = vmul.f32 %v2205, %v2240
        %v2258 = vmul.f32 %v2206, %v2240
        %v2259 = vmul.f32 %v2207, %v2240
        %v2260 = vmul.f32 %v2208, %v2240
        %v2261 = vmul.f32 %v2209, %v2240
        %v2262 = vmul.f32 %v2210, %v2240
        %v2263 = vmul.f32 %v2211, %v2240
        %v2264 = vmul.f32 %v2212, %v2240
        %v2265 = vmul.f32 %v2213, %v2244
        %v2266 = vmul.f32 %v2214, %v2244
        %v2267 = vmul.f32 %v2215, %v2244
        %v2268 = vmul.f32 %v2216, %v2244
        %v2269 = vmul.f32 %v2217, %v2244
        %v2270 = vmul.f32 %v2218, %v2244
        %v2271 = vmul.f32 %v2219, %v2244
        %v2272 = vmul.f32 %v2220, %v2244
        %v2273 = vmul.f32 %v2221, %v2248
        %v2274 = vmul.f32 %v2222, %v2248
        %v2275 = vmul.f32 %v2223, %v2248
        %v2276 = vmul.f32 %v2224, %v2248
        %v2277 = vmul.f32 %v2225, %v2248
        %v2278 = vmul.f32 %v2226, %v2248
        %v2279 = vmul.f32 %v2227, %v2248
        %v2280 = vmul.f32 %v2228, %v2248
        %v2281 = vmul.f32 %v2229, %v2252
        %v2282 = vmul.f32 %v2230, %v2252
        %v2283 = vmul.f32 %v2231, %v2252
        %v2284 = vmul.f32 %v2232, %v2252
        %v2285 = vmul.f32 %v2233, %v2252
        %v2286 = vmul.f32 %v2234, %v2252
        %v2287 = vmul.f32 %v2235, %v2252
        %v2288 = vmul.f32 %v2236, %v2252
        %v2289 = vadd.f32 %v2173, %v2257
        %v2290 = vadd.f32 %v2174, %v2258
        %v2291 = vadd.f32 %v2175, %v2259
        %v2292 = vadd.f32 %v2176, %v2260
        %v2293 = vadd.f32 %v2177, %v2261
        %v2294 = vadd.f32 %v2178, %v2262
        %v2295 = vadd.f32 %v2179, %v2263
        %v2296 = vadd.f32 %v2180, %v2264
        %v2297 = vadd.f32 %v2181, %v2265
        %v2298 = vadd.f32 %v2182, %v2266
        %v2299 = vadd.f32 %v2183, %v2267
        %v2300 = vadd.f32 %v2184, %v2268
        %v2301 = vadd.f32 %v2185, %v2269
        %v2302 = vadd.f32 %v2186, %v2270
        %v2303 = vadd.f32 %v2187, %v2271
        %v2304 = vadd.f32 %v2188, %v2272
        %v2305 = vadd.f32 %v2189, %v2273
        %v2306 = vadd.f32 %v2190, %v2274
        %v2307 = vadd.f32 %v2191, %v2275
        %v2308 = vadd.f32 %v2192, %v2276
        %v2309 = vadd.f32 %v2193, %v2277
        %v2310 = vadd.f32 %v2194, %v2278
        %v2311 = vadd.f32 %v2195, %v2279
        %v2312 = vadd.f32 %v2196, %v2280
        %v2313 = vadd.f32 %v2197, %v2281
        %v2314 = vadd.f32 %v2198, %v2282
        %v2315 = vadd.f32 %v2199, %v2283
        %v2316 = vadd.f32 %v2200, %v2284
        %v2317 = vadd.f32 %v2201, %v2285
        %v2318 = vadd.f32 %v2202, %v2286
        %v2319 = vadd.f32 %v2203, %v2287
        %v2320 = vadd.f32 %v2204, %v2288
        %v2321 = vld [vmem:[%s2088 + $0x8] sm:$0xff]
        %v2322 = vld [vmem:[%s2088 + $0x20] sm:$0xff]
        %v2323 = vld [vmem:[%s2088 + $0x38] sm:$0xff]
        %v2324 = vld [vmem:[%s2088 + $0x50] sm:$0xff]
        %v2325 = vld [vmem:[%s2088 + $0x68] sm:$0xff]
        %v2326 = vld [vmem:[%s2088 + $0x80] sm:$0xff]
        %v2327 = vld [vmem:[%s2088 + $0x98] sm:$0xff]
        %v2328 = vld [vmem:[%s2088 + $0xb0] sm:$0xff]
        %v2329 = vld [vmem:[%s2088 + $0x128] sm:$0xff]
        %v2330 = vld [vmem:[%s2088 + $0x140] sm:$0xff]
        %v2331 = vld [vmem:[%s2088 + $0x158] sm:$0xff]
        %v2332 = vld [vmem:[%s2088 + $0x170] sm:$0xff]
        %v2333 = vld [vmem:[%s2088 + $0x188] sm:$0xff]
        %v2334 = vld [vmem:[%s2088 + $0x1a0] sm:$0xff]
        %v2335 = vld [vmem:[%s2088 + $0x1b8] sm:$0xff]
        %v2336 = vld [vmem:[%s2088 + $0x1d0] sm:$0xff]
        %v2337 = vld [vmem:[%s2088 + $0x248] sm:$0xff]
        %v2338 = vld [vmem:[%s2088 + $0x260] sm:$0xff]
        %v2339 = vld [vmem:[%s2088 + $0x278] sm:$0xff]
        %v2340 = vld [vmem:[%s2088 + $0x290] sm:$0xff]
        %v2341 = vld [vmem:[%s2088 + $0x2a8] sm:$0xff]
        %v2342 = vld [vmem:[%s2088 + $0x2c0] sm:$0xff]
        %v2343 = vld [vmem:[%s2088 + $0x2d8] sm:$0xff]
        %v2344 = vld [vmem:[%s2088 + $0x2f0] sm:$0xff]
        %v2345 = vld [vmem:[%s2088 + $0x368] sm:$0xff]
        %v2346 = vld [vmem:[%s2088 + $0x380] sm:$0xff]
        %v2347 = vld [vmem:[%s2088 + $0x398] sm:$0xff]
        %v2348 = vld [vmem:[%s2088 + $0x3b0] sm:$0xff]
        %v2349 = vld [vmem:[%s2088 + $0x3c8] sm:$0xff]
        %v2350 = vld [vmem:[%s2088 + $0x3e0] sm:$0xff]
        %v2351 = vld [vmem:[%s2088 + $0x3f8] sm:$0xff]
        %v2352 = vld [vmem:[%s2088 + $0x410] sm:$0xff]
        %v2353 = vlaneseq
        %v2354 = vshrl.u32 %v2353, 7
        %v2355 = vsub.s32 0, %v2354
        %v2356 = vrot.slane %v1073, %v2355
        %v2357 = vlaneseq
        %v2358 = vshrl.u32 %v2357, 7
        %v2359 = vsub.s32 0, %v2358
        %v2360 = vrot.slane %v1080, %v2359
        %v2361 = vlaneseq
        %v2362 = vshrl.u32 %v2361, 7
        %v2363 = vsub.s32 0, %v2362
        %v2364 = vrot.slane %v1081, %v2363
        %v2365 = vlaneseq
        %v2366 = vshrl.u32 %v2365, 7
        %v2367 = vsub.s32 0, %v2366
        %v2368 = vrot.slane %v1082, %v2367
        %v2373 = vmul.f32 %v2321, %v2356
        %v2374 = vmul.f32 %v2322, %v2356
        %v2375 = vmul.f32 %v2323, %v2356
        %v2376 = vmul.f32 %v2324, %v2356
        %v2377 = vmul.f32 %v2325, %v2356
        %v2378 = vmul.f32 %v2326, %v2356
        %v2379 = vmul.f32 %v2327, %v2356
        %v2380 = vmul.f32 %v2328, %v2356
        %v2381 = vmul.f32 %v2329, %v2360
        %v2382 = vmul.f32 %v2330, %v2360
        %v2383 = vmul.f32 %v2331, %v2360
        %v2384 = vmul.f32 %v2332, %v2360
        %v2385 = vmul.f32 %v2333, %v2360
        %v2386 = vmul.f32 %v2334, %v2360
        %v2387 = vmul.f32 %v2335, %v2360
        %v2388 = vmul.f32 %v2336, %v2360
        %v2389 = vmul.f32 %v2337, %v2364
        %v2390 = vmul.f32 %v2338, %v2364
        %v2391 = vmul.f32 %v2339, %v2364
        %v2392 = vmul.f32 %v2340, %v2364
        %v2393 = vmul.f32 %v2341, %v2364
        %v2394 = vmul.f32 %v2342, %v2364
        %v2395 = vmul.f32 %v2343, %v2364
        %v2396 = vmul.f32 %v2344, %v2364
        %v2397 = vmul.f32 %v2345, %v2368
        %v2398 = vmul.f32 %v2346, %v2368
        %v2399 = vmul.f32 %v2347, %v2368
        %v2400 = vmul.f32 %v2348, %v2368
        %v2401 = vmul.f32 %v2349, %v2368
        %v2402 = vmul.f32 %v2350, %v2368
        %v2403 = vmul.f32 %v2351, %v2368
        %v2404 = vmul.f32 %v2352, %v2368
        %v2405 = vadd.f32 %v2289, %v2373
        %v2406 = vadd.f32 %v2290, %v2374
        %v2407 = vadd.f32 %v2291, %v2375
        %v2408 = vadd.f32 %v2292, %v2376
        %v2409 = vadd.f32 %v2293, %v2377
        %v2410 = vadd.f32 %v2294, %v2378
        %v2411 = vadd.f32 %v2295, %v2379
        %v2412 = vadd.f32 %v2296, %v2380
        %v2413 = vadd.f32 %v2297, %v2381
        %v2414 = vadd.f32 %v2298, %v2382
        %v2415 = vadd.f32 %v2299, %v2383
        %v2416 = vadd.f32 %v2300, %v2384
        %v2417 = vadd.f32 %v2301, %v2385
        %v2418 = vadd.f32 %v2302, %v2386
        %v2419 = vadd.f32 %v2303, %v2387
        %v2420 = vadd.f32 %v2304, %v2388
        %v2421 = vadd.f32 %v2305, %v2389
        %v2422 = vadd.f32 %v2306, %v2390
        %v2423 = vadd.f32 %v2307, %v2391
        %v2424 = vadd.f32 %v2308, %v2392
        %v2425 = vadd.f32 %v2309, %v2393
        %v2426 = vadd.f32 %v2310, %v2394
        %v2427 = vadd.f32 %v2311, %v2395
        %v2428 = vadd.f32 %v2312, %v2396
        %v2429 = vadd.f32 %v2313, %v2397
        %v2430 = vadd.f32 %v2314, %v2398
        %v2431 = vadd.f32 %v2315, %v2399
        %v2432 = vadd.f32 %v2316, %v2400
        %v2433 = vadd.f32 %v2317, %v2401
        %v2434 = vadd.f32 %v2318, %v2402
        %v2435 = vadd.f32 %v2319, %v2403
        %v2436 = vadd.f32 %v2320, %v2404
        %v2437 = vld [vmem:[%s2088 + $0x9] sm:$0xff]
        %v2438 = vld [vmem:[%s2088 + $0x21] sm:$0xff]
        %v2439 = vld [vmem:[%s2088 + $0x39] sm:$0xff]
        %v2440 = vld [vmem:[%s2088 + $0x51] sm:$0xff]
        %v2441 = vld [vmem:[%s2088 + $0x69] sm:$0xff]
        %v2442 = vld [vmem:[%s2088 + $0x81] sm:$0xff]
        %v2443 = vld [vmem:[%s2088 + $0x99] sm:$0xff]
        %v2444 = vld [vmem:[%s2088 + $0xb1] sm:$0xff]
        %v2445 = vld [vmem:[%s2088 + $0x129] sm:$0xff]
        %v2446 = vld [vmem:[%s2088 + $0x141] sm:$0xff]
        %v2447 = vld [vmem:[%s2088 + $0x159] sm:$0xff]
        %v2448 = vld [vmem:[%s2088 + $0x171] sm:$0xff]
        %v2449 = vld [vmem:[%s2088 + $0x189] sm:$0xff]
        %v2450 = vld [vmem:[%s2088 + $0x1a1] sm:$0xff]
        %v2451 = vld [vmem:[%s2088 + $0x1b9] sm:$0xff]
        %v2452 = vld [vmem:[%s2088 + $0x1d1] sm:$0xff]
        %v2453 = vld [vmem:[%s2088 + $0x249] sm:$0xff]
        %v2454 = vld [vmem:[%s2088 + $0x261] sm:$0xff]
        %v2455 = vld [vmem:[%s2088 + $0x279] sm:$0xff]
        %v2456 = vld [vmem:[%s2088 + $0x291] sm:$0xff]
        %v2457 = vld [vmem:[%s2088 + $0x2a9] sm:$0xff]
        %v2458 = vld [vmem:[%s2088 + $0x2c1] sm:$0xff]
        %v2459 = vld [vmem:[%s2088 + $0x2d9] sm:$0xff]
        %v2460 = vld [vmem:[%s2088 + $0x2f1] sm:$0xff]
        %v2461 = vld [vmem:[%s2088 + $0x369] sm:$0xff]
        %v2462 = vld [vmem:[%s2088 + $0x381] sm:$0xff]
        %v2463 = vld [vmem:[%s2088 + $0x399] sm:$0xff]
        %v2464 = vld [vmem:[%s2088 + $0x3b1] sm:$0xff]
        %v2465 = vld [vmem:[%s2088 + $0x3c9] sm:$0xff]
        %v2466 = vld [vmem:[%s2088 + $0x3e1] sm:$0xff]
        %v2467 = vld [vmem:[%s2088 + $0x3f9] sm:$0xff]
        %v2468 = vld [vmem:[%s2088 + $0x411] sm:$0xff]
        %v2469 = vlaneseq
        %v2470 = vshrl.u32 %v2469, 7
        %v2471 = vsub.s32 0, %v2470
        %v2472 = vrot.slane %v1098, %v2471
        %v2473 = vlaneseq
        %v2474 = vshrl.u32 %v2473, 7
        %v2475 = vsub.s32 0, %v2474
        %v2476 = vrot.slane %v1105, %v2475
        %v2477 = vlaneseq
        %v2478 = vshrl.u32 %v2477, 7
        %v2479 = vsub.s32 0, %v2478
        %v2480 = vrot.slane %v1106, %v2479
        %v2481 = vlaneseq
        %v2482 = vshrl.u32 %v2481, 7
        %v2483 = vsub.s32 0, %v2482
        %v2484 = vrot.slane %v1107, %v2483
        %v2489 = vmul.f32 %v2437, %v2472
        %v2490 = vmul.f32 %v2438, %v2472
        %v2491 = vmul.f32 %v2439, %v2472
        %v2492 = vmul.f32 %v2440, %v2472
        %v2493 = vmul.f32 %v2441, %v2472
        %v2494 = vmul.f32 %v2442, %v2472
        %v2495 = vmul.f32 %v2443, %v2472
        %v2496 = vmul.f32 %v2444, %v2472
        %v2497 = vmul.f32 %v2445, %v2476
        %v2498 = vmul.f32 %v2446, %v2476
        %v2499 = vmul.f32 %v2447, %v2476
        %v2500 = vmul.f32 %v2448, %v2476
        %v2501 = vmul.f32 %v2449, %v2476
        %v2502 = vmul.f32 %v2450, %v2476
        %v2503 = vmul.f32 %v2451, %v2476
        %v2504 = vmul.f32 %v2452, %v2476
        %v2505 = vmul.f32 %v2453, %v2480
        %v2506 = vmul.f32 %v2454, %v2480
        %v2507 = vmul.f32 %v2455, %v2480
        %v2508 = vmul.f32 %v2456, %v2480
        %v2509 = vmul.f32 %v2457, %v2480
        %v2510 = vmul.f32 %v2458, %v2480
        %v2511 = vmul.f32 %v2459, %v2480
        %v2512 = vmul.f32 %v2460, %v2480
        %v2513 = vmul.f32 %v2461, %v2484
        %v2514 = vmul.f32 %v2462, %v2484
        %v2515 = vmul.f32 %v2463, %v2484
        %v2516 = vmul.f32 %v2464, %v2484
        %v2517 = vmul.f32 %v2465, %v2484
        %v2518 = vmul.f32 %v2466, %v2484
        %v2519 = vmul.f32 %v2467, %v2484
        %v2520 = vmul.f32 %v2468, %v2484
        %v2521 = vadd.f32 %v2405, %v2489
        %v2522 = vadd.f32 %v2406, %v2490
        %v2523 = vadd.f32 %v2407, %v2491
        %v2524 = vadd.f32 %v2408, %v2492
        %v2525 = vadd.f32 %v2409, %v2493
        %v2526 = vadd.f32 %v2410, %v2494
        %v2527 = vadd.f32 %v2411, %v2495
        %v2528 = vadd.f32 %v2412, %v2496
        %v2529 = vadd.f32 %v2413, %v2497
        %v2530 = vadd.f32 %v2414, %v2498
        %v2531 = vadd.f32 %v2415, %v2499
        %v2532 = vadd.f32 %v2416, %v2500
        %v2533 = vadd.f32 %v2417, %v2501
        %v2534 = vadd.f32 %v2418, %v2502
        %v2535 = vadd.f32 %v2419, %v2503
        %v2536 = vadd.f32 %v2420, %v2504
        %v2537 = vadd.f32 %v2421, %v2505
        %v2538 = vadd.f32 %v2422, %v2506
        %v2539 = vadd.f32 %v2423, %v2507
        %v2540 = vadd.f32 %v2424, %v2508
        %v2541 = vadd.f32 %v2425, %v2509
        %v2542 = vadd.f32 %v2426, %v2510
        %v2543 = vadd.f32 %v2427, %v2511
        %v2544 = vadd.f32 %v2428, %v2512
        %v2545 = vadd.f32 %v2429, %v2513
        %v2546 = vadd.f32 %v2430, %v2514
        %v2547 = vadd.f32 %v2431, %v2515
        %v2548 = vadd.f32 %v2432, %v2516
        %v2549 = vadd.f32 %v2433, %v2517
        %v2550 = vadd.f32 %v2434, %v2518
        %v2551 = vadd.f32 %v2435, %v2519
        %v2552 = vadd.f32 %v2436, %v2520
        %v2553 = vld [vmem:[%s2088 + $0xa] sm:$0xff]
        %v2554 = vld [vmem:[%s2088 + $0x22] sm:$0xff]
        %v2555 = vld [vmem:[%s2088 + $0x3a] sm:$0xff]
        %v2556 = vld [vmem:[%s2088 + $0x52] sm:$0xff]
        %v2557 = vld [vmem:[%s2088 + $0x6a] sm:$0xff]
        %v2558 = vld [vmem:[%s2088 + $0x82] sm:$0xff]
        %v2559 = vld [vmem:[%s2088 + $0x9a] sm:$0xff]
        %v2560 = vld [vmem:[%s2088 + $0xb2] sm:$0xff]
        %v2561 = vld [vmem:[%s2088 + $0x12a] sm:$0xff]
        %v2562 = vld [vmem:[%s2088 + $0x142] sm:$0xff]
        %v2563 = vld [vmem:[%s2088 + $0x15a] sm:$0xff]
        %v2564 = vld [vmem:[%s2088 + $0x172] sm:$0xff]
        %v2565 = vld [vmem:[%s2088 + $0x18a] sm:$0xff]
        %v2566 = vld [vmem:[%s2088 + $0x1a2] sm:$0xff]
        %v2567 = vld [vmem:[%s2088 + $0x1ba] sm:$0xff]
        %v2568 = vld [vmem:[%s2088 + $0x1d2] sm:$0xff]
        %v2569 = vld [vmem:[%s2088 + $0x24a] sm:$0xff]
        %v2570 = vld [vmem:[%s2088 + $0x262] sm:$0xff]
        %v2571 = vld [vmem:[%s2088 + $0x27a] sm:$0xff]
        %v2572 = vld [vmem:[%s2088 + $0x292] sm:$0xff]
        %v2573 = vld [vmem:[%s2088 + $0x2aa] sm:$0xff]
        %v2574 = vld [vmem:[%s2088 + $0x2c2] sm:$0xff]
        %v2575 = vld [vmem:[%s2088 + $0x2da] sm:$0xff]
        %v2576 = vld [vmem:[%s2088 + $0x2f2] sm:$0xff]
        %v2577 = vld [vmem:[%s2088 + $0x36a] sm:$0xff]
        %v2578 = vld [vmem:[%s2088 + $0x382] sm:$0xff]
        %v2579 = vld [vmem:[%s2088 + $0x39a] sm:$0xff]
        %v2580 = vld [vmem:[%s2088 + $0x3b2] sm:$0xff]
        %v2581 = vld [vmem:[%s2088 + $0x3ca] sm:$0xff]
        %v2582 = vld [vmem:[%s2088 + $0x3e2] sm:$0xff]
        %v2583 = vld [vmem:[%s2088 + $0x3fa] sm:$0xff]
        %v2584 = vld [vmem:[%s2088 + $0x412] sm:$0xff]
        %v2585 = vlaneseq
        %v2586 = vshrl.u32 %v2585, 7
        %v2587 = vsub.s32 0, %v2586
        %v2588 = vrot.slane %v1123, %v2587
        %v2589 = vlaneseq
        %v2590 = vshrl.u32 %v2589, 7
        %v2591 = vsub.s32 0, %v2590
        %v2592 = vrot.slane %v1130, %v2591
        %v2593 = vlaneseq
        %v2594 = vshrl.u32 %v2593, 7
        %v2595 = vsub.s32 0, %v2594
        %v2596 = vrot.slane %v1131, %v2595
        %v2597 = vlaneseq
        %v2598 = vshrl.u32 %v2597, 7
        %v2599 = vsub.s32 0, %v2598
        %v2600 = vrot.slane %v1132, %v2599
        %v2605 = vmul.f32 %v2553, %v2588
        %v2606 = vmul.f32 %v2554, %v2588
        %v2607 = vmul.f32 %v2555, %v2588
        %v2608 = vmul.f32 %v2556, %v2588
        %v2609 = vmul.f32 %v2557, %v2588
        %v2610 = vmul.f32 %v2558, %v2588
        %v2611 = vmul.f32 %v2559, %v2588
        %v2612 = vmul.f32 %v2560, %v2588
        %v2613 = vmul.f32 %v2561, %v2592
        %v2614 = vmul.f32 %v2562, %v2592
        %v2615 = vmul.f32 %v2563, %v2592
        %v2616 = vmul.f32 %v2564, %v2592
        %v2617 = vmul.f32 %v2565, %v2592
        %v2618 = vmul.f32 %v2566, %v2592
        %v2619 = vmul.f32 %v2567, %v2592
        %v2620 = vmul.f32 %v2568, %v2592
        %v2621 = vmul.f32 %v2569, %v2596
        %v2622 = vmul.f32 %v2570, %v2596
        %v2623 = vmul.f32 %v2571, %v2596
        %v2624 = vmul.f32 %v2572, %v2596
        %v2625 = vmul.f32 %v2573, %v2596
        %v2626 = vmul.f32 %v2574, %v2596
        %v2627 = vmul.f32 %v2575, %v2596
        %v2628 = vmul.f32 %v2576, %v2596
        %v2629 = vmul.f32 %v2577, %v2600
        %v2630 = vmul.f32 %v2578, %v2600
        %v2631 = vmul.f32 %v2579, %v2600
        %v2632 = vmul.f32 %v2580, %v2600
        %v2633 = vmul.f32 %v2581, %v2600
        %v2634 = vmul.f32 %v2582, %v2600
        %v2635 = vmul.f32 %v2583, %v2600
        %v2636 = vmul.f32 %v2584, %v2600
        %v2637 = vadd.f32 %v2521, %v2605
        %v2638 = vadd.f32 %v2522, %v2606
        %v2639 = vadd.f32 %v2523, %v2607
        %v2640 = vadd.f32 %v2524, %v2608
        %v2641 = vadd.f32 %v2525, %v2609
        %v2642 = vadd.f32 %v2526, %v2610
        %v2643 = vadd.f32 %v2527, %v2611
        %v2644 = vadd.f32 %v2528, %v2612
        %v2645 = vadd.f32 %v2529, %v2613
        %v2646 = vadd.f32 %v2530, %v2614
        %v2647 = vadd.f32 %v2531, %v2615
        %v2648 = vadd.f32 %v2532, %v2616
        %v2649 = vadd.f32 %v2533, %v2617
        %v2650 = vadd.f32 %v2534, %v2618
        %v2651 = vadd.f32 %v2535, %v2619
        %v2652 = vadd.f32 %v2536, %v2620
        %v2653 = vadd.f32 %v2537, %v2621
        %v2654 = vadd.f32 %v2538, %v2622
        %v2655 = vadd.f32 %v2539, %v2623
        %v2656 = vadd.f32 %v2540, %v2624
        %v2657 = vadd.f32 %v2541, %v2625
        %v2658 = vadd.f32 %v2542, %v2626
        %v2659 = vadd.f32 %v2543, %v2627
        %v2660 = vadd.f32 %v2544, %v2628
        %v2661 = vadd.f32 %v2545, %v2629
        %v2662 = vadd.f32 %v2546, %v2630
        %v2663 = vadd.f32 %v2547, %v2631
        %v2664 = vadd.f32 %v2548, %v2632
        %v2665 = vadd.f32 %v2549, %v2633
        %v2666 = vadd.f32 %v2550, %v2634
        %v2667 = vadd.f32 %v2551, %v2635
        %v2668 = vadd.f32 %v2552, %v2636
        %v2669 = vld [vmem:[%s770 + $0x6] sm:$0xff]
        %v2670 = vld [vmem:[%s770 + $0x1e] sm:$0xff]
        %v2671 = vld [vmem:[%s770 + $0x36] sm:$0xff]
        %v2672 = vld [vmem:[%s770 + $0x4e] sm:$0xff]
        %v2673 = vld [vmem:[%s770 + $0x66] sm:$0xff]
        %v2674 = vld [vmem:[%s770 + $0x7e] sm:$0xff]
        %v2675 = vld [vmem:[%s770 + $0x96] sm:$0xff]
        %v2676 = vld [vmem:[%s770 + $0xae] sm:$0xff]
        %v2677 = vld [vmem:[%s770 + $0x126] sm:$0xff]
        %v2678 = vld [vmem:[%s770 + $0x13e] sm:$0xff]
        %v2679 = vld [vmem:[%s770 + $0x156] sm:$0xff]
        %v2680 = vld [vmem:[%s770 + $0x16e] sm:$0xff]
        %v2681 = vld [vmem:[%s770 + $0x186] sm:$0xff]
        %v2682 = vld [vmem:[%s770 + $0x19e] sm:$0xff]
        %v2683 = vld [vmem:[%s770 + $0x1b6] sm:$0xff]
        %v2684 = vld [vmem:[%s770 + $0x1ce] sm:$0xff]
        %v2685 = vld [vmem:[%s770 + $0x246] sm:$0xff]
        %v2686 = vld [vmem:[%s770 + $0x25e] sm:$0xff]
        %v2687 = vld [vmem:[%s770 + $0x276] sm:$0xff]
        %v2688 = vld [vmem:[%s770 + $0x28e] sm:$0xff]
        %v2689 = vld [vmem:[%s770 + $0x2a6] sm:$0xff]
        %v2690 = vld [vmem:[%s770 + $0x2be] sm:$0xff]
        %v2691 = vld [vmem:[%s770 + $0x2d6] sm:$0xff]
        %v2692 = vld [vmem:[%s770 + $0x2ee] sm:$0xff]
        %v2693 = vld [vmem:[%s770 + $0x366] sm:$0xff]
        %v2694 = vld [vmem:[%s770 + $0x37e] sm:$0xff]
        %v2695 = vld [vmem:[%s770 + $0x396] sm:$0xff]
        %v2696 = vld [vmem:[%s770 + $0x3ae] sm:$0xff]
        %v2697 = vld [vmem:[%s770 + $0x3c6] sm:$0xff]
        %v2698 = vld [vmem:[%s770 + $0x3de] sm:$0xff]
        %v2699 = vld [vmem:[%s770 + $0x3f6] sm:$0xff]
        %v2700 = vld [vmem:[%s770 + $0x40e] sm:$0xff]
        %v2701 = vlaneseq
        %v2702 = vshrl.u32 %v2701, 7
        %v2703 = vsub.s32 0, %v2702
        %v2704 = vrot.slane %v1148, %v2703
        %v2705 = vlaneseq
        %v2706 = vshrl.u32 %v2705, 7
        %v2707 = vsub.s32 0, %v2706
        %v2708 = vrot.slane %v1155, %v2707
        %v2709 = vlaneseq
        %v2710 = vshrl.u32 %v2709, 7
        %v2711 = vsub.s32 0, %v2710
        %v2712 = vrot.slane %v1156, %v2711
        %v2713 = vlaneseq
        %v2714 = vshrl.u32 %v2713, 7
        %v2715 = vsub.s32 0, %v2714
        %v2716 = vrot.slane %v1157, %v2715
        %v2721 = vmul.f32 %v2669, %v2704
        %v2722 = vmul.f32 %v2670, %v2704
        %v2723 = vmul.f32 %v2671, %v2704
        %v2724 = vmul.f32 %v2672, %v2704
        %v2725 = vmul.f32 %v2673, %v2704
        %v2726 = vmul.f32 %v2674, %v2704
        %v2727 = vmul.f32 %v2675, %v2704
        %v2728 = vmul.f32 %v2676, %v2704
        %v2729 = vmul.f32 %v2677, %v2708
        %v2730 = vmul.f32 %v2678, %v2708
        %v2731 = vmul.f32 %v2679, %v2708
        %v2732 = vmul.f32 %v2680, %v2708
        %v2733 = vmul.f32 %v2681, %v2708
        %v2734 = vmul.f32 %v2682, %v2708
        %v2735 = vmul.f32 %v2683, %v2708
        %v2736 = vmul.f32 %v2684, %v2708
        %v2737 = vmul.f32 %v2685, %v2712
        %v2738 = vmul.f32 %v2686, %v2712
        %v2739 = vmul.f32 %v2687, %v2712
        %v2740 = vmul.f32 %v2688, %v2712
        %v2741 = vmul.f32 %v2689, %v2712
        %v2742 = vmul.f32 %v2690, %v2712
        %v2743 = vmul.f32 %v2691, %v2712
        %v2744 = vmul.f32 %v2692, %v2712
        %v2745 = vmul.f32 %v2693, %v2716
        %v2746 = vmul.f32 %v2694, %v2716
        %v2747 = vmul.f32 %v2695, %v2716
        %v2748 = vmul.f32 %v2696, %v2716
        %v2749 = vmul.f32 %v2697, %v2716
        %v2750 = vmul.f32 %v2698, %v2716
        %v2751 = vmul.f32 %v2699, %v2716
        %v2752 = vmul.f32 %v2700, %v2716
        %v2753 = vadd.f32 %v2637, %v2721
        %v2754 = vadd.f32 %v2638, %v2722
        %v2755 = vadd.f32 %v2639, %v2723
        %v2756 = vadd.f32 %v2640, %v2724
        %v2757 = vadd.f32 %v2641, %v2725
        %v2758 = vadd.f32 %v2642, %v2726
        %v2759 = vadd.f32 %v2643, %v2727
        %v2760 = vadd.f32 %v2644, %v2728
        %v2761 = vadd.f32 %v2645, %v2729
        %v2762 = vadd.f32 %v2646, %v2730
        %v2763 = vadd.f32 %v2647, %v2731
        %v2764 = vadd.f32 %v2648, %v2732
        %v2765 = vadd.f32 %v2649, %v2733
        %v2766 = vadd.f32 %v2650, %v2734
        %v2767 = vadd.f32 %v2651, %v2735
        %v2768 = vadd.f32 %v2652, %v2736
        %v2769 = vadd.f32 %v2653, %v2737
        %v2770 = vadd.f32 %v2654, %v2738
        %v2771 = vadd.f32 %v2655, %v2739
        %v2772 = vadd.f32 %v2656, %v2740
        %v2773 = vadd.f32 %v2657, %v2741
        %v2774 = vadd.f32 %v2658, %v2742
        %v2775 = vadd.f32 %v2659, %v2743
        %v2776 = vadd.f32 %v2660, %v2744
        %v2777 = vadd.f32 %v2661, %v2745
        %v2778 = vadd.f32 %v2662, %v2746
        %v2779 = vadd.f32 %v2663, %v2747
        %v2780 = vadd.f32 %v2664, %v2748
        %v2781 = vadd.f32 %v2665, %v2749
        %v2782 = vadd.f32 %v2666, %v2750
        %v2783 = vadd.f32 %v2667, %v2751
        %v2784 = vadd.f32 %v2668, %v2752
        %v2785 = vld [vmem:[%s770 + $0x7] sm:$0xff]
        %v2786 = vld [vmem:[%s770 + $0x1f] sm:$0xff]
        %v2787 = vld [vmem:[%s770 + $0x37] sm:$0xff]
        %v2788 = vld [vmem:[%s770 + $0x4f] sm:$0xff]
        %v2789 = vld [vmem:[%s770 + $0x67] sm:$0xff]
        %v2790 = vld [vmem:[%s770 + $0x7f] sm:$0xff]
        %v2791 = vld [vmem:[%s770 + $0x97] sm:$0xff]
        %v2792 = vld [vmem:[%s770 + $0xaf] sm:$0xff]
        %v2793 = vld [vmem:[%s770 + $0x127] sm:$0xff]
        %v2794 = vld [vmem:[%s770 + $0x13f] sm:$0xff]
        %v2795 = vld [vmem:[%s770 + $0x157] sm:$0xff]
        %v2796 = vld [vmem:[%s770 + $0x16f] sm:$0xff]
        %v2797 = vld [vmem:[%s770 + $0x187] sm:$0xff]
        %v2798 = vld [vmem:[%s770 + $0x19f] sm:$0xff]
        %v2799 = vld [vmem:[%s770 + $0x1b7] sm:$0xff]
        %v2800 = vld [vmem:[%s770 + $0x1cf] sm:$0xff]
        %v2801 = vld [vmem:[%s770 + $0x247] sm:$0xff]
        %v2802 = vld [vmem:[%s770 + $0x25f] sm:$0xff]
        %v2803 = vld [vmem:[%s770 + $0x277] sm:$0xff]
        %v2804 = vld [vmem:[%s770 + $0x28f] sm:$0xff]
        %v2805 = vld [vmem:[%s770 + $0x2a7] sm:$0xff]
        %v2806 = vld [vmem:[%s770 + $0x2bf] sm:$0xff]
        %v2807 = vld [vmem:[%s770 + $0x2d7] sm:$0xff]
        %v2808 = vld [vmem:[%s770 + $0x2ef] sm:$0xff]
        %v2809 = vld [vmem:[%s770 + $0x367] sm:$0xff]
        %v2810 = vld [vmem:[%s770 + $0x37f] sm:$0xff]
        %v2811 = vld [vmem:[%s770 + $0x397] sm:$0xff]
        %v2812 = vld [vmem:[%s770 + $0x3af] sm:$0xff]
        %v2813 = vld [vmem:[%s770 + $0x3c7] sm:$0xff]
        %v2814 = vld [vmem:[%s770 + $0x3df] sm:$0xff]
        %v2815 = vld [vmem:[%s770 + $0x3f7] sm:$0xff]
        %v2816 = vld [vmem:[%s770 + $0x40f] sm:$0xff]
        %v2817 = vlaneseq
        %v2818 = vshrl.u32 %v2817, 7
        %v2819 = vsub.s32 0, %v2818
        %v2820 = vrot.slane %v1173, %v2819
        %v2821 = vlaneseq
        %v2822 = vshrl.u32 %v2821, 7
        %v2823 = vsub.s32 0, %v2822
        %v2824 = vrot.slane %v1180, %v2823
        %v2825 = vlaneseq
        %v2826 = vshrl.u32 %v2825, 7
        %v2827 = vsub.s32 0, %v2826
        %v2828 = vrot.slane %v1181, %v2827
        %v2829 = vlaneseq
        %v2830 = vshrl.u32 %v2829, 7
        %v2831 = vsub.s32 0, %v2830
        %v2832 = vrot.slane %v1182, %v2831
        %v2837 = vmul.f32 %v2785, %v2820
        %v2838 = vmul.f32 %v2786, %v2820
        %v2839 = vmul.f32 %v2787, %v2820
        %v2840 = vmul.f32 %v2788, %v2820
        %v2841 = vmul.f32 %v2789, %v2820
        %v2842 = vmul.f32 %v2790, %v2820
        %v2843 = vmul.f32 %v2791, %v2820
        %v2844 = vmul.f32 %v2792, %v2820
        %v2845 = vmul.f32 %v2793, %v2824
        %v2846 = vmul.f32 %v2794, %v2824
        %v2847 = vmul.f32 %v2795, %v2824
        %v2848 = vmul.f32 %v2796, %v2824
        %v2849 = vmul.f32 %v2797, %v2824
        %v2850 = vmul.f32 %v2798, %v2824
        %v2851 = vmul.f32 %v2799, %v2824
        %v2852 = vmul.f32 %v2800, %v2824
        %v2853 = vmul.f32 %v2801, %v2828
        %v2854 = vmul.f32 %v2802, %v2828
        %v2855 = vmul.f32 %v2803, %v2828
        %v2856 = vmul.f32 %v2804, %v2828
        %v2857 = vmul.f32 %v2805, %v2828
        %v2858 = vmul.f32 %v2806, %v2828
        %v2859 = vmul.f32 %v2807, %v2828
        %v2860 = vmul.f32 %v2808, %v2828
        %v2861 = vmul.f32 %v2809, %v2832
        %v2862 = vmul.f32 %v2810, %v2832
        %v2863 = vmul.f32 %v2811, %v2832
        %v2864 = vmul.f32 %v2812, %v2832
        %v2865 = vmul.f32 %v2813, %v2832
        %v2866 = vmul.f32 %v2814, %v2832
        %v2867 = vmul.f32 %v2815, %v2832
        %v2868 = vmul.f32 %v2816, %v2832
        %v2869 = vadd.f32 %v2753, %v2837
        %v2870 = vadd.f32 %v2754, %v2838
        %v2871 = vadd.f32 %v2755, %v2839
        %v2872 = vadd.f32 %v2756, %v2840
        %v2873 = vadd.f32 %v2757, %v2841
        %v2874 = vadd.f32 %v2758, %v2842
        %v2875 = vadd.f32 %v2759, %v2843
        %v2876 = vadd.f32 %v2760, %v2844
        %v2877 = vadd.f32 %v2761, %v2845
        %v2878 = vadd.f32 %v2762, %v2846
        %v2879 = vadd.f32 %v2763, %v2847
        %v2880 = vadd.f32 %v2764, %v2848
        %v2881 = vadd.f32 %v2765, %v2849
        %v2882 = vadd.f32 %v2766, %v2850
        %v2883 = vadd.f32 %v2767, %v2851
        %v2884 = vadd.f32 %v2768, %v2852
        %v2885 = vadd.f32 %v2769, %v2853
        %v2886 = vadd.f32 %v2770, %v2854
        %v2887 = vadd.f32 %v2771, %v2855
        %v2888 = vadd.f32 %v2772, %v2856
        %v2889 = vadd.f32 %v2773, %v2857
        %v2890 = vadd.f32 %v2774, %v2858
        %v2891 = vadd.f32 %v2775, %v2859
        %v2892 = vadd.f32 %v2776, %v2860
        %v2893 = vadd.f32 %v2777, %v2861
        %v2894 = vadd.f32 %v2778, %v2862
        %v2895 = vadd.f32 %v2779, %v2863
        %v2896 = vadd.f32 %v2780, %v2864
        %v2897 = vadd.f32 %v2781, %v2865
        %v2898 = vadd.f32 %v2782, %v2866
        %v2899 = vadd.f32 %v2783, %v2867
        %v2900 = vadd.f32 %v2784, %v2868
        %v2901 = vld [vmem:[%s770 + $0x8] sm:$0xff]
        %v2902 = vld [vmem:[%s770 + $0x20] sm:$0xff]
        %v2903 = vld [vmem:[%s770 + $0x38] sm:$0xff]
        %v2904 = vld [vmem:[%s770 + $0x50] sm:$0xff]
        %v2905 = vld [vmem:[%s770 + $0x68] sm:$0xff]
        %v2906 = vld [vmem:[%s770 + $0x80] sm:$0xff]
        %v2907 = vld [vmem:[%s770 + $0x98] sm:$0xff]
        %v2908 = vld [vmem:[%s770 + $0xb0] sm:$0xff]
        %v2909 = vld [vmem:[%s770 + $0x128] sm:$0xff]
        %v2910 = vld [vmem:[%s770 + $0x140] sm:$0xff]
        %v2911 = vld [vmem:[%s770 + $0x158] sm:$0xff]
        %v2912 = vld [vmem:[%s770 + $0x170] sm:$0xff]
        %v2913 = vld [vmem:[%s770 + $0x188] sm:$0xff]
        %v2914 = vld [vmem:[%s770 + $0x1a0] sm:$0xff]
        %v2915 = vld [vmem:[%s770 + $0x1b8] sm:$0xff]
        %v2916 = vld [vmem:[%s770 + $0x1d0] sm:$0xff]
        %v2917 = vld [vmem:[%s770 + $0x248] sm:$0xff]
        %v2918 = vld [vmem:[%s770 + $0x260] sm:$0xff]
        %v2919 = vld [vmem:[%s770 + $0x278] sm:$0xff]
        %v2920 = vld [vmem:[%s770 + $0x290] sm:$0xff]
        %v2921 = vld [vmem:[%s770 + $0x2a8] sm:$0xff]
        %v2922 = vld [vmem:[%s770 + $0x2c0] sm:$0xff]
        %v2923 = vld [vmem:[%s770 + $0x2d8] sm:$0xff]
        %v2924 = vld [vmem:[%s770 + $0x2f0] sm:$0xff]
        %v2925 = vld [vmem:[%s770 + $0x368] sm:$0xff]
        %v2926 = vld [vmem:[%s770 + $0x380] sm:$0xff]
        %v2927 = vld [vmem:[%s770 + $0x398] sm:$0xff]
        %v2928 = vld [vmem:[%s770 + $0x3b0] sm:$0xff]
        %v2929 = vld [vmem:[%s770 + $0x3c8] sm:$0xff]
        %v2930 = vld [vmem:[%s770 + $0x3e0] sm:$0xff]
        %v2931 = vld [vmem:[%s770 + $0x3f8] sm:$0xff]
        %v2932 = vld [vmem:[%s770 + $0x410] sm:$0xff]
        %v2933 = vlaneseq
        %v2934 = vshrl.u32 %v2933, 7
        %v2935 = vsub.s32 0, %v2934
        %v2936 = vrot.slane %v1198, %v2935
        %v2937 = vlaneseq
        %v2938 = vshrl.u32 %v2937, 7
        %v2939 = vsub.s32 0, %v2938
        %v2940 = vrot.slane %v1205, %v2939
        %v2941 = vlaneseq
        %v2942 = vshrl.u32 %v2941, 7
        %v2943 = vsub.s32 0, %v2942
        %v2944 = vrot.slane %v1206, %v2943
        %v2945 = vlaneseq
        %v2946 = vshrl.u32 %v2945, 7
        %v2947 = vsub.s32 0, %v2946
        %v2948 = vrot.slane %v1207, %v2947
        %v2953 = vmul.f32 %v2901, %v2936
        %v2954 = vmul.f32 %v2902, %v2936
        %v2955 = vmul.f32 %v2903, %v2936
        %v2956 = vmul.f32 %v2904, %v2936
        %v2957 = vmul.f32 %v2905, %v2936
        %v2958 = vmul.f32 %v2906, %v2936
        %v2959 = vmul.f32 %v2907, %v2936
        %v2960 = vmul.f32 %v2908, %v2936
        %v2961 = vmul.f32 %v2909, %v2940
        %v2962 = vmul.f32 %v2910, %v2940
        %v2963 = vmul.f32 %v2911, %v2940
        %v2964 = vmul.f32 %v2912, %v2940
        %v2965 = vmul.f32 %v2913, %v2940
        %v2966 = vmul.f32 %v2914, %v2940
        %v2967 = vmul.f32 %v2915, %v2940
        %v2968 = vmul.f32 %v2916, %v2940
        %v2969 = vmul.f32 %v2917, %v2944
        %v2970 = vmul.f32 %v2918, %v2944
        %v2971 = vmul.f32 %v2919, %v2944
        %v2972 = vmul.f32 %v2920, %v2944
        %v2973 = vmul.f32 %v2921, %v2944
        %v2974 = vmul.f32 %v2922, %v2944
        %v2975 = vmul.f32 %v2923, %v2944
        %v2976 = vmul.f32 %v2924, %v2944
        %v2977 = vmul.f32 %v2925, %v2948
        %v2978 = vmul.f32 %v2926, %v2948
        %v2979 = vmul.f32 %v2927, %v2948
        %v2980 = vmul.f32 %v2928, %v2948
        %v2981 = vmul.f32 %v2929, %v2948
        %v2982 = vmul.f32 %v2930, %v2948
        %v2983 = vmul.f32 %v2931, %v2948
        %v2984 = vmul.f32 %v2932, %v2948
        %v2985 = vadd.f32 %v2869, %v2953
        %v2986 = vadd.f32 %v2870, %v2954
        %v2987 = vadd.f32 %v2871, %v2955
        %v2988 = vadd.f32 %v2872, %v2956
        %v2989 = vadd.f32 %v2873, %v2957
        %v2990 = vadd.f32 %v2874, %v2958
        %v2991 = vadd.f32 %v2875, %v2959
        %v2992 = vadd.f32 %v2876, %v2960
        %v2993 = vadd.f32 %v2877, %v2961
        %v2994 = vadd.f32 %v2878, %v2962
        %v2995 = vadd.f32 %v2879, %v2963
        %v2996 = vadd.f32 %v2880, %v2964
        %v2997 = vadd.f32 %v2881, %v2965
        %v2998 = vadd.f32 %v2882, %v2966
        %v2999 = vadd.f32 %v2883, %v2967
        %v3000 = vadd.f32 %v2884, %v2968
        %v3001 = vadd.f32 %v2885, %v2969
        %v3002 = vadd.f32 %v2886, %v2970
        %v3003 = vadd.f32 %v2887, %v2971
        %v3004 = vadd.f32 %v2888, %v2972
        %v3005 = vadd.f32 %v2889, %v2973
        %v3006 = vadd.f32 %v2890, %v2974
        %v3007 = vadd.f32 %v2891, %v2975
        %v3008 = vadd.f32 %v2892, %v2976
        %v3009 = vadd.f32 %v2893, %v2977
        %v3010 = vadd.f32 %v2894, %v2978
        %v3011 = vadd.f32 %v2895, %v2979
        %v3012 = vadd.f32 %v2896, %v2980
        %v3013 = vadd.f32 %v2897, %v2981
        %v3014 = vadd.f32 %v2898, %v2982
        %v3015 = vadd.f32 %v2899, %v2983
        %v3016 = vadd.f32 %v2900, %v2984
        %v3017 = vld [vmem:[%s770 + $0x9] sm:$0xff]
        %v3018 = vld [vmem:[%s770 + $0x21] sm:$0xff]
        %v3019 = vld [vmem:[%s770 + $0x39] sm:$0xff]
        %v3020 = vld [vmem:[%s770 + $0x51] sm:$0xff]
        %v3021 = vld [vmem:[%s770 + $0x69] sm:$0xff]
        %v3022 = vld [vmem:[%s770 + $0x81] sm:$0xff]
        %v3023 = vld [vmem:[%s770 + $0x99] sm:$0xff]
        %v3024 = vld [vmem:[%s770 + $0xb1] sm:$0xff]
        %v3025 = vld [vmem:[%s770 + $0x129] sm:$0xff]
        %v3026 = vld [vmem:[%s770 + $0x141] sm:$0xff]
        %v3027 = vld [vmem:[%s770 + $0x159] sm:$0xff]
        %v3028 = vld [vmem:[%s770 + $0x171] sm:$0xff]
        %v3029 = vld [vmem:[%s770 + $0x189] sm:$0xff]
        %v3030 = vld [vmem:[%s770 + $0x1a1] sm:$0xff]
        %v3031 = vld [vmem:[%s770 + $0x1b9] sm:$0xff]
        %v3032 = vld [vmem:[%s770 + $0x1d1] sm:$0xff]
        %v3033 = vld [vmem:[%s770 + $0x249] sm:$0xff]
        %v3034 = vld [vmem:[%s770 + $0x261] sm:$0xff]
        %v3035 = vld [vmem:[%s770 + $0x279] sm:$0xff]
        %v3036 = vld [vmem:[%s770 + $0x291] sm:$0xff]
        %v3037 = vld [vmem:[%s770 + $0x2a9] sm:$0xff]
        %v3038 = vld [vmem:[%s770 + $0x2c1] sm:$0xff]
        %v3039 = vld [vmem:[%s770 + $0x2d9] sm:$0xff]
        %v3040 = vld [vmem:[%s770 + $0x2f1] sm:$0xff]
        %v3041 = vld [vmem:[%s770 + $0x369] sm:$0xff]
        %v3042 = vld [vmem:[%s770 + $0x381] sm:$0xff]
        %v3043 = vld [vmem:[%s770 + $0x399] sm:$0xff]
        %v3044 = vld [vmem:[%s770 + $0x3b1] sm:$0xff]
        %v3045 = vld [vmem:[%s770 + $0x3c9] sm:$0xff]
        %v3046 = vld [vmem:[%s770 + $0x3e1] sm:$0xff]
        %v3047 = vld [vmem:[%s770 + $0x3f9] sm:$0xff]
        %v3048 = vld [vmem:[%s770 + $0x411] sm:$0xff]
        %v3049 = vlaneseq
        %v3050 = vshrl.u32 %v3049, 7
        %v3051 = vsub.s32 0, %v3050
        %v3052 = vrot.slane %v1223, %v3051
        %v3053 = vlaneseq
        %v3054 = vshrl.u32 %v3053, 7
        %v3055 = vsub.s32 0, %v3054
        %v3056 = vrot.slane %v1230, %v3055
        %v3057 = vlaneseq
        %v3058 = vshrl.u32 %v3057, 7
        %v3059 = vsub.s32 0, %v3058
        %v3060 = vrot.slane %v1231, %v3059
        %v3061 = vlaneseq
        %v3062 = vshrl.u32 %v3061, 7
        %v3063 = vsub.s32 0, %v3062
        %v3064 = vrot.slane %v1232, %v3063
        %v3069 = vmul.f32 %v3017, %v3052
        %v3070 = vmul.f32 %v3018, %v3052
        %v3071 = vmul.f32 %v3019, %v3052
        %v3072 = vmul.f32 %v3020, %v3052
        %v3073 = vmul.f32 %v3021, %v3052
        %v3074 = vmul.f32 %v3022, %v3052
        %v3075 = vmul.f32 %v3023, %v3052
        %v3076 = vmul.f32 %v3024, %v3052
        %v3077 = vmul.f32 %v3025, %v3056
        %v3078 = vmul.f32 %v3026, %v3056
        %v3079 = vmul.f32 %v3027, %v3056
        %v3080 = vmul.f32 %v3028, %v3056
        %v3081 = vmul.f32 %v3029, %v3056
        %v3082 = vmul.f32 %v3030, %v3056
        %v3083 = vmul.f32 %v3031, %v3056
        %v3084 = vmul.f32 %v3032, %v3056
        %v3085 = vmul.f32 %v3033, %v3060
        %v3086 = vmul.f32 %v3034, %v3060
        %v3087 = vmul.f32 %v3035, %v3060
        %v3088 = vmul.f32 %v3036, %v3060
        %v3089 = vmul.f32 %v3037, %v3060
        %v3090 = vmul.f32 %v3038, %v3060
        %v3091 = vmul.f32 %v3039, %v3060
        %v3092 = vmul.f32 %v3040, %v3060
        %v3093 = vmul.f32 %v3041, %v3064
        %v3094 = vmul.f32 %v3042, %v3064
        %v3095 = vmul.f32 %v3043, %v3064
        %v3096 = vmul.f32 %v3044, %v3064
        %v3097 = vmul.f32 %v3045, %v3064
        %v3098 = vmul.f32 %v3046, %v3064
        %v3099 = vmul.f32 %v3047, %v3064
        %v3100 = vmul.f32 %v3048, %v3064
        %v3101 = vadd.f32 %v2985, %v3069
        %v3102 = vadd.f32 %v2986, %v3070
        %v3103 = vadd.f32 %v2987, %v3071
        %v3104 = vadd.f32 %v2988, %v3072
        %v3105 = vadd.f32 %v2989, %v3073
        %v3106 = vadd.f32 %v2990, %v3074
        %v3107 = vadd.f32 %v2991, %v3075
        %v3108 = vadd.f32 %v2992, %v3076
        %v3109 = vadd.f32 %v2993, %v3077
        %v3110 = vadd.f32 %v2994, %v3078
        %v3111 = vadd.f32 %v2995, %v3079
        %v3112 = vadd.f32 %v2996, %v3080
        %v3113 = vadd.f32 %v2997, %v3081
        %v3114 = vadd.f32 %v2998, %v3082
        %v3115 = vadd.f32 %v2999, %v3083
        %v3116 = vadd.f32 %v3000, %v3084
        %v3117 = vadd.f32 %v3001, %v3085
        %v3118 = vadd.f32 %v3002, %v3086
        %v3119 = vadd.f32 %v3003, %v3087
        %v3120 = vadd.f32 %v3004, %v3088
        %v3121 = vadd.f32 %v3005, %v3089
        %v3122 = vadd.f32 %v3006, %v3090
        %v3123 = vadd.f32 %v3007, %v3091
        %v3124 = vadd.f32 %v3008, %v3092
        %v3125 = vadd.f32 %v3009, %v3093
        %v3126 = vadd.f32 %v3010, %v3094
        %v3127 = vadd.f32 %v3011, %v3095
        %v3128 = vadd.f32 %v3012, %v3096
        %v3129 = vadd.f32 %v3013, %v3097
        %v3130 = vadd.f32 %v3014, %v3098
        %v3131 = vadd.f32 %v3015, %v3099
        %v3132 = vadd.f32 %v3016, %v3100
        %v3133 = vld [vmem:[%s770 + $0xa] sm:$0xff]
        %v3134 = vld [vmem:[%s770 + $0x22] sm:$0xff]
        %v3135 = vld [vmem:[%s770 + $0x3a] sm:$0xff]
        %v3136 = vld [vmem:[%s770 + $0x52] sm:$0xff]
        %v3137 = vld [vmem:[%s770 + $0x6a] sm:$0xff]
        %v3138 = vld [vmem:[%s770 + $0x82] sm:$0xff]
        %v3139 = vld [vmem:[%s770 + $0x9a] sm:$0xff]
        %v3140 = vld [vmem:[%s770 + $0xb2] sm:$0xff]
        %v3141 = vld [vmem:[%s770 + $0x12a] sm:$0xff]
        %v3142 = vld [vmem:[%s770 + $0x142] sm:$0xff]
        %v3143 = vld [vmem:[%s770 + $0x15a] sm:$0xff]
        %v3144 = vld [vmem:[%s770 + $0x172] sm:$0xff]
        %v3145 = vld [vmem:[%s770 + $0x18a] sm:$0xff]
        %v3146 = vld [vmem:[%s770 + $0x1a2] sm:$0xff]
        %v3147 = vld [vmem:[%s770 + $0x1ba] sm:$0xff]
        %v3148 = vld [vmem:[%s770 + $0x1d2] sm:$0xff]
        %v3149 = vld [vmem:[%s770 + $0x24a] sm:$0xff]
        %v3150 = vld [vmem:[%s770 + $0x262] sm:$0xff]
        %v3151 = vld [vmem:[%s770 + $0x27a] sm:$0xff]
        %v3152 = vld [vmem:[%s770 + $0x292] sm:$0xff]
        %v3153 = vld [vmem:[%s770 + $0x2aa] sm:$0xff]
        %v3154 = vld [vmem:[%s770 + $0x2c2] sm:$0xff]
        %v3155 = vld [vmem:[%s770 + $0x2da] sm:$0xff]
        %v3156 = vld [vmem:[%s770 + $0x2f2] sm:$0xff]
        %v3157 = vld [vmem:[%s770 + $0x36a] sm:$0xff]
        %v3158 = vld [vmem:[%s770 + $0x382] sm:$0xff]
        %v3159 = vld [vmem:[%s770 + $0x39a] sm:$0xff]
        %v3160 = vld [vmem:[%s770 + $0x3b2] sm:$0xff]
        %v3161 = vld [vmem:[%s770 + $0x3ca] sm:$0xff]
        %v3162 = vld [vmem:[%s770 + $0x3e2] sm:$0xff]
        %v3163 = vld [vmem:[%s770 + $0x3fa] sm:$0xff]
        %v3164 = vld [vmem:[%s770 + $0x412] sm:$0xff]
        %v3165 = vlaneseq
        %v3166 = vshrl.u32 %v3165, 7
        %v3167 = vsub.s32 0, %v3166
        %v3168 = vrot.slane %v1248, %v3167
        %v3169 = vlaneseq
        %v3170 = vshrl.u32 %v3169, 7
        %v3171 = vsub.s32 0, %v3170
        %v3172 = vrot.slane %v1255, %v3171
        %v3173 = vlaneseq
        %v3174 = vshrl.u32 %v3173, 7
        %v3175 = vsub.s32 0, %v3174
        %v3176 = vrot.slane %v1256, %v3175
        %v3177 = vlaneseq
        %v3178 = vshrl.u32 %v3177, 7
        %v3179 = vsub.s32 0, %v3178
        %v3180 = vrot.slane %v1257, %v3179
        %v3185 = vmul.f32 %v3133, %v3168
        %v3186 = vmul.f32 %v3134, %v3168
        %v3187 = vmul.f32 %v3135, %v3168
        %v3188 = vmul.f32 %v3136, %v3168
        %v3189 = vmul.f32 %v3137, %v3168
        %v3190 = vmul.f32 %v3138, %v3168
        %v3191 = vmul.f32 %v3139, %v3168
        %v3192 = vmul.f32 %v3140, %v3168
        %v3193 = vmul.f32 %v3141, %v3172
        %v3194 = vmul.f32 %v3142, %v3172
        %v3195 = vmul.f32 %v3143, %v3172
        %v3196 = vmul.f32 %v3144, %v3172
        %v3197 = vmul.f32 %v3145, %v3172
        %v3198 = vmul.f32 %v3146, %v3172
        %v3199 = vmul.f32 %v3147, %v3172
        %v3200 = vmul.f32 %v3148, %v3172
        %v3201 = vmul.f32 %v3149, %v3176
        %v3202 = vmul.f32 %v3150, %v3176
        %v3203 = vmul.f32 %v3151, %v3176
        %v3204 = vmul.f32 %v3152, %v3176
        %v3205 = vmul.f32 %v3153, %v3176
        %v3206 = vmul.f32 %v3154, %v3176
        %v3207 = vmul.f32 %v3155, %v3176
        %v3208 = vmul.f32 %v3156, %v3176
        %v3209 = vmul.f32 %v3157, %v3180
        %v3210 = vmul.f32 %v3158, %v3180
        %v3211 = vmul.f32 %v3159, %v3180
        %v3212 = vmul.f32 %v3160, %v3180
        %v3213 = vmul.f32 %v3161, %v3180
        %v3214 = vmul.f32 %v3162, %v3180
        %v3215 = vmul.f32 %v3163, %v3180
        %v3216 = vmul.f32 %v3164, %v3180
        %v3217 = vadd.f32 %v3101, %v3185
        %v3218 = vadd.f32 %v3102, %v3186
        %v3219 = vadd.f32 %v3103, %v3187
        %v3220 = vadd.f32 %v3104, %v3188
        %v3221 = vadd.f32 %v3105, %v3189
        %v3222 = vadd.f32 %v3106, %v3190
        %v3223 = vadd.f32 %v3107, %v3191
        %v3224 = vadd.f32 %v3108, %v3192
        %v3225 = vadd.f32 %v3109, %v3193
        %v3226 = vadd.f32 %v3110, %v3194
        %v3227 = vadd.f32 %v3111, %v3195
        %v3228 = vadd.f32 %v3112, %v3196
        %v3229 = vadd.f32 %v3113, %v3197
        %v3230 = vadd.f32 %v3114, %v3198
        %v3231 = vadd.f32 %v3115, %v3199
        %v3232 = vadd.f32 %v3116, %v3200
        %v3233 = vadd.f32 %v3117, %v3201
        %v3234 = vadd.f32 %v3118, %v3202
        %v3235 = vadd.f32 %v3119, %v3203
        %v3236 = vadd.f32 %v3120, %v3204
        %v3237 = vadd.f32 %v3121, %v3205
        %v3238 = vadd.f32 %v3122, %v3206
        %v3239 = vadd.f32 %v3123, %v3207
        %v3240 = vadd.f32 %v3124, %v3208
        %v3241 = vadd.f32 %v3125, %v3209
        %v3242 = vadd.f32 %v3126, %v3210
        %v3243 = vadd.f32 %v3127, %v3211
        %v3244 = vadd.f32 %v3128, %v3212
        %v3245 = vadd.f32 %v3129, %v3213
        %v3246 = vadd.f32 %v3130, %v3214
        %v3247 = vadd.f32 %v3131, %v3215
        %v3248 = vadd.f32 %v3132, %v3216
        %s3249 = scalar_lea.vmem [#allocation2], 72
        %v3250 = vld [vmem:[%s3249 + $0x6] sm:$0xff]
        %v3251 = vld [vmem:[%s3249 + $0x1e] sm:$0xff]
        %v3252 = vld [vmem:[%s3249 + $0x36] sm:$0xff]
        %v3253 = vld [vmem:[%s3249 + $0x4e] sm:$0xff]
        %v3254 = vld [vmem:[%s3249 + $0x66] sm:$0xff]
        %v3255 = vld [vmem:[%s3249 + $0x7e] sm:$0xff]
        %v3256 = vld [vmem:[%s3249 + $0x96] sm:$0xff]
        %v3257 = vld [vmem:[%s3249 + $0xae] sm:$0xff]
        %v3258 = vld [vmem:[%s3249 + $0x126] sm:$0xff]
        %v3259 = vld [vmem:[%s3249 + $0x13e] sm:$0xff]
        %v3260 = vld [vmem:[%s3249 + $0x156] sm:$0xff]
        %v3261 = vld [vmem:[%s3249 + $0x16e] sm:$0xff]
        %v3262 = vld [vmem:[%s3249 + $0x186] sm:$0xff]
        %v3263 = vld [vmem:[%s3249 + $0x19e] sm:$0xff]
        %v3264 = vld [vmem:[%s3249 + $0x1b6] sm:$0xff]
        %v3265 = vld [vmem:[%s3249 + $0x1ce] sm:$0xff]
        %v3266 = vld [vmem:[%s3249 + $0x246] sm:$0xff]
        %v3267 = vld [vmem:[%s3249 + $0x25e] sm:$0xff]
        %v3268 = vld [vmem:[%s3249 + $0x276] sm:$0xff]
        %v3269 = vld [vmem:[%s3249 + $0x28e] sm:$0xff]
        %v3270 = vld [vmem:[%s3249 + $0x2a6] sm:$0xff]
        %v3271 = vld [vmem:[%s3249 + $0x2be] sm:$0xff]
        %v3272 = vld [vmem:[%s3249 + $0x2d6] sm:$0xff]
        %v3273 = vld [vmem:[%s3249 + $0x2ee] sm:$0xff]
        %v3274 = vld [vmem:[%s3249 + $0x366] sm:$0xff]
        %v3275 = vld [vmem:[%s3249 + $0x37e] sm:$0xff]
        %v3276 = vld [vmem:[%s3249 + $0x396] sm:$0xff]
        %v3277 = vld [vmem:[%s3249 + $0x3ae] sm:$0xff]
        %v3278 = vld [vmem:[%s3249 + $0x3c6] sm:$0xff]
        %v3279 = vld [vmem:[%s3249 + $0x3de] sm:$0xff]
        %v3280 = vld [vmem:[%s3249 + $0x3f6] sm:$0xff]
        %v3281 = vld [vmem:[%s3249 + $0x40e] sm:$0xff]
        %v3282 = vlaneseq
        %v3283 = vshrl.u32 %v3282, 7
        %v3284 = vsub.s32 0, %v3283
        %v3285 = vrot.slane %v1273, %v3284
        %v3286 = vlaneseq
        %v3287 = vshrl.u32 %v3286, 7
        %v3288 = vsub.s32 0, %v3287
        %v3289 = vrot.slane %v1280, %v3288
        %v3290 = vlaneseq
        %v3291 = vshrl.u32 %v3290, 7
        %v3292 = vsub.s32 0, %v3291
        %v3293 = vrot.slane %v1281, %v3292
        %v3294 = vlaneseq
        %v3295 = vshrl.u32 %v3294, 7
        %v3296 = vsub.s32 0, %v3295
        %v3297 = vrot.slane %v1282, %v3296
        %v3302 = vmul.f32 %v3250, %v3285
        %v3303 = vmul.f32 %v3251, %v3285
        %v3304 = vmul.f32 %v3252, %v3285
        %v3305 = vmul.f32 %v3253, %v3285
        %v3306 = vmul.f32 %v3254, %v3285
        %v3307 = vmul.f32 %v3255, %v3285
        %v3308 = vmul.f32 %v3256, %v3285
        %v3309 = vmul.f32 %v3257, %v3285
        %v3310 = vmul.f32 %v3258, %v3289
        %v3311 = vmul.f32 %v3259, %v3289
        %v3312 = vmul.f32 %v3260, %v3289
        %v3313 = vmul.f32 %v3261, %v3289
        %v3314 = vmul.f32 %v3262, %v3289
        %v3315 = vmul.f32 %v3263, %v3289
        %v3316 = vmul.f32 %v3264, %v3289
        %v3317 = vmul.f32 %v3265, %v3289
        %v3318 = vmul.f32 %v3266, %v3293
        %v3319 = vmul.f32 %v3267, %v3293
        %v3320 = vmul.f32 %v3268, %v3293
        %v3321 = vmul.f32 %v3269, %v3293
        %v3322 = vmul.f32 %v3270, %v3293
        %v3323 = vmul.f32 %v3271, %v3293
        %v3324 = vmul.f32 %v3272, %v3293
        %v3325 = vmul.f32 %v3273, %v3293
        %v3326 = vmul.f32 %v3274, %v3297
        %v3327 = vmul.f32 %v3275, %v3297
        %v3328 = vmul.f32 %v3276, %v3297
        %v3329 = vmul.f32 %v3277, %v3297
        %v3330 = vmul.f32 %v3278, %v3297
        %v3331 = vmul.f32 %v3279, %v3297
        %v3332 = vmul.f32 %v3280, %v3297
        %v3333 = vmul.f32 %v3281, %v3297
        %v3334 = vadd.f32 %v3217, %v3302
        %v3335 = vadd.f32 %v3218, %v3303
        %v3336 = vadd.f32 %v3219, %v3304
        %v3337 = vadd.f32 %v3220, %v3305
        %v3338 = vadd.f32 %v3221, %v3306
        %v3339 = vadd.f32 %v3222, %v3307
        %v3340 = vadd.f32 %v3223, %v3308
        %v3341 = vadd.f32 %v3224, %v3309
        %v3342 = vadd.f32 %v3225, %v3310
        %v3343 = vadd.f32 %v3226, %v3311
        %v3344 = vadd.f32 %v3227, %v3312
        %v3345 = vadd.f32 %v3228, %v3313
        %v3346 = vadd.f32 %v3229, %v3314
        %v3347 = vadd.f32 %v3230, %v3315
        %v3348 = vadd.f32 %v3231, %v3316
        %v3349 = vadd.f32 %v3232, %v3317
        %v3350 = vadd.f32 %v3233, %v3318
        %v3351 = vadd.f32 %v3234, %v3319
        %v3352 = vadd.f32 %v3235, %v3320
        %v3353 = vadd.f32 %v3236, %v3321
        %v3354 = vadd.f32 %v3237, %v3322
        %v3355 = vadd.f32 %v3238, %v3323
        %v3356 = vadd.f32 %v3239, %v3324
        %v3357 = vadd.f32 %v3240, %v3325
        %v3358 = vadd.f32 %v3241, %v3326
        %v3359 = vadd.f32 %v3242, %v3327
        %v3360 = vadd.f32 %v3243, %v3328
        %v3361 = vadd.f32 %v3244, %v3329
        %v3362 = vadd.f32 %v3245, %v3330
        %v3363 = vadd.f32 %v3246, %v3331
        %v3364 = vadd.f32 %v3247, %v3332
        %v3365 = vadd.f32 %v3248, %v3333
        %v3366 = vld [vmem:[%s3249 + $0x7] sm:$0xff]
        %v3367 = vld [vmem:[%s3249 + $0x1f] sm:$0xff]
        %v3368 = vld [vmem:[%s3249 + $0x37] sm:$0xff]
        %v3369 = vld [vmem:[%s3249 + $0x4f] sm:$0xff]
        %v3370 = vld [vmem:[%s3249 + $0x67] sm:$0xff]
        %v3371 = vld [vmem:[%s3249 + $0x7f] sm:$0xff]
        %v3372 = vld [vmem:[%s3249 + $0x97] sm:$0xff]
        %v3373 = vld [vmem:[%s3249 + $0xaf] sm:$0xff]
        %v3374 = vld [vmem:[%s3249 + $0x127] sm:$0xff]
        %v3375 = vld [vmem:[%s3249 + $0x13f] sm:$0xff]
        %v3376 = vld [vmem:[%s3249 + $0x157] sm:$0xff]
        %v3377 = vld [vmem:[%s3249 + $0x16f] sm:$0xff]
        %v3378 = vld [vmem:[%s3249 + $0x187] sm:$0xff]
        %v3379 = vld [vmem:[%s3249 + $0x19f] sm:$0xff]
        %v3380 = vld [vmem:[%s3249 + $0x1b7] sm:$0xff]
        %v3381 = vld [vmem:[%s3249 + $0x1cf] sm:$0xff]
        %v3382 = vld [vmem:[%s3249 + $0x247] sm:$0xff]
        %v3383 = vld [vmem:[%s3249 + $0x25f] sm:$0xff]
        %v3384 = vld [vmem:[%s3249 + $0x277] sm:$0xff]
        %v3385 = vld [vmem:[%s3249 + $0x28f] sm:$0xff]
        %v3386 = vld [vmem:[%s3249 + $0x2a7] sm:$0xff]
        %v3387 = vld [vmem:[%s3249 + $0x2bf] sm:$0xff]
        %v3388 = vld [vmem:[%s3249 + $0x2d7] sm:$0xff]
        %v3389 = vld [vmem:[%s3249 + $0x2ef] sm:$0xff]
        %v3390 = vld [vmem:[%s3249 + $0x367] sm:$0xff]
        %v3391 = vld [vmem:[%s3249 + $0x37f] sm:$0xff]
        %v3392 = vld [vmem:[%s3249 + $0x397] sm:$0xff]
        %v3393 = vld [vmem:[%s3249 + $0x3af] sm:$0xff]
        %v3394 = vld [vmem:[%s3249 + $0x3c7] sm:$0xff]
        %v3395 = vld [vmem:[%s3249 + $0x3df] sm:$0xff]
        %v3396 = vld [vmem:[%s3249 + $0x3f7] sm:$0xff]
        %v3397 = vld [vmem:[%s3249 + $0x40f] sm:$0xff]
        %v3398 = vlaneseq
        %v3399 = vshrl.u32 %v3398, 7
        %v3400 = vsub.s32 0, %v3399
        %v3401 = vrot.slane %v1298, %v3400
        %v3402 = vlaneseq
        %v3403 = vshrl.u32 %v3402, 7
        %v3404 = vsub.s32 0, %v3403
        %v3405 = vrot.slane %v1305, %v3404
        %v3406 = vlaneseq
        %v3407 = vshrl.u32 %v3406, 7
        %v3408 = vsub.s32 0, %v3407
        %v3409 = vrot.slane %v1306, %v3408
        %v3410 = vlaneseq
        %v3411 = vshrl.u32 %v3410, 7
        %v3412 = vsub.s32 0, %v3411
        %v3413 = vrot.slane %v1307, %v3412
        %v3418 = vmul.f32 %v3366, %v3401
        %v3419 = vmul.f32 %v3367, %v3401
        %v3420 = vmul.f32 %v3368, %v3401
        %v3421 = vmul.f32 %v3369, %v3401
        %v3422 = vmul.f32 %v3370, %v3401
        %v3423 = vmul.f32 %v3371, %v3401
        %v3424 = vmul.f32 %v3372, %v3401
        %v3425 = vmul.f32 %v3373, %v3401
        %v3426 = vmul.f32 %v3374, %v3405
        %v3427 = vmul.f32 %v3375, %v3405
        %v3428 = vmul.f32 %v3376, %v3405
        %v3429 = vmul.f32 %v3377, %v3405
        %v3430 = vmul.f32 %v3378, %v3405
        %v3431 = vmul.f32 %v3379, %v3405
        %v3432 = vmul.f32 %v3380, %v3405
        %v3433 = vmul.f32 %v3381, %v3405
        %v3434 = vmul.f32 %v3382, %v3409
        %v3435 = vmul.f32 %v3383, %v3409
        %v3436 = vmul.f32 %v3384, %v3409
        %v3437 = vmul.f32 %v3385, %v3409
        %v3438 = vmul.f32 %v3386, %v3409
        %v3439 = vmul.f32 %v3387, %v3409
        %v3440 = vmul.f32 %v3388, %v3409
        %v3441 = vmul.f32 %v3389, %v3409
        %v3442 = vmul.f32 %v3390, %v3413
        %v3443 = vmul.f32 %v3391, %v3413
        %v3444 = vmul.f32 %v3392, %v3413
        %v3445 = vmul.f32 %v3393, %v3413
        %v3446 = vmul.f32 %v3394, %v3413
        %v3447 = vmul.f32 %v3395, %v3413
        %v3448 = vmul.f32 %v3396, %v3413
        %v3449 = vmul.f32 %v3397, %v3413
        %v3450 = vadd.f32 %v3334, %v3418
        %v3451 = vadd.f32 %v3335, %v3419
        %v3452 = vadd.f32 %v3336, %v3420
        %v3453 = vadd.f32 %v3337, %v3421
        %v3454 = vadd.f32 %v3338, %v3422
        %v3455 = vadd.f32 %v3339, %v3423
        %v3456 = vadd.f32 %v3340, %v3424
        %v3457 = vadd.f32 %v3341, %v3425
        %v3458 = vadd.f32 %v3342, %v3426
        %v3459 = vadd.f32 %v3343, %v3427
        %v3460 = vadd.f32 %v3344, %v3428
        %v3461 = vadd.f32 %v3345, %v3429
        %v3462 = vadd.f32 %v3346, %v3430
        %v3463 = vadd.f32 %v3347, %v3431
        %v3464 = vadd.f32 %v3348, %v3432
        %v3465 = vadd.f32 %v3349, %v3433
        %v3466 = vadd.f32 %v3350, %v3434
        %v3467 = vadd.f32 %v3351, %v3435
        %v3468 = vadd.f32 %v3352, %v3436
        %v3469 = vadd.f32 %v3353, %v3437
        %v3470 = vadd.f32 %v3354, %v3438
        %v3471 = vadd.f32 %v3355, %v3439
        %v3472 = vadd.f32 %v3356, %v3440
        %v3473 = vadd.f32 %v3357, %v3441
        %v3474 = vadd.f32 %v3358, %v3442
        %v3475 = vadd.f32 %v3359, %v3443
        %v3476 = vadd.f32 %v3360, %v3444
        %v3477 = vadd.f32 %v3361, %v3445
        %v3478 = vadd.f32 %v3362, %v3446
        %v3479 = vadd.f32 %v3363, %v3447
        %v3480 = vadd.f32 %v3364, %v3448
        %v3481 = vadd.f32 %v3365, %v3449
        %v3482 = vld [vmem:[%s3249 + $0x8] sm:$0xff]
        %v3483 = vld [vmem:[%s3249 + $0x20] sm:$0xff]
        %v3484 = vld [vmem:[%s3249 + $0x38] sm:$0xff]
        %v3485 = vld [vmem:[%s3249 + $0x50] sm:$0xff]
        %v3486 = vld [vmem:[%s3249 + $0x68] sm:$0xff]
        %v3487 = vld [vmem:[%s3249 + $0x80] sm:$0xff]
        %v3488 = vld [vmem:[%s3249 + $0x98] sm:$0xff]
        %v3489 = vld [vmem:[%s3249 + $0xb0] sm:$0xff]
        %v3490 = vld [vmem:[%s3249 + $0x128] sm:$0xff]
        %v3491 = vld [vmem:[%s3249 + $0x140] sm:$0xff]
        %v3492 = vld [vmem:[%s3249 + $0x158] sm:$0xff]
        %v3493 = vld [vmem:[%s3249 + $0x170] sm:$0xff]
        %v3494 = vld [vmem:[%s3249 + $0x188] sm:$0xff]
        %v3495 = vld [vmem:[%s3249 + $0x1a0] sm:$0xff]
        %v3496 = vld [vmem:[%s3249 + $0x1b8] sm:$0xff]
        %v3497 = vld [vmem:[%s3249 + $0x1d0] sm:$0xff]
        %v3498 = vld [vmem:[%s3249 + $0x248] sm:$0xff]
        %v3499 = vld [vmem:[%s3249 + $0x260] sm:$0xff]
        %v3500 = vld [vmem:[%s3249 + $0x278] sm:$0xff]
        %v3501 = vld [vmem:[%s3249 + $0x290] sm:$0xff]
        %v3502 = vld [vmem:[%s3249 + $0x2a8] sm:$0xff]
        %v3503 = vld [vmem:[%s3249 + $0x2c0] sm:$0xff]
        %v3504 = vld [vmem:[%s3249 + $0x2d8] sm:$0xff]
        %v3505 = vld [vmem:[%s3249 + $0x2f0] sm:$0xff]
        %v3506 = vld [vmem:[%s3249 + $0x368] sm:$0xff]
        %v3507 = vld [vmem:[%s3249 + $0x380] sm:$0xff]
        %v3508 = vld [vmem:[%s3249 + $0x398] sm:$0xff]
        %v3509 = vld [vmem:[%s3249 + $0x3b0] sm:$0xff]
        %v3510 = vld [vmem:[%s3249 + $0x3c8] sm:$0xff]
        %v3511 = vld [vmem:[%s3249 + $0x3e0] sm:$0xff]
        %v3512 = vld [vmem:[%s3249 + $0x3f8] sm:$0xff]
        %v3513 = vld [vmem:[%s3249 + $0x410] sm:$0xff]
        %v3514 = vlaneseq
        %v3515 = vshrl.u32 %v3514, 7
        %v3516 = vsub.s32 0, %v3515
        %v3517 = vrot.slane %v1323, %v3516
        %v3518 = vlaneseq
        %v3519 = vshrl.u32 %v3518, 7
        %v3520 = vsub.s32 0, %v3519
        %v3521 = vrot.slane %v1330, %v3520
        %v3522 = vlaneseq
        %v3523 = vshrl.u32 %v3522, 7
        %v3524 = vsub.s32 0, %v3523
        %v3525 = vrot.slane %v1331, %v3524
        %v3526 = vlaneseq
        %v3527 = vshrl.u32 %v3526, 7
        %v3528 = vsub.s32 0, %v3527
        %v3529 = vrot.slane %v1332, %v3528
        %v3534 = vmul.f32 %v3482, %v3517
        %v3535 = vmul.f32 %v3483, %v3517
        %v3536 = vmul.f32 %v3484, %v3517
        %v3537 = vmul.f32 %v3485, %v3517
        %v3538 = vmul.f32 %v3486, %v3517
        %v3539 = vmul.f32 %v3487, %v3517
        %v3540 = vmul.f32 %v3488, %v3517
        %v3541 = vmul.f32 %v3489, %v3517
        %v3542 = vmul.f32 %v3490, %v3521
        %v3543 = vmul.f32 %v3491, %v3521
        %v3544 = vmul.f32 %v3492, %v3521
        %v3545 = vmul.f32 %v3493, %v3521
        %v3546 = vmul.f32 %v3494, %v3521
        %v3547 = vmul.f32 %v3495, %v3521
        %v3548 = vmul.f32 %v3496, %v3521
        %v3549 = vmul.f32 %v3497, %v3521
        %v3550 = vmul.f32 %v3498, %v3525
        %v3551 = vmul.f32 %v3499, %v3525
        %v3552 = vmul.f32 %v3500, %v3525
        %v3553 = vmul.f32 %v3501, %v3525
        %v3554 = vmul.f32 %v3502, %v3525
        %v3555 = vmul.f32 %v3503, %v3525
        %v3556 = vmul.f32 %v3504, %v3525
        %v3557 = vmul.f32 %v3505, %v3525
        %v3558 = vmul.f32 %v3506, %v3529
        %v3559 = vmul.f32 %v3507, %v3529
        %v3560 = vmul.f32 %v3508, %v3529
        %v3561 = vmul.f32 %v3509, %v3529
        %v3562 = vmul.f32 %v3510, %v3529
        %v3563 = vmul.f32 %v3511, %v3529
        %v3564 = vmul.f32 %v3512, %v3529
        %v3565 = vmul.f32 %v3513, %v3529
        %v3566 = vadd.f32 %v3450, %v3534
        %v3567 = vadd.f32 %v3451, %v3535
        %v3568 = vadd.f32 %v3452, %v3536
        %v3569 = vadd.f32 %v3453, %v3537
        %v3570 = vadd.f32 %v3454, %v3538
        %v3571 = vadd.f32 %v3455, %v3539
        %v3572 = vadd.f32 %v3456, %v3540
        %v3573 = vadd.f32 %v3457, %v3541
        %v3574 = vadd.f32 %v3458, %v3542
        %v3575 = vadd.f32 %v3459, %v3543
        %v3576 = vadd.f32 %v3460, %v3544
        %v3577 = vadd.f32 %v3461, %v3545
        %v3578 = vadd.f32 %v3462, %v3546
        %v3579 = vadd.f32 %v3463, %v3547
        %v3580 = vadd.f32 %v3464, %v3548
        %v3581 = vadd.f32 %v3465, %v3549
        %v3582 = vadd.f32 %v3466, %v3550
        %v3583 = vadd.f32 %v3467, %v3551
        %v3584 = vadd.f32 %v3468, %v3552
        %v3585 = vadd.f32 %v3469, %v3553
        %v3586 = vadd.f32 %v3470, %v3554
        %v3587 = vadd.f32 %v3471, %v3555
        %v3588 = vadd.f32 %v3472, %v3556
        %v3589 = vadd.f32 %v3473, %v3557
        %v3590 = vadd.f32 %v3474, %v3558
        %v3591 = vadd.f32 %v3475, %v3559
        %v3592 = vadd.f32 %v3476, %v3560
        %v3593 = vadd.f32 %v3477, %v3561
        %v3594 = vadd.f32 %v3478, %v3562
        %v3595 = vadd.f32 %v3479, %v3563
        %v3596 = vadd.f32 %v3480, %v3564
        %v3597 = vadd.f32 %v3481, %v3565
        %v3598 = vld [vmem:[%s3249 + $0x9] sm:$0xff]
        %v3599 = vld [vmem:[%s3249 + $0x21] sm:$0xff]
        %v3600 = vld [vmem:[%s3249 + $0x39] sm:$0xff]
        %v3601 = vld [vmem:[%s3249 + $0x51] sm:$0xff]
        %v3602 = vld [vmem:[%s3249 + $0x69] sm:$0xff]
        %v3603 = vld [vmem:[%s3249 + $0x81] sm:$0xff]
        %v3604 = vld [vmem:[%s3249 + $0x99] sm:$0xff]
        %v3605 = vld [vmem:[%s3249 + $0xb1] sm:$0xff]
        %v3606 = vld [vmem:[%s3249 + $0x129] sm:$0xff]
        %v3607 = vld [vmem:[%s3249 + $0x141] sm:$0xff]
        %v3608 = vld [vmem:[%s3249 + $0x159] sm:$0xff]
        %v3609 = vld [vmem:[%s3249 + $0x171] sm:$0xff]
        %v3610 = vld [vmem:[%s3249 + $0x189] sm:$0xff]
        %v3611 = vld [vmem:[%s3249 + $0x1a1] sm:$0xff]
        %v3612 = vld [vmem:[%s3249 + $0x1b9] sm:$0xff]
        %v3613 = vld [vmem:[%s3249 + $0x1d1] sm:$0xff]
        %v3614 = vld [vmem:[%s3249 + $0x249] sm:$0xff]
        %v3615 = vld [vmem:[%s3249 + $0x261] sm:$0xff]
        %v3616 = vld [vmem:[%s3249 + $0x279] sm:$0xff]
        %v3617 = vld [vmem:[%s3249 + $0x291] sm:$0xff]
        %v3618 = vld [vmem:[%s3249 + $0x2a9] sm:$0xff]
        %v3619 = vld [vmem:[%s3249 + $0x2c1] sm:$0xff]
        %v3620 = vld [vmem:[%s3249 + $0x2d9] sm:$0xff]
        %v3621 = vld [vmem:[%s3249 + $0x2f1] sm:$0xff]
        %v3622 = vld [vmem:[%s3249 + $0x369] sm:$0xff]
        %v3623 = vld [vmem:[%s3249 + $0x381] sm:$0xff]
        %v3624 = vld [vmem:[%s3249 + $0x399] sm:$0xff]
        %v3625 = vld [vmem:[%s3249 + $0x3b1] sm:$0xff]
        %v3626 = vld [vmem:[%s3249 + $0x3c9] sm:$0xff]
        %v3627 = vld [vmem:[%s3249 + $0x3e1] sm:$0xff]
        %v3628 = vld [vmem:[%s3249 + $0x3f9] sm:$0xff]
        %v3629 = vld [vmem:[%s3249 + $0x411] sm:$0xff]
        %v3630 = vlaneseq
        %v3631 = vshrl.u32 %v3630, 7
        %v3632 = vsub.s32 0, %v3631
        %v3633 = vrot.slane %v1348, %v3632
        %v3634 = vlaneseq
        %v3635 = vshrl.u32 %v3634, 7
        %v3636 = vsub.s32 0, %v3635
        %v3637 = vrot.slane %v1355, %v3636
        %v3638 = vlaneseq
        %v3639 = vshrl.u32 %v3638, 7
        %v3640 = vsub.s32 0, %v3639
        %v3641 = vrot.slane %v1356, %v3640
        %v3642 = vlaneseq
        %v3643 = vshrl.u32 %v3642, 7
        %v3644 = vsub.s32 0, %v3643
        %v3645 = vrot.slane %v1357, %v3644
        %v3650 = vmul.f32 %v3598, %v3633
        %v3651 = vmul.f32 %v3599, %v3633
        %v3652 = vmul.f32 %v3600, %v3633
        %v3653 = vmul.f32 %v3601, %v3633
        %v3654 = vmul.f32 %v3602, %v3633
        %v3655 = vmul.f32 %v3603, %v3633
        %v3656 = vmul.f32 %v3604, %v3633
        %v3657 = vmul.f32 %v3605, %v3633
        %v3658 = vmul.f32 %v3606, %v3637
        %v3659 = vmul.f32 %v3607, %v3637
        %v3660 = vmul.f32 %v3608, %v3637
        %v3661 = vmul.f32 %v3609, %v3637
        %v3662 = vmul.f32 %v3610, %v3637
        %v3663 = vmul.f32 %v3611, %v3637
        %v3664 = vmul.f32 %v3612, %v3637
        %v3665 = vmul.f32 %v3613, %v3637
        %v3666 = vmul.f32 %v3614, %v3641
        %v3667 = vmul.f32 %v3615, %v3641
        %v3668 = vmul.f32 %v3616, %v3641
        %v3669 = vmul.f32 %v3617, %v3641
        %v3670 = vmul.f32 %v3618, %v3641
        %v3671 = vmul.f32 %v3619, %v3641
        %v3672 = vmul.f32 %v3620, %v3641
        %v3673 = vmul.f32 %v3621, %v3641
        %v3674 = vmul.f32 %v3622, %v3645
        %v3675 = vmul.f32 %v3623, %v3645
        %v3676 = vmul.f32 %v3624, %v3645
        %v3677 = vmul.f32 %v3625, %v3645
        %v3678 = vmul.f32 %v3626, %v3645
        %v3679 = vmul.f32 %v3627, %v3645
        %v3680 = vmul.f32 %v3628, %v3645
        %v3681 = vmul.f32 %v3629, %v3645
        %v3682 = vadd.f32 %v3566, %v3650
        %v3683 = vadd.f32 %v3567, %v3651
        %v3684 = vadd.f32 %v3568, %v3652
        %v3685 = vadd.f32 %v3569, %v3653
        %v3686 = vadd.f32 %v3570, %v3654
        %v3687 = vadd.f32 %v3571, %v3655
        %v3688 = vadd.f32 %v3572, %v3656
        %v3689 = vadd.f32 %v3573, %v3657
        %v3690 = vadd.f32 %v3574, %v3658
        %v3691 = vadd.f32 %v3575, %v3659
        %v3692 = vadd.f32 %v3576, %v3660
        %v3693 = vadd.f32 %v3577, %v3661
        %v3694 = vadd.f32 %v3578, %v3662
        %v3695 = vadd.f32 %v3579, %v3663
        %v3696 = vadd.f32 %v3580, %v3664
        %v3697 = vadd.f32 %v3581, %v3665
        %v3698 = vadd.f32 %v3582, %v3666
        %v3699 = vadd.f32 %v3583, %v3667
        %v3700 = vadd.f32 %v3584, %v3668
        %v3701 = vadd.f32 %v3585, %v3669
        %v3702 = vadd.f32 %v3586, %v3670
        %v3703 = vadd.f32 %v3587, %v3671
        %v3704 = vadd.f32 %v3588, %v3672
        %v3705 = vadd.f32 %v3589, %v3673
        %v3706 = vadd.f32 %v3590, %v3674
        %v3707 = vadd.f32 %v3591, %v3675
        %v3708 = vadd.f32 %v3592, %v3676
        %v3709 = vadd.f32 %v3593, %v3677
        %v3710 = vadd.f32 %v3594, %v3678
        %v3711 = vadd.f32 %v3595, %v3679
        %v3712 = vadd.f32 %v3596, %v3680
        %v3713 = vadd.f32 %v3597, %v3681
        %v3714 = vld [vmem:[%s3249 + $0xa] sm:$0xff]
        %v3715 = vld [vmem:[%s3249 + $0x22] sm:$0xff]
        %v3716 = vld [vmem:[%s3249 + $0x3a] sm:$0xff]
        %v3717 = vld [vmem:[%s3249 + $0x52] sm:$0xff]
        %v3718 = vld [vmem:[%s3249 + $0x6a] sm:$0xff]
        %v3719 = vld [vmem:[%s3249 + $0x82] sm:$0xff]
        %v3720 = vld [vmem:[%s3249 + $0x9a] sm:$0xff]
        %v3721 = vld [vmem:[%s3249 + $0xb2] sm:$0xff]
        %v3722 = vld [vmem:[%s3249 + $0x12a] sm:$0xff]
        %v3723 = vld [vmem:[%s3249 + $0x142] sm:$0xff]
        %v3724 = vld [vmem:[%s3249 + $0x15a] sm:$0xff]
        %v3725 = vld [vmem:[%s3249 + $0x172] sm:$0xff]
        %v3726 = vld [vmem:[%s3249 + $0x18a] sm:$0xff]
        %v3727 = vld [vmem:[%s3249 + $0x1a2] sm:$0xff]
        %v3728 = vld [vmem:[%s3249 + $0x1ba] sm:$0xff]
        %v3729 = vld [vmem:[%s3249 + $0x1d2] sm:$0xff]
        %v3730 = vld [vmem:[%s3249 + $0x24a] sm:$0xff]
        %v3731 = vld [vmem:[%s3249 + $0x262] sm:$0xff]
        %v3732 = vld [vmem:[%s3249 + $0x27a] sm:$0xff]
        %v3733 = vld [vmem:[%s3249 + $0x292] sm:$0xff]
        %v3734 = vld [vmem:[%s3249 + $0x2aa] sm:$0xff]
        %v3735 = vld [vmem:[%s3249 + $0x2c2] sm:$0xff]
        %v3736 = vld [vmem:[%s3249 + $0x2da] sm:$0xff]
        %v3737 = vld [vmem:[%s3249 + $0x2f2] sm:$0xff]
        %v3738 = vld [vmem:[%s3249 + $0x36a] sm:$0xff]
        %v3739 = vld [vmem:[%s3249 + $0x382] sm:$0xff]
        %v3740 = vld [vmem:[%s3249 + $0x39a] sm:$0xff]
        %v3741 = vld [vmem:[%s3249 + $0x3b2] sm:$0xff]
        %v3742 = vld [vmem:[%s3249 + $0x3ca] sm:$0xff]
        %v3743 = vld [vmem:[%s3249 + $0x3e2] sm:$0xff]
        %v3744 = vld [vmem:[%s3249 + $0x3fa] sm:$0xff]
        %v3745 = vld [vmem:[%s3249 + $0x412] sm:$0xff]
        %v3746 = vlaneseq
        %v3747 = vshrl.u32 %v3746, 7
        %v3748 = vsub.s32 0, %v3747
        %v3749 = vrot.slane %v1373, %v3748
        %v3750 = vlaneseq
        %v3751 = vshrl.u32 %v3750, 7
        %v3752 = vsub.s32 0, %v3751
        %v3753 = vrot.slane %v1380, %v3752
        %v3754 = vlaneseq
        %v3755 = vshrl.u32 %v3754, 7
        %v3756 = vsub.s32 0, %v3755
        %v3757 = vrot.slane %v1381, %v3756
        %v3758 = vlaneseq
        %v3759 = vshrl.u32 %v3758, 7
        %v3760 = vsub.s32 0, %v3759
        %v3761 = vrot.slane %v1382, %v3760
        %v3766 = vmul.f32 %v3714, %v3749
        %v3767 = vmul.f32 %v3715, %v3749
        %v3768 = vmul.f32 %v3716, %v3749
        %v3769 = vmul.f32 %v3717, %v3749
        %v3770 = vmul.f32 %v3718, %v3749
        %v3771 = vmul.f32 %v3719, %v3749
        %v3772 = vmul.f32 %v3720, %v3749
        %v3773 = vmul.f32 %v3721, %v3749
        %v3774 = vmul.f32 %v3722, %v3753
        %v3775 = vmul.f32 %v3723, %v3753
        %v3776 = vmul.f32 %v3724, %v3753
        %v3777 = vmul.f32 %v3725, %v3753
        %v3778 = vmul.f32 %v3726, %v3753
        %v3779 = vmul.f32 %v3727, %v3753
        %v3780 = vmul.f32 %v3728, %v3753
        %v3781 = vmul.f32 %v3729, %v3753
        %v3782 = vmul.f32 %v3730, %v3757
        %v3783 = vmul.f32 %v3731, %v3757
        %v3784 = vmul.f32 %v3732, %v3757
        %v3785 = vmul.f32 %v3733, %v3757
        %v3786 = vmul.f32 %v3734, %v3757
        %v3787 = vmul.f32 %v3735, %v3757
        %v3788 = vmul.f32 %v3736, %v3757
        %v3789 = vmul.f32 %v3737, %v3757
        %v3790 = vmul.f32 %v3738, %v3761
        %v3791 = vmul.f32 %v3739, %v3761
        %v3792 = vmul.f32 %v3740, %v3761
        %v3793 = vmul.f32 %v3741, %v3761
        %v3794 = vmul.f32 %v3742, %v3761
        %v3795 = vmul.f32 %v3743, %v3761
        %v3796 = vmul.f32 %v3744, %v3761
        %v3797 = vmul.f32 %v3745, %v3761
        %v3798 = vadd.f32 %v3682, %v3766
        %v3799 = vadd.f32 %v3683, %v3767
        %v3800 = vadd.f32 %v3684, %v3768
        %v3801 = vadd.f32 %v3685, %v3769
        %v3802 = vadd.f32 %v3686, %v3770
        %v3803 = vadd.f32 %v3687, %v3771
        %v3804 = vadd.f32 %v3688, %v3772
        %v3805 = vadd.f32 %v3689, %v3773
        %v3806 = vadd.f32 %v3690, %v3774
        %v3807 = vadd.f32 %v3691, %v3775
        %v3808 = vadd.f32 %v3692, %v3776
        %v3809 = vadd.f32 %v3693, %v3777
        %v3810 = vadd.f32 %v3694, %v3778
        %v3811 = vadd.f32 %v3695, %v3779
        %v3812 = vadd.f32 %v3696, %v3780
        %v3813 = vadd.f32 %v3697, %v3781
        %v3814 = vadd.f32 %v3698, %v3782
        %v3815 = vadd.f32 %v3699, %v3783
        %v3816 = vadd.f32 %v3700, %v3784
        %v3817 = vadd.f32 %v3701, %v3785
        %v3818 = vadd.f32 %v3702, %v3786
        %v3819 = vadd.f32 %v3703, %v3787
        %v3820 = vadd.f32 %v3704, %v3788
        %v3821 = vadd.f32 %v3705, %v3789
        %v3822 = vadd.f32 %v3706, %v3790
        %v3823 = vadd.f32 %v3707, %v3791
        %v3824 = vadd.f32 %v3708, %v3792
        %v3825 = vadd.f32 %v3709, %v3793
        %v3826 = vadd.f32 %v3710, %v3794
        %v3827 = vadd.f32 %v3711, %v3795
        %v3828 = vadd.f32 %v3712, %v3796
        %v3829 = vadd.f32 %v3713, %v3797
        %s3830 = scalar_lea.vmem [#allocation2], 96
        %v3831 = vld [vmem:[%s3830 + $0x6] sm:$0xff]
        %v3832 = vld [vmem:[%s3830 + $0x1e] sm:$0xff]
        %v3833 = vld [vmem:[%s3830 + $0x36] sm:$0xff]
        %v3834 = vld [vmem:[%s3830 + $0x4e] sm:$0xff]
        %v3835 = vld [vmem:[%s3830 + $0x66] sm:$0xff]
        %v3836 = vld [vmem:[%s3830 + $0x7e] sm:$0xff]
        %v3837 = vld [vmem:[%s3830 + $0x96] sm:$0xff]
        %v3838 = vld [vmem:[%s3830 + $0xae] sm:$0xff]
        %v3839 = vld [vmem:[%s3830 + $0x126] sm:$0xff]
        %v3840 = vld [vmem:[%s3830 + $0x13e] sm:$0xff]
        %v3841 = vld [vmem:[%s3830 + $0x156] sm:$0xff]
        %v3842 = vld [vmem:[%s3830 + $0x16e] sm:$0xff]
        %v3843 = vld [vmem:[%s3830 + $0x186] sm:$0xff]
        %v3844 = vld [vmem:[%s3830 + $0x19e] sm:$0xff]
        %v3845 = vld [vmem:[%s3830 + $0x1b6] sm:$0xff]
        %v3846 = vld [vmem:[%s3830 + $0x1ce] sm:$0xff]
        %v3847 = vld [vmem:[%s3830 + $0x246] sm:$0xff]
        %v3848 = vld [vmem:[%s3830 + $0x25e] sm:$0xff]
        %v3849 = vld [vmem:[%s3830 + $0x276] sm:$0xff]
        %v3850 = vld [vmem:[%s3830 + $0x28e] sm:$0xff]
        %v3851 = vld [vmem:[%s3830 + $0x2a6] sm:$0xff]
        %v3852 = vld [vmem:[%s3830 + $0x2be] sm:$0xff]
        %v3853 = vld [vmem:[%s3830 + $0x2d6] sm:$0xff]
        %v3854 = vld [vmem:[%s3830 + $0x2ee] sm:$0xff]
        %v3855 = vld [vmem:[%s3830 + $0x366] sm:$0xff]
        %v3856 = vld [vmem:[%s3830 + $0x37e] sm:$0xff]
        %v3857 = vld [vmem:[%s3830 + $0x396] sm:$0xff]
        %v3858 = vld [vmem:[%s3830 + $0x3ae] sm:$0xff]
        %v3859 = vld [vmem:[%s3830 + $0x3c6] sm:$0xff]
        %v3860 = vld [vmem:[%s3830 + $0x3de] sm:$0xff]
        %v3861 = vld [vmem:[%s3830 + $0x3f6] sm:$0xff]
        %v3862 = vld [vmem:[%s3830 + $0x40e] sm:$0xff]
        %v3863 = vlaneseq
        %v3864 = vshrl.u32 %v3863, 7
        %v3865 = vsub.s32 0, %v3864
        %v3866 = vrot.slane %v1398, %v3865
        %v3867 = vlaneseq
        %v3868 = vshrl.u32 %v3867, 7
        %v3869 = vsub.s32 0, %v3868
        %v3870 = vrot.slane %v1405, %v3869
        %v3871 = vlaneseq
        %v3872 = vshrl.u32 %v3871, 7
        %v3873 = vsub.s32 0, %v3872
        %v3874 = vrot.slane %v1406, %v3873
        %v3875 = vlaneseq
        %v3876 = vshrl.u32 %v3875, 7
        %v3877 = vsub.s32 0, %v3876
        %v3878 = vrot.slane %v1407, %v3877
        %v3883 = vmul.f32 %v3831, %v3866
        %v3884 = vmul.f32 %v3832, %v3866
        %v3885 = vmul.f32 %v3833, %v3866
        %v3886 = vmul.f32 %v3834, %v3866
        %v3887 = vmul.f32 %v3835, %v3866
        %v3888 = vmul.f32 %v3836, %v3866
        %v3889 = vmul.f32 %v3837, %v3866
        %v3890 = vmul.f32 %v3838, %v3866
        %v3891 = vmul.f32 %v3839, %v3870
        %v3892 = vmul.f32 %v3840, %v3870
        %v3893 = vmul.f32 %v3841, %v3870
        %v3894 = vmul.f32 %v3842, %v3870
        %v3895 = vmul.f32 %v3843, %v3870
        %v3896 = vmul.f32 %v3844, %v3870
        %v3897 = vmul.f32 %v3845, %v3870
        %v3898 = vmul.f32 %v3846, %v3870
        %v3899 = vmul.f32 %v3847, %v3874
        %v3900 = vmul.f32 %v3848, %v3874
        %v3901 = vmul.f32 %v3849, %v3874
        %v3902 = vmul.f32 %v3850, %v3874
        %v3903 = vmul.f32 %v3851, %v3874
        %v3904 = vmul.f32 %v3852, %v3874
        %v3905 = vmul.f32 %v3853, %v3874
        %v3906 = vmul.f32 %v3854, %v3874
        %v3907 = vmul.f32 %v3855, %v3878
        %v3908 = vmul.f32 %v3856, %v3878
        %v3909 = vmul.f32 %v3857, %v3878
        %v3910 = vmul.f32 %v3858, %v3878
        %v3911 = vmul.f32 %v3859, %v3878
        %v3912 = vmul.f32 %v3860, %v3878
        %v3913 = vmul.f32 %v3861, %v3878
        %v3914 = vmul.f32 %v3862, %v3878
        %v3915 = vadd.f32 %v3798, %v3883
        %v3916 = vadd.f32 %v3799, %v3884
        %v3917 = vadd.f32 %v3800, %v3885
        %v3918 = vadd.f32 %v3801, %v3886
        %v3919 = vadd.f32 %v3802, %v3887
        %v3920 = vadd.f32 %v3803, %v3888
        %v3921 = vadd.f32 %v3804, %v3889
        %v3922 = vadd.f32 %v3805, %v3890
        %v3923 = vadd.f32 %v3806, %v3891
        %v3924 = vadd.f32 %v3807, %v3892
        %v3925 = vadd.f32 %v3808, %v3893
        %v3926 = vadd.f32 %v3809, %v3894
        %v3927 = vadd.f32 %v3810, %v3895
        %v3928 = vadd.f32 %v3811, %v3896
        %v3929 = vadd.f32 %v3812, %v3897
        %v3930 = vadd.f32 %v3813, %v3898
        %v3931 = vadd.f32 %v3814, %v3899
        %v3932 = vadd.f32 %v3815, %v3900
        %v3933 = vadd.f32 %v3816, %v3901
        %v3934 = vadd.f32 %v3817, %v3902
        %v3935 = vadd.f32 %v3818, %v3903
        %v3936 = vadd.f32 %v3819, %v3904
        %v3937 = vadd.f32 %v3820, %v3905
        %v3938 = vadd.f32 %v3821, %v3906
        %v3939 = vadd.f32 %v3822, %v3907
        %v3940 = vadd.f32 %v3823, %v3908
        %v3941 = vadd.f32 %v3824, %v3909
        %v3942 = vadd.f32 %v3825, %v3910
        %v3943 = vadd.f32 %v3826, %v3911
        %v3944 = vadd.f32 %v3827, %v3912
        %v3945 = vadd.f32 %v3828, %v3913
        %v3946 = vadd.f32 %v3829, %v3914
        %v3947 = vld [vmem:[%s3830 + $0x7] sm:$0xff]
        %v3948 = vld [vmem:[%s3830 + $0x1f] sm:$0xff]
        %v3949 = vld [vmem:[%s3830 + $0x37] sm:$0xff]
        %v3950 = vld [vmem:[%s3830 + $0x4f] sm:$0xff]
        %v3951 = vld [vmem:[%s3830 + $0x67] sm:$0xff]
        %v3952 = vld [vmem:[%s3830 + $0x7f] sm:$0xff]
        %v3953 = vld [vmem:[%s3830 + $0x97] sm:$0xff]
        %v3954 = vld [vmem:[%s3830 + $0xaf] sm:$0xff]
        %v3955 = vld [vmem:[%s3830 + $0x127] sm:$0xff]
        %v3956 = vld [vmem:[%s3830 + $0x13f] sm:$0xff]
        %v3957 = vld [vmem:[%s3830 + $0x157] sm:$0xff]
        %v3958 = vld [vmem:[%s3830 + $0x16f] sm:$0xff]
        %v3959 = vld [vmem:[%s3830 + $0x187] sm:$0xff]
        %v3960 = vld [vmem:[%s3830 + $0x19f] sm:$0xff]
        %v3961 = vld [vmem:[%s3830 + $0x1b7] sm:$0xff]
        %v3962 = vld [vmem:[%s3830 + $0x1cf] sm:$0xff]
        %v3963 = vld [vmem:[%s3830 + $0x247] sm:$0xff]
        %v3964 = vld [vmem:[%s3830 + $0x25f] sm:$0xff]
        %v3965 = vld [vmem:[%s3830 + $0x277] sm:$0xff]
        %v3966 = vld [vmem:[%s3830 + $0x28f] sm:$0xff]
        %v3967 = vld [vmem:[%s3830 + $0x2a7] sm:$0xff]
        %v3968 = vld [vmem:[%s3830 + $0x2bf] sm:$0xff]
        %v3969 = vld [vmem:[%s3830 + $0x2d7] sm:$0xff]
        %v3970 = vld [vmem:[%s3830 + $0x2ef] sm:$0xff]
        %v3971 = vld [vmem:[%s3830 + $0x367] sm:$0xff]
        %v3972 = vld [vmem:[%s3830 + $0x37f] sm:$0xff]
        %v3973 = vld [vmem:[%s3830 + $0x397] sm:$0xff]
        %v3974 = vld [vmem:[%s3830 + $0x3af] sm:$0xff]
        %v3975 = vld [vmem:[%s3830 + $0x3c7] sm:$0xff]
        %v3976 = vld [vmem:[%s3830 + $0x3df] sm:$0xff]
        %v3977 = vld [vmem:[%s3830 + $0x3f7] sm:$0xff]
        %v3978 = vld [vmem:[%s3830 + $0x40f] sm:$0xff]
        %v3979 = vlaneseq
        %v3980 = vshrl.u32 %v3979, 7
        %v3981 = vsub.s32 0, %v3980
        %v3982 = vrot.slane %v1423, %v3981
        %v3983 = vlaneseq
        %v3984 = vshrl.u32 %v3983, 7
        %v3985 = vsub.s32 0, %v3984
        %v3986 = vrot.slane %v1430, %v3985
        %v3987 = vlaneseq
        %v3988 = vshrl.u32 %v3987, 7
        %v3989 = vsub.s32 0, %v3988
        %v3990 = vrot.slane %v1431, %v3989
        %v3991 = vlaneseq
        %v3992 = vshrl.u32 %v3991, 7
        %v3993 = vsub.s32 0, %v3992
        %v3994 = vrot.slane %v1432, %v3993
        %v3999 = vmul.f32 %v3947, %v3982
        %v4000 = vmul.f32 %v3948, %v3982
        %v4001 = vmul.f32 %v3949, %v3982
        %v4002 = vmul.f32 %v3950, %v3982
        %v4003 = vmul.f32 %v3951, %v3982
        %v4004 = vmul.f32 %v3952, %v3982
        %v4005 = vmul.f32 %v3953, %v3982
        %v4006 = vmul.f32 %v3954, %v3982
        %v4007 = vmul.f32 %v3955, %v3986
        %v4008 = vmul.f32 %v3956, %v3986
        %v4009 = vmul.f32 %v3957, %v3986
        %v4010 = vmul.f32 %v3958, %v3986
        %v4011 = vmul.f32 %v3959, %v3986
        %v4012 = vmul.f32 %v3960, %v3986
        %v4013 = vmul.f32 %v3961, %v3986
        %v4014 = vmul.f32 %v3962, %v3986
        %v4015 = vmul.f32 %v3963, %v3990
        %v4016 = vmul.f32 %v3964, %v3990
        %v4017 = vmul.f32 %v3965, %v3990
        %v4018 = vmul.f32 %v3966, %v3990
        %v4019 = vmul.f32 %v3967, %v3990
        %v4020 = vmul.f32 %v3968, %v3990
        %v4021 = vmul.f32 %v3969, %v3990
        %v4022 = vmul.f32 %v3970, %v3990
        %v4023 = vmul.f32 %v3971, %v3994
        %v4024 = vmul.f32 %v3972, %v3994
        %v4025 = vmul.f32 %v3973, %v3994
        %v4026 = vmul.f32 %v3974, %v3994
        %v4027 = vmul.f32 %v3975, %v3994
        %v4028 = vmul.f32 %v3976, %v3994
        %v4029 = vmul.f32 %v3977, %v3994
        %v4030 = vmul.f32 %v3978, %v3994
        %v4031 = vadd.f32 %v3915, %v3999
        %v4032 = vadd.f32 %v3916, %v4000
        %v4033 = vadd.f32 %v3917, %v4001
        %v4034 = vadd.f32 %v3918, %v4002
        %v4035 = vadd.f32 %v3919, %v4003
        %v4036 = vadd.f32 %v3920, %v4004
        %v4037 = vadd.f32 %v3921, %v4005
        %v4038 = vadd.f32 %v3922, %v4006
        %v4039 = vadd.f32 %v3923, %v4007
        %v4040 = vadd.f32 %v3924, %v4008
        %v4041 = vadd.f32 %v3925, %v4009
        %v4042 = vadd.f32 %v3926, %v4010
        %v4043 = vadd.f32 %v3927, %v4011
        %v4044 = vadd.f32 %v3928, %v4012
        %v4045 = vadd.f32 %v3929, %v4013
        %v4046 = vadd.f32 %v3930, %v4014
        %v4047 = vadd.f32 %v3931, %v4015
        %v4048 = vadd.f32 %v3932, %v4016
        %v4049 = vadd.f32 %v3933, %v4017
        %v4050 = vadd.f32 %v3934, %v4018
        %v4051 = vadd.f32 %v3935, %v4019
        %v4052 = vadd.f32 %v3936, %v4020
        %v4053 = vadd.f32 %v3937, %v4021
        %v4054 = vadd.f32 %v3938, %v4022
        %v4055 = vadd.f32 %v3939, %v4023
        %v4056 = vadd.f32 %v3940, %v4024
        %v4057 = vadd.f32 %v3941, %v4025
        %v4058 = vadd.f32 %v3942, %v4026
        %v4059 = vadd.f32 %v3943, %v4027
        %v4060 = vadd.f32 %v3944, %v4028
        %v4061 = vadd.f32 %v3945, %v4029
        %v4062 = vadd.f32 %v3946, %v4030
        %v4063 = vld [vmem:[%s3830 + $0x8] sm:$0xff]
        %v4064 = vld [vmem:[%s3830 + $0x20] sm:$0xff]
        %v4065 = vld [vmem:[%s3830 + $0x38] sm:$0xff]
        %v4066 = vld [vmem:[%s3830 + $0x50] sm:$0xff]
        %v4067 = vld [vmem:[%s3830 + $0x68] sm:$0xff]
        %v4068 = vld [vmem:[%s3830 + $0x80] sm:$0xff]
        %v4069 = vld [vmem:[%s3830 + $0x98] sm:$0xff]
        %v4070 = vld [vmem:[%s3830 + $0xb0] sm:$0xff]
        %v4071 = vld [vmem:[%s3830 + $0x128] sm:$0xff]
        %v4072 = vld [vmem:[%s3830 + $0x140] sm:$0xff]
        %v4073 = vld [vmem:[%s3830 + $0x158] sm:$0xff]
        %v4074 = vld [vmem:[%s3830 + $0x170] sm:$0xff]
        %v4075 = vld [vmem:[%s3830 + $0x188] sm:$0xff]
        %v4076 = vld [vmem:[%s3830 + $0x1a0] sm:$0xff]
        %v4077 = vld [vmem:[%s3830 + $0x1b8] sm:$0xff]
        %v4078 = vld [vmem:[%s3830 + $0x1d0] sm:$0xff]
        %v4079 = vld [vmem:[%s3830 + $0x248] sm:$0xff]
        %v4080 = vld [vmem:[%s3830 + $0x260] sm:$0xff]
        %v4081 = vld [vmem:[%s3830 + $0x278] sm:$0xff]
        %v4082 = vld [vmem:[%s3830 + $0x290] sm:$0xff]
        %v4083 = vld [vmem:[%s3830 + $0x2a8] sm:$0xff]
        %v4084 = vld [vmem:[%s3830 + $0x2c0] sm:$0xff]
        %v4085 = vld [vmem:[%s3830 + $0x2d8] sm:$0xff]
        %v4086 = vld [vmem:[%s3830 + $0x2f0] sm:$0xff]
        %v4087 = vld [vmem:[%s3830 + $0x368] sm:$0xff]
        %v4088 = vld [vmem:[%s3830 + $0x380] sm:$0xff]
        %v4089 = vld [vmem:[%s3830 + $0x398] sm:$0xff]
        %v4090 = vld [vmem:[%s3830 + $0x3b0] sm:$0xff]
        %v4091 = vld [vmem:[%s3830 + $0x3c8] sm:$0xff]
        %v4092 = vld [vmem:[%s3830 + $0x3e0] sm:$0xff]
        %v4093 = vld [vmem:[%s3830 + $0x3f8] sm:$0xff]
        %v4094 = vld [vmem:[%s3830 + $0x410] sm:$0xff]
        %v4095 = vlaneseq
        %v4096 = vshrl.u32 %v4095, 7
        %v4097 = vsub.s32 0, %v4096
        %v4098 = vrot.slane %v1448, %v4097
        %v4099 = vlaneseq
        %v4100 = vshrl.u32 %v4099, 7
        %v4101 = vsub.s32 0, %v4100
        %v4102 = vrot.slane %v1455, %v4101
        %v4103 = vlaneseq
        %v4104 = vshrl.u32 %v4103, 7
        %v4105 = vsub.s32 0, %v4104
        %v4106 = vrot.slane %v1456, %v4105
        %v4107 = vlaneseq
        %v4108 = vshrl.u32 %v4107, 7
        %v4109 = vsub.s32 0, %v4108
        %v4110 = vrot.slane %v1457, %v4109
        %v4115 = vmul.f32 %v4063, %v4098
        %v4116 = vmul.f32 %v4064, %v4098
        %v4117 = vmul.f32 %v4065, %v4098
        %v4118 = vmul.f32 %v4066, %v4098
        %v4119 = vmul.f32 %v4067, %v4098
        %v4120 = vmul.f32 %v4068, %v4098
        %v4121 = vmul.f32 %v4069, %v4098
        %v4122 = vmul.f32 %v4070, %v4098
        %v4123 = vmul.f32 %v4071, %v4102
        %v4124 = vmul.f32 %v4072, %v4102
        %v4125 = vmul.f32 %v4073, %v4102
        %v4126 = vmul.f32 %v4074, %v4102
        %v4127 = vmul.f32 %v4075, %v4102
        %v4128 = vmul.f32 %v4076, %v4102
        %v4129 = vmul.f32 %v4077, %v4102
        %v4130 = vmul.f32 %v4078, %v4102
        %v4131 = vmul.f32 %v4079, %v4106
        %v4132 = vmul.f32 %v4080, %v4106
        %v4133 = vmul.f32 %v4081, %v4106
        %v4134 = vmul.f32 %v4082, %v4106
        %v4135 = vmul.f32 %v4083, %v4106
        %v4136 = vmul.f32 %v4084, %v4106
        %v4137 = vmul.f32 %v4085, %v4106
        %v4138 = vmul.f32 %v4086, %v4106
        %v4139 = vmul.f32 %v4087, %v4110
        %v4140 = vmul.f32 %v4088, %v4110
        %v4141 = vmul.f32 %v4089, %v4110
        %v4142 = vmul.f32 %v4090, %v4110
        %v4143 = vmul.f32 %v4091, %v4110
        %v4144 = vmul.f32 %v4092, %v4110
        %v4145 = vmul.f32 %v4093, %v4110
        %v4146 = vmul.f32 %v4094, %v4110
        %v4147 = vadd.f32 %v4031, %v4115
        %v4148 = vadd.f32 %v4032, %v4116
        %v4149 = vadd.f32 %v4033, %v4117
        %v4150 = vadd.f32 %v4034, %v4118
        %v4151 = vadd.f32 %v4035, %v4119
        %v4152 = vadd.f32 %v4036, %v4120
        %v4153 = vadd.f32 %v4037, %v4121
        %v4154 = vadd.f32 %v4038, %v4122
        %v4155 = vadd.f32 %v4039, %v4123
        %v4156 = vadd.f32 %v4040, %v4124
        %v4157 = vadd.f32 %v4041, %v4125
        %v4158 = vadd.f32 %v4042, %v4126
        %v4159 = vadd.f32 %v4043, %v4127
        %v4160 = vadd.f32 %v4044, %v4128
        %v4161 = vadd.f32 %v4045, %v4129
        %v4162 = vadd.f32 %v4046, %v4130
        %v4163 = vadd.f32 %v4047, %v4131
        %v4164 = vadd.f32 %v4048, %v4132
        %v4165 = vadd.f32 %v4049, %v4133
        %v4166 = vadd.f32 %v4050, %v4134
        %v4167 = vadd.f32 %v4051, %v4135
        %v4168 = vadd.f32 %v4052, %v4136
        %v4169 = vadd.f32 %v4053, %v4137
        %v4170 = vadd.f32 %v4054, %v4138
        %v4171 = vadd.f32 %v4055, %v4139
        %v4172 = vadd.f32 %v4056, %v4140
        %v4173 = vadd.f32 %v4057, %v4141
        %v4174 = vadd.f32 %v4058, %v4142
        %v4175 = vadd.f32 %v4059, %v4143
        %v4176 = vadd.f32 %v4060, %v4144
        %v4177 = vadd.f32 %v4061, %v4145
        %v4178 = vadd.f32 %v4062, %v4146
        %v4179 = vld [vmem:[%s3830 + $0x9] sm:$0xff]
        %v4180 = vld [vmem:[%s3830 + $0x21] sm:$0xff]
        %v4181 = vld [vmem:[%s3830 + $0x39] sm:$0xff]
        %v4182 = vld [vmem:[%s3830 + $0x51] sm:$0xff]
        %v4183 = vld [vmem:[%s3830 + $0x69] sm:$0xff]
        %v4184 = vld [vmem:[%s3830 + $0x81] sm:$0xff]
        %v4185 = vld [vmem:[%s3830 + $0x99] sm:$0xff]
        %v4186 = vld [vmem:[%s3830 + $0xb1] sm:$0xff]
        %v4187 = vld [vmem:[%s3830 + $0x129] sm:$0xff]
        %v4188 = vld [vmem:[%s3830 + $0x141] sm:$0xff]
        %v4189 = vld [vmem:[%s3830 + $0x159] sm:$0xff]
        %v4190 = vld [vmem:[%s3830 + $0x171] sm:$0xff]
        %v4191 = vld [vmem:[%s3830 + $0x189] sm:$0xff]
        %v4192 = vld [vmem:[%s3830 + $0x1a1] sm:$0xff]
        %v4193 = vld [vmem:[%s3830 + $0x1b9] sm:$0xff]
        %v4194 = vld [vmem:[%s3830 + $0x1d1] sm:$0xff]
        %v4195 = vld [vmem:[%s3830 + $0x249] sm:$0xff]
        %v4196 = vld [vmem:[%s3830 + $0x261] sm:$0xff]
        %v4197 = vld [vmem:[%s3830 + $0x279] sm:$0xff]
        %v4198 = vld [vmem:[%s3830 + $0x291] sm:$0xff]
        %v4199 = vld [vmem:[%s3830 + $0x2a9] sm:$0xff]
        %v4200 = vld [vmem:[%s3830 + $0x2c1] sm:$0xff]
        %v4201 = vld [vmem:[%s3830 + $0x2d9] sm:$0xff]
        %v4202 = vld [vmem:[%s3830 + $0x2f1] sm:$0xff]
        %v4203 = vld [vmem:[%s3830 + $0x369] sm:$0xff]
        %v4204 = vld [vmem:[%s3830 + $0x381] sm:$0xff]
        %v4205 = vld [vmem:[%s3830 + $0x399] sm:$0xff]
        %v4206 = vld [vmem:[%s3830 + $0x3b1] sm:$0xff]
        %v4207 = vld [vmem:[%s3830 + $0x3c9] sm:$0xff]
        %v4208 = vld [vmem:[%s3830 + $0x3e1] sm:$0xff]
        %v4209 = vld [vmem:[%s3830 + $0x3f9] sm:$0xff]
        %v4210 = vld [vmem:[%s3830 + $0x411] sm:$0xff]
        %v4211 = vlaneseq
        %v4212 = vshrl.u32 %v4211, 7
        %v4213 = vsub.s32 0, %v4212
        %v4214 = vrot.slane %v1473, %v4213
        %v4215 = vlaneseq
        %v4216 = vshrl.u32 %v4215, 7
        %v4217 = vsub.s32 0, %v4216
        %v4218 = vrot.slane %v1480, %v4217
        %v4219 = vlaneseq
        %v4220 = vshrl.u32 %v4219, 7
        %v4221 = vsub.s32 0, %v4220
        %v4222 = vrot.slane %v1481, %v4221
        %v4223 = vlaneseq
        %v4224 = vshrl.u32 %v4223, 7
        %v4225 = vsub.s32 0, %v4224
        %v4226 = vrot.slane %v1482, %v4225
        %v4231 = vmul.f32 %v4179, %v4214
        %v4232 = vmul.f32 %v4180, %v4214
        %v4233 = vmul.f32 %v4181, %v4214
        %v4234 = vmul.f32 %v4182, %v4214
        %v4235 = vmul.f32 %v4183, %v4214
        %v4236 = vmul.f32 %v4184, %v4214
        %v4237 = vmul.f32 %v4185, %v4214
        %v4238 = vmul.f32 %v4186, %v4214
        %v4239 = vmul.f32 %v4187, %v4218
        %v4240 = vmul.f32 %v4188, %v4218
        %v4241 = vmul.f32 %v4189, %v4218
        %v4242 = vmul.f32 %v4190, %v4218
        %v4243 = vmul.f32 %v4191, %v4218
        %v4244 = vmul.f32 %v4192, %v4218
        %v4245 = vmul.f32 %v4193, %v4218
        %v4246 = vmul.f32 %v4194, %v4218
        %v4247 = vmul.f32 %v4195, %v4222
        %v4248 = vmul.f32 %v4196, %v4222
        %v4249 = vmul.f32 %v4197, %v4222
        %v4250 = vmul.f32 %v4198, %v4222
        %v4251 = vmul.f32 %v4199, %v4222
        %v4252 = vmul.f32 %v4200, %v4222
        %v4253 = vmul.f32 %v4201, %v4222
        %v4254 = vmul.f32 %v4202, %v4222
        %v4255 = vmul.f32 %v4203, %v4226
        %v4256 = vmul.f32 %v4204, %v4226
        %v4257 = vmul.f32 %v4205, %v4226
        %v4258 = vmul.f32 %v4206, %v4226
        %v4259 = vmul.f32 %v4207, %v4226
        %v4260 = vmul.f32 %v4208, %v4226
        %v4261 = vmul.f32 %v4209, %v4226
        %v4262 = vmul.f32 %v4210, %v4226
        %v4263 = vadd.f32 %v4147, %v4231
        %v4264 = vadd.f32 %v4148, %v4232
        %v4265 = vadd.f32 %v4149, %v4233
        %v4266 = vadd.f32 %v4150, %v4234
        %v4267 = vadd.f32 %v4151, %v4235
        %v4268 = vadd.f32 %v4152, %v4236
        %v4269 = vadd.f32 %v4153, %v4237
        %v4270 = vadd.f32 %v4154, %v4238
        %v4271 = vadd.f32 %v4155, %v4239
        %v4272 = vadd.f32 %v4156, %v4240
        %v4273 = vadd.f32 %v4157, %v4241
        %v4274 = vadd.f32 %v4158, %v4242
        %v4275 = vadd.f32 %v4159, %v4243
        %v4276 = vadd.f32 %v4160, %v4244
        %v4277 = vadd.f32 %v4161, %v4245
        %v4278 = vadd.f32 %v4162, %v4246
        %v4279 = vadd.f32 %v4163, %v4247
        %v4280 = vadd.f32 %v4164, %v4248
        %v4281 = vadd.f32 %v4165, %v4249
        %v4282 = vadd.f32 %v4166, %v4250
        %v4283 = vadd.f32 %v4167, %v4251
        %v4284 = vadd.f32 %v4168, %v4252
        %v4285 = vadd.f32 %v4169, %v4253
        %v4286 = vadd.f32 %v4170, %v4254
        %v4287 = vadd.f32 %v4171, %v4255
        %v4288 = vadd.f32 %v4172, %v4256
        %v4289 = vadd.f32 %v4173, %v4257
        %v4290 = vadd.f32 %v4174, %v4258
        %v4291 = vadd.f32 %v4175, %v4259
        %v4292 = vadd.f32 %v4176, %v4260
        %v4293 = vadd.f32 %v4177, %v4261
        %v4294 = vadd.f32 %v4178, %v4262
        %v4295 = vld [vmem:[%s3830 + $0xa] sm:$0xff]
        %v4296 = vld [vmem:[%s3830 + $0x22] sm:$0xff]
        %v4297 = vld [vmem:[%s3830 + $0x3a] sm:$0xff]
        %v4298 = vld [vmem:[%s3830 + $0x52] sm:$0xff]
        %v4299 = vld [vmem:[%s3830 + $0x6a] sm:$0xff]
        %v4300 = vld [vmem:[%s3830 + $0x82] sm:$0xff]
        %v4301 = vld [vmem:[%s3830 + $0x9a] sm:$0xff]
        %v4302 = vld [vmem:[%s3830 + $0xb2] sm:$0xff]
        %v4303 = vld [vmem:[%s3830 + $0x12a] sm:$0xff]
        %v4304 = vld [vmem:[%s3830 + $0x142] sm:$0xff]
        %v4305 = vld [vmem:[%s3830 + $0x15a] sm:$0xff]
        %v4306 = vld [vmem:[%s3830 + $0x172] sm:$0xff]
        %v4307 = vld [vmem:[%s3830 + $0x18a] sm:$0xff]
        %v4308 = vld [vmem:[%s3830 + $0x1a2] sm:$0xff]
        %v4309 = vld [vmem:[%s3830 + $0x1ba] sm:$0xff]
        %v4310 = vld [vmem:[%s3830 + $0x1d2] sm:$0xff]
        %v4311 = vld [vmem:[%s3830 + $0x24a] sm:$0xff]
        %v4312 = vld [vmem:[%s3830 + $0x262] sm:$0xff]
        %v4313 = vld [vmem:[%s3830 + $0x27a] sm:$0xff]
        %v4314 = vld [vmem:[%s3830 + $0x292] sm:$0xff]
        %v4315 = vld [vmem:[%s3830 + $0x2aa] sm:$0xff]
        %v4316 = vld [vmem:[%s3830 + $0x2c2] sm:$0xff]
        %v4317 = vld [vmem:[%s3830 + $0x2da] sm:$0xff]
        %v4318 = vld [vmem:[%s3830 + $0x2f2] sm:$0xff]
        %v4319 = vld [vmem:[%s3830 + $0x36a] sm:$0xff]
        %v4320 = vld [vmem:[%s3830 + $0x382] sm:$0xff]
        %v4321 = vld [vmem:[%s3830 + $0x39a] sm:$0xff]
        %v4322 = vld [vmem:[%s3830 + $0x3b2] sm:$0xff]
        %v4323 = vld [vmem:[%s3830 + $0x3ca] sm:$0xff]
        %v4324 = vld [vmem:[%s3830 + $0x3e2] sm:$0xff]
        %v4325 = vld [vmem:[%s3830 + $0x3fa] sm:$0xff]
        %v4326 = vld [vmem:[%s3830 + $0x412] sm:$0xff]
        %v4327 = vlaneseq
        %v4328 = vshrl.u32 %v4327, 7
        %v4329 = vsub.s32 0, %v4328
        %v4330 = vrot.slane %v1498, %v4329
        %v4331 = vlaneseq
        %v4332 = vshrl.u32 %v4331, 7
        %v4333 = vsub.s32 0, %v4332
        %v4334 = vrot.slane %v1505, %v4333
        %v4335 = vlaneseq
        %v4336 = vshrl.u32 %v4335, 7
        %v4337 = vsub.s32 0, %v4336
        %v4338 = vrot.slane %v1506, %v4337
        %v4339 = vlaneseq
        %v4340 = vshrl.u32 %v4339, 7
        %v4341 = vsub.s32 0, %v4340
        %v4342 = vrot.slane %v1507, %v4341
        %v4347 = vmul.f32 %v4295, %v4330
        %v4348 = vmul.f32 %v4296, %v4330
        %v4349 = vmul.f32 %v4297, %v4330
        %v4350 = vmul.f32 %v4298, %v4330
        %v4351 = vmul.f32 %v4299, %v4330
        %v4352 = vmul.f32 %v4300, %v4330
        %v4353 = vmul.f32 %v4301, %v4330
        %v4354 = vmul.f32 %v4302, %v4330
        %v4355 = vmul.f32 %v4303, %v4334
        %v4356 = vmul.f32 %v4304, %v4334
        %v4357 = vmul.f32 %v4305, %v4334
        %v4358 = vmul.f32 %v4306, %v4334
        %v4359 = vmul.f32 %v4307, %v4334
        %v4360 = vmul.f32 %v4308, %v4334
        %v4361 = vmul.f32 %v4309, %v4334
        %v4362 = vmul.f32 %v4310, %v4334
        %v4363 = vmul.f32 %v4311, %v4338
        %v4364 = vmul.f32 %v4312, %v4338
        %v4365 = vmul.f32 %v4313, %v4338
        %v4366 = vmul.f32 %v4314, %v4338
        %v4367 = vmul.f32 %v4315, %v4338
        %v4368 = vmul.f32 %v4316, %v4338
        %v4369 = vmul.f32 %v4317, %v4338
        %v4370 = vmul.f32 %v4318, %v4338
        %v4371 = vmul.f32 %v4319, %v4342
        %v4372 = vmul.f32 %v4320, %v4342
        %v4373 = vmul.f32 %v4321, %v4342
        %v4374 = vmul.f32 %v4322, %v4342
        %v4375 = vmul.f32 %v4323, %v4342
        %v4376 = vmul.f32 %v4324, %v4342
        %v4377 = vmul.f32 %v4325, %v4342
        %v4378 = vmul.f32 %v4326, %v4342
        %v4379 = vadd.f32 %v4263, %v4347
        %v4380 = vadd.f32 %v4264, %v4348
        %v4381 = vadd.f32 %v4265, %v4349
        %v4382 = vadd.f32 %v4266, %v4350
        %v4383 = vadd.f32 %v4267, %v4351
        %v4384 = vadd.f32 %v4268, %v4352
        %v4385 = vadd.f32 %v4269, %v4353
        %v4386 = vadd.f32 %v4270, %v4354
        %v4387 = vadd.f32 %v4271, %v4355
        %v4388 = vadd.f32 %v4272, %v4356
        %v4389 = vadd.f32 %v4273, %v4357
        %v4390 = vadd.f32 %v4274, %v4358
        %v4391 = vadd.f32 %v4275, %v4359
        %v4392 = vadd.f32 %v4276, %v4360
        %v4393 = vadd.f32 %v4277, %v4361
        %v4394 = vadd.f32 %v4278, %v4362
        %v4395 = vadd.f32 %v4279, %v4363
        %v4396 = vadd.f32 %v4280, %v4364
        %v4397 = vadd.f32 %v4281, %v4365
        %v4398 = vadd.f32 %v4282, %v4366
        %v4399 = vadd.f32 %v4283, %v4367
        %v4400 = vadd.f32 %v4284, %v4368
        %v4401 = vadd.f32 %v4285, %v4369
        %v4402 = vadd.f32 %v4286, %v4370
        %v4403 = vadd.f32 %v4287, %v4371
        %v4404 = vadd.f32 %v4288, %v4372
        %v4405 = vadd.f32 %v4289, %v4373
        %v4406 = vadd.f32 %v4290, %v4374
        %v4407 = vadd.f32 %v4291, %v4375
        %v4408 = vadd.f32 %v4292, %v4376
        %v4409 = vadd.f32 %v4293, %v4377
        %v4410 = vadd.f32 %v4294, %v4378
        %v4411 = vadd.f32 %v4379, %v4387
        %v4412 = vadd.f32 %v4380, %v4388
        %v4413 = vadd.f32 %v4381, %v4389
        %v4414 = vadd.f32 %v4382, %v4390
        %v4415 = vadd.f32 %v4383, %v4391
        %v4416 = vadd.f32 %v4384, %v4392
        %v4417 = vadd.f32 %v4385, %v4393
        %v4418 = vadd.f32 %v4386, %v4394
        %v4419 = vadd.f32 %v4395, %v4403
        %v4420 = vadd.f32 %v4396, %v4404
        %v4421 = vadd.f32 %v4397, %v4405
        %v4422 = vadd.f32 %v4398, %v4406
        %v4423 = vadd.f32 %v4399, %v4407
        %v4424 = vadd.f32 %v4400, %v4408
        %v4425 = vadd.f32 %v4401, %v4409
        %v4426 = vadd.f32 %v4402, %v4410
        %v4427 = vsub.f32 %v4379, %v4387
        %v4428 = vsub.f32 %v4380, %v4388
        %v4429 = vsub.f32 %v4381, %v4389
        %v4430 = vsub.f32 %v4382, %v4390
        %v4431 = vsub.f32 %v4383, %v4391
        %v4432 = vsub.f32 %v4384, %v4392
        %v4433 = vsub.f32 %v4385, %v4393
        %v4434 = vsub.f32 %v4386, %v4394
        %v4435 = vsub.f32 %v4395, %v4403
        %v4436 = vsub.f32 %v4396, %v4404
        %v4437 = vsub.f32 %v4397, %v4405
        %v4438 = vsub.f32 %v4398, %v4406
        %v4439 = vsub.f32 %v4399, %v4407
        %v4440 = vsub.f32 %v4400, %v4408
        %v4441 = vsub.f32 %v4401, %v4409
        %v4442 = vsub.f32 %v4402, %v4410
        %v4443 = vadd.f32 %v4411, %v4419
        %v4444 = vadd.f32 %v4412, %v4420
        %v4445 = vadd.f32 %v4413, %v4421
        %v4446 = vadd.f32 %v4414, %v4422
        %v4447 = vadd.f32 %v4415, %v4423
        %v4448 = vadd.f32 %v4416, %v4424
        %v4449 = vadd.f32 %v4417, %v4425
        %v4450 = vadd.f32 %v4418, %v4426
        %4451 = vst [vmem:[%s516] sm:$0xff] %v4443
        %4452 = vst [vmem:[%s516 + $0x8] sm:$0xff] %v4444
        %4453 = vst [vmem:[%s516 + $0x10] sm:$0xff] %v4445
        %4454 = vst [vmem:[%s516 + $0x18] sm:$0xff] %v4446
        %4455 = vst [vmem:[%s516 + $0x20] sm:$0xff] %v4447
        %4456 = vst [vmem:[%s516 + $0x28] sm:$0xff] %v4448
        %4457 = vst [vmem:[%s516 + $0x30] sm:$0xff] %v4449
        %4458 = vst [vmem:[%s516 + $0x38] sm:$0xff] %v4450
        %v4459 = vsub.f32 %v4411, %v4419
        %v4460 = vsub.f32 %v4412, %v4420
        %v4461 = vsub.f32 %v4413, %v4421
        %v4462 = vsub.f32 %v4414, %v4422
        %v4463 = vsub.f32 %v4415, %v4423
        %v4464 = vsub.f32 %v4416, %v4424
        %v4465 = vsub.f32 %v4417, %v4425
        %v4466 = vsub.f32 %v4418, %v4426
        %s4467 = scalar_lea.vmem %s516, 64 [#allocation11]
        %4468 = vst [vmem:[%s4467] sm:$0xff] %v4459
        %4469 = vst [vmem:[%s4467 + $0x8] sm:$0xff] %v4460
        %4470 = vst [vmem:[%s4467 + $0x10] sm:$0xff] %v4461
        %4471 = vst [vmem:[%s4467 + $0x18] sm:$0xff] %v4462
        %4472 = vst [vmem:[%s4467 + $0x20] sm:$0xff] %v4463
        %4473 = vst [vmem:[%s4467 + $0x28] sm:$0xff] %v4464
        %4474 = vst [vmem:[%s4467 + $0x30] sm:$0xff] %v4465
        %4475 = vst [vmem:[%s4467 + $0x38] sm:$0xff] %v4466
        %v4476 = vadd.f32 %v4427, %v4435
        %v4477 = vadd.f32 %v4428, %v4436
        %v4478 = vadd.f32 %v4429, %v4437
        %v4479 = vadd.f32 %v4430, %v4438
        %v4480 = vadd.f32 %v4431, %v4439
        %v4481 = vadd.f32 %v4432, %v4440
        %v4482 = vadd.f32 %v4433, %v4441
        %v4483 = vadd.f32 %v4434, %v4442
        %s4484 = scalar_lea.vmem %s516, 128 [#allocation11]
        %4485 = vst [vmem:[%s4484] sm:$0xff] %v4476
        %4486 = vst [vmem:[%s4484 + $0x8] sm:$0xff] %v4477
        %4487 = vst [vmem:[%s4484 + $0x10] sm:$0xff] %v4478
        %4488 = vst [vmem:[%s4484 + $0x18] sm:$0xff] %v4479
        %4489 = vst [vmem:[%s4484 + $0x20] sm:$0xff] %v4480
        %4490 = vst [vmem:[%s4484 + $0x28] sm:$0xff] %v4481
        %4491 = vst [vmem:[%s4484 + $0x30] sm:$0xff] %v4482
        %4492 = vst [vmem:[%s4484 + $0x38] sm:$0xff] %v4483
        %v4493 = vsub.f32 %v4427, %v4435
        %v4494 = vsub.f32 %v4428, %v4436
        %v4495 = vsub.f32 %v4429, %v4437
        %v4496 = vsub.f32 %v4430, %v4438
        %v4497 = vsub.f32 %v4431, %v4439
        %v4498 = vsub.f32 %v4432, %v4440
        %v4499 = vsub.f32 %v4433, %v4441
        %v4500 = vsub.f32 %v4434, %v4442
        %s4501 = scalar_lea.vmem %s516, 192 [#allocation11]
        %4502 = vst [vmem:[%s4501] sm:$0xff] %v4493
        %4503 = vst [vmem:[%s4501 + $0x8] sm:$0xff] %v4494
        %4504 = vst [vmem:[%s4501 + $0x10] sm:$0xff] %v4495
        %4505 = vst [vmem:[%s4501 + $0x18] sm:$0xff] %v4496
        %4506 = vst [vmem:[%s4501 + $0x20] sm:$0xff] %v4497
        %4507 = vst [vmem:[%s4501 + $0x28] sm:$0xff] %v4498
        %4508 = vst [vmem:[%s4501 + $0x30] sm:$0xff] %v4499
        %4509 = vst [vmem:[%s4501 + $0x38] sm:$0xff] %v4500
        %4510 = vst [vmem:[#allocation2 + $0x8] sm:$0xff] %v646
        %4511 = vst [vmem:[#allocation2 + $0x20] sm:$0xff] %v647
        %4512 = vst [vmem:[#allocation2 + $0x128] sm:$0xff] %v648
        %4513 = vst [vmem:[#allocation2 + $0x140] sm:$0xff] %v649
        %4514 = vst [vmem:[#allocation2 + $0x248] sm:$0xff] %v650
        %4515 = vst [vmem:[#allocation2 + $0x260] sm:$0xff] %v651
        %4516 = vst [vmem:[#allocation2 + $0x368] sm:$0xff] %v652
        %4517 = vst [vmem:[#allocation2 + $0x380] sm:$0xff] %v653
        %v4518 = vld [vmem:[%s448] sm:$0xff]
        %v4519 = vld [vmem:[%s448 + $0x8] sm:$0xff]
        %v4520 = vld [vmem:[%s448 + $0x10] sm:$0xff]
        %v4521 = vld [vmem:[%s448 + $0x18] sm:$0xff]
        %v4522 = vld [vmem:[%s448 + $0x20] sm:$0xff]
        %v4523 = vld [vmem:[%s448 + $0x28] sm:$0xff]
        %v4524 = vld [vmem:[%s448 + $0x30] sm:$0xff]
        %v4525 = vld [vmem:[%s448 + $0x38] sm:$0xff]
        %v4526 = vld [vmem:[%s448 + $0x40] sm:$0xff]
        %v4527 = vld [vmem:[%s448 + $0x48] sm:$0xff]
        %v4528 = vld [vmem:[%s448 + $0x50] sm:$0xff]
        %v4529 = vld [vmem:[%s448 + $0x58] sm:$0xff]
        %v4530 = vld [vmem:[%s448 + $0x60] sm:$0xff]
        %v4531 = vld [vmem:[%s448 + $0x68] sm:$0xff]
        %v4532 = vld [vmem:[%s448 + $0x70] sm:$0xff]
        %v4533 = vld [vmem:[%s448 + $0x78] sm:$0xff]
        %v4534 = vld [vmem:[%s448 + $0x80] sm:$0xff]
        %v4535 = vld [vmem:[%s448 + $0x88] sm:$0xff]
        %v4536 = vld [vmem:[%s448 + $0x90] sm:$0xff]
        %v4537 = vld [vmem:[%s448 + $0x98] sm:$0xff]
        %v4538 = vld [vmem:[%s448 + $0xa0] sm:$0xff]
        %v4539 = vld [vmem:[%s448 + $0xa8] sm:$0xff]
        %v4540 = vld [vmem:[%s448 + $0xb0] sm:$0xff]
        %v4541 = vld [vmem:[%s448 + $0xb8] sm:$0xff]
        %v4542 = vld [vmem:[%s448 + $0xc0] sm:$0xff]
        %v4543 = vld [vmem:[%s448 + $0xc8] sm:$0xff]
        %v4544 = vld [vmem:[%s448 + $0xd0] sm:$0xff]
        %v4545 = vld [vmem:[%s448 + $0xd8] sm:$0xff]
        %v4546 = vld [vmem:[%s448 + $0xe0] sm:$0xff]
        %v4547 = vld [vmem:[%s448 + $0xe8] sm:$0xff]
        %v4548 = vld [vmem:[%s448 + $0xf0] sm:$0xff]
        %v4549 = vld [vmem:[%s448 + $0xf8] sm:$0xff]
        %4550 = vst [vmem:[%s770 + $0x8] sm:$0xff] %v4518
        %4551 = vst [vmem:[%s770 + $0x20] sm:$0xff] %v4519
        %4552 = vst [vmem:[%s770 + $0x38] sm:$0xff] %v4520
        %4553 = vst [vmem:[%s770 + $0x50] sm:$0xff] %v4521
        %4554 = vst [vmem:[%s770 + $0x68] sm:$0xff] %v4522
        %4555 = vst [vmem:[%s770 + $0x80] sm:$0xff] %v4523
        %4556 = vst [vmem:[%s770 + $0x98] sm:$0xff] %v4524
        %4557 = vst [vmem:[%s770 + $0xb0] sm:$0xff] %v4525
        %4558 = vst [vmem:[%s770 + $0x128] sm:$0xff] %v4526
        %4559 = vst [vmem:[%s770 + $0x140] sm:$0xff] %v4527
        %4560 = vst [vmem:[%s770 + $0x158] sm:$0xff] %v4528
        %4561 = vst [vmem:[%s770 + $0x170] sm:$0xff] %v4529
        %4562 = vst [vmem:[%s770 + $0x188] sm:$0xff] %v4530
        %4563 = vst [vmem:[%s770 + $0x1a0] sm:$0xff] %v4531
        %4564 = vst [vmem:[%s770 + $0x1b8] sm:$0xff] %v4532
        %4565 = vst [vmem:[%s770 + $0x1d0] sm:$0xff] %v4533
        %4566 = vst [vmem:[%s770 + $0x248] sm:$0xff] %v4534
        %4567 = vst [vmem:[%s770 + $0x260] sm:$0xff] %v4535
        %4568 = vst [vmem:[%s770 + $0x278] sm:$0xff] %v4536
        %4569 = vst [vmem:[%s770 + $0x290] sm:$0xff] %v4537
        %4570 = vst [vmem:[%s770 + $0x2a8] sm:$0xff] %v4538
        %4571 = vst [vmem:[%s770 + $0x2c0] sm:$0xff] %v4539
        %4572 = vst [vmem:[%s770 + $0x2d8] sm:$0xff] %v4540
        %4573 = vst [vmem:[%s770 + $0x2f0] sm:$0xff] %v4541
        %4574 = vst [vmem:[%s770 + $0x368] sm:$0xff] %v4542
        %4575 = vst [vmem:[%s770 + $0x380] sm:$0xff] %v4543
        %4576 = vst [vmem:[%s770 + $0x398] sm:$0xff] %v4544
        %4577 = vst [vmem:[%s770 + $0x3b0] sm:$0xff] %v4545
        %4578 = vst [vmem:[%s770 + $0x3c8] sm:$0xff] %v4546
        %4579 = vst [vmem:[%s770 + $0x3e0] sm:$0xff] %v4547
        %4580 = vst [vmem:[%s770 + $0x3f8] sm:$0xff] %v4548
        %4581 = vst [vmem:[%s770 + $0x410] sm:$0xff] %v4549
        %4582 = vst [vmem:[%s840 + $0x8] sm:$0xff] %v663
        %4583 = vst [vmem:[%s840 + $0x20] sm:$0xff] %v664
        %4584 = vst [vmem:[%s840 + $0x128] sm:$0xff] %v665
        %4585 = vst [vmem:[%s840 + $0x140] sm:$0xff] %v666
        %4586 = vst [vmem:[%s840 + $0x248] sm:$0xff] %v667
        %4587 = vst [vmem:[%s840 + $0x260] sm:$0xff] %v668
        %4588 = vst [vmem:[%s840 + $0x368] sm:$0xff] %v669
        %4589 = vst [vmem:[%s840 + $0x380] sm:$0xff] %v670
        %v4590 = vld [vmem:[%s532] sm:$0x1f]
        %v4591 = vld [vmem:[%s532 + $0x8] sm:$0x1f]
        %v4592 = vld [vmem:[%s532 + $0x10] sm:$0x1f]
        %v4593 = vld [vmem:[%s532 + $0x18] sm:$0x1f]
        %v4594 = vld [vmem:[%s532 + $0x20] sm:$0x1f]
        %v4595 = vld [vmem:[%s535] sm:$0x1]
        %v4596 = vld [vmem:[%s2088 + $0x7] sm:$0xff]
        %v4597 = vld [vmem:[%s2088 + $0x1f] sm:$0xff]
        %v4598 = vld [vmem:[%s2088 + $0x37] sm:$0xff]
        %v4599 = vld [vmem:[%s2088 + $0x4f] sm:$0xff]
        %v4600 = vld [vmem:[%s2088 + $0x67] sm:$0xff]
        %v4601 = vld [vmem:[%s2088 + $0x7f] sm:$0xff]
        %v4602 = vld [vmem:[%s2088 + $0x97] sm:$0xff]
        %v4603 = vld [vmem:[%s2088 + $0xaf] sm:$0xff]
        %v4604 = vlaneseq
        %v4605 = vshrl.u32 %v4604, 7
        %v4606 = vsub.s32 0, %v4605
        %v4607 = vrot.slane %v4590, %v4606
        %v4608 = vmul.f32 %v4596, %v4607
        %v4609 = vmul.f32 %v4597, %v4607
        %v4610 = vmul.f32 %v4598, %v4607
        %v4611 = vmul.f32 %v4599, %v4607
        %v4612 = vmul.f32 %v4600, %v4607
        %v4613 = vmul.f32 %v4601, %v4607
        %v4614 = vmul.f32 %v4602, %v4607
        %v4615 = vmul.f32 %v4603, %v4607
        %v4616 = vadd.f32 %v4608, 0.0
        %v4617 = vadd.f32 %v4609, 0.0
        %v4618 = vadd.f32 %v4610, 0.0
        %v4619 = vadd.f32 %v4611, 0.0
        %v4620 = vadd.f32 %v4612, 0.0
        %v4621 = vadd.f32 %v4613, 0.0
        %v4622 = vadd.f32 %v4614, 0.0
        %v4623 = vadd.f32 %v4615, 0.0
        %s4624 = scalar_lea.vmem [#allocation2], 312
        %v4625 = vld [vmem:[%s4624 + $0x7] sm:$0xff]
        %v4626 = vld [vmem:[%s4624 + $0x1f] sm:$0xff]
        %v4627 = vld [vmem:[%s4624 + $0x37] sm:$0xff]
        %v4628 = vld [vmem:[%s4624 + $0x4f] sm:$0xff]
        %v4629 = vld [vmem:[%s4624 + $0x67] sm:$0xff]
        %v4630 = vld [vmem:[%s4624 + $0x7f] sm:$0xff]
        %v4631 = vld [vmem:[%s4624 + $0x97] sm:$0xff]
        %v4632 = vld [vmem:[%s4624 + $0xaf] sm:$0xff]
        %v4633 = vlaneseq
        %v4634 = vshrl.u32 %v4633, 7
        %v4635 = vsub.s32 1, %v4634
        %v4636 = vrot.slane %v4590, %v4635
        %v4637 = vmul.f32 %v4625, %v4636
        %v4638 = vmul.f32 %v4626, %v4636
        %v4639 = vmul.f32 %v4627, %v4636
        %v4640 = vmul.f32 %v4628, %v4636
        %v4641 = vmul.f32 %v4629, %v4636
        %v4642 = vmul.f32 %v4630, %v4636
        %v4643 = vmul.f32 %v4631, %v4636
        %v4644 = vmul.f32 %v4632, %v4636
        %v4645 = vadd.f32 %v4616, %v4637
        %v4646 = vadd.f32 %v4617, %v4638
        %v4647 = vadd.f32 %v4618, %v4639
        %v4648 = vadd.f32 %v4619, %v4640
        %v4649 = vadd.f32 %v4620, %v4641
        %v4650 = vadd.f32 %v4621, %v4642
        %v4651 = vadd.f32 %v4622, %v4643
        %v4652 = vadd.f32 %v4623, %v4644
        %v4653 = vmul.f32 %v4625, %v4607
        %v4654 = vmul.f32 %v4626, %v4607
        %v4655 = vmul.f32 %v4627, %v4607
        %v4656 = vmul.f32 %v4628, %v4607
        %v4657 = vmul.f32 %v4629, %v4607
        %v4658 = vmul.f32 %v4630, %v4607
        %v4659 = vmul.f32 %v4631, %v4607
        %v4660 = vmul.f32 %v4632, %v4607
        %v4661 = vadd.f32 %v4653, 0.0
        %v4662 = vadd.f32 %v4654, 0.0
        %v4663 = vadd.f32 %v4655, 0.0
        %v4664 = vadd.f32 %v4656, 0.0
        %v4665 = vadd.f32 %v4657, 0.0
        %v4666 = vadd.f32 %v4658, 0.0
        %v4667 = vadd.f32 %v4659, 0.0
        %v4668 = vadd.f32 %v4660, 0.0
        %v4669 = vld [vmem:[%s2088 + $0x8] sm:$0xff]
        %v4670 = vld [vmem:[%s2088 + $0x20] sm:$0xff]
        %v4671 = vld [vmem:[%s2088 + $0x38] sm:$0xff]
        %v4672 = vld [vmem:[%s2088 + $0x50] sm:$0xff]
        %v4673 = vld [vmem:[%s2088 + $0x68] sm:$0xff]
        %v4674 = vld [vmem:[%s2088 + $0x80] sm:$0xff]
        %v4675 = vld [vmem:[%s2088 + $0x98] sm:$0xff]
        %v4676 = vld [vmem:[%s2088 + $0xb0] sm:$0xff]
        %v4677 = vlaneseq
        %v4678 = vshrl.u32 %v4677, 7
        %v4679 = vsub.s32 2, %v4678
        %v4680 = vrot.slane %v4590, %v4679
        %v4681 = vmul.f32 %v4669, %v4680
        %v4682 = vmul.f32 %v4670, %v4680
        %v4683 = vmul.f32 %v4671, %v4680
        %v4684 = vmul.f32 %v4672, %v4680
        %v4685 = vmul.f32 %v4673, %v4680
        %v4686 = vmul.f32 %v4674, %v4680
        %v4687 = vmul.f32 %v4675, %v4680
        %v4688 = vmul.f32 %v4676, %v4680
        %v4689 = vadd.f32 %v4645, %v4681
        %v4690 = vadd.f32 %v4646, %v4682
        %v4691 = vadd.f32 %v4647, %v4683
        %v4692 = vadd.f32 %v4648, %v4684
        %v4693 = vadd.f32 %v4649, %v4685
        %v4694 = vadd.f32 %v4650, %v4686
        %v4695 = vadd.f32 %v4651, %v4687
        %v4696 = vadd.f32 %v4652, %v4688
        %v4697 = vmul.f32 %v4669, %v4636
        %v4698 = vmul.f32 %v4670, %v4636
        %v4699 = vmul.f32 %v4671, %v4636
        %v4700 = vmul.f32 %v4672, %v4636
        %v4701 = vmul.f32 %v4673, %v4636
        %v4702 = vmul.f32 %v4674, %v4636
        %v4703 = vmul.f32 %v4675, %v4636
        %v4704 = vmul.f32 %v4676, %v4636
        %v4705 = vadd.f32 %v4661, %v4697
        %v4706 = vadd.f32 %v4662, %v4698
        %v4707 = vadd.f32 %v4663, %v4699
        %v4708 = vadd.f32 %v4664, %v4700
        %v4709 = vadd.f32 %v4665, %v4701
        %v4710 = vadd.f32 %v4666, %v4702
        %v4711 = vadd.f32 %v4667, %v4703
        %v4712 = vadd.f32 %v4668, %v4704
        %v4713 = vld [vmem:[%s4624 + $0x8] sm:$0xff]
        %v4714 = vld [vmem:[%s4624 + $0x20] sm:$0xff]
        %v4715 = vld [vmem:[%s4624 + $0x38] sm:$0xff]
        %v4716 = vld [vmem:[%s4624 + $0x50] sm:$0xff]
        %v4717 = vld [vmem:[%s4624 + $0x68] sm:$0xff]
        %v4718 = vld [vmem:[%s4624 + $0x80] sm:$0xff]
        %v4719 = vld [vmem:[%s4624 + $0x98] sm:$0xff]
        %v4720 = vld [vmem:[%s4624 + $0xb0] sm:$0xff]
        %v4721 = vlaneseq
        %v4722 = vshrl.u32 %v4721, 7
        %v4723 = vsub.s32 3, %v4722
        %v4724 = vrot.slane %v4590, %v4723
        %v4725 = vmul.f32 %v4713, %v4724
        %v4726 = vmul.f32 %v4714, %v4724
        %v4727 = vmul.f32 %v4715, %v4724
        %v4728 = vmul.f32 %v4716, %v4724
        %v4729 = vmul.f32 %v4717, %v4724
        %v4730 = vmul.f32 %v4718, %v4724
        %v4731 = vmul.f32 %v4719, %v4724
        %v4732 = vmul.f32 %v4720, %v4724
        %v4733 = vadd.f32 %v4689, %v4725
        %v4734 = vadd.f32 %v4690, %v4726
        %v4735 = vadd.f32 %v4691, %v4727
        %v4736 = vadd.f32 %v4692, %v4728
        %v4737 = vadd.f32 %v4693, %v4729
        %v4738 = vadd.f32 %v4694, %v4730
        %v4739 = vadd.f32 %v4695, %v4731
        %v4740 = vadd.f32 %v4696, %v4732
        %v4741 = vmul.f32 %v4713, %v4680
        %v4742 = vmul.f32 %v4714, %v4680
        %v4743 = vmul.f32 %v4715, %v4680
        %v4744 = vmul.f32 %v4716, %v4680
        %v4745 = vmul.f32 %v4717, %v4680
        %v4746 = vmul.f32 %v4718, %v4680
        %v4747 = vmul.f32 %v4719, %v4680
        %v4748 = vmul.f32 %v4720, %v4680
        %v4749 = vadd.f32 %v4705, %v4741
        %v4750 = vadd.f32 %v4706, %v4742
        %v4751 = vadd.f32 %v4707, %v4743
        %v4752 = vadd.f32 %v4708, %v4744
        %v4753 = vadd.f32 %v4709, %v4745
        %v4754 = vadd.f32 %v4710, %v4746
        %v4755 = vadd.f32 %v4711, %v4747
        %v4756 = vadd.f32 %v4712, %v4748
        %v4757 = vld [vmem:[%s2088 + $0x9] sm:$0xff]
        %v4758 = vld [vmem:[%s2088 + $0x21] sm:$0xff]
        %v4759 = vld [vmem:[%s2088 + $0x39] sm:$0xff]
        %v4760 = vld [vmem:[%s2088 + $0x51] sm:$0xff]
        %v4761 = vld [vmem:[%s2088 + $0x69] sm:$0xff]
        %v4762 = vld [vmem:[%s2088 + $0x81] sm:$0xff]
        %v4763 = vld [vmem:[%s2088 + $0x99] sm:$0xff]
        %v4764 = vld [vmem:[%s2088 + $0xb1] sm:$0xff]
        %v4765 = vlaneseq
        %v4766 = vshrl.u32 %v4765, 7
        %v4767 = vsub.s32 4, %v4766
        %v4768 = vrot.slane %v4590, %v4767
        %v4769 = vmul.f32 %v4757, %v4768
        %v4770 = vmul.f32 %v4758, %v4768
        %v4771 = vmul.f32 %v4759, %v4768
        %v4772 = vmul.f32 %v4760, %v4768
        %v4773 = vmul.f32 %v4761, %v4768
        %v4774 = vmul.f32 %v4762, %v4768
        %v4775 = vmul.f32 %v4763, %v4768
        %v4776 = vmul.f32 %v4764, %v4768
        %v4777 = vadd.f32 %v4733, %v4769
        %v4778 = vadd.f32 %v4734, %v4770
        %v4779 = vadd.f32 %v4735, %v4771
        %v4780 = vadd.f32 %v4736, %v4772
        %v4781 = vadd.f32 %v4737, %v4773
        %v4782 = vadd.f32 %v4738, %v4774
        %v4783 = vadd.f32 %v4739, %v4775
        %v4784 = vadd.f32 %v4740, %v4776
        %v4785 = vmul.f32 %v4757, %v4724
        %v4786 = vmul.f32 %v4758, %v4724
        %v4787 = vmul.f32 %v4759, %v4724
        %v4788 = vmul.f32 %v4760, %v4724
        %v4789 = vmul.f32 %v4761, %v4724
        %v4790 = vmul.f32 %v4762, %v4724
        %v4791 = vmul.f32 %v4763, %v4724
        %v4792 = vmul.f32 %v4764, %v4724
        %v4793 = vadd.f32 %v4749, %v4785
        %v4794 = vadd.f32 %v4750, %v4786
        %v4795 = vadd.f32 %v4751, %v4787
        %v4796 = vadd.f32 %v4752, %v4788
        %v4797 = vadd.f32 %v4753, %v4789
        %v4798 = vadd.f32 %v4754, %v4790
        %v4799 = vadd.f32 %v4755, %v4791
        %v4800 = vadd.f32 %v4756, %v4792
        %v4801 = vld [vmem:[%s4624 + $0x9] sm:$0xff]
        %v4802 = vld [vmem:[%s4624 + $0x21] sm:$0xff]
        %v4803 = vld [vmem:[%s4624 + $0x39] sm:$0xff]
        %v4804 = vld [vmem:[%s4624 + $0x51] sm:$0xff]
        %v4805 = vld [vmem:[%s4624 + $0x69] sm:$0xff]
        %v4806 = vld [vmem:[%s4624 + $0x81] sm:$0xff]
        %v4807 = vld [vmem:[%s4624 + $0x99] sm:$0xff]
        %v4808 = vld [vmem:[%s4624 + $0xb1] sm:$0xff]
        %v4809 = vmul.f32 %v4801, %v4768
        %v4810 = vmul.f32 %v4802, %v4768
        %v4811 = vmul.f32 %v4803, %v4768
        %v4812 = vmul.f32 %v4804, %v4768
        %v4813 = vmul.f32 %v4805, %v4768
        %v4814 = vmul.f32 %v4806, %v4768
        %v4815 = vmul.f32 %v4807, %v4768
        %v4816 = vmul.f32 %v4808, %v4768
        %v4817 = vadd.f32 %v4793, %v4809
        %v4818 = vadd.f32 %v4794, %v4810
        %v4819 = vadd.f32 %v4795, %v4811
        %v4820 = vadd.f32 %v4796, %v4812
        %v4821 = vadd.f32 %v4797, %v4813
        %v4822 = vadd.f32 %v4798, %v4814
        %v4823 = vadd.f32 %v4799, %v4815
        %v4824 = vadd.f32 %v4800, %v4816
        %s4825 = scalar_lea.vmem [#allocation2], 600
        %v4826 = vld [vmem:[%s4825 + $0x7] sm:$0xff]
        %v4827 = vld [vmem:[%s4825 + $0x1f] sm:$0xff]
        %v4828 = vld [vmem:[%s4825 + $0x37] sm:$0xff]
        %v4829 = vld [vmem:[%s4825 + $0x4f] sm:$0xff]
        %v4830 = vld [vmem:[%s4825 + $0x67] sm:$0xff]
        %v4831 = vld [vmem:[%s4825 + $0x7f] sm:$0xff]
        %v4832 = vld [vmem:[%s4825 + $0x97] sm:$0xff]
        %v4833 = vld [vmem:[%s4825 + $0xaf] sm:$0xff]
        %v4834 = vlaneseq
        %v4835 = vshrl.u32 %v4834, 7
        %v4836 = vsub.s32 0, %v4835
        %v4837 = vrot.slane %v4591, %v4836
        %v4838 = vmul.f32 %v4826, %v4837
        %v4839 = vmul.f32 %v4827, %v4837
        %v4840 = vmul.f32 %v4828, %v4837
        %v4841 = vmul.f32 %v4829, %v4837
        %v4842 = vmul.f32 %v4830, %v4837
        %v4843 = vmul.f32 %v4831, %v4837
        %v4844 = vmul.f32 %v4832, %v4837
        %v4845 = vmul.f32 %v4833, %v4837
        %v4846 = vadd.f32 %v4777, %v4838
        %v4847 = vadd.f32 %v4778, %v4839
        %v4848 = vadd.f32 %v4779, %v4840
        %v4849 = vadd.f32 %v4780, %v4841
        %v4850 = vadd.f32 %v4781, %v4842
        %v4851 = vadd.f32 %v4782, %v4843
        %v4852 = vadd.f32 %v4783, %v4844
        %v4853 = vadd.f32 %v4784, %v4845
        %v4854 = vmul.f32 %v4826, %v4607
        %v4855 = vmul.f32 %v4827, %v4607
        %v4856 = vmul.f32 %v4828, %v4607
        %v4857 = vmul.f32 %v4829, %v4607
        %v4858 = vmul.f32 %v4830, %v4607
        %v4859 = vmul.f32 %v4831, %v4607
        %v4860 = vmul.f32 %v4832, %v4607
        %v4861 = vmul.f32 %v4833, %v4607
        %v4862 = vadd.f32 %v4854, 0.0
        %v4863 = vadd.f32 %v4855, 0.0
        %v4864 = vadd.f32 %v4856, 0.0
        %v4865 = vadd.f32 %v4857, 0.0
        %v4866 = vadd.f32 %v4858, 0.0
        %v4867 = vadd.f32 %v4859, 0.0
        %v4868 = vadd.f32 %v4860, 0.0
        %v4869 = vadd.f32 %v4861, 0.0
        %s4870 = scalar_lea.vmem [#allocation2], 888
        %v4871 = vld [vmem:[%s4870 + $0x7] sm:$0xff]
        %v4872 = vld [vmem:[%s4870 + $0x1f] sm:$0xff]
        %v4873 = vld [vmem:[%s4870 + $0x37] sm:$0xff]
        %v4874 = vld [vmem:[%s4870 + $0x4f] sm:$0xff]
        %v4875 = vld [vmem:[%s4870 + $0x67] sm:$0xff]
        %v4876 = vld [vmem:[%s4870 + $0x7f] sm:$0xff]
        %v4877 = vld [vmem:[%s4870 + $0x97] sm:$0xff]
        %v4878 = vld [vmem:[%s4870 + $0xaf] sm:$0xff]
        %v4879 = vlaneseq
        %v4880 = vshrl.u32 %v4879, 7
        %v4881 = vsub.s32 1, %v4880
        %v4882 = vrot.slane %v4591, %v4881
        %v4883 = vmul.f32 %v4871, %v4882
        %v4884 = vmul.f32 %v4872, %v4882
        %v4885 = vmul.f32 %v4873, %v4882
        %v4886 = vmul.f32 %v4874, %v4882
        %v4887 = vmul.f32 %v4875, %v4882
        %v4888 = vmul.f32 %v4876, %v4882
        %v4889 = vmul.f32 %v4877, %v4882
        %v4890 = vmul.f32 %v4878, %v4882
        %v4891 = vadd.f32 %v4846, %v4883
        %v4892 = vadd.f32 %v4847, %v4884
        %v4893 = vadd.f32 %v4848, %v4885
        %v4894 = vadd.f32 %v4849, %v4886
        %v4895 = vadd.f32 %v4850, %v4887
        %v4896 = vadd.f32 %v4851, %v4888
        %v4897 = vadd.f32 %v4852, %v4889
        %v4898 = vadd.f32 %v4853, %v4890
        %v4899 = vmul.f32 %v4871, %v4837
        %v4900 = vmul.f32 %v4872, %v4837
        %v4901 = vmul.f32 %v4873, %v4837
        %v4902 = vmul.f32 %v4874, %v4837
        %v4903 = vmul.f32 %v4875, %v4837
        %v4904 = vmul.f32 %v4876, %v4837
        %v4905 = vmul.f32 %v4877, %v4837
        %v4906 = vmul.f32 %v4878, %v4837
        %v4907 = vadd.f32 %v4817, %v4899
        %v4908 = vadd.f32 %v4818, %v4900
        %v4909 = vadd.f32 %v4819, %v4901
        %v4910 = vadd.f32 %v4820, %v4902
        %v4911 = vadd.f32 %v4821, %v4903
        %v4912 = vadd.f32 %v4822, %v4904
        %v4913 = vadd.f32 %v4823, %v4905
        %v4914 = vadd.f32 %v4824, %v4906
        %v4915 = vmul.f32 %v4871, %v4636
        %v4916 = vmul.f32 %v4872, %v4636
        %v4917 = vmul.f32 %v4873, %v4636
        %v4918 = vmul.f32 %v4874, %v4636
        %v4919 = vmul.f32 %v4875, %v4636
        %v4920 = vmul.f32 %v4876, %v4636
        %v4921 = vmul.f32 %v4877, %v4636
        %v4922 = vmul.f32 %v4878, %v4636
        %v4923 = vadd.f32 %v4862, %v4915
        %v4924 = vadd.f32 %v4863, %v4916
        %v4925 = vadd.f32 %v4864, %v4917
        %v4926 = vadd.f32 %v4865, %v4918
        %v4927 = vadd.f32 %v4866, %v4919
        %v4928 = vadd.f32 %v4867, %v4920
        %v4929 = vadd.f32 %v4868, %v4921
        %v4930 = vadd.f32 %v4869, %v4922
        %v4931 = vmul.f32 %v4871, %v4607
        %v4932 = vmul.f32 %v4872, %v4607
        %v4933 = vmul.f32 %v4873, %v4607
        %v4934 = vmul.f32 %v4874, %v4607
        %v4935 = vmul.f32 %v4875, %v4607
        %v4936 = vmul.f32 %v4876, %v4607
        %v4937 = vmul.f32 %v4877, %v4607
        %v4938 = vmul.f32 %v4878, %v4607
        %v4939 = vadd.f32 %v4931, 0.0
        %v4940 = vadd.f32 %v4932, 0.0
        %v4941 = vadd.f32 %v4933, 0.0
        %v4942 = vadd.f32 %v4934, 0.0
        %v4943 = vadd.f32 %v4935, 0.0
        %v4944 = vadd.f32 %v4936, 0.0
        %v4945 = vadd.f32 %v4937, 0.0
        %v4946 = vadd.f32 %v4938, 0.0
        %v4947 = vld [vmem:[%s4825 + $0x8] sm:$0xff]
        %v4948 = vld [vmem:[%s4825 + $0x20] sm:$0xff]
        %v4949 = vld [vmem:[%s4825 + $0x38] sm:$0xff]
        %v4950 = vld [vmem:[%s4825 + $0x50] sm:$0xff]
        %v4951 = vld [vmem:[%s4825 + $0x68] sm:$0xff]
        %v4952 = vld [vmem:[%s4825 + $0x80] sm:$0xff]
        %v4953 = vld [vmem:[%s4825 + $0x98] sm:$0xff]
        %v4954 = vld [vmem:[%s4825 + $0xb0] sm:$0xff]
        %v4955 = vlaneseq
        %v4956 = vshrl.u32 %v4955, 7
        %v4957 = vsub.s32 2, %v4956
        %v4958 = vrot.slane %v4591, %v4957
        %v4959 = vmul.f32 %v4947, %v4958
        %v4960 = vmul.f32 %v4948, %v4958
        %v4961 = vmul.f32 %v4949, %v4958
        %v4962 = vmul.f32 %v4950, %v4958
        %v4963 = vmul.f32 %v4951, %v4958
        %v4964 = vmul.f32 %v4952, %v4958
        %v4965 = vmul.f32 %v4953, %v4958
        %v4966 = vmul.f32 %v4954, %v4958
        %v4967 = vadd.f32 %v4891, %v4959
        %v4968 = vadd.f32 %v4892, %v4960
        %v4969 = vadd.f32 %v4893, %v4961
        %v4970 = vadd.f32 %v4894, %v4962
        %v4971 = vadd.f32 %v4895, %v4963
        %v4972 = vadd.f32 %v4896, %v4964
        %v4973 = vadd.f32 %v4897, %v4965
        %v4974 = vadd.f32 %v4898, %v4966
        %v4975 = vmul.f32 %v4947, %v4882
        %v4976 = vmul.f32 %v4948, %v4882
        %v4977 = vmul.f32 %v4949, %v4882
        %v4978 = vmul.f32 %v4950, %v4882
        %v4979 = vmul.f32 %v4951, %v4882
        %v4980 = vmul.f32 %v4952, %v4882
        %v4981 = vmul.f32 %v4953, %v4882
        %v4982 = vmul.f32 %v4954, %v4882
        %v4983 = vadd.f32 %v4907, %v4975
        %v4984 = vadd.f32 %v4908, %v4976
        %v4985 = vadd.f32 %v4909, %v4977
        %v4986 = vadd.f32 %v4910, %v4978
        %v4987 = vadd.f32 %v4911, %v4979
        %v4988 = vadd.f32 %v4912, %v4980
        %v4989 = vadd.f32 %v4913, %v4981
        %v4990 = vadd.f32 %v4914, %v4982
        %v4991 = vmul.f32 %v4947, %v4680
        %v4992 = vmul.f32 %v4948, %v4680
        %v4993 = vmul.f32 %v4949, %v4680
        %v4994 = vmul.f32 %v4950, %v4680
        %v4995 = vmul.f32 %v4951, %v4680
        %v4996 = vmul.f32 %v4952, %v4680
        %v4997 = vmul.f32 %v4953, %v4680
        %v4998 = vmul.f32 %v4954, %v4680
        %v4999 = vadd.f32 %v4923, %v4991
        %v5000 = vadd.f32 %v4924, %v4992
        %v5001 = vadd.f32 %v4925, %v4993
        %v5002 = vadd.f32 %v4926, %v4994
        %v5003 = vadd.f32 %v4927, %v4995
        %v5004 = vadd.f32 %v4928, %v4996
        %v5005 = vadd.f32 %v4929, %v4997
        %v5006 = vadd.f32 %v4930, %v4998
        %v5007 = vmul.f32 %v4947, %v4636
        %v5008 = vmul.f32 %v4948, %v4636
        %v5009 = vmul.f32 %v4949, %v4636
        %v5010 = vmul.f32 %v4950, %v4636
        %v5011 = vmul.f32 %v4951, %v4636
        %v5012 = vmul.f32 %v4952, %v4636
        %v5013 = vmul.f32 %v4953, %v4636
        %v5014 = vmul.f32 %v4954, %v4636
        %v5015 = vadd.f32 %v4939, %v5007
        %v5016 = vadd.f32 %v4940, %v5008
        %v5017 = vadd.f32 %v4941, %v5009
        %v5018 = vadd.f32 %v4942, %v5010
        %v5019 = vadd.f32 %v4943, %v5011
        %v5020 = vadd.f32 %v4944, %v5012
        %v5021 = vadd.f32 %v4945, %v5013
        %v5022 = vadd.f32 %v4946, %v5014
        %v5023 = vld [vmem:[%s4870 + $0x8] sm:$0xff]
        %v5024 = vld [vmem:[%s4870 + $0x20] sm:$0xff]
        %v5025 = vld [vmem:[%s4870 + $0x38] sm:$0xff]
        %v5026 = vld [vmem:[%s4870 + $0x50] sm:$0xff]
        %v5027 = vld [vmem:[%s4870 + $0x68] sm:$0xff]
        %v5028 = vld [vmem:[%s4870 + $0x80] sm:$0xff]
        %v5029 = vld [vmem:[%s4870 + $0x98] sm:$0xff]
        %v5030 = vld [vmem:[%s4870 + $0xb0] sm:$0xff]
        %v5031 = vlaneseq
        %v5032 = vshrl.u32 %v5031, 7
        %v5033 = vsub.s32 3, %v5032
        %v5034 = vrot.slane %v4591, %v5033
        %v5035 = vmul.f32 %v5023, %v5034
        %v5036 = vmul.f32 %v5024, %v5034
        %v5037 = vmul.f32 %v5025, %v5034
        %v5038 = vmul.f32 %v5026, %v5034
        %v5039 = vmul.f32 %v5027, %v5034
        %v5040 = vmul.f32 %v5028, %v5034
        %v5041 = vmul.f32 %v5029, %v5034
        %v5042 = vmul.f32 %v5030, %v5034
        %v5043 = vadd.f32 %v4967, %v5035
        %v5044 = vadd.f32 %v4968, %v5036
        %v5045 = vadd.f32 %v4969, %v5037
        %v5046 = vadd.f32 %v4970, %v5038
        %v5047 = vadd.f32 %v4971, %v5039
        %v5048 = vadd.f32 %v4972, %v5040
        %v5049 = vadd.f32 %v4973, %v5041
        %v5050 = vadd.f32 %v4974, %v5042
        %v5051 = vmul.f32 %v5023, %v4958
        %v5052 = vmul.f32 %v5024, %v4958
        %v5053 = vmul.f32 %v5025, %v4958
        %v5054 = vmul.f32 %v5026, %v4958
        %v5055 = vmul.f32 %v5027, %v4958
        %v5056 = vmul.f32 %v5028, %v4958
        %v5057 = vmul.f32 %v5029, %v4958
        %v5058 = vmul.f32 %v5030, %v4958
        %v5059 = vadd.f32 %v4983, %v5051
        %v5060 = vadd.f32 %v4984, %v5052
        %v5061 = vadd.f32 %v4985, %v5053
        %v5062 = vadd.f32 %v4986, %v5054
        %v5063 = vadd.f32 %v4987, %v5055
        %v5064 = vadd.f32 %v4988, %v5056
        %v5065 = vadd.f32 %v4989, %v5057
        %v5066 = vadd.f32 %v4990, %v5058
        %v5067 = vmul.f32 %v5023, %v4724
        %v5068 = vmul.f32 %v5024, %v4724
        %v5069 = vmul.f32 %v5025, %v4724
        %v5070 = vmul.f32 %v5026, %v4724
        %v5071 = vmul.f32 %v5027, %v4724
        %v5072 = vmul.f32 %v5028, %v4724
        %v5073 = vmul.f32 %v5029, %v4724
        %v5074 = vmul.f32 %v5030, %v4724
        %v5075 = vadd.f32 %v4999, %v5067
        %v5076 = vadd.f32 %v5000, %v5068
        %v5077 = vadd.f32 %v5001, %v5069
        %v5078 = vadd.f32 %v5002, %v5070
        %v5079 = vadd.f32 %v5003, %v5071
        %v5080 = vadd.f32 %v5004, %v5072
        %v5081 = vadd.f32 %v5005, %v5073
        %v5082 = vadd.f32 %v5006, %v5074
        %v5083 = vmul.f32 %v5023, %v4680
        %v5084 = vmul.f32 %v5024, %v4680
        %v5085 = vmul.f32 %v5025, %v4680
        %v5086 = vmul.f32 %v5026, %v4680
        %v5087 = vmul.f32 %v5027, %v4680
        %v5088 = vmul.f32 %v5028, %v4680
        %v5089 = vmul.f32 %v5029, %v4680
        %v5090 = vmul.f32 %v5030, %v4680
        %v5091 = vadd.f32 %v5015, %v5083
        %v5092 = vadd.f32 %v5016, %v5084
        %v5093 = vadd.f32 %v5017, %v5085
        %v5094 = vadd.f32 %v5018, %v5086
        %v5095 = vadd.f32 %v5019, %v5087
        %v5096 = vadd.f32 %v5020, %v5088
        %v5097 = vadd.f32 %v5021, %v5089
        %v5098 = vadd.f32 %v5022, %v5090
        %v5099 = vld [vmem:[%s4825 + $0x9] sm:$0xff]
        %v5100 = vld [vmem:[%s4825 + $0x21] sm:$0xff]
        %v5101 = vld [vmem:[%s4825 + $0x39] sm:$0xff]
        %v5102 = vld [vmem:[%s4825 + $0x51] sm:$0xff]
        %v5103 = vld [vmem:[%s4825 + $0x69] sm:$0xff]
        %v5104 = vld [vmem:[%s4825 + $0x81] sm:$0xff]
        %v5105 = vld [vmem:[%s4825 + $0x99] sm:$0xff]
        %v5106 = vld [vmem:[%s4825 + $0xb1] sm:$0xff]
        %v5107 = vlaneseq
        %v5108 = vshrl.u32 %v5107, 7
        %v5109 = vsub.s32 4, %v5108
        %v5110 = vrot.slane %v4591, %v5109
        %v5111 = vmul.f32 %v5099, %v5110
        %v5112 = vmul.f32 %v5100, %v5110
        %v5113 = vmul.f32 %v5101, %v5110
        %v5114 = vmul.f32 %v5102, %v5110
        %v5115 = vmul.f32 %v5103, %v5110
        %v5116 = vmul.f32 %v5104, %v5110
        %v5117 = vmul.f32 %v5105, %v5110
        %v5118 = vmul.f32 %v5106, %v5110
        %v5119 = vadd.f32 %v5043, %v5111
        %v5120 = vadd.f32 %v5044, %v5112
        %v5121 = vadd.f32 %v5045, %v5113
        %v5122 = vadd.f32 %v5046, %v5114
        %v5123 = vadd.f32 %v5047, %v5115
        %v5124 = vadd.f32 %v5048, %v5116
        %v5125 = vadd.f32 %v5049, %v5117
        %v5126 = vadd.f32 %v5050, %v5118
        %v5127 = vmul.f32 %v5099, %v5034
        %v5128 = vmul.f32 %v5100, %v5034
        %v5129 = vmul.f32 %v5101, %v5034
        %v5130 = vmul.f32 %v5102, %v5034
        %v5131 = vmul.f32 %v5103, %v5034
        %v5132 = vmul.f32 %v5104, %v5034
        %v5133 = vmul.f32 %v5105, %v5034
        %v5134 = vmul.f32 %v5106, %v5034
        %v5135 = vadd.f32 %v5059, %v5127
        %v5136 = vadd.f32 %v5060, %v5128
        %v5137 = vadd.f32 %v5061, %v5129
        %v5138 = vadd.f32 %v5062, %v5130
        %v5139 = vadd.f32 %v5063, %v5131
        %v5140 = vadd.f32 %v5064, %v5132
        %v5141 = vadd.f32 %v5065, %v5133
        %v5142 = vadd.f32 %v5066, %v5134
        %v5143 = vmul.f32 %v5099, %v4768
        %v5144 = vmul.f32 %v5100, %v4768
        %v5145 = vmul.f32 %v5101, %v4768
        %v5146 = vmul.f32 %v5102, %v4768
        %v5147 = vmul.f32 %v5103, %v4768
        %v5148 = vmul.f32 %v5104, %v4768
        %v5149 = vmul.f32 %v5105, %v4768
        %v5150 = vmul.f32 %v5106, %v4768
        %v5151 = vadd.f32 %v5075, %v5143
        %v5152 = vadd.f32 %v5076, %v5144
        %v5153 = vadd.f32 %v5077, %v5145
        %v5154 = vadd.f32 %v5078, %v5146
        %v5155 = vadd.f32 %v5079, %v5147
        %v5156 = vadd.f32 %v5080, %v5148
        %v5157 = vadd.f32 %v5081, %v5149
        %v5158 = vadd.f32 %v5082, %v5150
        %v5159 = vmul.f32 %v5099, %v4724
        %v5160 = vmul.f32 %v5100, %v4724
        %v5161 = vmul.f32 %v5101, %v4724
        %v5162 = vmul.f32 %v5102, %v4724
        %v5163 = vmul.f32 %v5103, %v4724
        %v5164 = vmul.f32 %v5104, %v4724
        %v5165 = vmul.f32 %v5105, %v4724
        %v5166 = vmul.f32 %v5106, %v4724
        %v5167 = vadd.f32 %v5091, %v5159
        %v5168 = vadd.f32 %v5092, %v5160
        %v5169 = vadd.f32 %v5093, %v5161
        %v5170 = vadd.f32 %v5094, %v5162
        %v5171 = vadd.f32 %v5095, %v5163
        %v5172 = vadd.f32 %v5096, %v5164
        %v5173 = vadd.f32 %v5097, %v5165
        %v5174 = vadd.f32 %v5098, %v5166
        %v5175 = vld [vmem:[%s4870 + $0x9] sm:$0xff]
        %v5176 = vld [vmem:[%s4870 + $0x21] sm:$0xff]
        %v5177 = vld [vmem:[%s4870 + $0x39] sm:$0xff]
        %v5178 = vld [vmem:[%s4870 + $0x51] sm:$0xff]
        %v5179 = vld [vmem:[%s4870 + $0x69] sm:$0xff]
        %v5180 = vld [vmem:[%s4870 + $0x81] sm:$0xff]
        %v5181 = vld [vmem:[%s4870 + $0x99] sm:$0xff]
        %v5182 = vld [vmem:[%s4870 + $0xb1] sm:$0xff]
        %v5183 = vmul.f32 %v5175, %v5110
        %v5184 = vmul.f32 %v5176, %v5110
        %v5185 = vmul.f32 %v5177, %v5110
        %v5186 = vmul.f32 %v5178, %v5110
        %v5187 = vmul.f32 %v5179, %v5110
        %v5188 = vmul.f32 %v5180, %v5110
        %v5189 = vmul.f32 %v5181, %v5110
        %v5190 = vmul.f32 %v5182, %v5110
        %v5191 = vadd.f32 %v5135, %v5183
        %v5192 = vadd.f32 %v5136, %v5184
        %v5193 = vadd.f32 %v5137, %v5185
        %v5194 = vadd.f32 %v5138, %v5186
        %v5195 = vadd.f32 %v5139, %v5187
        %v5196 = vadd.f32 %v5140, %v5188
        %v5197 = vadd.f32 %v5141, %v5189
        %v5198 = vadd.f32 %v5142, %v5190
        %v5199 = vmul.f32 %v5175, %v4768
        %v5200 = vmul.f32 %v5176, %v4768
        %v5201 = vmul.f32 %v5177, %v4768
        %v5202 = vmul.f32 %v5178, %v4768
        %v5203 = vmul.f32 %v5179, %v4768
        %v5204 = vmul.f32 %v5180, %v4768
        %v5205 = vmul.f32 %v5181, %v4768
        %v5206 = vmul.f32 %v5182, %v4768
        %v5207 = vadd.f32 %v5167, %v5199
        %v5208 = vadd.f32 %v5168, %v5200
        %v5209 = vadd.f32 %v5169, %v5201
        %v5210 = vadd.f32 %v5170, %v5202
        %v5211 = vadd.f32 %v5171, %v5203
        %v5212 = vadd.f32 %v5172, %v5204
        %v5213 = vadd.f32 %v5173, %v5205
        %v5214 = vadd.f32 %v5174, %v5206
        %v5215 = vld [vmem:[%s770 + $0x7] sm:$0xff]
        %v5216 = vld [vmem:[%s770 + $0x1f] sm:$0xff]
        %v5217 = vld [vmem:[%s770 + $0x37] sm:$0xff]
        %v5218 = vld [vmem:[%s770 + $0x4f] sm:$0xff]
        %v5219 = vld [vmem:[%s770 + $0x67] sm:$0xff]
        %v5220 = vld [vmem:[%s770 + $0x7f] sm:$0xff]
        %v5221 = vld [vmem:[%s770 + $0x97] sm:$0xff]
        %v5222 = vld [vmem:[%s770 + $0xaf] sm:$0xff]
        %v5223 = vlaneseq
        %v5224 = vshrl.u32 %v5223, 7
        %v5225 = vsub.s32 0, %v5224
        %v5226 = vrot.slane %v4592, %v5225
        %v5227 = vmul.f32 %v5215, %v5226
        %v5228 = vmul.f32 %v5216, %v5226
        %v5229 = vmul.f32 %v5217, %v5226
        %v5230 = vmul.f32 %v5218, %v5226
        %v5231 = vmul.f32 %v5219, %v5226
        %v5232 = vmul.f32 %v5220, %v5226
        %v5233 = vmul.f32 %v5221, %v5226
        %v5234 = vmul.f32 %v5222, %v5226
        %v5235 = vadd.f32 %v5119, %v5227
        %v5236 = vadd.f32 %v5120, %v5228
        %v5237 = vadd.f32 %v5121, %v5229
        %v5238 = vadd.f32 %v5122, %v5230
        %v5239 = vadd.f32 %v5123, %v5231
        %v5240 = vadd.f32 %v5124, %v5232
        %v5241 = vadd.f32 %v5125, %v5233
        %v5242 = vadd.f32 %v5126, %v5234
        %v5243 = vmul.f32 %v5215, %v4837
        %v5244 = vmul.f32 %v5216, %v4837
        %v5245 = vmul.f32 %v5217, %v4837
        %v5246 = vmul.f32 %v5218, %v4837
        %v5247 = vmul.f32 %v5219, %v4837
        %v5248 = vmul.f32 %v5220, %v4837
        %v5249 = vmul.f32 %v5221, %v4837
        %v5250 = vmul.f32 %v5222, %v4837
        %v5251 = vadd.f32 %v5151, %v5243
        %v5252 = vadd.f32 %v5152, %v5244
        %v5253 = vadd.f32 %v5153, %v5245
        %v5254 = vadd.f32 %v5154, %v5246
        %v5255 = vadd.f32 %v5155, %v5247
        %v5256 = vadd.f32 %v5156, %v5248
        %v5257 = vadd.f32 %v5157, %v5249
        %v5258 = vadd.f32 %v5158, %v5250
        %v5259 = vld [vmem:[%s787 + $0x7] sm:$0xff]
        %v5260 = vld [vmem:[%s787 + $0x1f] sm:$0xff]
        %v5261 = vld [vmem:[%s787 + $0x37] sm:$0xff]
        %v5262 = vld [vmem:[%s787 + $0x4f] sm:$0xff]
        %v5263 = vld [vmem:[%s787 + $0x67] sm:$0xff]
        %v5264 = vld [vmem:[%s787 + $0x7f] sm:$0xff]
        %v5265 = vld [vmem:[%s787 + $0x97] sm:$0xff]
        %v5266 = vld [vmem:[%s787 + $0xaf] sm:$0xff]
        %v5267 = vlaneseq
        %v5268 = vshrl.u32 %v5267, 7
        %v5269 = vsub.s32 1, %v5268
        %v5270 = vrot.slane %v4592, %v5269
        %v5271 = vmul.f32 %v5259, %v5270
        %v5272 = vmul.f32 %v5260, %v5270
        %v5273 = vmul.f32 %v5261, %v5270
        %v5274 = vmul.f32 %v5262, %v5270
        %v5275 = vmul.f32 %v5263, %v5270
        %v5276 = vmul.f32 %v5264, %v5270
        %v5277 = vmul.f32 %v5265, %v5270
        %v5278 = vmul.f32 %v5266, %v5270
        %v5279 = vadd.f32 %v5235, %v5271
        %v5280 = vadd.f32 %v5236, %v5272
        %v5281 = vadd.f32 %v5237, %v5273
        %v5282 = vadd.f32 %v5238, %v5274
        %v5283 = vadd.f32 %v5239, %v5275
        %v5284 = vadd.f32 %v5240, %v5276
        %v5285 = vadd.f32 %v5241, %v5277
        %v5286 = vadd.f32 %v5242, %v5278
        %v5287 = vmul.f32 %v5259, %v5226
        %v5288 = vmul.f32 %v5260, %v5226
        %v5289 = vmul.f32 %v5261, %v5226
        %v5290 = vmul.f32 %v5262, %v5226
        %v5291 = vmul.f32 %v5263, %v5226
        %v5292 = vmul.f32 %v5264, %v5226
        %v5293 = vmul.f32 %v5265, %v5226
        %v5294 = vmul.f32 %v5266, %v5226
        %v5295 = vadd.f32 %v5191, %v5287
        %v5296 = vadd.f32 %v5192, %v5288
        %v5297 = vadd.f32 %v5193, %v5289
        %v5298 = vadd.f32 %v5194, %v5290
        %v5299 = vadd.f32 %v5195, %v5291
        %v5300 = vadd.f32 %v5196, %v5292
        %v5301 = vadd.f32 %v5197, %v5293
        %v5302 = vadd.f32 %v5198, %v5294
        %v5303 = vmul.f32 %v5259, %v4882
        %v5304 = vmul.f32 %v5260, %v4882
        %v5305 = vmul.f32 %v5261, %v4882
        %v5306 = vmul.f32 %v5262, %v4882
        %v5307 = vmul.f32 %v5263, %v4882
        %v5308 = vmul.f32 %v5264, %v4882
        %v5309 = vmul.f32 %v5265, %v4882
        %v5310 = vmul.f32 %v5266, %v4882
        %v5311 = vadd.f32 %v5251, %v5303
        %v5312 = vadd.f32 %v5252, %v5304
        %v5313 = vadd.f32 %v5253, %v5305
        %v5314 = vadd.f32 %v5254, %v5306
        %v5315 = vadd.f32 %v5255, %v5307
        %v5316 = vadd.f32 %v5256, %v5308
        %v5317 = vadd.f32 %v5257, %v5309
        %v5318 = vadd.f32 %v5258, %v5310
        %v5319 = vmul.f32 %v5259, %v4837
        %v5320 = vmul.f32 %v5260, %v4837
        %v5321 = vmul.f32 %v5261, %v4837
        %v5322 = vmul.f32 %v5262, %v4837
        %v5323 = vmul.f32 %v5263, %v4837
        %v5324 = vmul.f32 %v5264, %v4837
        %v5325 = vmul.f32 %v5265, %v4837
        %v5326 = vmul.f32 %v5266, %v4837
        %v5327 = vadd.f32 %v5207, %v5319
        %v5328 = vadd.f32 %v5208, %v5320
        %v5329 = vadd.f32 %v5209, %v5321
        %v5330 = vadd.f32 %v5210, %v5322
        %v5331 = vadd.f32 %v5211, %v5323
        %v5332 = vadd.f32 %v5212, %v5324
        %v5333 = vadd.f32 %v5213, %v5325
        %v5334 = vadd.f32 %v5214, %v5326
        %v5335 = vld [vmem:[%s770 + $0x8] sm:$0xff]
        %v5336 = vld [vmem:[%s770 + $0x20] sm:$0xff]
        %v5337 = vld [vmem:[%s770 + $0x38] sm:$0xff]
        %v5338 = vld [vmem:[%s770 + $0x50] sm:$0xff]
        %v5339 = vld [vmem:[%s770 + $0x68] sm:$0xff]
        %v5340 = vld [vmem:[%s770 + $0x80] sm:$0xff]
        %v5341 = vld [vmem:[%s770 + $0x98] sm:$0xff]
        %v5342 = vld [vmem:[%s770 + $0xb0] sm:$0xff]
        %v5343 = vlaneseq
        %v5344 = vshrl.u32 %v5343, 7
        %v5345 = vsub.s32 2, %v5344
        %v5346 = vrot.slane %v4592, %v5345
        %v5347 = vmul.f32 %v5335, %v5346
        %v5348 = vmul.f32 %v5336, %v5346
        %v5349 = vmul.f32 %v5337, %v5346
        %v5350 = vmul.f32 %v5338, %v5346
        %v5351 = vmul.f32 %v5339, %v5346
        %v5352 = vmul.f32 %v5340, %v5346
        %v5353 = vmul.f32 %v5341, %v5346
        %v5354 = vmul.f32 %v5342, %v5346
        %v5355 = vadd.f32 %v5279, %v5347
        %v5356 = vadd.f32 %v5280, %v5348
        %v5357 = vadd.f32 %v5281, %v5349
        %v5358 = vadd.f32 %v5282, %v5350
        %v5359 = vadd.f32 %v5283, %v5351
        %v5360 = vadd.f32 %v5284, %v5352
        %v5361 = vadd.f32 %v5285, %v5353
        %v5362 = vadd.f32 %v5286, %v5354
        %v5363 = vmul.f32 %v5335, %v5270
        %v5364 = vmul.f32 %v5336, %v5270
        %v5365 = vmul.f32 %v5337, %v5270
        %v5366 = vmul.f32 %v5338, %v5270
        %v5367 = vmul.f32 %v5339, %v5270
        %v5368 = vmul.f32 %v5340, %v5270
        %v5369 = vmul.f32 %v5341, %v5270
        %v5370 = vmul.f32 %v5342, %v5270
        %v5371 = vadd.f32 %v5295, %v5363
        %v5372 = vadd.f32 %v5296, %v5364
        %v5373 = vadd.f32 %v5297, %v5365
        %v5374 = vadd.f32 %v5298, %v5366
        %v5375 = vadd.f32 %v5299, %v5367
        %v5376 = vadd.f32 %v5300, %v5368
        %v5377 = vadd.f32 %v5301, %v5369
        %v5378 = vadd.f32 %v5302, %v5370
        %v5379 = vmul.f32 %v5335, %v4958
        %v5380 = vmul.f32 %v5336, %v4958
        %v5381 = vmul.f32 %v5337, %v4958
        %v5382 = vmul.f32 %v5338, %v4958
        %v5383 = vmul.f32 %v5339, %v4958
        %v5384 = vmul.f32 %v5340, %v4958
        %v5385 = vmul.f32 %v5341, %v4958
        %v5386 = vmul.f32 %v5342, %v4958
        %v5387 = vadd.f32 %v5311, %v5379
        %v5388 = vadd.f32 %v5312, %v5380
        %v5389 = vadd.f32 %v5313, %v5381
        %v5390 = vadd.f32 %v5314, %v5382
        %v5391 = vadd.f32 %v5315, %v5383
        %v5392 = vadd.f32 %v5316, %v5384
        %v5393 = vadd.f32 %v5317, %v5385
        %v5394 = vadd.f32 %v5318, %v5386
        %v5395 = vmul.f32 %v5335, %v4882
        %v5396 = vmul.f32 %v5336, %v4882
        %v5397 = vmul.f32 %v5337, %v4882
        %v5398 = vmul.f32 %v5338, %v4882
        %v5399 = vmul.f32 %v5339, %v4882
        %v5400 = vmul.f32 %v5340, %v4882
        %v5401 = vmul.f32 %v5341, %v4882
        %v5402 = vmul.f32 %v5342, %v4882
        %v5403 = vadd.f32 %v5327, %v5395
        %v5404 = vadd.f32 %v5328, %v5396
        %v5405 = vadd.f32 %v5329, %v5397
        %v5406 = vadd.f32 %v5330, %v5398
        %v5407 = vadd.f32 %v5331, %v5399
        %v5408 = vadd.f32 %v5332, %v5400
        %v5409 = vadd.f32 %v5333, %v5401
        %v5410 = vadd.f32 %v5334, %v5402
        %v5411 = vld [vmem:[%s787 + $0x8] sm:$0xff]
        %v5412 = vld [vmem:[%s787 + $0x20] sm:$0xff]
        %v5413 = vld [vmem:[%s787 + $0x38] sm:$0xff]
        %v5414 = vld [vmem:[%s787 + $0x50] sm:$0xff]
        %v5415 = vld [vmem:[%s787 + $0x68] sm:$0xff]
        %v5416 = vld [vmem:[%s787 + $0x80] sm:$0xff]
        %v5417 = vld [vmem:[%s787 + $0x98] sm:$0xff]
        %v5418 = vld [vmem:[%s787 + $0xb0] sm:$0xff]
        %v5419 = vlaneseq
        %v5420 = vshrl.u32 %v5419, 7
        %v5421 = vsub.s32 3, %v5420
        %v5422 = vrot.slane %v4592, %v5421
        %v5423 = vmul.f32 %v5411, %v5422
        %v5424 = vmul.f32 %v5412, %v5422
        %v5425 = vmul.f32 %v5413, %v5422
        %v5426 = vmul.f32 %v5414, %v5422
        %v5427 = vmul.f32 %v5415, %v5422
        %v5428 = vmul.f32 %v5416, %v5422
        %v5429 = vmul.f32 %v5417, %v5422
        %v5430 = vmul.f32 %v5418, %v5422
        %v5431 = vadd.f32 %v5355, %v5423
        %v5432 = vadd.f32 %v5356, %v5424
        %v5433 = vadd.f32 %v5357, %v5425
        %v5434 = vadd.f32 %v5358, %v5426
        %v5435 = vadd.f32 %v5359, %v5427
        %v5436 = vadd.f32 %v5360, %v5428
        %v5437 = vadd.f32 %v5361, %v5429
        %v5438 = vadd.f32 %v5362, %v5430
        %v5439 = vmul.f32 %v5411, %v5346
        %v5440 = vmul.f32 %v5412, %v5346
        %v5441 = vmul.f32 %v5413, %v5346
        %v5442 = vmul.f32 %v5414, %v5346
        %v5443 = vmul.f32 %v5415, %v5346
        %v5444 = vmul.f32 %v5416, %v5346
        %v5445 = vmul.f32 %v5417, %v5346
        %v5446 = vmul.f32 %v5418, %v5346
        %v5447 = vadd.f32 %v5371, %v5439
        %v5448 = vadd.f32 %v5372, %v5440
        %v5449 = vadd.f32 %v5373, %v5441
        %v5450 = vadd.f32 %v5374, %v5442
        %v5451 = vadd.f32 %v5375, %v5443
        %v5452 = vadd.f32 %v5376, %v5444
        %v5453 = vadd.f32 %v5377, %v5445
        %v5454 = vadd.f32 %v5378, %v5446
        %v5455 = vmul.f32 %v5411, %v5034
        %v5456 = vmul.f32 %v5412, %v5034
        %v5457 = vmul.f32 %v5413, %v5034
        %v5458 = vmul.f32 %v5414, %v5034
        %v5459 = vmul.f32 %v5415, %v5034
        %v5460 = vmul.f32 %v5416, %v5034
        %v5461 = vmul.f32 %v5417, %v5034
        %v5462 = vmul.f32 %v5418, %v5034
        %v5463 = vadd.f32 %v5387, %v5455
        %v5464 = vadd.f32 %v5388, %v5456
        %v5465 = vadd.f32 %v5389, %v5457
        %v5466 = vadd.f32 %v5390, %v5458
        %v5467 = vadd.f32 %v5391, %v5459
        %v5468 = vadd.f32 %v5392, %v5460
        %v5469 = vadd.f32 %v5393, %v5461
        %v5470 = vadd.f32 %v5394, %v5462
        %v5471 = vmul.f32 %v5411, %v4958
        %v5472 = vmul.f32 %v5412, %v4958
        %v5473 = vmul.f32 %v5413, %v4958
        %v5474 = vmul.f32 %v5414, %v4958
        %v5475 = vmul.f32 %v5415, %v4958
        %v5476 = vmul.f32 %v5416, %v4958
        %v5477 = vmul.f32 %v5417, %v4958
        %v5478 = vmul.f32 %v5418, %v4958
        %v5479 = vadd.f32 %v5403, %v5471
        %v5480 = vadd.f32 %v5404, %v5472
        %v5481 = vadd.f32 %v5405, %v5473
        %v5482 = vadd.f32 %v5406, %v5474
        %v5483 = vadd.f32 %v5407, %v5475
        %v5484 = vadd.f32 %v5408, %v5476
        %v5485 = vadd.f32 %v5409, %v5477
        %v5486 = vadd.f32 %v5410, %v5478
        %v5487 = vld [vmem:[%s770 + $0x9] sm:$0xff]
        %v5488 = vld [vmem:[%s770 + $0x21] sm:$0xff]
        %v5489 = vld [vmem:[%s770 + $0x39] sm:$0xff]
        %v5490 = vld [vmem:[%s770 + $0x51] sm:$0xff]
        %v5491 = vld [vmem:[%s770 + $0x69] sm:$0xff]
        %v5492 = vld [vmem:[%s770 + $0x81] sm:$0xff]
        %v5493 = vld [vmem:[%s770 + $0x99] sm:$0xff]
        %v5494 = vld [vmem:[%s770 + $0xb1] sm:$0xff]
        %v5495 = vlaneseq
        %v5496 = vshrl.u32 %v5495, 7
        %v5497 = vsub.s32 4, %v5496
        %v5498 = vrot.slane %v4592, %v5497
        %v5499 = vmul.f32 %v5487, %v5498
        %v5500 = vmul.f32 %v5488, %v5498
        %v5501 = vmul.f32 %v5489, %v5498
        %v5502 = vmul.f32 %v5490, %v5498
        %v5503 = vmul.f32 %v5491, %v5498
        %v5504 = vmul.f32 %v5492, %v5498
        %v5505 = vmul.f32 %v5493, %v5498
        %v5506 = vmul.f32 %v5494, %v5498
        %v5507 = vadd.f32 %v5431, %v5499
        %v5508 = vadd.f32 %v5432, %v5500
        %v5509 = vadd.f32 %v5433, %v5501
        %v5510 = vadd.f32 %v5434, %v5502
        %v5511 = vadd.f32 %v5435, %v5503
        %v5512 = vadd.f32 %v5436, %v5504
        %v5513 = vadd.f32 %v5437, %v5505
        %v5514 = vadd.f32 %v5438, %v5506
        %v5515 = vmul.f32 %v5487, %v5422
        %v5516 = vmul.f32 %v5488, %v5422
        %v5517 = vmul.f32 %v5489, %v5422
        %v5518 = vmul.f32 %v5490, %v5422
        %v5519 = vmul.f32 %v5491, %v5422
        %v5520 = vmul.f32 %v5492, %v5422
        %v5521 = vmul.f32 %v5493, %v5422
        %v5522 = vmul.f32 %v5494, %v5422
        %v5523 = vadd.f32 %v5447, %v5515
        %v5524 = vadd.f32 %v5448, %v5516
        %v5525 = vadd.f32 %v5449, %v5517
        %v5526 = vadd.f32 %v5450, %v5518
        %v5527 = vadd.f32 %v5451, %v5519
        %v5528 = vadd.f32 %v5452, %v5520
        %v5529 = vadd.f32 %v5453, %v5521
        %v5530 = vadd.f32 %v5454, %v5522
        %v5531 = vmul.f32 %v5487, %v5110
        %v5532 = vmul.f32 %v5488, %v5110
        %v5533 = vmul.f32 %v5489, %v5110
        %v5534 = vmul.f32 %v5490, %v5110
        %v5535 = vmul.f32 %v5491, %v5110
        %v5536 = vmul.f32 %v5492, %v5110
        %v5537 = vmul.f32 %v5493, %v5110
        %v5538 = vmul.f32 %v5494, %v5110
        %v5539 = vadd.f32 %v5463, %v5531
        %v5540 = vadd.f32 %v5464, %v5532
        %v5541 = vadd.f32 %v5465, %v5533
        %v5542 = vadd.f32 %v5466, %v5534
        %v5543 = vadd.f32 %v5467, %v5535
        %v5544 = vadd.f32 %v5468, %v5536
        %v5545 = vadd.f32 %v5469, %v5537
        %v5546 = vadd.f32 %v5470, %v5538
        %v5547 = vmul.f32 %v5487, %v5034
        %v5548 = vmul.f32 %v5488, %v5034
        %v5549 = vmul.f32 %v5489, %v5034
        %v5550 = vmul.f32 %v5490, %v5034
        %v5551 = vmul.f32 %v5491, %v5034
        %v5552 = vmul.f32 %v5492, %v5034
        %v5553 = vmul.f32 %v5493, %v5034
        %v5554 = vmul.f32 %v5494, %v5034
        %v5555 = vadd.f32 %v5479, %v5547
        %v5556 = vadd.f32 %v5480, %v5548
        %v5557 = vadd.f32 %v5481, %v5549
        %v5558 = vadd.f32 %v5482, %v5550
        %v5559 = vadd.f32 %v5483, %v5551
        %v5560 = vadd.f32 %v5484, %v5552
        %v5561 = vadd.f32 %v5485, %v5553
        %v5562 = vadd.f32 %v5486, %v5554
        %v5563 = vld [vmem:[%s787 + $0x9] sm:$0xff]
        %v5564 = vld [vmem:[%s787 + $0x21] sm:$0xff]
        %v5565 = vld [vmem:[%s787 + $0x39] sm:$0xff]
        %v5566 = vld [vmem:[%s787 + $0x51] sm:$0xff]
        %v5567 = vld [vmem:[%s787 + $0x69] sm:$0xff]
        %v5568 = vld [vmem:[%s787 + $0x81] sm:$0xff]
        %v5569 = vld [vmem:[%s787 + $0x99] sm:$0xff]
        %v5570 = vld [vmem:[%s787 + $0xb1] sm:$0xff]
        %v5571 = vmul.f32 %v5563, %v5498
        %v5572 = vmul.f32 %v5564, %v5498
        %v5573 = vmul.f32 %v5565, %v5498
        %v5574 = vmul.f32 %v5566, %v5498
        %v5575 = vmul.f32 %v5567, %v5498
        %v5576 = vmul.f32 %v5568, %v5498
        %v5577 = vmul.f32 %v5569, %v5498
        %v5578 = vmul.f32 %v5570, %v5498
        %v5579 = vadd.f32 %v5523, %v5571
        %v5580 = vadd.f32 %v5524, %v5572
        %v5581 = vadd.f32 %v5525, %v5573
        %v5582 = vadd.f32 %v5526, %v5574
        %v5583 = vadd.f32 %v5527, %v5575
        %v5584 = vadd.f32 %v5528, %v5576
        %v5585 = vadd.f32 %v5529, %v5577
        %v5586 = vadd.f32 %v5530, %v5578
        %v5587 = vmul.f32 %v5563, %v5110
        %v5588 = vmul.f32 %v5564, %v5110
        %v5589 = vmul.f32 %v5565, %v5110
        %v5590 = vmul.f32 %v5566, %v5110
        %v5591 = vmul.f32 %v5567, %v5110
        %v5592 = vmul.f32 %v5568, %v5110
        %v5593 = vmul.f32 %v5569, %v5110
        %v5594 = vmul.f32 %v5570, %v5110
        %v5595 = vadd.f32 %v5555, %v5587
        %v5596 = vadd.f32 %v5556, %v5588
        %v5597 = vadd.f32 %v5557, %v5589
        %v5598 = vadd.f32 %v5558, %v5590
        %v5599 = vadd.f32 %v5559, %v5591
        %v5600 = vadd.f32 %v5560, %v5592
        %v5601 = vadd.f32 %v5561, %v5593
        %v5602 = vadd.f32 %v5562, %v5594
        %v5603 = vld [vmem:[%s804 + $0x7] sm:$0xff]
        %v5604 = vld [vmem:[%s804 + $0x1f] sm:$0xff]
        %v5605 = vld [vmem:[%s804 + $0x37] sm:$0xff]
        %v5606 = vld [vmem:[%s804 + $0x4f] sm:$0xff]
        %v5607 = vld [vmem:[%s804 + $0x67] sm:$0xff]
        %v5608 = vld [vmem:[%s804 + $0x7f] sm:$0xff]
        %v5609 = vld [vmem:[%s804 + $0x97] sm:$0xff]
        %v5610 = vld [vmem:[%s804 + $0xaf] sm:$0xff]
        %v5611 = vlaneseq
        %v5612 = vshrl.u32 %v5611, 7
        %v5613 = vsub.s32 0, %v5612
        %v5614 = vrot.slane %v4593, %v5613
        %v5615 = vmul.f32 %v5603, %v5614
        %v5616 = vmul.f32 %v5604, %v5614
        %v5617 = vmul.f32 %v5605, %v5614
        %v5618 = vmul.f32 %v5606, %v5614
        %v5619 = vmul.f32 %v5607, %v5614
        %v5620 = vmul.f32 %v5608, %v5614
        %v5621 = vmul.f32 %v5609, %v5614
        %v5622 = vmul.f32 %v5610, %v5614
        %v5623 = vadd.f32 %v5507, %v5615
        %v5624 = vadd.f32 %v5508, %v5616
        %v5625 = vadd.f32 %v5509, %v5617
        %v5626 = vadd.f32 %v5510, %v5618
        %v5627 = vadd.f32 %v5511, %v5619
        %v5628 = vadd.f32 %v5512, %v5620
        %v5629 = vadd.f32 %v5513, %v5621
        %v5630 = vadd.f32 %v5514, %v5622
        %v5631 = vmul.f32 %v5603, %v5226
        %v5632 = vmul.f32 %v5604, %v5226
        %v5633 = vmul.f32 %v5605, %v5226
        %v5634 = vmul.f32 %v5606, %v5226
        %v5635 = vmul.f32 %v5607, %v5226
        %v5636 = vmul.f32 %v5608, %v5226
        %v5637 = vmul.f32 %v5609, %v5226
        %v5638 = vmul.f32 %v5610, %v5226
        %v5639 = vadd.f32 %v5539, %v5631
        %v5640 = vadd.f32 %v5540, %v5632
        %v5641 = vadd.f32 %v5541, %v5633
        %v5642 = vadd.f32 %v5542, %v5634
        %v5643 = vadd.f32 %v5543, %v5635
        %v5644 = vadd.f32 %v5544, %v5636
        %v5645 = vadd.f32 %v5545, %v5637
        %v5646 = vadd.f32 %v5546, %v5638
        %v5647 = vld [vmem:[%s821 + $0x7] sm:$0xff]
        %v5648 = vld [vmem:[%s821 + $0x1f] sm:$0xff]
        %v5649 = vld [vmem:[%s821 + $0x37] sm:$0xff]
        %v5650 = vld [vmem:[%s821 + $0x4f] sm:$0xff]
        %v5651 = vld [vmem:[%s821 + $0x67] sm:$0xff]
        %v5652 = vld [vmem:[%s821 + $0x7f] sm:$0xff]
        %v5653 = vld [vmem:[%s821 + $0x97] sm:$0xff]
        %v5654 = vld [vmem:[%s821 + $0xaf] sm:$0xff]
        %v5655 = vlaneseq
        %v5656 = vshrl.u32 %v5655, 7
        %v5657 = vsub.s32 1, %v5656
        %v5658 = vrot.slane %v4593, %v5657
        %v5659 = vmul.f32 %v5647, %v5658
        %v5660 = vmul.f32 %v5648, %v5658
        %v5661 = vmul.f32 %v5649, %v5658
        %v5662 = vmul.f32 %v5650, %v5658
        %v5663 = vmul.f32 %v5651, %v5658
        %v5664 = vmul.f32 %v5652, %v5658
        %v5665 = vmul.f32 %v5653, %v5658
        %v5666 = vmul.f32 %v5654, %v5658
        %v5667 = vadd.f32 %v5623, %v5659
        %v5668 = vadd.f32 %v5624, %v5660
        %v5669 = vadd.f32 %v5625, %v5661
        %v5670 = vadd.f32 %v5626, %v5662
        %v5671 = vadd.f32 %v5627, %v5663
        %v5672 = vadd.f32 %v5628, %v5664
        %v5673 = vadd.f32 %v5629, %v5665
        %v5674 = vadd.f32 %v5630, %v5666
        %v5675 = vmul.f32 %v5647, %v5614
        %v5676 = vmul.f32 %v5648, %v5614
        %v5677 = vmul.f32 %v5649, %v5614
        %v5678 = vmul.f32 %v5650, %v5614
        %v5679 = vmul.f32 %v5651, %v5614
        %v5680 = vmul.f32 %v5652, %v5614
        %v5681 = vmul.f32 %v5653, %v5614
        %v5682 = vmul.f32 %v5654, %v5614
        %v5683 = vadd.f32 %v5579, %v5675
        %v5684 = vadd.f32 %v5580, %v5676
        %v5685 = vadd.f32 %v5581, %v5677
        %v5686 = vadd.f32 %v5582, %v5678
        %v5687 = vadd.f32 %v5583, %v5679
        %v5688 = vadd.f32 %v5584, %v5680
        %v5689 = vadd.f32 %v5585, %v5681
        %v5690 = vadd.f32 %v5586, %v5682
        %v5691 = vmul.f32 %v5647, %v5270
        %v5692 = vmul.f32 %v5648, %v5270
        %v5693 = vmul.f32 %v5649, %v5270
        %v5694 = vmul.f32 %v5650, %v5270
        %v5695 = vmul.f32 %v5651, %v5270
        %v5696 = vmul.f32 %v5652, %v5270
        %v5697 = vmul.f32 %v5653, %v5270
        %v5698 = vmul.f32 %v5654, %v5270
        %v5699 = vadd.f32 %v5639, %v5691
        %v5700 = vadd.f32 %v5640, %v5692
        %v5701 = vadd.f32 %v5641, %v5693
        %v5702 = vadd.f32 %v5642, %v5694
        %v5703 = vadd.f32 %v5643, %v5695
        %v5704 = vadd.f32 %v5644, %v5696
        %v5705 = vadd.f32 %v5645, %v5697
        %v5706 = vadd.f32 %v5646, %v5698
        %v5707 = vmul.f32 %v5647, %v5226
        %v5708 = vmul.f32 %v5648, %v5226
        %v5709 = vmul.f32 %v5649, %v5226
        %v5710 = vmul.f32 %v5650, %v5226
        %v5711 = vmul.f32 %v5651, %v5226
        %v5712 = vmul.f32 %v5652, %v5226
        %v5713 = vmul.f32 %v5653, %v5226
        %v5714 = vmul.f32 %v5654, %v5226
        %v5715 = vadd.f32 %v5595, %v5707
        %v5716 = vadd.f32 %v5596, %v5708
        %v5717 = vadd.f32 %v5597, %v5709
        %v5718 = vadd.f32 %v5598, %v5710
        %v5719 = vadd.f32 %v5599, %v5711
        %v5720 = vadd.f32 %v5600, %v5712
        %v5721 = vadd.f32 %v5601, %v5713
        %v5722 = vadd.f32 %v5602, %v5714
        %v5723 = vld [vmem:[%s804 + $0x8] sm:$0xff]
        %v5724 = vld [vmem:[%s804 + $0x20] sm:$0xff]
        %v5725 = vld [vmem:[%s804 + $0x38] sm:$0xff]
        %v5726 = vld [vmem:[%s804 + $0x50] sm:$0xff]
        %v5727 = vld [vmem:[%s804 + $0x68] sm:$0xff]
        %v5728 = vld [vmem:[%s804 + $0x80] sm:$0xff]
        %v5729 = vld [vmem:[%s804 + $0x98] sm:$0xff]
        %v5730 = vld [vmem:[%s804 + $0xb0] sm:$0xff]
        %v5731 = vlaneseq
        %v5732 = vshrl.u32 %v5731, 7
        %v5733 = vsub.s32 2, %v5732
        %v5734 = vrot.slane %v4593, %v5733
        %v5735 = vmul.f32 %v5723, %v5734
        %v5736 = vmul.f32 %v5724, %v5734
        %v5737 = vmul.f32 %v5725, %v5734
        %v5738 = vmul.f32 %v5726, %v5734
        %v5739 = vmul.f32 %v5727, %v5734
        %v5740 = vmul.f32 %v5728, %v5734
        %v5741 = vmul.f32 %v5729, %v5734
        %v5742 = vmul.f32 %v5730, %v5734
        %v5743 = vadd.f32 %v5667, %v5735
        %v5744 = vadd.f32 %v5668, %v5736
        %v5745 = vadd.f32 %v5669, %v5737
        %v5746 = vadd.f32 %v5670, %v5738
        %v5747 = vadd.f32 %v5671, %v5739
        %v5748 = vadd.f32 %v5672, %v5740
        %v5749 = vadd.f32 %v5673, %v5741
        %v5750 = vadd.f32 %v5674, %v5742
        %v5751 = vmul.f32 %v5723, %v5658
        %v5752 = vmul.f32 %v5724, %v5658
        %v5753 = vmul.f32 %v5725, %v5658
        %v5754 = vmul.f32 %v5726, %v5658
        %v5755 = vmul.f32 %v5727, %v5658
        %v5756 = vmul.f32 %v5728, %v5658
        %v5757 = vmul.f32 %v5729, %v5658
        %v5758 = vmul.f32 %v5730, %v5658
        %v5759 = vadd.f32 %v5683, %v5751
        %v5760 = vadd.f32 %v5684, %v5752
        %v5761 = vadd.f32 %v5685, %v5753
        %v5762 = vadd.f32 %v5686, %v5754
        %v5763 = vadd.f32 %v5687, %v5755
        %v5764 = vadd.f32 %v5688, %v5756
        %v5765 = vadd.f32 %v5689, %v5757
        %v5766 = vadd.f32 %v5690, %v5758
        %v5767 = vmul.f32 %v5723, %v5346
        %v5768 = vmul.f32 %v5724, %v5346
        %v5769 = vmul.f32 %v5725, %v5346
        %v5770 = vmul.f32 %v5726, %v5346
        %v5771 = vmul.f32 %v5727, %v5346
        %v5772 = vmul.f32 %v5728, %v5346
        %v5773 = vmul.f32 %v5729, %v5346
        %v5774 = vmul.f32 %v5730, %v5346
        %v5775 = vadd.f32 %v5699, %v5767
        %v5776 = vadd.f32 %v5700, %v5768
        %v5777 = vadd.f32 %v5701, %v5769
        %v5778 = vadd.f32 %v5702, %v5770
        %v5779 = vadd.f32 %v5703, %v5771
        %v5780 = vadd.f32 %v5704, %v5772
        %v5781 = vadd.f32 %v5705, %v5773
        %v5782 = vadd.f32 %v5706, %v5774
        %v5783 = vmul.f32 %v5723, %v5270
        %v5784 = vmul.f32 %v5724, %v5270
        %v5785 = vmul.f32 %v5725, %v5270
        %v5786 = vmul.f32 %v5726, %v5270
        %v5787 = vmul.f32 %v5727, %v5270
        %v5788 = vmul.f32 %v5728, %v5270
        %v5789 = vmul.f32 %v5729, %v5270
        %v5790 = vmul.f32 %v5730, %v5270
        %v5791 = vadd.f32 %v5715, %v5783
        %v5792 = vadd.f32 %v5716, %v5784
        %v5793 = vadd.f32 %v5717, %v5785
        %v5794 = vadd.f32 %v5718, %v5786
        %v5795 = vadd.f32 %v5719, %v5787
        %v5796 = vadd.f32 %v5720, %v5788
        %v5797 = vadd.f32 %v5721, %v5789
        %v5798 = vadd.f32 %v5722, %v5790
        %v5799 = vld [vmem:[%s821 + $0x8] sm:$0xff]
        %v5800 = vld [vmem:[%s821 + $0x20] sm:$0xff]
        %v5801 = vld [vmem:[%s821 + $0x38] sm:$0xff]
        %v5802 = vld [vmem:[%s821 + $0x50] sm:$0xff]
        %v5803 = vld [vmem:[%s821 + $0x68] sm:$0xff]
        %v5804 = vld [vmem:[%s821 + $0x80] sm:$0xff]
        %v5805 = vld [vmem:[%s821 + $0x98] sm:$0xff]
        %v5806 = vld [vmem:[%s821 + $0xb0] sm:$0xff]
        %v5807 = vlaneseq
        %v5808 = vshrl.u32 %v5807, 7
        %v5809 = vsub.s32 3, %v5808
        %v5810 = vrot.slane %v4593, %v5809
        %v5811 = vmul.f32 %v5799, %v5810
        %v5812 = vmul.f32 %v5800, %v5810
        %v5813 = vmul.f32 %v5801, %v5810
        %v5814 = vmul.f32 %v5802, %v5810
        %v5815 = vmul.f32 %v5803, %v5810
        %v5816 = vmul.f32 %v5804, %v5810
        %v5817 = vmul.f32 %v5805, %v5810
        %v5818 = vmul.f32 %v5806, %v5810
        %v5819 = vadd.f32 %v5743, %v5811
        %v5820 = vadd.f32 %v5744, %v5812
        %v5821 = vadd.f32 %v5745, %v5813
        %v5822 = vadd.f32 %v5746, %v5814
        %v5823 = vadd.f32 %v5747, %v5815
        %v5824 = vadd.f32 %v5748, %v5816
        %v5825 = vadd.f32 %v5749, %v5817
        %v5826 = vadd.f32 %v5750, %v5818
        %v5827 = vmul.f32 %v5799, %v5734
        %v5828 = vmul.f32 %v5800, %v5734
        %v5829 = vmul.f32 %v5801, %v5734
        %v5830 = vmul.f32 %v5802, %v5734
        %v5831 = vmul.f32 %v5803, %v5734
        %v5832 = vmul.f32 %v5804, %v5734
        %v5833 = vmul.f32 %v5805, %v5734
        %v5834 = vmul.f32 %v5806, %v5734
        %v5835 = vadd.f32 %v5759, %v5827
        %v5836 = vadd.f32 %v5760, %v5828
        %v5837 = vadd.f32 %v5761, %v5829
        %v5838 = vadd.f32 %v5762, %v5830
        %v5839 = vadd.f32 %v5763, %v5831
        %v5840 = vadd.f32 %v5764, %v5832
        %v5841 = vadd.f32 %v5765, %v5833
        %v5842 = vadd.f32 %v5766, %v5834
        %v5843 = vmul.f32 %v5799, %v5422
        %v5844 = vmul.f32 %v5800, %v5422
        %v5845 = vmul.f32 %v5801, %v5422
        %v5846 = vmul.f32 %v5802, %v5422
        %v5847 = vmul.f32 %v5803, %v5422
        %v5848 = vmul.f32 %v5804, %v5422
        %v5849 = vmul.f32 %v5805, %v5422
        %v5850 = vmul.f32 %v5806, %v5422
        %v5851 = vadd.f32 %v5775, %v5843
        %v5852 = vadd.f32 %v5776, %v5844
        %v5853 = vadd.f32 %v5777, %v5845
        %v5854 = vadd.f32 %v5778, %v5846
        %v5855 = vadd.f32 %v5779, %v5847
        %v5856 = vadd.f32 %v5780, %v5848
        %v5857 = vadd.f32 %v5781, %v5849
        %v5858 = vadd.f32 %v5782, %v5850
        %v5859 = vmul.f32 %v5799, %v5346
        %v5860 = vmul.f32 %v5800, %v5346
        %v5861 = vmul.f32 %v5801, %v5346
        %v5862 = vmul.f32 %v5802, %v5346
        %v5863 = vmul.f32 %v5803, %v5346
        %v5864 = vmul.f32 %v5804, %v5346
        %v5865 = vmul.f32 %v5805, %v5346
        %v5866 = vmul.f32 %v5806, %v5346
        %v5867 = vadd.f32 %v5791, %v5859
        %v5868 = vadd.f32 %v5792, %v5860
        %v5869 = vadd.f32 %v5793, %v5861
        %v5870 = vadd.f32 %v5794, %v5862
        %v5871 = vadd.f32 %v5795, %v5863
        %v5872 = vadd.f32 %v5796, %v5864
        %v5873 = vadd.f32 %v5797, %v5865
        %v5874 = vadd.f32 %v5798, %v5866
        %v5875 = vld [vmem:[%s804 + $0x9] sm:$0xff]
        %v5876 = vld [vmem:[%s804 + $0x21] sm:$0xff]
        %v5877 = vld [vmem:[%s804 + $0x39] sm:$0xff]
        %v5878 = vld [vmem:[%s804 + $0x51] sm:$0xff]
        %v5879 = vld [vmem:[%s804 + $0x69] sm:$0xff]
        %v5880 = vld [vmem:[%s804 + $0x81] sm:$0xff]
        %v5881 = vld [vmem:[%s804 + $0x99] sm:$0xff]
        %v5882 = vld [vmem:[%s804 + $0xb1] sm:$0xff]
        %v5883 = vlaneseq
        %v5884 = vshrl.u32 %v5883, 7
        %v5885 = vsub.s32 4, %v5884
        %v5886 = vrot.slane %v4593, %v5885
        %v5887 = vmul.f32 %v5875, %v5886
        %v5888 = vmul.f32 %v5876, %v5886
        %v5889 = vmul.f32 %v5877, %v5886
        %v5890 = vmul.f32 %v5878, %v5886
        %v5891 = vmul.f32 %v5879, %v5886
        %v5892 = vmul.f32 %v5880, %v5886
        %v5893 = vmul.f32 %v5881, %v5886
        %v5894 = vmul.f32 %v5882, %v5886
        %v5895 = vadd.f32 %v5819, %v5887
        %v5896 = vadd.f32 %v5820, %v5888
        %v5897 = vadd.f32 %v5821, %v5889
        %v5898 = vadd.f32 %v5822, %v5890
        %v5899 = vadd.f32 %v5823, %v5891
        %v5900 = vadd.f32 %v5824, %v5892
        %v5901 = vadd.f32 %v5825, %v5893
        %v5902 = vadd.f32 %v5826, %v5894
        %v5903 = vmul.f32 %v5875, %v5810
        %v5904 = vmul.f32 %v5876, %v5810
        %v5905 = vmul.f32 %v5877, %v5810
        %v5906 = vmul.f32 %v5878, %v5810
        %v5907 = vmul.f32 %v5879, %v5810
        %v5908 = vmul.f32 %v5880, %v5810
        %v5909 = vmul.f32 %v5881, %v5810
        %v5910 = vmul.f32 %v5882, %v5810
        %v5911 = vadd.f32 %v5835, %v5903
        %v5912 = vadd.f32 %v5836, %v5904
        %v5913 = vadd.f32 %v5837, %v5905
        %v5914 = vadd.f32 %v5838, %v5906
        %v5915 = vadd.f32 %v5839, %v5907
        %v5916 = vadd.f32 %v5840, %v5908
        %v5917 = vadd.f32 %v5841, %v5909
        %v5918 = vadd.f32 %v5842, %v5910
        %v5919 = vmul.f32 %v5875, %v5498
        %v5920 = vmul.f32 %v5876, %v5498
        %v5921 = vmul.f32 %v5877, %v5498
        %v5922 = vmul.f32 %v5878, %v5498
        %v5923 = vmul.f32 %v5879, %v5498
        %v5924 = vmul.f32 %v5880, %v5498
        %v5925 = vmul.f32 %v5881, %v5498
        %v5926 = vmul.f32 %v5882, %v5498
        %v5927 = vadd.f32 %v5851, %v5919
        %v5928 = vadd.f32 %v5852, %v5920
        %v5929 = vadd.f32 %v5853, %v5921
        %v5930 = vadd.f32 %v5854, %v5922
        %v5931 = vadd.f32 %v5855, %v5923
        %v5932 = vadd.f32 %v5856, %v5924
        %v5933 = vadd.f32 %v5857, %v5925
        %v5934 = vadd.f32 %v5858, %v5926
        %v5935 = vmul.f32 %v5875, %v5422
        %v5936 = vmul.f32 %v5876, %v5422
        %v5937 = vmul.f32 %v5877, %v5422
        %v5938 = vmul.f32 %v5878, %v5422
        %v5939 = vmul.f32 %v5879, %v5422
        %v5940 = vmul.f32 %v5880, %v5422
        %v5941 = vmul.f32 %v5881, %v5422
        %v5942 = vmul.f32 %v5882, %v5422
        %v5943 = vadd.f32 %v5867, %v5935
        %v5944 = vadd.f32 %v5868, %v5936
        %v5945 = vadd.f32 %v5869, %v5937
        %v5946 = vadd.f32 %v5870, %v5938
        %v5947 = vadd.f32 %v5871, %v5939
        %v5948 = vadd.f32 %v5872, %v5940
        %v5949 = vadd.f32 %v5873, %v5941
        %v5950 = vadd.f32 %v5874, %v5942
        %v5951 = vld [vmem:[%s821 + $0x9] sm:$0xff]
        %v5952 = vld [vmem:[%s821 + $0x21] sm:$0xff]
        %v5953 = vld [vmem:[%s821 + $0x39] sm:$0xff]
        %v5954 = vld [vmem:[%s821 + $0x51] sm:$0xff]
        %v5955 = vld [vmem:[%s821 + $0x69] sm:$0xff]
        %v5956 = vld [vmem:[%s821 + $0x81] sm:$0xff]
        %v5957 = vld [vmem:[%s821 + $0x99] sm:$0xff]
        %v5958 = vld [vmem:[%s821 + $0xb1] sm:$0xff]
        %v5959 = vmul.f32 %v5951, %v5886
        %v5960 = vmul.f32 %v5952, %v5886
        %v5961 = vmul.f32 %v5953, %v5886
        %v5962 = vmul.f32 %v5954, %v5886
        %v5963 = vmul.f32 %v5955, %v5886
        %v5964 = vmul.f32 %v5956, %v5886
        %v5965 = vmul.f32 %v5957, %v5886
        %v5966 = vmul.f32 %v5958, %v5886
        %v5967 = vadd.f32 %v5911, %v5959
        %v5968 = vadd.f32 %v5912, %v5960
        %v5969 = vadd.f32 %v5913, %v5961
        %v5970 = vadd.f32 %v5914, %v5962
        %v5971 = vadd.f32 %v5915, %v5963
        %v5972 = vadd.f32 %v5916, %v5964
        %v5973 = vadd.f32 %v5917, %v5965
        %v5974 = vadd.f32 %v5918, %v5966
        %v5975 = vmul.f32 %v5951, %v5498
        %v5976 = vmul.f32 %v5952, %v5498
        %v5977 = vmul.f32 %v5953, %v5498
        %v5978 = vmul.f32 %v5954, %v5498
        %v5979 = vmul.f32 %v5955, %v5498
        %v5980 = vmul.f32 %v5956, %v5498
        %v5981 = vmul.f32 %v5957, %v5498
        %v5982 = vmul.f32 %v5958, %v5498
        %v5983 = vadd.f32 %v5943, %v5975
        %v5984 = vadd.f32 %v5944, %v5976
        %v5985 = vadd.f32 %v5945, %v5977
        %v5986 = vadd.f32 %v5946, %v5978
        %v5987 = vadd.f32 %v5947, %v5979
        %v5988 = vadd.f32 %v5948, %v5980
        %v5989 = vadd.f32 %v5949, %v5981
        %v5990 = vadd.f32 %v5950, %v5982
        %v5991 = vld [vmem:[%s3249 + $0x7] sm:$0xff]
        %v5992 = vld [vmem:[%s3249 + $0x1f] sm:$0xff]
        %v5993 = vld [vmem:[%s3249 + $0x37] sm:$0xff]
        %v5994 = vld [vmem:[%s3249 + $0x4f] sm:$0xff]
        %v5995 = vld [vmem:[%s3249 + $0x67] sm:$0xff]
        %v5996 = vld [vmem:[%s3249 + $0x7f] sm:$0xff]
        %v5997 = vld [vmem:[%s3249 + $0x97] sm:$0xff]
        %v5998 = vld [vmem:[%s3249 + $0xaf] sm:$0xff]
        %v5999 = vlaneseq
        %v6000 = vshrl.u32 %v5999, 7
        %v6001 = vsub.s32 0, %v6000
        %v6002 = vrot.slane %v4594, %v6001
        %v6003 = vmul.f32 %v5991, %v6002
        %v6004 = vmul.f32 %v5992, %v6002
        %v6005 = vmul.f32 %v5993, %v6002
        %v6006 = vmul.f32 %v5994, %v6002
        %v6007 = vmul.f32 %v5995, %v6002
        %v6008 = vmul.f32 %v5996, %v6002
        %v6009 = vmul.f32 %v5997, %v6002
        %v6010 = vmul.f32 %v5998, %v6002
        %v6011 = vadd.f32 %v5895, %v6003
        %v6012 = vadd.f32 %v5896, %v6004
        %v6013 = vadd.f32 %v5897, %v6005
        %v6014 = vadd.f32 %v5898, %v6006
        %v6015 = vadd.f32 %v5899, %v6007
        %v6016 = vadd.f32 %v5900, %v6008
        %v6017 = vadd.f32 %v5901, %v6009
        %v6018 = vadd.f32 %v5902, %v6010
        %v6019 = vmul.f32 %v5991, %v5614
        %v6020 = vmul.f32 %v5992, %v5614
        %v6021 = vmul.f32 %v5993, %v5614
        %v6022 = vmul.f32 %v5994, %v5614
        %v6023 = vmul.f32 %v5995, %v5614
        %v6024 = vmul.f32 %v5996, %v5614
        %v6025 = vmul.f32 %v5997, %v5614
        %v6026 = vmul.f32 %v5998, %v5614
        %v6027 = vadd.f32 %v5927, %v6019
        %v6028 = vadd.f32 %v5928, %v6020
        %v6029 = vadd.f32 %v5929, %v6021
        %v6030 = vadd.f32 %v5930, %v6022
        %v6031 = vadd.f32 %v5931, %v6023
        %v6032 = vadd.f32 %v5932, %v6024
        %v6033 = vadd.f32 %v5933, %v6025
        %v6034 = vadd.f32 %v5934, %v6026
        %s6035 = scalar_lea.vmem [#allocation2], 360
        %v6036 = vld [vmem:[%s6035 + $0x7] sm:$0xff]
        %v6037 = vld [vmem:[%s6035 + $0x1f] sm:$0xff]
        %v6038 = vld [vmem:[%s6035 + $0x37] sm:$0xff]
        %v6039 = vld [vmem:[%s6035 + $0x4f] sm:$0xff]
        %v6040 = vld [vmem:[%s6035 + $0x67] sm:$0xff]
        %v6041 = vld [vmem:[%s6035 + $0x7f] sm:$0xff]
        %v6042 = vld [vmem:[%s6035 + $0x97] sm:$0xff]
        %v6043 = vld [vmem:[%s6035 + $0xaf] sm:$0xff]
        %v6044 = vlaneseq
        %v6045 = vshrl.u32 %v6044, 7
        %v6046 = vsub.s32 1, %v6045
        %v6047 = vrot.slane %v4594, %v6046
        %v6048 = vmul.f32 %v6036, %v6047
        %v6049 = vmul.f32 %v6037, %v6047
        %v6050 = vmul.f32 %v6038, %v6047
        %v6051 = vmul.f32 %v6039, %v6047
        %v6052 = vmul.f32 %v6040, %v6047
        %v6053 = vmul.f32 %v6041, %v6047
        %v6054 = vmul.f32 %v6042, %v6047
        %v6055 = vmul.f32 %v6043, %v6047
        %v6056 = vadd.f32 %v6011, %v6048
        %v6057 = vadd.f32 %v6012, %v6049
        %v6058 = vadd.f32 %v6013, %v6050
        %v6059 = vadd.f32 %v6014, %v6051
        %v6060 = vadd.f32 %v6015, %v6052
        %v6061 = vadd.f32 %v6016, %v6053
        %v6062 = vadd.f32 %v6017, %v6054
        %v6063 = vadd.f32 %v6018, %v6055
        %v6064 = vmul.f32 %v6036, %v6002
        %v6065 = vmul.f32 %v6037, %v6002
        %v6066 = vmul.f32 %v6038, %v6002
        %v6067 = vmul.f32 %v6039, %v6002
        %v6068 = vmul.f32 %v6040, %v6002
        %v6069 = vmul.f32 %v6041, %v6002
        %v6070 = vmul.f32 %v6042, %v6002
        %v6071 = vmul.f32 %v6043, %v6002
        %v6072 = vadd.f32 %v5967, %v6064
        %v6073 = vadd.f32 %v5968, %v6065
        %v6074 = vadd.f32 %v5969, %v6066
        %v6075 = vadd.f32 %v5970, %v6067
        %v6076 = vadd.f32 %v5971, %v6068
        %v6077 = vadd.f32 %v5972, %v6069
        %v6078 = vadd.f32 %v5973, %v6070
        %v6079 = vadd.f32 %v5974, %v6071
        %v6080 = vmul.f32 %v6036, %v5658
        %v6081 = vmul.f32 %v6037, %v5658
        %v6082 = vmul.f32 %v6038, %v5658
        %v6083 = vmul.f32 %v6039, %v5658
        %v6084 = vmul.f32 %v6040, %v5658
        %v6085 = vmul.f32 %v6041, %v5658
        %v6086 = vmul.f32 %v6042, %v5658
        %v6087 = vmul.f32 %v6043, %v5658
        %v6088 = vadd.f32 %v6027, %v6080
        %v6089 = vadd.f32 %v6028, %v6081
        %v6090 = vadd.f32 %v6029, %v6082
        %v6091 = vadd.f32 %v6030, %v6083
        %v6092 = vadd.f32 %v6031, %v6084
        %v6093 = vadd.f32 %v6032, %v6085
        %v6094 = vadd.f32 %v6033, %v6086
        %v6095 = vadd.f32 %v6034, %v6087
        %v6096 = vmul.f32 %v6036, %v5614
        %v6097 = vmul.f32 %v6037, %v5614
        %v6098 = vmul.f32 %v6038, %v5614
        %v6099 = vmul.f32 %v6039, %v5614
        %v6100 = vmul.f32 %v6040, %v5614
        %v6101 = vmul.f32 %v6041, %v5614
        %v6102 = vmul.f32 %v6042, %v5614
        %v6103 = vmul.f32 %v6043, %v5614
        %v6104 = vadd.f32 %v5983, %v6096
        %v6105 = vadd.f32 %v5984, %v6097
        %v6106 = vadd.f32 %v5985, %v6098
        %v6107 = vadd.f32 %v5986, %v6099
        %v6108 = vadd.f32 %v5987, %v6100
        %v6109 = vadd.f32 %v5988, %v6101
        %v6110 = vadd.f32 %v5989, %v6102
        %v6111 = vadd.f32 %v5990, %v6103
        %v6112 = vld [vmem:[%s3249 + $0x8] sm:$0xff]
        %v6113 = vld [vmem:[%s3249 + $0x20] sm:$0xff]
        %v6114 = vld [vmem:[%s3249 + $0x38] sm:$0xff]
        %v6115 = vld [vmem:[%s3249 + $0x50] sm:$0xff]
        %v6116 = vld [vmem:[%s3249 + $0x68] sm:$0xff]
        %v6117 = vld [vmem:[%s3249 + $0x80] sm:$0xff]
        %v6118 = vld [vmem:[%s3249 + $0x98] sm:$0xff]
        %v6119 = vld [vmem:[%s3249 + $0xb0] sm:$0xff]
        %v6120 = vlaneseq
        %v6121 = vshrl.u32 %v6120, 7
        %v6122 = vsub.s32 2, %v6121
        %v6123 = vrot.slane %v4594, %v6122
        %v6124 = vmul.f32 %v6112, %v6123
        %v6125 = vmul.f32 %v6113, %v6123
        %v6126 = vmul.f32 %v6114, %v6123
        %v6127 = vmul.f32 %v6115, %v6123
        %v6128 = vmul.f32 %v6116, %v6123
        %v6129 = vmul.f32 %v6117, %v6123
        %v6130 = vmul.f32 %v6118, %v6123
        %v6131 = vmul.f32 %v6119, %v6123
        %v6132 = vadd.f32 %v6056, %v6124
        %v6133 = vadd.f32 %v6057, %v6125
        %v6134 = vadd.f32 %v6058, %v6126
        %v6135 = vadd.f32 %v6059, %v6127
        %v6136 = vadd.f32 %v6060, %v6128
        %v6137 = vadd.f32 %v6061, %v6129
        %v6138 = vadd.f32 %v6062, %v6130
        %v6139 = vadd.f32 %v6063, %v6131
        %v6140 = vmul.f32 %v6112, %v6047
        %v6141 = vmul.f32 %v6113, %v6047
        %v6142 = vmul.f32 %v6114, %v6047
        %v6143 = vmul.f32 %v6115, %v6047
        %v6144 = vmul.f32 %v6116, %v6047
        %v6145 = vmul.f32 %v6117, %v6047
        %v6146 = vmul.f32 %v6118, %v6047
        %v6147 = vmul.f32 %v6119, %v6047
        %v6148 = vadd.f32 %v6072, %v6140
        %v6149 = vadd.f32 %v6073, %v6141
        %v6150 = vadd.f32 %v6074, %v6142
        %v6151 = vadd.f32 %v6075, %v6143
        %v6152 = vadd.f32 %v6076, %v6144
        %v6153 = vadd.f32 %v6077, %v6145
        %v6154 = vadd.f32 %v6078, %v6146
        %v6155 = vadd.f32 %v6079, %v6147
        %v6156 = vmul.f32 %v6112, %v5734
        %v6157 = vmul.f32 %v6113, %v5734
        %v6158 = vmul.f32 %v6114, %v5734
        %v6159 = vmul.f32 %v6115, %v5734
        %v6160 = vmul.f32 %v6116, %v5734
        %v6161 = vmul.f32 %v6117, %v5734
        %v6162 = vmul.f32 %v6118, %v5734
        %v6163 = vmul.f32 %v6119, %v5734
        %v6164 = vadd.f32 %v6088, %v6156
        %v6165 = vadd.f32 %v6089, %v6157
        %v6166 = vadd.f32 %v6090, %v6158
        %v6167 = vadd.f32 %v6091, %v6159
        %v6168 = vadd.f32 %v6092, %v6160
        %v6169 = vadd.f32 %v6093, %v6161
        %v6170 = vadd.f32 %v6094, %v6162
        %v6171 = vadd.f32 %v6095, %v6163
        %v6172 = vmul.f32 %v6112, %v5658
        %v6173 = vmul.f32 %v6113, %v5658
        %v6174 = vmul.f32 %v6114, %v5658
        %v6175 = vmul.f32 %v6115, %v5658
        %v6176 = vmul.f32 %v6116, %v5658
        %v6177 = vmul.f32 %v6117, %v5658
        %v6178 = vmul.f32 %v6118, %v5658
        %v6179 = vmul.f32 %v6119, %v5658
        %v6180 = vadd.f32 %v6104, %v6172
        %v6181 = vadd.f32 %v6105, %v6173
        %v6182 = vadd.f32 %v6106, %v6174
        %v6183 = vadd.f32 %v6107, %v6175
        %v6184 = vadd.f32 %v6108, %v6176
        %v6185 = vadd.f32 %v6109, %v6177
        %v6186 = vadd.f32 %v6110, %v6178
        %v6187 = vadd.f32 %v6111, %v6179
        %v6188 = vld [vmem:[%s6035 + $0x8] sm:$0xff]
        %v6189 = vld [vmem:[%s6035 + $0x20] sm:$0xff]
        %v6190 = vld [vmem:[%s6035 + $0x38] sm:$0xff]
        %v6191 = vld [vmem:[%s6035 + $0x50] sm:$0xff]
        %v6192 = vld [vmem:[%s6035 + $0x68] sm:$0xff]
        %v6193 = vld [vmem:[%s6035 + $0x80] sm:$0xff]
        %v6194 = vld [vmem:[%s6035 + $0x98] sm:$0xff]
        %v6195 = vld [vmem:[%s6035 + $0xb0] sm:$0xff]
        %v6196 = vlaneseq
        %v6197 = vshrl.u32 %v6196, 7
        %v6198 = vsub.s32 3, %v6197
        %v6199 = vrot.slane %v4594, %v6198
        %v6200 = vmul.f32 %v6188, %v6199
        %v6201 = vmul.f32 %v6189, %v6199
        %v6202 = vmul.f32 %v6190, %v6199
        %v6203 = vmul.f32 %v6191, %v6199
        %v6204 = vmul.f32 %v6192, %v6199
        %v6205 = vmul.f32 %v6193, %v6199
        %v6206 = vmul.f32 %v6194, %v6199
        %v6207 = vmul.f32 %v6195, %v6199
        %v6208 = vadd.f32 %v6132, %v6200
        %v6209 = vadd.f32 %v6133, %v6201
        %v6210 = vadd.f32 %v6134, %v6202
        %v6211 = vadd.f32 %v6135, %v6203
        %v6212 = vadd.f32 %v6136, %v6204
        %v6213 = vadd.f32 %v6137, %v6205
        %v6214 = vadd.f32 %v6138, %v6206
        %v6215 = vadd.f32 %v6139, %v6207
        %v6216 = vmul.f32 %v6188, %v6123
        %v6217 = vmul.f32 %v6189, %v6123
        %v6218 = vmul.f32 %v6190, %v6123
        %v6219 = vmul.f32 %v6191, %v6123
        %v6220 = vmul.f32 %v6192, %v6123
        %v6221 = vmul.f32 %v6193, %v6123
        %v6222 = vmul.f32 %v6194, %v6123
        %v6223 = vmul.f32 %v6195, %v6123
        %v6224 = vadd.f32 %v6148, %v6216
        %v6225 = vadd.f32 %v6149, %v6217
        %v6226 = vadd.f32 %v6150, %v6218
        %v6227 = vadd.f32 %v6151, %v6219
        %v6228 = vadd.f32 %v6152, %v6220
        %v6229 = vadd.f32 %v6153, %v6221
        %v6230 = vadd.f32 %v6154, %v6222
        %v6231 = vadd.f32 %v6155, %v6223
        %v6232 = vmul.f32 %v6188, %v5810
        %v6233 = vmul.f32 %v6189, %v5810
        %v6234 = vmul.f32 %v6190, %v5810
        %v6235 = vmul.f32 %v6191, %v5810
        %v6236 = vmul.f32 %v6192, %v5810
        %v6237 = vmul.f32 %v6193, %v5810
        %v6238 = vmul.f32 %v6194, %v5810
        %v6239 = vmul.f32 %v6195, %v5810
        %v6240 = vadd.f32 %v6164, %v6232
        %v6241 = vadd.f32 %v6165, %v6233
        %v6242 = vadd.f32 %v6166, %v6234
        %v6243 = vadd.f32 %v6167, %v6235
        %v6244 = vadd.f32 %v6168, %v6236
        %v6245 = vadd.f32 %v6169, %v6237
        %v6246 = vadd.f32 %v6170, %v6238
        %v6247 = vadd.f32 %v6171, %v6239
        %v6248 = vmul.f32 %v6188, %v5734
        %v6249 = vmul.f32 %v6189, %v5734
        %v6250 = vmul.f32 %v6190, %v5734
        %v6251 = vmul.f32 %v6191, %v5734
        %v6252 = vmul.f32 %v6192, %v5734
        %v6253 = vmul.f32 %v6193, %v5734
        %v6254 = vmul.f32 %v6194, %v5734
        %v6255 = vmul.f32 %v6195, %v5734
        %v6256 = vadd.f32 %v6180, %v6248
        %v6257 = vadd.f32 %v6181, %v6249
        %v6258 = vadd.f32 %v6182, %v6250
        %v6259 = vadd.f32 %v6183, %v6251
        %v6260 = vadd.f32 %v6184, %v6252
        %v6261 = vadd.f32 %v6185, %v6253
        %v6262 = vadd.f32 %v6186, %v6254
        %v6263 = vadd.f32 %v6187, %v6255
        %v6264 = vld [vmem:[%s3249 + $0x9] sm:$0xff]
        %v6265 = vld [vmem:[%s3249 + $0x21] sm:$0xff]
        %v6266 = vld [vmem:[%s3249 + $0x39] sm:$0xff]
        %v6267 = vld [vmem:[%s3249 + $0x51] sm:$0xff]
        %v6268 = vld [vmem:[%s3249 + $0x69] sm:$0xff]
        %v6269 = vld [vmem:[%s3249 + $0x81] sm:$0xff]
        %v6270 = vld [vmem:[%s3249 + $0x99] sm:$0xff]
        %v6271 = vld [vmem:[%s3249 + $0xb1] sm:$0xff]
        %v6272 = vlaneseq
        %v6273 = vshrl.u32 %v6272, 7
        %v6274 = vsub.s32 4, %v6273
        %v6275 = vrot.slane %v4594, %v6274
        %v6276 = vmul.f32 %v6264, %v6275
        %v6277 = vmul.f32 %v6265, %v6275
        %v6278 = vmul.f32 %v6266, %v6275
        %v6279 = vmul.f32 %v6267, %v6275
        %v6280 = vmul.f32 %v6268, %v6275
        %v6281 = vmul.f32 %v6269, %v6275
        %v6282 = vmul.f32 %v6270, %v6275
        %v6283 = vmul.f32 %v6271, %v6275
        %v6284 = vadd.f32 %v6208, %v6276
        %v6285 = vadd.f32 %v6209, %v6277
        %v6286 = vadd.f32 %v6210, %v6278
        %v6287 = vadd.f32 %v6211, %v6279
        %v6288 = vadd.f32 %v6212, %v6280
        %v6289 = vadd.f32 %v6213, %v6281
        %v6290 = vadd.f32 %v6214, %v6282
        %v6291 = vadd.f32 %v6215, %v6283
        %v6292 = vmul.f32 %v6264, %v6199
        %v6293 = vmul.f32 %v6265, %v6199
        %v6294 = vmul.f32 %v6266, %v6199
        %v6295 = vmul.f32 %v6267, %v6199
        %v6296 = vmul.f32 %v6268, %v6199
        %v6297 = vmul.f32 %v6269, %v6199
        %v6298 = vmul.f32 %v6270, %v6199
        %v6299 = vmul.f32 %v6271, %v6199
        %v6300 = vadd.f32 %v6224, %v6292
        %v6301 = vadd.f32 %v6225, %v6293
        %v6302 = vadd.f32 %v6226, %v6294
        %v6303 = vadd.f32 %v6227, %v6295
        %v6304 = vadd.f32 %v6228, %v6296
        %v6305 = vadd.f32 %v6229, %v6297
        %v6306 = vadd.f32 %v6230, %v6298
        %v6307 = vadd.f32 %v6231, %v6299
        %v6308 = vmul.f32 %v6264, %v5886
        %v6309 = vmul.f32 %v6265, %v5886
        %v6310 = vmul.f32 %v6266, %v5886
        %v6311 = vmul.f32 %v6267, %v5886
        %v6312 = vmul.f32 %v6268, %v5886
        %v6313 = vmul.f32 %v6269, %v5886
        %v6314 = vmul.f32 %v6270, %v5886
        %v6315 = vmul.f32 %v6271, %v5886
        %v6316 = vadd.f32 %v6240, %v6308
        %v6317 = vadd.f32 %v6241, %v6309
        %v6318 = vadd.f32 %v6242, %v6310
        %v6319 = vadd.f32 %v6243, %v6311
        %v6320 = vadd.f32 %v6244, %v6312
        %v6321 = vadd.f32 %v6245, %v6313
        %v6322 = vadd.f32 %v6246, %v6314
        %v6323 = vadd.f32 %v6247, %v6315
        %v6324 = vmul.f32 %v6264, %v5810
        %v6325 = vmul.f32 %v6265, %v5810
        %v6326 = vmul.f32 %v6266, %v5810
        %v6327 = vmul.f32 %v6267, %v5810
        %v6328 = vmul.f32 %v6268, %v5810
        %v6329 = vmul.f32 %v6269, %v5810
        %v6330 = vmul.f32 %v6270, %v5810
        %v6331 = vmul.f32 %v6271, %v5810
        %v6332 = vadd.f32 %v6256, %v6324
        %v6333 = vadd.f32 %v6257, %v6325
        %v6334 = vadd.f32 %v6258, %v6326
        %v6335 = vadd.f32 %v6259, %v6327
        %v6336 = vadd.f32 %v6260, %v6328
        %v6337 = vadd.f32 %v6261, %v6329
        %v6338 = vadd.f32 %v6262, %v6330
        %v6339 = vadd.f32 %v6263, %v6331
        %v6340 = vld [vmem:[%s6035 + $0x9] sm:$0xff]
        %v6341 = vld [vmem:[%s6035 + $0x21] sm:$0xff]
        %v6342 = vld [vmem:[%s6035 + $0x39] sm:$0xff]
        %v6343 = vld [vmem:[%s6035 + $0x51] sm:$0xff]
        %v6344 = vld [vmem:[%s6035 + $0x69] sm:$0xff]
        %v6345 = vld [vmem:[%s6035 + $0x81] sm:$0xff]
        %v6346 = vld [vmem:[%s6035 + $0x99] sm:$0xff]
        %v6347 = vld [vmem:[%s6035 + $0xb1] sm:$0xff]
        %v6348 = vmul.f32 %v6340, %v6275
        %v6349 = vmul.f32 %v6341, %v6275
        %v6350 = vmul.f32 %v6342, %v6275
        %v6351 = vmul.f32 %v6343, %v6275
        %v6352 = vmul.f32 %v6344, %v6275
        %v6353 = vmul.f32 %v6345, %v6275
        %v6354 = vmul.f32 %v6346, %v6275
        %v6355 = vmul.f32 %v6347, %v6275
        %v6356 = vadd.f32 %v6300, %v6348
        %v6357 = vadd.f32 %v6301, %v6349
        %v6358 = vadd.f32 %v6302, %v6350
        %v6359 = vadd.f32 %v6303, %v6351
        %v6360 = vadd.f32 %v6304, %v6352
        %v6361 = vadd.f32 %v6305, %v6353
        %v6362 = vadd.f32 %v6306, %v6354
        %v6363 = vadd.f32 %v6307, %v6355
        %v6364 = vmul.f32 %v6340, %v5886
        %v6365 = vmul.f32 %v6341, %v5886
        %v6366 = vmul.f32 %v6342, %v5886
        %v6367 = vmul.f32 %v6343, %v5886
        %v6368 = vmul.f32 %v6344, %v5886
        %v6369 = vmul.f32 %v6345, %v5886
        %v6370 = vmul.f32 %v6346, %v5886
        %v6371 = vmul.f32 %v6347, %v5886
        %v6372 = vadd.f32 %v6332, %v6364
        %v6373 = vadd.f32 %v6333, %v6365
        %v6374 = vadd.f32 %v6334, %v6366
        %v6375 = vadd.f32 %v6335, %v6367
        %v6376 = vadd.f32 %v6336, %v6368
        %v6377 = vadd.f32 %v6337, %v6369
        %v6378 = vadd.f32 %v6338, %v6370
        %v6379 = vadd.f32 %v6339, %v6371
        %s6380 = scalar_lea.vmem [#allocation2], 648
        %v6381 = vld [vmem:[%s6380 + $0x7] sm:$0xff]
        %v6382 = vld [vmem:[%s6380 + $0x1f] sm:$0xff]
        %v6383 = vld [vmem:[%s6380 + $0x37] sm:$0xff]
        %v6384 = vld [vmem:[%s6380 + $0x4f] sm:$0xff]
        %v6385 = vld [vmem:[%s6380 + $0x67] sm:$0xff]
        %v6386 = vld [vmem:[%s6380 + $0x7f] sm:$0xff]
        %v6387 = vld [vmem:[%s6380 + $0x97] sm:$0xff]
        %v6388 = vld [vmem:[%s6380 + $0xaf] sm:$0xff]
        %v6389 = vmul.f32 %v6381, %v6002
        %v6390 = vmul.f32 %v6382, %v6002
        %v6391 = vmul.f32 %v6383, %v6002
        %v6392 = vmul.f32 %v6384, %v6002
        %v6393 = vmul.f32 %v6385, %v6002
        %v6394 = vmul.f32 %v6386, %v6002
        %v6395 = vmul.f32 %v6387, %v6002
        %v6396 = vmul.f32 %v6388, %v6002
        %v6397 = vadd.f32 %v6316, %v6389
        %v6398 = vadd.f32 %v6317, %v6390
        %v6399 = vadd.f32 %v6318, %v6391
        %v6400 = vadd.f32 %v6319, %v6392
        %v6401 = vadd.f32 %v6320, %v6393
        %v6402 = vadd.f32 %v6321, %v6394
        %v6403 = vadd.f32 %v6322, %v6395
        %v6404 = vadd.f32 %v6323, %v6396
        %s6405 = scalar_lea.vmem [#allocation2], 936
        %v6406 = vld [vmem:[%s6405 + $0x7] sm:$0xff]
        %v6407 = vld [vmem:[%s6405 + $0x1f] sm:$0xff]
        %v6408 = vld [vmem:[%s6405 + $0x37] sm:$0xff]
        %v6409 = vld [vmem:[%s6405 + $0x4f] sm:$0xff]
        %v6410 = vld [vmem:[%s6405 + $0x67] sm:$0xff]
        %v6411 = vld [vmem:[%s6405 + $0x7f] sm:$0xff]
        %v6412 = vld [vmem:[%s6405 + $0x97] sm:$0xff]
        %v6413 = vld [vmem:[%s6405 + $0xaf] sm:$0xff]
        %v6414 = vmul.f32 %v6406, %v6047
        %v6415 = vmul.f32 %v6407, %v6047
        %v6416 = vmul.f32 %v6408, %v6047
        %v6417 = vmul.f32 %v6409, %v6047
        %v6418 = vmul.f32 %v6410, %v6047
        %v6419 = vmul.f32 %v6411, %v6047
        %v6420 = vmul.f32 %v6412, %v6047
        %v6421 = vmul.f32 %v6413, %v6047
        %v6422 = vadd.f32 %v6397, %v6414
        %v6423 = vadd.f32 %v6398, %v6415
        %v6424 = vadd.f32 %v6399, %v6416
        %v6425 = vadd.f32 %v6400, %v6417
        %v6426 = vadd.f32 %v6401, %v6418
        %v6427 = vadd.f32 %v6402, %v6419
        %v6428 = vadd.f32 %v6403, %v6420
        %v6429 = vadd.f32 %v6404, %v6421
        %v6430 = vmul.f32 %v6406, %v6002
        %v6431 = vmul.f32 %v6407, %v6002
        %v6432 = vmul.f32 %v6408, %v6002
        %v6433 = vmul.f32 %v6409, %v6002
        %v6434 = vmul.f32 %v6410, %v6002
        %v6435 = vmul.f32 %v6411, %v6002
        %v6436 = vmul.f32 %v6412, %v6002
        %v6437 = vmul.f32 %v6413, %v6002
        %v6438 = vadd.f32 %v6372, %v6430
        %v6439 = vadd.f32 %v6373, %v6431
        %v6440 = vadd.f32 %v6374, %v6432
        %v6441 = vadd.f32 %v6375, %v6433
        %v6442 = vadd.f32 %v6376, %v6434
        %v6443 = vadd.f32 %v6377, %v6435
        %v6444 = vadd.f32 %v6378, %v6436
        %v6445 = vadd.f32 %v6379, %v6437
        %v6446 = vld [vmem:[%s6380 + $0x8] sm:$0xff]
        %v6447 = vld [vmem:[%s6380 + $0x20] sm:$0xff]
        %v6448 = vld [vmem:[%s6380 + $0x38] sm:$0xff]
        %v6449 = vld [vmem:[%s6380 + $0x50] sm:$0xff]
        %v6450 = vld [vmem:[%s6380 + $0x68] sm:$0xff]
        %v6451 = vld [vmem:[%s6380 + $0x80] sm:$0xff]
        %v6452 = vld [vmem:[%s6380 + $0x98] sm:$0xff]
        %v6453 = vld [vmem:[%s6380 + $0xb0] sm:$0xff]
        %v6454 = vmul.f32 %v6446, %v6123
        %v6455 = vmul.f32 %v6447, %v6123
        %v6456 = vmul.f32 %v6448, %v6123
        %v6457 = vmul.f32 %v6449, %v6123
        %v6458 = vmul.f32 %v6450, %v6123
        %v6459 = vmul.f32 %v6451, %v6123
        %v6460 = vmul.f32 %v6452, %v6123
        %v6461 = vmul.f32 %v6453, %v6123
        %v6462 = vadd.f32 %v6422, %v6454
        %v6463 = vadd.f32 %v6423, %v6455
        %v6464 = vadd.f32 %v6424, %v6456
        %v6465 = vadd.f32 %v6425, %v6457
        %v6466 = vadd.f32 %v6426, %v6458
        %v6467 = vadd.f32 %v6427, %v6459
        %v6468 = vadd.f32 %v6428, %v6460
        %v6469 = vadd.f32 %v6429, %v6461
        %v6470 = vmul.f32 %v6446, %v6047
        %v6471 = vmul.f32 %v6447, %v6047
        %v6472 = vmul.f32 %v6448, %v6047
        %v6473 = vmul.f32 %v6449, %v6047
        %v6474 = vmul.f32 %v6450, %v6047
        %v6475 = vmul.f32 %v6451, %v6047
        %v6476 = vmul.f32 %v6452, %v6047
        %v6477 = vmul.f32 %v6453, %v6047
        %v6478 = vadd.f32 %v6438, %v6470
        %v6479 = vadd.f32 %v6439, %v6471
        %v6480 = vadd.f32 %v6440, %v6472
        %v6481 = vadd.f32 %v6441, %v6473
        %v6482 = vadd.f32 %v6442, %v6474
        %v6483 = vadd.f32 %v6443, %v6475
        %v6484 = vadd.f32 %v6444, %v6476
        %v6485 = vadd.f32 %v6445, %v6477
        %v6486 = vld [vmem:[%s6405 + $0x8] sm:$0xff]
        %v6487 = vld [vmem:[%s6405 + $0x20] sm:$0xff]
        %v6488 = vld [vmem:[%s6405 + $0x38] sm:$0xff]
        %v6489 = vld [vmem:[%s6405 + $0x50] sm:$0xff]
        %v6490 = vld [vmem:[%s6405 + $0x68] sm:$0xff]
        %v6491 = vld [vmem:[%s6405 + $0x80] sm:$0xff]
        %v6492 = vld [vmem:[%s6405 + $0x98] sm:$0xff]
        %v6493 = vld [vmem:[%s6405 + $0xb0] sm:$0xff]
        %v6494 = vmul.f32 %v6486, %v6199
        %v6495 = vmul.f32 %v6487, %v6199
        %v6496 = vmul.f32 %v6488, %v6199
        %v6497 = vmul.f32 %v6489, %v6199
        %v6498 = vmul.f32 %v6490, %v6199
        %v6499 = vmul.f32 %v6491, %v6199
        %v6500 = vmul.f32 %v6492, %v6199
        %v6501 = vmul.f32 %v6493, %v6199
        %v6502 = vadd.f32 %v6462, %v6494
        %v6503 = vadd.f32 %v6463, %v6495
        %v6504 = vadd.f32 %v6464, %v6496
        %v6505 = vadd.f32 %v6465, %v6497
        %v6506 = vadd.f32 %v6466, %v6498
        %v6507 = vadd.f32 %v6467, %v6499
        %v6508 = vadd.f32 %v6468, %v6500
        %v6509 = vadd.f32 %v6469, %v6501
        %v6510 = vmul.f32 %v6486, %v6123
        %v6511 = vmul.f32 %v6487, %v6123
        %v6512 = vmul.f32 %v6488, %v6123
        %v6513 = vmul.f32 %v6489, %v6123
        %v6514 = vmul.f32 %v6490, %v6123
        %v6515 = vmul.f32 %v6491, %v6123
        %v6516 = vmul.f32 %v6492, %v6123
        %v6517 = vmul.f32 %v6493, %v6123
        %v6518 = vadd.f32 %v6478, %v6510
        %v6519 = vadd.f32 %v6479, %v6511
        %v6520 = vadd.f32 %v6480, %v6512
        %v6521 = vadd.f32 %v6481, %v6513
        %v6522 = vadd.f32 %v6482, %v6514
        %v6523 = vadd.f32 %v6483, %v6515
        %v6524 = vadd.f32 %v6484, %v6516
        %v6525 = vadd.f32 %v6485, %v6517
        %v6526 = vld [vmem:[%s6380 + $0x9] sm:$0xff]
        %v6527 = vld [vmem:[%s6380 + $0x21] sm:$0xff]
        %v6528 = vld [vmem:[%s6380 + $0x39] sm:$0xff]
        %v6529 = vld [vmem:[%s6380 + $0x51] sm:$0xff]
        %v6530 = vld [vmem:[%s6380 + $0x69] sm:$0xff]
        %v6531 = vld [vmem:[%s6380 + $0x81] sm:$0xff]
        %v6532 = vld [vmem:[%s6380 + $0x99] sm:$0xff]
        %v6533 = vld [vmem:[%s6380 + $0xb1] sm:$0xff]
        %v6534 = vmul.f32 %v6526, %v6275
        %v6535 = vmul.f32 %v6527, %v6275
        %v6536 = vmul.f32 %v6528, %v6275
        %v6537 = vmul.f32 %v6529, %v6275
        %v6538 = vmul.f32 %v6530, %v6275
        %v6539 = vmul.f32 %v6531, %v6275
        %v6540 = vmul.f32 %v6532, %v6275
        %v6541 = vmul.f32 %v6533, %v6275
        %v6542 = vadd.f32 %v6502, %v6534
        %v6543 = vadd.f32 %v6503, %v6535
        %v6544 = vadd.f32 %v6504, %v6536
        %v6545 = vadd.f32 %v6505, %v6537
        %v6546 = vadd.f32 %v6506, %v6538
        %v6547 = vadd.f32 %v6507, %v6539
        %v6548 = vadd.f32 %v6508, %v6540
        %v6549 = vadd.f32 %v6509, %v6541
        %v6550 = vmul.f32 %v6526, %v6199
        %v6551 = vmul.f32 %v6527, %v6199
        %v6552 = vmul.f32 %v6528, %v6199
        %v6553 = vmul.f32 %v6529, %v6199
        %v6554 = vmul.f32 %v6530, %v6199
        %v6555 = vmul.f32 %v6531, %v6199
        %v6556 = vmul.f32 %v6532, %v6199
        %v6557 = vmul.f32 %v6533, %v6199
        %v6558 = vadd.f32 %v6518, %v6550
        %v6559 = vadd.f32 %v6519, %v6551
        %v6560 = vadd.f32 %v6520, %v6552
        %v6561 = vadd.f32 %v6521, %v6553
        %v6562 = vadd.f32 %v6522, %v6554
        %v6563 = vadd.f32 %v6523, %v6555
        %v6564 = vadd.f32 %v6524, %v6556
        %v6565 = vadd.f32 %v6525, %v6557
        %v6566 = vld [vmem:[%s6405 + $0x9] sm:$0xff]
        %v6567 = vld [vmem:[%s6405 + $0x21] sm:$0xff]
        %v6568 = vld [vmem:[%s6405 + $0x39] sm:$0xff]
        %v6569 = vld [vmem:[%s6405 + $0x51] sm:$0xff]
        %v6570 = vld [vmem:[%s6405 + $0x69] sm:$0xff]
        %v6571 = vld [vmem:[%s6405 + $0x81] sm:$0xff]
        %v6572 = vld [vmem:[%s6405 + $0x99] sm:$0xff]
        %v6573 = vld [vmem:[%s6405 + $0xb1] sm:$0xff]
        %v6574 = vmul.f32 %v6566, %v6275
        %v6575 = vmul.f32 %v6567, %v6275
        %v6576 = vmul.f32 %v6568, %v6275
        %v6577 = vmul.f32 %v6569, %v6275
        %v6578 = vmul.f32 %v6570, %v6275
        %v6579 = vmul.f32 %v6571, %v6275
        %v6580 = vmul.f32 %v6572, %v6275
        %v6581 = vmul.f32 %v6573, %v6275
        %v6582 = vadd.f32 %v6558, %v6574
        %v6583 = vadd.f32 %v6559, %v6575
        %v6584 = vadd.f32 %v6560, %v6576
        %v6585 = vadd.f32 %v6561, %v6577
        %v6586 = vadd.f32 %v6562, %v6578
        %v6587 = vadd.f32 %v6563, %v6579
        %v6588 = vadd.f32 %v6564, %v6580
        %v6589 = vadd.f32 %v6565, %v6581
        %v6590 = vld [vmem:[%s516] sm:$0xff]
        %v6591 = vld [vmem:[%s516 + $0x8] sm:$0xff]
        %v6592 = vld [vmem:[%s516 + $0x10] sm:$0xff]
        %v6593 = vld [vmem:[%s516 + $0x18] sm:$0xff]
        %v6594 = vld [vmem:[%s516 + $0x20] sm:$0xff]
        %v6595 = vld [vmem:[%s516 + $0x28] sm:$0xff]
        %v6596 = vld [vmem:[%s516 + $0x30] sm:$0xff]
        %v6597 = vld [vmem:[%s516 + $0x38] sm:$0xff]
        %v6598 = vadd.f32 %v6590, %v6284
        %v6599 = vadd.f32 %v6591, %v6285
        %v6600 = vadd.f32 %v6592, %v6286
        %v6601 = vadd.f32 %v6593, %v6287
        %v6602 = vadd.f32 %v6594, %v6288
        %v6603 = vadd.f32 %v6595, %v6289
        %v6604 = vadd.f32 %v6596, %v6290
        %v6605 = vadd.f32 %v6597, %v6291
        %v6607 = vlaneseq
        %v6608 = vshrl.u32 %v6607, 7
        %v6609 = vsub.s32 0, %v6608
        %v6610 = vrot.slane %v4595, %v6609
        %v6612 = vadd.f32 %v6598, %v6610
        %v6613 = vadd.f32 %v6599, %v6610
        %v6614 = vadd.f32 %v6600, %v6610
        %v6615 = vadd.f32 %v6601, %v6610
        %v6616 = vadd.f32 %v6602, %v6610
        %v6617 = vadd.f32 %v6603, %v6610
        %v6618 = vadd.f32 %v6604, %v6610
        %v6619 = vadd.f32 %v6605, %v6610
        %6620 = vst [vmem:[%s516] sm:$0xff] %v6612
        %6621 = vst [vmem:[%s516 + $0x8] sm:$0xff] %v6613
        %6622 = vst [vmem:[%s516 + $0x10] sm:$0xff] %v6614
        %6623 = vst [vmem:[%s516 + $0x18] sm:$0xff] %v6615
        %6624 = vst [vmem:[%s516 + $0x20] sm:$0xff] %v6616
        %6625 = vst [vmem:[%s516 + $0x28] sm:$0xff] %v6617
        %6626 = vst [vmem:[%s516 + $0x30] sm:$0xff] %v6618
        %6627 = vst [vmem:[%s516 + $0x38] sm:$0xff] %v6619
        %v6628 = vld [vmem:[%s4467] sm:$0xff]
        %v6629 = vld [vmem:[%s4467 + $0x8] sm:$0xff]
        %v6630 = vld [vmem:[%s4467 + $0x10] sm:$0xff]
        %v6631 = vld [vmem:[%s4467 + $0x18] sm:$0xff]
        %v6632 = vld [vmem:[%s4467 + $0x20] sm:$0xff]
        %v6633 = vld [vmem:[%s4467 + $0x28] sm:$0xff]
        %v6634 = vld [vmem:[%s4467 + $0x30] sm:$0xff]
        %v6635 = vld [vmem:[%s4467 + $0x38] sm:$0xff]
        %v6636 = vadd.f32 %v6628, %v6356
        %v6637 = vadd.f32 %v6629, %v6357
        %v6638 = vadd.f32 %v6630, %v6358
        %v6639 = vadd.f32 %v6631, %v6359
        %v6640 = vadd.f32 %v6632, %v6360
        %v6641 = vadd.f32 %v6633, %v6361
        %v6642 = vadd.f32 %v6634, %v6362
        %v6643 = vadd.f32 %v6635, %v6363
        %v6644 = vadd.f32 %v6636, %v6610
        %v6645 = vadd.f32 %v6637, %v6610
        %v6646 = vadd.f32 %v6638, %v6610
        %v6647 = vadd.f32 %v6639, %v6610
        %v6648 = vadd.f32 %v6640, %v6610
        %v6649 = vadd.f32 %v6641, %v6610
        %v6650 = vadd.f32 %v6642, %v6610
        %v6651 = vadd.f32 %v6643, %v6610
        %6652 = vst [vmem:[%s4467] sm:$0xff] %v6644
        %6653 = vst [vmem:[%s4467 + $0x8] sm:$0xff] %v6645
        %6654 = vst [vmem:[%s4467 + $0x10] sm:$0xff] %v6646
        %6655 = vst [vmem:[%s4467 + $0x18] sm:$0xff] %v6647
        %6656 = vst [vmem:[%s4467 + $0x20] sm:$0xff] %v6648
        %6657 = vst [vmem:[%s4467 + $0x28] sm:$0xff] %v6649
        %6658 = vst [vmem:[%s4467 + $0x30] sm:$0xff] %v6650
        %6659 = vst [vmem:[%s4467 + $0x38] sm:$0xff] %v6651
        %v6660 = vld [vmem:[%s4484] sm:$0xff]
        %v6661 = vld [vmem:[%s4484 + $0x8] sm:$0xff]
        %v6662 = vld [vmem:[%s4484 + $0x10] sm:$0xff]
        %v6663 = vld [vmem:[%s4484 + $0x18] sm:$0xff]
        %v6664 = vld [vmem:[%s4484 + $0x20] sm:$0xff]
        %v6665 = vld [vmem:[%s4484 + $0x28] sm:$0xff]
        %v6666 = vld [vmem:[%s4484 + $0x30] sm:$0xff]
        %v6667 = vld [vmem:[%s4484 + $0x38] sm:$0xff]
        %v6668 = vadd.f32 %v6660, %v6542
        %v6669 = vadd.f32 %v6661, %v6543
        %v6670 = vadd.f32 %v6662, %v6544
        %v6671 = vadd.f32 %v6663, %v6545
        %v6672 = vadd.f32 %v6664, %v6546
        %v6673 = vadd.f32 %v6665, %v6547
        %v6674 = vadd.f32 %v6666, %v6548
        %v6675 = vadd.f32 %v6667, %v6549
        %v6676 = vadd.f32 %v6668, %v6610
        %v6677 = vadd.f32 %v6669, %v6610
        %v6678 = vadd.f32 %v6670, %v6610
        %v6679 = vadd.f32 %v6671, %v6610
        %v6680 = vadd.f32 %v6672, %v6610
        %v6681 = vadd.f32 %v6673, %v6610
        %v6682 = vadd.f32 %v6674, %v6610
        %v6683 = vadd.f32 %v6675, %v6610
        %6684 = vst [vmem:[%s4484] sm:$0xff] %v6676
        %6685 = vst [vmem:[%s4484 + $0x8] sm:$0xff] %v6677
        %6686 = vst [vmem:[%s4484 + $0x10] sm:$0xff] %v6678
        %6687 = vst [vmem:[%s4484 + $0x18] sm:$0xff] %v6679
        %6688 = vst [vmem:[%s4484 + $0x20] sm:$0xff] %v6680
        %6689 = vst [vmem:[%s4484 + $0x28] sm:$0xff] %v6681
        %6690 = vst [vmem:[%s4484 + $0x30] sm:$0xff] %v6682
        %6691 = vst [vmem:[%s4484 + $0x38] sm:$0xff] %v6683
        %v6692 = vld [vmem:[%s4501] sm:$0xff]
        %v6693 = vld [vmem:[%s4501 + $0x8] sm:$0xff]
        %v6694 = vld [vmem:[%s4501 + $0x10] sm:$0xff]
        %v6695 = vld [vmem:[%s4501 + $0x18] sm:$0xff]
        %v6696 = vld [vmem:[%s4501 + $0x20] sm:$0xff]
        %v6697 = vld [vmem:[%s4501 + $0x28] sm:$0xff]
        %v6698 = vld [vmem:[%s4501 + $0x30] sm:$0xff]
        %v6699 = vld [vmem:[%s4501 + $0x38] sm:$0xff]
        %v6700 = vadd.f32 %v6692, %v6582
        %v6701 = vadd.f32 %v6693, %v6583
        %v6702 = vadd.f32 %v6694, %v6584
        %v6703 = vadd.f32 %v6695, %v6585
        %v6704 = vadd.f32 %v6696, %v6586
        %v6705 = vadd.f32 %v6697, %v6587
        %v6706 = vadd.f32 %v6698, %v6588
        %v6707 = vadd.f32 %v6699, %v6589
        %v6708 = vadd.f32 %v6700, %v6610
        %v6709 = vadd.f32 %v6701, %v6610
        %v6710 = vadd.f32 %v6702, %v6610
        %v6711 = vadd.f32 %v6703, %v6610
        %v6712 = vadd.f32 %v6704, %v6610
        %v6713 = vadd.f32 %v6705, %v6610
        %v6714 = vadd.f32 %v6706, %v6610
        %v6715 = vadd.f32 %v6707, %v6610
        %6716 = vst [vmem:[%s4501] sm:$0xff] %v6708
        %6717 = vst [vmem:[%s4501 + $0x8] sm:$0xff] %v6709
        %6718 = vst [vmem:[%s4501 + $0x10] sm:$0xff] %v6710
        %6719 = vst [vmem:[%s4501 + $0x18] sm:$0xff] %v6711
        %6720 = vst [vmem:[%s4501 + $0x20] sm:$0xff] %v6712
        %6721 = vst [vmem:[%s4501 + $0x28] sm:$0xff] %v6713
        %6722 = vst [vmem:[%s4501 + $0x30] sm:$0xff] %v6714
        %6723 = vst [vmem:[%s4501 + $0x38] sm:$0xff] %v6715
        %s6724 = sand.u32 %s242, 1
        %s6725 = scalar_lea.sflag [#allocation5], %s6724
        %s6726 = sand.u32 %s242, 1
        %s6727 = smul.addr %s6726, 256
        %s6728 = scalar_lea.vmem [#allocation11], %s6727
        // Predicated region
        $region61: #{tpu_custom_call.1} parent=43 // pred_check
          %p6729 = pneg %p252
        $region62: #{tpu_custom_call.1} parent=43 // pred_check_branch
          %6731 = sbr.rel (%p6729) target = $region64
        $region63: #{tpu_custom_call.1} parent=43 // pred_region
          %s6732 = smul.u32 8, %s34
          %s6734 = ssub.s32 4096, 4096
          %6735 = vsyncadd %s6725, %s6734
          %s6736 = smul.addr %s32, 32
          %s6737 = sadd.s32 %s6732, %s6736
          %s6738 = smul.addr %s33, 32
          %s6739 = sadd.s32 %s6737, %s6738
          %s6740 = smul.addr %s6739, 128
          %s6741 = scalar_lea.hbm %s6, %s6740
          %s6742 = sshll.u32 %s6728, 4
          %s6743 = int_to_ptr.vmem [resolvable:$true] %s6742
          %6748 = dma.vmem_to_hbm [thread:$0]  %s6743, 4096, %s6741, %s6725, 128, 128, 8
        $region64: #{tpu_custom_call.1} parent=43 // pred_fallthru
          _
      $region44: #{tpu_custom_call.1} parent=5 // pred_fallthru
        _
      %p6749 = scmp.le.s32.totalorder 2, %s22
      // Predicated region
      $region65: #{tpu_custom_call.1} parent=5 // pred_check
        %p6750 = pneg %p6749
      $region66: #{tpu_custom_call.1} parent=5 // pred_check_branch
        %6752 = sbr.rel (%p6750) target = $region68
      $region67: #{tpu_custom_call.1} parent=5 // pred_region
        %s6753 = ssub.s32 %s22, 2
        // Predicated region
        $region69: #{tpu_custom_call.1} parent=67 // pred_check
          %p6754 = pneg %p258
        $region70: #{tpu_custom_call.1} parent=67 // pred_check_branch
          %6756 = sbr.rel (%p6754) target = $region72
        $region71: #{tpu_custom_call.1} parent=67 // pred_region
          %s6757 = sand.u32 %s243, 1
          %s6758 = scalar_lea.sflag [#allocation5], %s6757
          %s6759 = sand.u32 %s243, 1
          %s6760 = smul.addr %s6759, 256
          %s6761 = scalar_lea.vmem [#allocation11], %s6760
          %6762 = dma.done %s6758, 4096
        $region72: #{tpu_custom_call.1} parent=67 // pred_fallthru
          _
      $region68: #{tpu_custom_call.1} parent=5 // pred_fallthru
        _
    $region6: #{tpu_custom_call.1} parent=1 // loop_footer
      %s26 = sadd.s32 1, %s22
    $region7: #{tpu_custom_call.1} parent=1 // loop_footer_branch
      %21 = sbr.rel target = $region3
    $region8: #{tpu_custom_call.1} parent=1 // loop_exit
      _
    %6763 = vsyncpa [#allocation4], 1
    %s6764 = scalar_lea.sflag [#allocation4], 1
    %6765 = vsyncpa %s6764, 1
    %6766 = vsyncpa [#allocation7], 1
    %s6767 = scalar_lea.sflag [#allocation7], 1
    %6768 = vsyncpa %s6767, 1
    %6769 = vsyncpa [#allocation10], 1
    %6770 = vsyncpa [#allocation5], 1
    %s6771 = scalar_lea.sflag [#allocation5], 1
    %6772 = vsyncpa %s6771, 1

</llo_original>
